<compile_context>
chip_gen: v6e
topology: v6e:2x2x1
jax: 0.10.0
libtpu: 0.0.40
codegen_flags: <defaults>
</compile_context>

<pallas_src>
import functools
from math import prod

import jax
import jax.numpy as jnp
from jax.experimental import pallas as pl
from jax.experimental.pallas import tpu as pltpu


_SELU_ALPHA = 1.6732632423543772
_SELU_SCALE = 1.0507009873554805
_LANE = 128


def _selu(x):
    # exp only on the non-positive branch so the discarded branch cannot overflow.
    return _SELU_SCALE * jnp.where(
        x > 0, x, _SELU_ALPHA * (jnp.exp(jnp.minimum(x, 0.0)) - 1.0))


def _round_up(n, m):
    return ((n + m - 1) // m) * m


def _div_const(x, d):
    """x // d for non-negative ints; uses shifts when d is a power of two."""
    if d & (d - 1) == 0:
        return x >> (int(d).bit_length() - 1)
    return x // d  # TODO(synk): non-power-of-two spatial dims rely on integer div lowering.


def _mod_const(x, d):
    if d & (d - 1) == 0:
        return x & (d - 1)
    return x % d


# --------------------------- fused residual stage ---------------------------

def _stage_kernel(*refs, H, W, HW, L_in, L_out, pool, out_act, has_skip):
    """One image: conv3x3 -> SELU -> conv3x3 -> 1x1 skip -> add -> [SELU] -> [pool]."""
    if has_skip:
        x_ref, w1_ref, b1_ref, w2_ref, b2_ref, wsk_ref, bsk_ref, o_ref = refs
    else:
        x_ref, w1_ref, b1_ref, w2_ref, b2_ref, o_ref = refs

    x = x_ref[0]                                            # (Cin, L_in) f32

    # row/col of every flat lane position (shared by both convs).
    m = jax.lax.broadcasted_iota(jnp.int32, (1, L_in), 1)
    row = _div_const(m, W)
    col = _mod_const(m, W)

    def conv3x3(inp_f32, w_ref):
        """inp (Ci, L_in) f32, w_ref (9*Co, Ci) bf16 -> (Co, L_in) f32 (no bias)."""
        nco = w_ref.shape[0] // 9
        acc = jnp.zeros((nco, L_in), jnp.float32)
        t = 0
        for dy in (-1, 0, 1):
            for dx in (-1, 0, 1):
                s = dy * W + dx
                v = inp_f32 if s == 0 else pltpu.roll(inp_f32, (-s) % L_in, axis=1)
                conds = []
                if dy < 0:
                    conds.append(row >= -dy)
                elif dy > 0:
                    conds.append(row < H - dy)
                if dx < 0:
                    conds.append(col >= -dx)
                elif dx > 0:
                    conds.append(col < W - dx)
                if conds:
                    ok = conds[0]
                    for c in conds[1:]:
                        ok = jnp.logical_and(ok, c)
                    v = jnp.where(ok, v, 0.0)
                wt = w_ref[t * nco:(t + 1) * nco, :]        # (Co, Ci) bf16, tap t
                acc = acc + jnp.dot(wt, v.astype(jnp.bfloat16),
                                    preferred_element_type=jnp.float32)
                t += 1
        return acc

    h1 = _selu(conv3x3(x, w1_ref) + b1_ref[...])            # (Cmid, L_in)
    out = conv3x3(h1, w2_ref) + b2_ref[...]                 # (Cout, L_in)

    if has_skip:
        out = out + jnp.dot(wsk_ref[...], x.astype(jnp.bfloat16),
                            preferred_element_type=jnp.float32) + bsk_ref[...]
    else:
        out = out + x                                        # identity skip (Cin == Cout)

    if out_act == "selu":
        out = _selu(out)

    if pool:
        # 2x2 / stride-2 average pool fused here: selection matrix built from
        # iota in-registers (no HBM constant, no transposes), applied on the MXU.
        Ho, Wo = H // 2, W // 2
        mi = jax.lax.broadcasted_iota(jnp.int32, (L_in, 1), 0)
        mo = jax.lax.broadcasted_iota(jnp.int32, (1, L_out), 1)
        rows_match = _div_const(_div_const(mi, W), 2) == _div_const(mo, Wo)
        cols_match = _div_const(_mod_const(mi, W), 2) == _mod_const(mo, Wo)
        P = jnp.where(jnp.logical_and(rows_match, cols_match), 0.25, 0.0)
        out = jnp.dot(out, P.astype(jnp.float32), preferred_element_type=jnp.float32)
        valid = Ho * Wo
    else:
        valid = HW

    # zero the lane padding so downstream stages / the MLP see exact zeros.
    lane = jax.lax.broadcasted_iota(jnp.int32, (1, L_out), 1)
    out = jnp.where(lane < valid, out, 0.0)
    o_ref[0] = out.astype(o_ref.dtype)


def _residual_stage(x, p, *, H, W, pool, out_act):
    N, Cin, L_in = x.shape
    HW = H * W
    assert L_in == max(_LANE, _round_up(HW, _LANE))
    Cmid = p["b1"].shape[0]
    Cout = p["b2"].shape[0]
    has_skip = "wskt" in p
    HWo = (H // 2) * (W // 2) if pool else HW
    L_out = max(_LANE, _round_up(HWo, _LANE))
    if not pool:
        assert L_out == L_in

    kernel = functools.partial(
        _stage_kernel, H=H, W=W, HW=HW, L_in=L_in, L_out=L_out,
        pool=pool, out_act=out_act, has_skip=has_skip)

    in_specs = [
        pl.BlockSpec((1, Cin, L_in), lambda n: (n, 0, 0)),
        pl.BlockSpec((9 * Cmid, Cin), lambda n: (0, 0)),
        pl.BlockSpec((Cmid, 1), lambda n: (0, 0)),
        pl.BlockSpec((9 * Cout, Cmid), lambda n: (0, 0)),
        pl.BlockSpec((Cout, 1), lambda n: (0, 0)),
    ]
    args = [x, p["w1t"], p["b1"], p["w2t"], p["b2"]]
    if has_skip:
        in_specs += [pl.BlockSpec((Cout, Cin), lambda n: (0, 0)),
                     pl.BlockSpec((Cout, 1), lambda n: (0, 0))]
        args += [p["wskt"], p["bsk"]]

    return pl.pallas_call(
        kernel,
        out_shape=jax.ShapeDtypeStruct((N, Cout, L_out), jnp.float32),
        grid=(N,),
        in_specs=in_specs,
        out_specs=pl.BlockSpec((1, Cout, L_out), lambda n: (n, 0, 0)),
        compiler_params=pltpu.CompilerParams(
            dimension_semantics=("parallel",),
            vmem_limit_bytes=32 * 1024 * 1024),
    )(*args)


# ---------------------------------- MLP -------------------------------------

def _mlp_kernel(x_ref, w1_ref, b1_ref, w2_ref, b2_ref, o_ref):
    x = x_ref[...]
    h = jnp.dot(x.astype(jnp.bfloat16), w1_ref[...],
                preferred_element_type=jnp.float32) + b1_ref[...]
    h = _selu(h)
    z = jnp.dot(h.astype(jnp.bfloat16), w2_ref[...],
                preferred_element_type=jnp.float32) + b2_ref[...]
    o_ref[...] = z.astype(o_ref.dtype)


def _mlp(x, p):
    N, F = x.shape
    Dh = p["w1"].shape[1]
    Do = p["w2"].shape[1]
    return pl.pallas_call(
        _mlp_kernel,
        out_shape=jax.ShapeDtypeStruct((N, Do), jnp.float32),
        grid=(1,),
        in_specs=[pl.BlockSpec((N, F), lambda i: (0, 0)),
                  pl.BlockSpec((F, Dh), lambda i: (0, 0)),
                  pl.BlockSpec((1, Dh), lambda i: (0, 0)),
                  pl.BlockSpec((Dh, Do), lambda i: (0, 0)),
                  pl.BlockSpec((1, Do), lambda i: (0, 0))],
        out_specs=pl.BlockSpec((N, Do), lambda i: (0, 0)),
        compiler_params=pltpu.CompilerParams(
            dimension_semantics=("arbitrary",),
            vmem_limit_bytes=32 * 1024 * 1024),
    )(x, p["w1"], p["b1"], p["w2"], p["b2"])


# ------------------------------ encoder forward ------------------------------

def encoder_forward(x_btchw, params):
    B, T, C, H, W = x_btchw.shape
    N = B * T
    HW = H * W
    L0 = max(_LANE, _round_up(HW, _LANE))
    # (B, T, C, H, W) -> (N, C, H*W): pure reshape, CHW order kept (no transpose).
    x = x_btchw.reshape(N, C, HW).astype(jnp.float32)
    if L0 != HW:
        x = jnp.pad(x, ((0, 0), (0, 0), (0, L0 - HW)))

    h = x
    cur_h, cur_w = H, W
    n_stages = len(params["stages"])
    for si, sp in enumerate(params["stages"]):
        pool = si < n_stages - 1          # pool fused into every stage except the last
        out_act = "selu" if si == 0 else None   # emb_act
        h = _residual_stage(h, sp, H=cur_h, W=cur_w, pool=pool, out_act=out_act)
        if pool:
            cur_h //= 2
            cur_w //= 2

    # '(b t) c h w -> b t (c h w)': the stored (N, C, Lpad) layout is already
    # channel-major; lane padding is folded into zero rows of mlp w1.
    flat = h.reshape(N, -1)
    z = _mlp(flat, params["mlp"])
    return z.reshape(B, T, -1)


# ------------------------------- param init ---------------------------------

def _stage_params(key, cin, cout, scale=0.05):
    k = jax.random.split(key, 6)
    w1 = scale * jax.random.normal(k[0], (3, 3, cin, cout), jnp.float32)
    w2 = scale * jax.random.normal(k[2], (3, 3, cout, cout), jnp.float32)
    p = {
        # taps stacked on rows, each (cout, cin) block already transposed for the kernel
        "w1t": jnp.transpose(w1, (0, 1, 3, 2)).reshape(9 * cout, cin).astype(jnp.bfloat16),
        "b1": scale * jax.random.normal(k[1], (cout, 1), jnp.float32),
        "w2t": jnp.transpose(w2, (0, 1, 3, 2)).reshape(9 * cout, cout).astype(jnp.bfloat16),
        "b2": scale * jax.random.normal(k[3], (cout, 1), jnp.float32),
    }
    if cin != cout:
        wsk = scale * jax.random.normal(k[4], (cin, cout), jnp.float32)
        p["wskt"] = jnp.transpose(wsk).astype(jnp.bfloat16)     # (cout, cin)
        p["bsk"] = scale * jax.random.normal(k[5], (cout, 1), jnp.float32)
    return p


def init_encoder_params(key, *, base_channels, in_shape, channels_mult,
                        out_size, mlp_feedforward_dim):
    in_channels, H, W = in_shape
    channels = tuple(base_channels * m for m in channels_mult)
    size_div = 2 ** (len(channels) - 1)
    assert H % size_div == 0 and W % size_div == 0
    Hf, Wf = H // size_div, W // size_div
    HWf = Hf * Wf
    cnn_out_size = channels[-1] * HWf
    Lf = max(_LANE, _round_up(HWf, _LANE))

    keys = jax.random.split(key, len(channels) + 2)
    stages = [_stage_params(keys[0], in_channels, channels[0])]
    for i in range(len(channels) - 1):
        stages.append(_stage_params(keys[1 + i], channels[i], channels[i + 1]))

    km1, km2 = keys[-2], keys[-1]
    w1 = 0.05 * jax.random.normal(km1, (cnn_out_size, mlp_feedforward_dim), jnp.float32)
    # scatter w1 rows into the lane-padded flatten order (c * Lf + m); padded
    # rows stay zero so the lane padding contributes nothing.
    w1p = jnp.zeros((channels[-1], Lf, mlp_feedforward_dim), jnp.float32)
    w1p = w1p.at[:, :HWf, :].set(w1.reshape(channels[-1], HWf, mlp_feedforward_dim))
    w1p = w1p.reshape(channels[-1] * Lf, mlp_feedforward_dim)

    params = {
        "stages": stages,
        "mlp": {
            "w1": w1p.astype(jnp.bfloat16),
            "b1": jnp.zeros((1, mlp_feedforward_dim), jnp.float32),
            "w2": (0.05 * jax.random.normal(
                km2, (mlp_feedforward_dim, out_size), jnp.float32)).astype(jnp.bfloat16),
            "b2": jnp.zeros((1, out_size), jnp.float32),
        },
    }
    return params, cnn_out_size


# ---------------------------------- main -------------------------------------

if __name__ == "__main__":
    # Small, shape-consistent config: channels = (8, 16, 32, 16), spatial 16 -> 2.
    base_channels = 8
    in_shape = (3, 16, 16)
    channels_mult = (1, 2, 4, 2)
    out_size = 16
    mlp_feedforward_dim = 32
    B, T = 2, 2

    key = jax.random.PRNGKey(0)
    k_params, k_x = jax.random.split(key)
    params, cnn_out_size = init_encoder_params(
        k_params,
        base_channels=base_channels,
        in_shape=in_shape,
        channels_mult=channels_mult,
        out_size=out_size,
        mlp_feedforward_dim=mlp_feedforward_dim,
    )

    x = jax.random.normal(k_x, (B, T) + in_shape, jnp.float32)  # (B, T, C, H, W)

    out = jax.jit(encoder_forward)(x, params)
    out = jax.block_until_ready(out)
    assert out.shape == (B, T, out_size), out.shape
    assert bool(jnp.all(jnp.isfinite(out)))
    print("KERNEL_OK")
</pallas_src>

<mosaic_0001>
module attributes {stable_mosaic.version = 11 : i64} {
  func.func @_stage_kernel(%arg0: i32, %arg1: memref<1x3x256xf32, #tpu.memory_space<vmem>>, %arg2: memref<72x3xbf16, #tpu.memory_space<vmem>>, %arg3: memref<8x1xf32, #tpu.memory_space<vmem>>, %arg4: memref<72x8xbf16, #tpu.memory_space<vmem>>, %arg5: memref<8x1xf32, #tpu.memory_space<vmem>>, %arg6: memref<8x3xbf16, #tpu.memory_space<vmem>>, %arg7: memref<8x1xf32, #tpu.memory_space<vmem>>, %arg8: memref<1x8x128xf32, #tpu.memory_space<vmem>>) attributes {dimension_semantics = [#tpu.dimension_semantics<parallel>], iteration_bounds = array<i64: 4>, scalar_prefetch = 0 : i64, scratch_operands = 0 : i64, tpu.core_type = #tpu.core_type<tc>, window_params = [{transform_indices = @transform_0, window_bounds = array<i64: 1, 3, 256>}, {pipeline_mode = #tpu.pipeline_mode<synchronous>, transform_indices = @transform_1, window_bounds = array<i64: 72, 3>}, {pipeline_mode = #tpu.pipeline_mode<synchronous>, transform_indices = @transform_2, window_bounds = array<i64: 8, 1>}, {pipeline_mode = #tpu.pipeline_mode<synchronous>, transform_indices = @transform_3, window_bounds = array<i64: 72, 8>}, {pipeline_mode = #tpu.pipeline_mode<synchronous>, transform_indices = @transform_4, window_bounds = array<i64: 8, 1>}, {pipeline_mode = #tpu.pipeline_mode<synchronous>, transform_indices = @transform_5, window_bounds = array<i64: 8, 3>}, {pipeline_mode = #tpu.pipeline_mode<synchronous>, transform_indices = @transform_6, window_bounds = array<i64: 8, 1>}, {transform_indices = @transform_7, window_bounds = array<i64: 1, 8, 128>}]} {
    %c0 = arith.constant 0 : index
    %c0_0 = arith.constant 0 : index
    %c0_1 = arith.constant 0 : index
    %0 = vector.load %arg1[%c0, %c0_0, %c0_1] : memref<1x3x256xf32, #tpu.memory_space<vmem>>, vector<1x3x256xf32>
    %1 = vector.shape_cast %0 : vector<1x3x256xf32> to vector<3x256xf32>
    %2 = tpu.iota {dimensions = array<i32: 1>} : vector<1x256xi32>
    %c4_i32 = arith.constant 4 : i32
    %3 = vector.broadcast %c4_i32 : i32 to vector<1x256xi32>
    %4 = arith.shrsi %2, %3 : vector<1x256xi32>
    %c15_i32 = arith.constant 15 : i32
    %5 = vector.broadcast %c15_i32 : i32 to vector<1x256xi32>
    %6 = arith.andi %2, %5 : vector<1x256xi32>
    %cst = arith.constant 0.000000e+00 : f32
    %7 = vector.broadcast %cst : f32 to vector<8x256xf32>
    %c17_i32 = arith.constant 17 : i32
    %8 = tpu.dynamic_rotate %1 by %c17_i32 dim 1 : vector<3x256xf32>, i32 -> vector<3x256xf32>
    %c1_i32 = arith.constant 1 : i32
    %9 = vector.broadcast %c1_i32 : i32 to vector<1x256xi32>
    %10 = arith.cmpi sge, %4, %9 : vector<1x256xi32>
    %c1_i32_2 = arith.constant 1 : i32
    %11 = vector.broadcast %c1_i32_2 : i32 to vector<1x256xi32>
    %12 = arith.cmpi sge, %6, %11 : vector<1x256xi32>
    %13 = arith.andi %10, %12 : vector<1x256xi1>
    %cst_3 = arith.constant 0.000000e+00 : f32
    %14 = vector.shape_cast %13 : vector<1x256xi1> to vector<1x256xi1>
    %15 = vector.broadcast %14 : vector<1x256xi1> to vector<3x256xi1>
    %16 = vector.broadcast %cst_3 : f32 to vector<3x256xf32>
    %17 = arith.select %15, %8, %16 : vector<3x256xi1>, vector<3x256xf32>
    %c0_4 = arith.constant 0 : index
    %c0_5 = arith.constant 0 : index
    %18 = vector.load %arg2[%c0_4, %c0_5] : memref<72x3xbf16, #tpu.memory_space<vmem>>, vector<8x3xbf16>
    %19 = arith.truncf %17 : vector<3x256xf32> to vector<3x256xbf16>
    %cst_6 = arith.constant dense<0.000000e+00> : vector<8x256xf32>
    %20 = tpu.matmul %18, %19, %cst_6 {dimension_numbers = #tpu.dot_dimension_numbers<[1], [0], [0], [1], [0, 0, 1, 1], [], []>} : vector<8x3xbf16>, vector<3x256xbf16>, vector<8x256xf32> -> vector<8x256xf32>
    %21 = arith.addf %7, %20 : vector<8x256xf32>
    %c16_i32 = arith.constant 16 : i32
    %22 = tpu.dynamic_rotate %1 by %c16_i32 dim 1 : vector<3x256xf32>, i32 -> vector<3x256xf32>
    %c1_i32_7 = arith.constant 1 : i32
    %23 = vector.broadcast %c1_i32_7 : i32 to vector<1x256xi32>
    %24 = arith.cmpi sge, %4, %23 : vector<1x256xi32>
    %cst_8 = arith.constant 0.000000e+00 : f32
    %25 = vector.shape_cast %24 : vector<1x256xi1> to vector<1x256xi1>
    %26 = vector.broadcast %25 : vector<1x256xi1> to vector<3x256xi1>
    %27 = vector.broadcast %cst_8 : f32 to vector<3x256xf32>
    %28 = arith.select %26, %22, %27 : vector<3x256xi1>, vector<3x256xf32>
    %c8 = arith.constant 8 : index
    %c0_9 = arith.constant 0 : index
    %29 = vector.load %arg2[%c8, %c0_9] : memref<72x3xbf16, #tpu.memory_space<vmem>>, vector<8x3xbf16>
    %30 = arith.truncf %28 : vector<3x256xf32> to vector<3x256xbf16>
    %cst_10 = arith.constant dense<0.000000e+00> : vector<8x256xf32>
    %31 = tpu.matmul %29, %30, %cst_10 {dimension_numbers = #tpu.dot_dimension_numbers<[1], [0], [0], [1], [0, 0, 1, 1], [], []>} : vector<8x3xbf16>, vector<3x256xbf16>, vector<8x256xf32> -> vector<8x256xf32>
    %32 = arith.addf %21, %31 : vector<8x256xf32>
    %c15_i32_11 = arith.constant 15 : i32
    %33 = tpu.dynamic_rotate %1 by %c15_i32_11 dim 1 : vector<3x256xf32>, i32 -> vector<3x256xf32>
    %c1_i32_12 = arith.constant 1 : i32
    %34 = vector.broadcast %c1_i32_12 : i32 to vector<1x256xi32>
    %35 = arith.cmpi sge, %4, %34 : vector<1x256xi32>
    %c15_i32_13 = arith.constant 15 : i32
    %36 = vector.broadcast %c15_i32_13 : i32 to vector<1x256xi32>
    %37 = arith.cmpi slt, %6, %36 : vector<1x256xi32>
    %38 = arith.andi %35, %37 : vector<1x256xi1>
    %cst_14 = arith.constant 0.000000e+00 : f32
    %39 = vector.shape_cast %38 : vector<1x256xi1> to vector<1x256xi1>
    %40 = vector.broadcast %39 : vector<1x256xi1> to vector<3x256xi1>
    %41 = vector.broadcast %cst_14 : f32 to vector<3x256xf32>
    %42 = arith.select %40, %33, %41 : vector<3x256xi1>, vector<3x256xf32>
    %c16 = arith.constant 16 : index
    %c0_15 = arith.constant 0 : index
    %43 = vector.load %arg2[%c16, %c0_15] : memref<72x3xbf16, #tpu.memory_space<vmem>>, vector<8x3xbf16>
    %44 = arith.truncf %42 : vector<3x256xf32> to vector<3x256xbf16>
    %cst_16 = arith.constant dense<0.000000e+00> : vector<8x256xf32>
    %45 = tpu.matmul %43, %44, %cst_16 {dimension_numbers = #tpu.dot_dimension_numbers<[1], [0], [0], [1], [0, 0, 1, 1], [], []>} : vector<8x3xbf16>, vector<3x256xbf16>, vector<8x256xf32> -> vector<8x256xf32>
    %46 = arith.addf %32, %45 : vector<8x256xf32>
    %c1_i32_17 = arith.constant 1 : i32
    %47 = tpu.dynamic_rotate %1 by %c1_i32_17 dim 1 : vector<3x256xf32>, i32 -> vector<3x256xf32>
    %c1_i32_18 = arith.constant 1 : i32
    %48 = vector.broadcast %c1_i32_18 : i32 to vector<1x256xi32>
    %49 = arith.cmpi sge, %6, %48 : vector<1x256xi32>
    %cst_19 = arith.constant 0.000000e+00 : f32
    %50 = vector.shape_cast %49 : vector<1x256xi1> to vector<1x256xi1>
    %51 = vector.broadcast %50 : vector<1x256xi1> to vector<3x256xi1>
    %52 = vector.broadcast %cst_19 : f32 to vector<3x256xf32>
    %53 = arith.select %51, %47, %52 : vector<3x256xi1>, vector<3x256xf32>
    %c24 = arith.constant 24 : index
    %c0_20 = arith.constant 0 : index
    %54 = vector.load %arg2[%c24, %c0_20] : memref<72x3xbf16, #tpu.memory_space<vmem>>, vector<8x3xbf16>
    %55 = arith.truncf %53 : vector<3x256xf32> to vector<3x256xbf16>
    %cst_21 = arith.constant dense<0.000000e+00> : vector<8x256xf32>
    %56 = tpu.matmul %54, %55, %cst_21 {dimension_numbers = #tpu.dot_dimension_numbers<[1], [0], [0], [1], [0, 0, 1, 1], [], []>} : vector<8x3xbf16>, vector<3x256xbf16>, vector<8x256xf32> -> vector<8x256xf32>
    %57 = arith.addf %46, %56 : vector<8x256xf32>
    %c32 = arith.constant 32 : index
    %c0_22 = arith.constant 0 : index
    %58 = vector.load %arg2[%c32, %c0_22] : memref<72x3xbf16, #tpu.memory_space<vmem>>, vector<8x3xbf16>
    %59 = arith.truncf %1 : vector<3x256xf32> to vector<3x256xbf16>
    %cst_23 = arith.constant dense<0.000000e+00> : vector<8x256xf32>
    %60 = tpu.matmul %58, %59, %cst_23 {dimension_numbers = #tpu.dot_dimension_numbers<[1], [0], [0], [1], [0, 0, 1, 1], [], []>} : vector<8x3xbf16>, vector<3x256xbf16>, vector<8x256xf32> -> vector<8x256xf32>
    %61 = arith.addf %57, %60 : vector<8x256xf32>
    %c255_i32 = arith.constant 255 : i32
    %62 = tpu.dynamic_rotate %1 by %c255_i32 dim 1 : vector<3x256xf32>, i32 -> vector<3x256xf32>
    %c15_i32_24 = arith.constant 15 : i32
    %63 = vector.broadcast %c15_i32_24 : i32 to vector<1x256xi32>
    %64 = arith.cmpi slt, %6, %63 : vector<1x256xi32>
    %cst_25 = arith.constant 0.000000e+00 : f32
    %65 = vector.shape_cast %64 : vector<1x256xi1> to vector<1x256xi1>
    %66 = vector.broadcast %65 : vector<1x256xi1> to vector<3x256xi1>
    %67 = vector.broadcast %cst_25 : f32 to vector<3x256xf32>
    %68 = arith.select %66, %62, %67 : vector<3x256xi1>, vector<3x256xf32>
    %c40 = arith.constant 40 : index
    %c0_26 = arith.constant 0 : index
    %69 = vector.load %arg2[%c40, %c0_26] : memref<72x3xbf16, #tpu.memory_space<vmem>>, vector<8x3xbf16>
    %70 = arith.truncf %68 : vector<3x256xf32> to vector<3x256xbf16>
    %cst_27 = arith.constant dense<0.000000e+00> : vector<8x256xf32>
    %71 = tpu.matmul %69, %70, %cst_27 {dimension_numbers = #tpu.dot_dimension_numbers<[1], [0], [0], [1], [0, 0, 1, 1], [], []>} : vector<8x3xbf16>, vector<3x256xbf16>, vector<8x256xf32> -> vector<8x256xf32>
    %72 = arith.addf %61, %71 : vector<8x256xf32>
    %c241_i32 = arith.constant 241 : i32
    %73 = tpu.dynamic_rotate %1 by %c241_i32 dim 1 : vector<3x256xf32>, i32 -> vector<3x256xf32>
    %c15_i32_28 = arith.constant 15 : i32
    %74 = vector.broadcast %c15_i32_28 : i32 to vector<1x256xi32>
    %75 = arith.cmpi slt, %4, %74 : vector<1x256xi32>
    %c1_i32_29 = arith.constant 1 : i32
    %76 = vector.broadcast %c1_i32_29 : i32 to vector<1x256xi32>
    %77 = arith.cmpi sge, %6, %76 : vector<1x256xi32>
    %78 = arith.andi %75, %77 : vector<1x256xi1>
    %cst_30 = arith.constant 0.000000e+00 : f32
    %79 = vector.shape_cast %78 : vector<1x256xi1> to vector<1x256xi1>
    %80 = vector.broadcast %79 : vector<1x256xi1> to vector<3x256xi1>
    %81 = vector.broadcast %cst_30 : f32 to vector<3x256xf32>
    %82 = arith.select %80, %73, %81 : vector<3x256xi1>, vector<3x256xf32>
    %c48 = arith.constant 48 : index
    %c0_31 = arith.constant 0 : index
    %83 = vector.load %arg2[%c48, %c0_31] : memref<72x3xbf16, #tpu.memory_space<vmem>>, vector<8x3xbf16>
    %84 = arith.truncf %82 : vector<3x256xf32> to vector<3x256xbf16>
    %cst_32 = arith.constant dense<0.000000e+00> : vector<8x256xf32>
    %85 = tpu.matmul %83, %84, %cst_32 {dimension_numbers = #tpu.dot_dimension_numbers<[1], [0], [0], [1], [0, 0, 1, 1], [], []>} : vector<8x3xbf16>, vector<3x256xbf16>, vector<8x256xf32> -> vector<8x256xf32>
    %86 = arith.addf %72, %85 : vector<8x256xf32>
    %c240_i32 = arith.constant 240 : i32
    %87 = tpu.dynamic_rotate %1 by %c240_i32 dim 1 : vector<3x256xf32>, i32 -> vector<3x256xf32>
    %c15_i32_33 = arith.constant 15 : i32
    %88 = vector.broadcast %c15_i32_33 : i32 to vector<1x256xi32>
    %89 = arith.cmpi slt, %4, %88 : vector<1x256xi32>
    %cst_34 = arith.constant 0.000000e+00 : f32
    %90 = vector.shape_cast %89 : vector<1x256xi1> to vector<1x256xi1>
    %91 = vector.broadcast %90 : vector<1x256xi1> to vector<3x256xi1>
    %92 = vector.broadcast %cst_34 : f32 to vector<3x256xf32>
    %93 = arith.select %91, %87, %92 : vector<3x256xi1>, vector<3x256xf32>
    %c56 = arith.constant 56 : index
    %c0_35 = arith.constant 0 : index
    %94 = vector.load %arg2[%c56, %c0_35] : memref<72x3xbf16, #tpu.memory_space<vmem>>, vector<8x3xbf16>
    %95 = arith.truncf %93 : vector<3x256xf32> to vector<3x256xbf16>
    %cst_36 = arith.constant dense<0.000000e+00> : vector<8x256xf32>
    %96 = tpu.matmul %94, %95, %cst_36 {dimension_numbers = #tpu.dot_dimension_numbers<[1], [0], [0], [1], [0, 0, 1, 1], [], []>} : vector<8x3xbf16>, vector<3x256xbf16>, vector<8x256xf32> -> vector<8x256xf32>
    %97 = arith.addf %86, %96 : vector<8x256xf32>
    %c239_i32 = arith.constant 239 : i32
    %98 = tpu.dynamic_rotate %1 by %c239_i32 dim 1 : vector<3x256xf32>, i32 -> vector<3x256xf32>
    %c15_i32_37 = arith.constant 15 : i32
    %99 = vector.broadcast %c15_i32_37 : i32 to vector<1x256xi32>
    %100 = arith.cmpi slt, %4, %99 : vector<1x256xi32>
    %c15_i32_38 = arith.constant 15 : i32
    %101 = vector.broadcast %c15_i32_38 : i32 to vector<1x256xi32>
    %102 = arith.cmpi slt, %6, %101 : vector<1x256xi32>
    %103 = arith.andi %100, %102 : vector<1x256xi1>
    %cst_39 = arith.constant 0.000000e+00 : f32
    %104 = vector.shape_cast %103 : vector<1x256xi1> to vector<1x256xi1>
    %105 = vector.broadcast %104 : vector<1x256xi1> to vector<3x256xi1>
    %106 = vector.broadcast %cst_39 : f32 to vector<3x256xf32>
    %107 = arith.select %105, %98, %106 : vector<3x256xi1>, vector<3x256xf32>
    %c64 = arith.constant 64 : index
    %c0_40 = arith.constant 0 : index
    %108 = vector.load %arg2[%c64, %c0_40] : memref<72x3xbf16, #tpu.memory_space<vmem>>, vector<8x3xbf16>
    %109 = arith.truncf %107 : vector<3x256xf32> to vector<3x256xbf16>
    %cst_41 = arith.constant dense<0.000000e+00> : vector<8x256xf32>
    %110 = tpu.matmul %108, %109, %cst_41 {dimension_numbers = #tpu.dot_dimension_numbers<[1], [0], [0], [1], [0, 0, 1, 1], [], []>} : vector<8x3xbf16>, vector<3x256xbf16>, vector<8x256xf32> -> vector<8x256xf32>
    %111 = arith.addf %97, %110 : vector<8x256xf32>
    %c0_42 = arith.constant 0 : index
    %c0_43 = arith.constant 0 : index
    %112 = vector.load %arg3[%c0_42, %c0_43] : memref<8x1xf32, #tpu.memory_space<vmem>>, vector<8x1xf32>
    %113 = vector.broadcast %112 : vector<8x1xf32> to vector<8x256xf32>
    %114 = arith.addf %111, %113 : vector<8x256xf32>
    %cst_44 = arith.constant 0.000000e+00 : f32
    %115 = vector.broadcast %cst_44 : f32 to vector<8x256xf32>
    %116 = arith.cmpf ogt, %114, %115 : vector<8x256xf32>
    %cst_45 = arith.constant 0.000000e+00 : f32
    %117 = vector.broadcast %cst_45 : f32 to vector<8x256xf32>
    %118 = arith.minimumf %114, %117 : vector<8x256xf32>
    %119 = math.exp %118 : vector<8x256xf32>
    %cst_46 = arith.constant 1.000000e+00 : f32
    %120 = vector.broadcast %cst_46 : f32 to vector<8x256xf32>
    %121 = arith.subf %119, %120 : vector<8x256xf32>
    %cst_47 = arith.constant 1.67326319 : f32
    %122 = vector.broadcast %cst_47 : f32 to vector<8x256xf32>
    %123 = arith.mulf %122, %121 : vector<8x256xf32>
    %124 = arith.select %116, %114, %123 : vector<8x256xi1>, vector<8x256xf32>
    %cst_48 = arith.constant 1.05070102 : f32
    %125 = vector.broadcast %cst_48 : f32 to vector<8x256xf32>
    %126 = arith.mulf %125, %124 : vector<8x256xf32>
    %cst_49 = arith.constant 0.000000e+00 : f32
    %127 = vector.broadcast %cst_49 : f32 to vector<8x256xf32>
    %c17_i32_50 = arith.constant 17 : i32
    %128 = tpu.dynamic_rotate %126 by %c17_i32_50 dim 1 : vector<8x256xf32>, i32 -> vector<8x256xf32>
    %c1_i32_51 = arith.constant 1 : i32
    %129 = vector.broadcast %c1_i32_51 : i32 to vector<1x256xi32>
    %130 = arith.cmpi sge, %4, %129 : vector<1x256xi32>
    %c1_i32_52 = arith.constant 1 : i32
    %131 = vector.broadcast %c1_i32_52 : i32 to vector<1x256xi32>
    %132 = arith.cmpi sge, %6, %131 : vector<1x256xi32>
    %133 = arith.andi %130, %132 : vector<1x256xi1>
    %cst_53 = arith.constant 0.000000e+00 : f32
    %134 = vector.shape_cast %133 : vector<1x256xi1> to vector<1x256xi1>
    %135 = vector.broadcast %134 : vector<1x256xi1> to vector<8x256xi1>
    %136 = vector.broadcast %cst_53 : f32 to vector<8x256xf32>
    %137 = arith.select %135, %128, %136 : vector<8x256xi1>, vector<8x256xf32>
    %c0_54 = arith.constant 0 : index
    %c0_55 = arith.constant 0 : index
    %138 = vector.load %arg4[%c0_54, %c0_55] : memref<72x8xbf16, #tpu.memory_space<vmem>>, vector<8x8xbf16>
    %139 = arith.truncf %137 : vector<8x256xf32> to vector<8x256xbf16>
    %cst_56 = arith.constant dense<0.000000e+00> : vector<8x256xf32>
    %140 = tpu.matmul %138, %139, %cst_56 {dimension_numbers = #tpu.dot_dimension_numbers<[1], [0], [0], [1], [0, 0, 1, 1], [], []>} : vector<8x8xbf16>, vector<8x256xbf16>, vector<8x256xf32> -> vector<8x256xf32>
    %141 = arith.addf %127, %140 : vector<8x256xf32>
    %c16_i32_57 = arith.constant 16 : i32
    %142 = tpu.dynamic_rotate %126 by %c16_i32_57 dim 1 : vector<8x256xf32>, i32 -> vector<8x256xf32>
    %c1_i32_58 = arith.constant 1 : i32
    %143 = vector.broadcast %c1_i32_58 : i32 to vector<1x256xi32>
    %144 = arith.cmpi sge, %4, %143 : vector<1x256xi32>
    %cst_59 = arith.constant 0.000000e+00 : f32
    %145 = vector.shape_cast %144 : vector<1x256xi1> to vector<1x256xi1>
    %146 = vector.broadcast %145 : vector<1x256xi1> to vector<8x256xi1>
    %147 = vector.broadcast %cst_59 : f32 to vector<8x256xf32>
    %148 = arith.select %146, %142, %147 : vector<8x256xi1>, vector<8x256xf32>
    %c8_60 = arith.constant 8 : index
    %c0_61 = arith.constant 0 : index
    %149 = vector.load %arg4[%c8_60, %c0_61] : memref<72x8xbf16, #tpu.memory_space<vmem>>, vector<8x8xbf16>
    %150 = arith.truncf %148 : vector<8x256xf32> to vector<8x256xbf16>
    %cst_62 = arith.constant dense<0.000000e+00> : vector<8x256xf32>
    %151 = tpu.matmul %149, %150, %cst_62 {dimension_numbers = #tpu.dot_dimension_numbers<[1], [0], [0], [1], [0, 0, 1, 1], [], []>} : vector<8x8xbf16>, vector<8x256xbf16>, vector<8x256xf32> -> vector<8x256xf32>
    %152 = arith.addf %141, %151 : vector<8x256xf32>
    %c15_i32_63 = arith.constant 15 : i32
    %153 = tpu.dynamic_rotate %126 by %c15_i32_63 dim 1 : vector<8x256xf32>, i32 -> vector<8x256xf32>
    %c1_i32_64 = arith.constant 1 : i32
    %154 = vector.broadcast %c1_i32_64 : i32 to vector<1x256xi32>
    %155 = arith.cmpi sge, %4, %154 : vector<1x256xi32>
    %c15_i32_65 = arith.constant 15 : i32
    %156 = vector.broadcast %c15_i32_65 : i32 to vector<1x256xi32>
    %157 = arith.cmpi slt, %6, %156 : vector<1x256xi32>
    %158 = arith.andi %155, %157 : vector<1x256xi1>
    %cst_66 = arith.constant 0.000000e+00 : f32
    %159 = vector.shape_cast %158 : vector<1x256xi1> to vector<1x256xi1>
    %160 = vector.broadcast %159 : vector<1x256xi1> to vector<8x256xi1>
    %161 = vector.broadcast %cst_66 : f32 to vector<8x256xf32>
    %162 = arith.select %160, %153, %161 : vector<8x256xi1>, vector<8x256xf32>
    %c16_67 = arith.constant 16 : index
    %c0_68 = arith.constant 0 : index
    %163 = vector.load %arg4[%c16_67, %c0_68] : memref<72x8xbf16, #tpu.memory_space<vmem>>, vector<8x8xbf16>
    %164 = arith.truncf %162 : vector<8x256xf32> to vector<8x256xbf16>
    %cst_69 = arith.constant dense<0.000000e+00> : vector<8x256xf32>
    %165 = tpu.matmul %163, %164, %cst_69 {dimension_numbers = #tpu.dot_dimension_numbers<[1], [0], [0], [1], [0, 0, 1, 1], [], []>} : vector<8x8xbf16>, vector<8x256xbf16>, vector<8x256xf32> -> vector<8x256xf32>
    %166 = arith.addf %152, %165 : vector<8x256xf32>
    %c1_i32_70 = arith.constant 1 : i32
    %167 = tpu.dynamic_rotate %126 by %c1_i32_70 dim 1 : vector<8x256xf32>, i32 -> vector<8x256xf32>
    %c1_i32_71 = arith.constant 1 : i32
    %168 = vector.broadcast %c1_i32_71 : i32 to vector<1x256xi32>
    %169 = arith.cmpi sge, %6, %168 : vector<1x256xi32>
    %cst_72 = arith.constant 0.000000e+00 : f32
    %170 = vector.shape_cast %169 : vector<1x256xi1> to vector<1x256xi1>
    %171 = vector.broadcast %170 : vector<1x256xi1> to vector<8x256xi1>
    %172 = vector.broadcast %cst_72 : f32 to vector<8x256xf32>
    %173 = arith.select %171, %167, %172 : vector<8x256xi1>, vector<8x256xf32>
    %c24_73 = arith.constant 24 : index
    %c0_74 = arith.constant 0 : index
    %174 = vector.load %arg4[%c24_73, %c0_74] : memref<72x8xbf16, #tpu.memory_space<vmem>>, vector<8x8xbf16>
    %175 = arith.truncf %173 : vector<8x256xf32> to vector<8x256xbf16>
    %cst_75 = arith.constant dense<0.000000e+00> : vector<8x256xf32>
    %176 = tpu.matmul %174, %175, %cst_75 {dimension_numbers = #tpu.dot_dimension_numbers<[1], [0], [0], [1], [0, 0, 1, 1], [], []>} : vector<8x8xbf16>, vector<8x256xbf16>, vector<8x256xf32> -> vector<8x256xf32>
    %177 = arith.addf %166, %176 : vector<8x256xf32>
    %c32_76 = arith.constant 32 : index
    %c0_77 = arith.constant 0 : index
    %178 = vector.load %arg4[%c32_76, %c0_77] : memref<72x8xbf16, #tpu.memory_space<vmem>>, vector<8x8xbf16>
    %179 = arith.truncf %126 : vector<8x256xf32> to vector<8x256xbf16>
    %cst_78 = arith.constant dense<0.000000e+00> : vector<8x256xf32>
    %180 = tpu.matmul %178, %179, %cst_78 {dimension_numbers = #tpu.dot_dimension_numbers<[1], [0], [0], [1], [0, 0, 1, 1], [], []>} : vector<8x8xbf16>, vector<8x256xbf16>, vector<8x256xf32> -> vector<8x256xf32>
    %181 = arith.addf %177, %180 : vector<8x256xf32>
    %c255_i32_79 = arith.constant 255 : i32
    %182 = tpu.dynamic_rotate %126 by %c255_i32_79 dim 1 : vector<8x256xf32>, i32 -> vector<8x256xf32>
    %c15_i32_80 = arith.constant 15 : i32
    %183 = vector.broadcast %c15_i32_80 : i32 to vector<1x256xi32>
    %184 = arith.cmpi slt, %6, %183 : vector<1x256xi32>
    %cst_81 = arith.constant 0.000000e+00 : f32
    %185 = vector.shape_cast %184 : vector<1x256xi1> to vector<1x256xi1>
    %186 = vector.broadcast %185 : vector<1x256xi1> to vector<8x256xi1>
    %187 = vector.broadcast %cst_81 : f32 to vector<8x256xf32>
    %188 = arith.select %186, %182, %187 : vector<8x256xi1>, vector<8x256xf32>
    %c40_82 = arith.constant 40 : index
    %c0_83 = arith.constant 0 : index
    %189 = vector.load %arg4[%c40_82, %c0_83] : memref<72x8xbf16, #tpu.memory_space<vmem>>, vector<8x8xbf16>
    %190 = arith.truncf %188 : vector<8x256xf32> to vector<8x256xbf16>
    %cst_84 = arith.constant dense<0.000000e+00> : vector<8x256xf32>
    %191 = tpu.matmul %189, %190, %cst_84 {dimension_numbers = #tpu.dot_dimension_numbers<[1], [0], [0], [1], [0, 0, 1, 1], [], []>} : vector<8x8xbf16>, vector<8x256xbf16>, vector<8x256xf32> -> vector<8x256xf32>
    %192 = arith.addf %181, %191 : vector<8x256xf32>
    %c241_i32_85 = arith.constant 241 : i32
    %193 = tpu.dynamic_rotate %126 by %c241_i32_85 dim 1 : vector<8x256xf32>, i32 -> vector<8x256xf32>
    %c15_i32_86 = arith.constant 15 : i32
    %194 = vector.broadcast %c15_i32_86 : i32 to vector<1x256xi32>
    %195 = arith.cmpi slt, %4, %194 : vector<1x256xi32>
    %c1_i32_87 = arith.constant 1 : i32
    %196 = vector.broadcast %c1_i32_87 : i32 to vector<1x256xi32>
    %197 = arith.cmpi sge, %6, %196 : vector<1x256xi32>
    %198 = arith.andi %195, %197 : vector<1x256xi1>
    %cst_88 = arith.constant 0.000000e+00 : f32
    %199 = vector.shape_cast %198 : vector<1x256xi1> to vector<1x256xi1>
    %200 = vector.broadcast %199 : vector<1x256xi1> to vector<8x256xi1>
    %201 = vector.broadcast %cst_88 : f32 to vector<8x256xf32>
    %202 = arith.select %200, %193, %201 : vector<8x256xi1>, vector<8x256xf32>
    %c48_89 = arith.constant 48 : index
    %c0_90 = arith.constant 0 : index
    %203 = vector.load %arg4[%c48_89, %c0_90] : memref<72x8xbf16, #tpu.memory_space<vmem>>, vector<8x8xbf16>
    %204 = arith.truncf %202 : vector<8x256xf32> to vector<8x256xbf16>
    %cst_91 = arith.constant dense<0.000000e+00> : vector<8x256xf32>
    %205 = tpu.matmul %203, %204, %cst_91 {dimension_numbers = #tpu.dot_dimension_numbers<[1], [0], [0], [1], [0, 0, 1, 1], [], []>} : vector<8x8xbf16>, vector<8x256xbf16>, vector<8x256xf32> -> vector<8x256xf32>
    %206 = arith.addf %192, %205 : vector<8x256xf32>
    %c240_i32_92 = arith.constant 240 : i32
    %207 = tpu.dynamic_rotate %126 by %c240_i32_92 dim 1 : vector<8x256xf32>, i32 -> vector<8x256xf32>
    %c15_i32_93 = arith.constant 15 : i32
    %208 = vector.broadcast %c15_i32_93 : i32 to vector<1x256xi32>
    %209 = arith.cmpi slt, %4, %208 : vector<1x256xi32>
    %cst_94 = arith.constant 0.000000e+00 : f32
    %210 = vector.shape_cast %209 : vector<1x256xi1> to vector<1x256xi1>
    %211 = vector.broadcast %210 : vector<1x256xi1> to vector<8x256xi1>
    %212 = vector.broadcast %cst_94 : f32 to vector<8x256xf32>
    %213 = arith.select %211, %207, %212 : vector<8x256xi1>, vector<8x256xf32>
    %c56_95 = arith.constant 56 : index
    %c0_96 = arith.constant 0 : index
    %214 = vector.load %arg4[%c56_95, %c0_96] : memref<72x8xbf16, #tpu.memory_space<vmem>>, vector<8x8xbf16>
    %215 = arith.truncf %213 : vector<8x256xf32> to vector<8x256xbf16>
    %cst_97 = arith.constant dense<0.000000e+00> : vector<8x256xf32>
    %216 = tpu.matmul %214, %215, %cst_97 {dimension_numbers = #tpu.dot_dimension_numbers<[1], [0], [0], [1], [0, 0, 1, 1], [], []>} : vector<8x8xbf16>, vector<8x256xbf16>, vector<8x256xf32> -> vector<8x256xf32>
    %217 = arith.addf %206, %216 : vector<8x256xf32>
    %c239_i32_98 = arith.constant 239 : i32
    %218 = tpu.dynamic_rotate %126 by %c239_i32_98 dim 1 : vector<8x256xf32>, i32 -> vector<8x256xf32>
    %c15_i32_99 = arith.constant 15 : i32
    %219 = vector.broadcast %c15_i32_99 : i32 to vector<1x256xi32>
    %220 = arith.cmpi slt, %4, %219 : vector<1x256xi32>
    %c15_i32_100 = arith.constant 15 : i32
    %221 = vector.broadcast %c15_i32_100 : i32 to vector<1x256xi32>
    %222 = arith.cmpi slt, %6, %221 : vector<1x256xi32>
    %223 = arith.andi %220, %222 : vector<1x256xi1>
    %cst_101 = arith.constant 0.000000e+00 : f32
    %224 = vector.shape_cast %223 : vector<1x256xi1> to vector<1x256xi1>
    %225 = vector.broadcast %224 : vector<1x256xi1> to vector<8x256xi1>
    %226 = vector.broadcast %cst_101 : f32 to vector<8x256xf32>
    %227 = arith.select %225, %218, %226 : vector<8x256xi1>, vector<8x256xf32>
    %c64_102 = arith.constant 64 : index
    %c0_103 = arith.constant 0 : index
    %228 = vector.load %arg4[%c64_102, %c0_103] : memref<72x8xbf16, #tpu.memory_space<vmem>>, vector<8x8xbf16>
    %229 = arith.truncf %227 : vector<8x256xf32> to vector<8x256xbf16>
    %cst_104 = arith.constant dense<0.000000e+00> : vector<8x256xf32>
    %230 = tpu.matmul %228, %229, %cst_104 {dimension_numbers = #tpu.dot_dimension_numbers<[1], [0], [0], [1], [0, 0, 1, 1], [], []>} : vector<8x8xbf16>, vector<8x256xbf16>, vector<8x256xf32> -> vector<8x256xf32>
    %231 = arith.addf %217, %230 : vector<8x256xf32>
    %c0_105 = arith.constant 0 : index
    %c0_106 = arith.constant 0 : index
    %232 = vector.load %arg5[%c0_105, %c0_106] : memref<8x1xf32, #tpu.memory_space<vmem>>, vector<8x1xf32>
    %233 = vector.broadcast %232 : vector<8x1xf32> to vector<8x256xf32>
    %234 = arith.addf %231, %233 : vector<8x256xf32>
    %c0_107 = arith.constant 0 : index
    %c0_108 = arith.constant 0 : index
    %235 = vector.load %arg6[%c0_107, %c0_108] : memref<8x3xbf16, #tpu.memory_space<vmem>>, vector<8x3xbf16>
    %236 = arith.truncf %1 : vector<3x256xf32> to vector<3x256xbf16>
    %cst_109 = arith.constant dense<0.000000e+00> : vector<8x256xf32>
    %237 = tpu.matmul %235, %236, %cst_109 {dimension_numbers = #tpu.dot_dimension_numbers<[1], [0], [0], [1], [0, 0, 1, 1], [], []>} : vector<8x3xbf16>, vector<3x256xbf16>, vector<8x256xf32> -> vector<8x256xf32>
    %238 = arith.addf %234, %237 : vector<8x256xf32>
    %c0_110 = arith.constant 0 : index
    %c0_111 = arith.constant 0 : index
    %239 = vector.load %arg7[%c0_110, %c0_111] : memref<8x1xf32, #tpu.memory_space<vmem>>, vector<8x1xf32>
    %240 = vector.broadcast %239 : vector<8x1xf32> to vector<8x256xf32>
    %241 = arith.addf %238, %240 : vector<8x256xf32>
    %cst_112 = arith.constant 0.000000e+00 : f32
    %242 = vector.broadcast %cst_112 : f32 to vector<8x256xf32>
    %243 = arith.cmpf ogt, %241, %242 : vector<8x256xf32>
    %cst_113 = arith.constant 0.000000e+00 : f32
    %244 = vector.broadcast %cst_113 : f32 to vector<8x256xf32>
    %245 = arith.minimumf %241, %244 : vector<8x256xf32>
    %246 = math.exp %245 : vector<8x256xf32>
    %cst_114 = arith.constant 1.000000e+00 : f32
    %247 = vector.broadcast %cst_114 : f32 to vector<8x256xf32>
    %248 = arith.subf %246, %247 : vector<8x256xf32>
    %cst_115 = arith.constant 1.67326319 : f32
    %249 = vector.broadcast %cst_115 : f32 to vector<8x256xf32>
    %250 = arith.mulf %249, %248 : vector<8x256xf32>
    %251 = arith.select %243, %241, %250 : vector<8x256xi1>, vector<8x256xf32>
    %cst_116 = arith.constant 1.05070102 : f32
    %252 = vector.broadcast %cst_116 : f32 to vector<8x256xf32>
    %253 = arith.mulf %252, %251 : vector<8x256xf32>
    %254 = tpu.iota {dimensions = array<i32: 0>} : vector<256x1xi32>
    %255 = tpu.iota {dimensions = array<i32: 1>} : vector<1x128xi32>
    %c4_i32_117 = arith.constant 4 : i32
    %256 = vector.broadcast %c4_i32_117 : i32 to vector<256x1xi32>
    %257 = arith.shrsi %254, %256 : vector<256x1xi32>
    %c1_i32_118 = arith.constant 1 : i32
    %258 = vector.broadcast %c1_i32_118 : i32 to vector<256x1xi32>
    %259 = arith.shrsi %257, %258 : vector<256x1xi32>
    %c3_i32 = arith.constant 3 : i32
    %260 = vector.broadcast %c3_i32 : i32 to vector<1x128xi32>
    %261 = arith.shrsi %255, %260 : vector<1x128xi32>
    %262 = vector.broadcast %259 : vector<256x1xi32> to vector<256x128xi32>
    %263 = vector.broadcast %261 : vector<1x128xi32> to vector<256x128xi32>
    %264 = arith.cmpi eq, %262, %263 : vector<256x128xi32>
    %c15_i32_119 = arith.constant 15 : i32
    %265 = vector.broadcast %c15_i32_119 : i32 to vector<256x1xi32>
    %266 = arith.andi %254, %265 : vector<256x1xi32>
    %c1_i32_120 = arith.constant 1 : i32
    %267 = vector.broadcast %c1_i32_120 : i32 to vector<256x1xi32>
    %268 = arith.shrsi %266, %267 : vector<256x1xi32>
    %c7_i32 = arith.constant 7 : i32
    %269 = vector.broadcast %c7_i32 : i32 to vector<1x128xi32>
    %270 = arith.andi %255, %269 : vector<1x128xi32>
    %271 = vector.broadcast %268 : vector<256x1xi32> to vector<256x128xi32>
    %272 = vector.broadcast %270 : vector<1x128xi32> to vector<256x128xi32>
    %273 = arith.cmpi eq, %271, %272 : vector<256x128xi32>
    %274 = arith.andi %264, %273 : vector<256x128xi1>
    %cst_121 = arith.constant 2.500000e-01 : f32
    %cst_122 = arith.constant 0.000000e+00 : f32
    %275 = vector.broadcast %cst_121 : f32 to vector<256x128xf32>
    %276 = vector.broadcast %cst_122 : f32 to vector<256x128xf32>
    %277 = arith.select %274, %275, %276 : vector<256x128xi1>, vector<256x128xf32>
    %cst_123 = arith.constant dense<0.000000e+00> : vector<8x128xf32>
    %278 = tpu.matmul %253, %277, %cst_123 {dimension_numbers = #tpu.dot_dimension_numbers<[1], [0], [0], [1], [0, 0, 1, 1], [], []>} : vector<8x256xf32>, vector<256x128xf32>, vector<8x128xf32> -> vector<8x128xf32>
    %279 = tpu.iota {dimensions = array<i32: 1>} : vector<1x128xi32>
    %c64_i32 = arith.constant 64 : i32
    %280 = vector.broadcast %c64_i32 : i32 to vector<1x128xi32>
    %281 = arith.cmpi slt, %279, %280 : vector<1x128xi32>
    %cst_124 = arith.constant 0.000000e+00 : f32
    %282 = vector.shape_cast %281 : vector<1x128xi1> to vector<1x128xi1>
    %283 = vector.broadcast %282 : vector<1x128xi1> to vector<8x128xi1>
    %284 = vector.broadcast %cst_124 : f32 to vector<8x128xf32>
    %285 = arith.select %283, %278, %284 : vector<8x128xi1>, vector<8x128xf32>
    %c0_125 = arith.constant 0 : index
    %c0_126 = arith.constant 0 : index
    %c0_127 = arith.constant 0 : index
    %286 = vector.load %arg8[%c0_125, %c0_126, %c0_127] : memref<1x8x128xf32, #tpu.memory_space<vmem>>, vector<1x8x128xf32>
    %287 = vector.shape_cast %286 : vector<1x8x128xf32> to vector<8x128xf32>
    %288 = vector.shape_cast %285 : vector<8x128xf32> to vector<1x8x128xf32>
    tpu.vector_store %arg8[%c0_125, %c0_126, %c0_127], %288 {strides = array<i32>} : memref<1x8x128xf32, #tpu.memory_space<vmem>>, vector<1x8x128xf32>,
    return
  }
  func.func @transform_0(%arg0: i32) -> (i32, i32, i32) {
    %c0_i32 = arith.constant 0 : i32
    %c0_i32_0 = arith.constant 0 : i32
    %c0_i32_1 = arith.constant 0 : i32
    return %arg0, %c0_i32, %c0_i32_0 : i32, i32, i32
  }
  func.func @transform_1(%arg0: i32) -> (i32, i32) {
    %c0_i32 = arith.constant 0 : i32
    %c0_i32_0 = arith.constant 0 : i32
    %c0_i32_1 = arith.constant 0 : i32
    return %c0_i32, %c0_i32_0 : i32, i32
  }
  func.func @transform_2(%arg0: i32) -> (i32, i32) {
    %c0_i32 = arith.constant 0 : i32
    %c0_i32_0 = arith.constant 0 : i32
    %c0_i32_1 = arith.constant 0 : i32
    return %c0_i32, %c0_i32_0 : i32, i32
  }
  func.func @transform_3(%arg0: i32) -> (i32, i32) {
    %c0_i32 = arith.constant 0 : i32
    %c0_i32_0 = arith.constant 0 : i32
    %c0_i32_1 = arith.constant 0 : i32
    return %c0_i32, %c0_i32_0 : i32, i32
  }
  func.func @transform_4(%arg0: i32) -> (i32, i32) {
    %c0_i32 = arith.constant 0 : i32
    %c0_i32_0 = arith.constant 0 : i32
    %c0_i32_1 = arith.constant 0 : i32
    return %c0_i32, %c0_i32_0 : i32, i32
  }
  func.func @transform_5(%arg0: i32) -> (i32, i32) {
    %c0_i32 = arith.constant 0 : i32
    %c0_i32_0 = arith.constant 0 : i32
    %c0_i32_1 = arith.constant 0 : i32
    return %c0_i32, %c0_i32_0 : i32, i32
  }
  func.func @transform_6(%arg0: i32) -> (i32, i32) {
    %c0_i32 = arith.constant 0 : i32
    %c0_i32_0 = arith.constant 0 : i32
    %c0_i32_1 = arith.constant 0 : i32
    return %c0_i32, %c0_i32_0 : i32, i32
  }
  func.func @transform_7(%arg0: i32) -> (i32, i32, i32) {
    %c0_i32 = arith.constant 0 : i32
    %c0_i32_0 = arith.constant 0 : i32
    %c0_i32_1 = arith.constant 0 : i32
    return %arg0, %c0_i32, %c0_i32_0 : i32, i32, i32
  }
}

module attributes {stable_mosaic.version = 11 : i64} {
  func.func @_stage_kernel(%arg0: i32, %arg1: memref<1x8x128xf32, #tpu.memory_space<vmem>>, %arg2: memref<144x8xbf16, #tpu.memory_space<vmem>>, %arg3: memref<16x1xf32, #tpu.memory_space<vmem>>, %arg4: memref<144x16xbf16, #tpu.memory_space<vmem>>, %arg5: memref<16x1xf32, #tpu.memory_space<vmem>>, %arg6: memref<16x8xbf16, #tpu.memory_space<vmem>>, %arg7: memref<16x1xf32, #tpu.memory_space<vmem>>, %arg8: memref<1x16x128xf32, #tpu.memory_space<vmem>>) attributes {dimension_semantics = [#tpu.dimension_semantics<parallel>], iteration_bounds = array<i64: 4>, scalar_prefetch = 0 : i64, scratch_operands = 0 : i64, tpu.core_type = #tpu.core_type<tc>, window_params = [{transform_indices = @transform_0, window_bounds = array<i64: 1, 8, 128>}, {pipeline_mode = #tpu.pipeline_mode<synchronous>, transform_indices = @transform_1, window_bounds = array<i64: 144, 8>}, {pipeline_mode = #tpu.pipeline_mode<synchronous>, transform_indices = @transform_2, window_bounds = array<i64: 16, 1>}, {pipeline_mode = #tpu.pipeline_mode<synchronous>, transform_indices = @transform_3, window_bounds = array<i64: 144, 16>}, {pipeline_mode = #tpu.pipeline_mode<synchronous>, transform_indices = @transform_4, window_bounds = array<i64: 16, 1>}, {pipeline_mode = #tpu.pipeline_mode<synchronous>, transform_indices = @transform_5, window_bounds = array<i64: 16, 8>}, {pipeline_mode = #tpu.pipeline_mode<synchronous>, transform_indices = @transform_6, window_bounds = array<i64: 16, 1>}, {transform_indices = @transform_7, window_bounds = array<i64: 1, 16, 128>}]} {
    %c0 = arith.constant 0 : index
    %c0_0 = arith.constant 0 : index
    %c0_1 = arith.constant 0 : index
    %0 = vector.load %arg1[%c0, %c0_0, %c0_1] : memref<1x8x128xf32, #tpu.memory_space<vmem>>, vector<1x8x128xf32>
    %1 = vector.shape_cast %0 : vector<1x8x128xf32> to vector<8x128xf32>
    %2 = tpu.iota {dimensions = array<i32: 1>} : vector<1x128xi32>
    %c3_i32 = arith.constant 3 : i32
    %3 = vector.broadcast %c3_i32 : i32 to vector<1x128xi32>
    %4 = arith.shrsi %2, %3 : vector<1x128xi32>
    %c7_i32 = arith.constant 7 : i32
    %5 = vector.broadcast %c7_i32 : i32 to vector<1x128xi32>
    %6 = arith.andi %2, %5 : vector<1x128xi32>
    %cst = arith.constant 0.000000e+00 : f32
    %7 = vector.broadcast %cst : f32 to vector<16x128xf32>
    %c9_i32 = arith.constant 9 : i32
    %8 = tpu.dynamic_rotate %1 by %c9_i32 dim 1 : vector<8x128xf32>, i32 -> vector<8x128xf32>
    %c1_i32 = arith.constant 1 : i32
    %9 = vector.broadcast %c1_i32 : i32 to vector<1x128xi32>
    %10 = arith.cmpi sge, %4, %9 : vector<1x128xi32>
    %c1_i32_2 = arith.constant 1 : i32
    %11 = vector.broadcast %c1_i32_2 : i32 to vector<1x128xi32>
    %12 = arith.cmpi sge, %6, %11 : vector<1x128xi32>
    %13 = arith.andi %10, %12 : vector<1x128xi1>
    %cst_3 = arith.constant 0.000000e+00 : f32
    %14 = vector.shape_cast %13 : vector<1x128xi1> to vector<1x128xi1>
    %15 = vector.broadcast %14 : vector<1x128xi1> to vector<8x128xi1>
    %16 = vector.broadcast %cst_3 : f32 to vector<8x128xf32>
    %17 = arith.select %15, %8, %16 : vector<8x128xi1>, vector<8x128xf32>
    %c0_4 = arith.constant 0 : index
    %c0_5 = arith.constant 0 : index
    %18 = vector.load %arg2[%c0_4, %c0_5] : memref<144x8xbf16, #tpu.memory_space<vmem>>, vector<16x8xbf16>
    %19 = arith.truncf %17 : vector<8x128xf32> to vector<8x128xbf16>
    %cst_6 = arith.constant dense<0.000000e+00> : vector<16x128xf32>
    %20 = tpu.matmul %18, %19, %cst_6 {dimension_numbers = #tpu.dot_dimension_numbers<[1], [0], [0], [1], [0, 0, 1, 1], [], []>} : vector<16x8xbf16>, vector<8x128xbf16>, vector<16x128xf32> -> vector<16x128xf32>
    %21 = arith.addf %7, %20 : vector<16x128xf32>
    %c8_i32 = arith.constant 8 : i32
    %22 = tpu.dynamic_rotate %1 by %c8_i32 dim 1 : vector<8x128xf32>, i32 -> vector<8x128xf32>
    %c1_i32_7 = arith.constant 1 : i32
    %23 = vector.broadcast %c1_i32_7 : i32 to vector<1x128xi32>
    %24 = arith.cmpi sge, %4, %23 : vector<1x128xi32>
    %cst_8 = arith.constant 0.000000e+00 : f32
    %25 = vector.shape_cast %24 : vector<1x128xi1> to vector<1x128xi1>
    %26 = vector.broadcast %25 : vector<1x128xi1> to vector<8x128xi1>
    %27 = vector.broadcast %cst_8 : f32 to vector<8x128xf32>
    %28 = arith.select %26, %22, %27 : vector<8x128xi1>, vector<8x128xf32>
    %c16 = arith.constant 16 : index
    %c0_9 = arith.constant 0 : index
    %29 = vector.load %arg2[%c16, %c0_9] : memref<144x8xbf16, #tpu.memory_space<vmem>>, vector<16x8xbf16>
    %30 = arith.truncf %28 : vector<8x128xf32> to vector<8x128xbf16>
    %cst_10 = arith.constant dense<0.000000e+00> : vector<16x128xf32>
    %31 = tpu.matmul %29, %30, %cst_10 {dimension_numbers = #tpu.dot_dimension_numbers<[1], [0], [0], [1], [0, 0, 1, 1], [], []>} : vector<16x8xbf16>, vector<8x128xbf16>, vector<16x128xf32> -> vector<16x128xf32>
    %32 = arith.addf %21, %31 : vector<16x128xf32>
    %c7_i32_11 = arith.constant 7 : i32
    %33 = tpu.dynamic_rotate %1 by %c7_i32_11 dim 1 : vector<8x128xf32>, i32 -> vector<8x128xf32>
    %c1_i32_12 = arith.constant 1 : i32
    %34 = vector.broadcast %c1_i32_12 : i32 to vector<1x128xi32>
    %35 = arith.cmpi sge, %4, %34 : vector<1x128xi32>
    %c7_i32_13 = arith.constant 7 : i32
    %36 = vector.broadcast %c7_i32_13 : i32 to vector<1x128xi32>
    %37 = arith.cmpi slt, %6, %36 : vector<1x128xi32>
    %38 = arith.andi %35, %37 : vector<1x128xi1>
    %cst_14 = arith.constant 0.000000e+00 : f32
    %39 = vector.shape_cast %38 : vector<1x128xi1> to vector<1x128xi1>
    %40 = vector.broadcast %39 : vector<1x128xi1> to vector<8x128xi1>
    %41 = vector.broadcast %cst_14 : f32 to vector<8x128xf32>
    %42 = arith.select %40, %33, %41 : vector<8x128xi1>, vector<8x128xf32>
    %c32 = arith.constant 32 : index
    %c0_15 = arith.constant 0 : index
    %43 = vector.load %arg2[%c32, %c0_15] : memref<144x8xbf16, #tpu.memory_space<vmem>>, vector<16x8xbf16>
    %44 = arith.truncf %42 : vector<8x128xf32> to vector<8x128xbf16>
    %cst_16 = arith.constant dense<0.000000e+00> : vector<16x128xf32>
    %45 = tpu.matmul %43, %44, %cst_16 {dimension_numbers = #tpu.dot_dimension_numbers<[1], [0], [0], [1], [0, 0, 1, 1], [], []>} : vector<16x8xbf16>, vector<8x128xbf16>, vector<16x128xf32> -> vector<16x128xf32>
    %46 = arith.addf %32, %45 : vector<16x128xf32>
    %c1_i32_17 = arith.constant 1 : i32
    %47 = tpu.dynamic_rotate %1 by %c1_i32_17 dim 1 : vector<8x128xf32>, i32 -> vector<8x128xf32>
    %c1_i32_18 = arith.constant 1 : i32
    %48 = vector.broadcast %c1_i32_18 : i32 to vector<1x128xi32>
    %49 = arith.cmpi sge, %6, %48 : vector<1x128xi32>
    %cst_19 = arith.constant 0.000000e+00 : f32
    %50 = vector.shape_cast %49 : vector<1x128xi1> to vector<1x128xi1>
    %51 = vector.broadcast %50 : vector<1x128xi1> to vector<8x128xi1>
    %52 = vector.broadcast %cst_19 : f32 to vector<8x128xf32>
    %53 = arith.select %51, %47, %52 : vector<8x128xi1>, vector<8x128xf32>
    %c48 = arith.constant 48 : index
    %c0_20 = arith.constant 0 : index
    %54 = vector.load %arg2[%c48, %c0_20] : memref<144x8xbf16, #tpu.memory_space<vmem>>, vector<16x8xbf16>
    %55 = arith.truncf %53 : vector<8x128xf32> to vector<8x128xbf16>
    %cst_21 = arith.constant dense<0.000000e+00> : vector<16x128xf32>
    %56 = tpu.matmul %54, %55, %cst_21 {dimension_numbers = #tpu.dot_dimension_numbers<[1], [0], [0], [1], [0, 0, 1, 1], [], []>} : vector<16x8xbf16>, vector<8x128xbf16>, vector<16x128xf32> -> vector<16x128xf32>
    %57 = arith.addf %46, %56 : vector<16x128xf32>
    %c64 = arith.constant 64 : index
    %c0_22 = arith.constant 0 : index
    %58 = vector.load %arg2[%c64, %c0_22] : memref<144x8xbf16, #tpu.memory_space<vmem>>, vector<16x8xbf16>
    %59 = arith.truncf %1 : vector<8x128xf32> to vector<8x128xbf16>
    %cst_23 = arith.constant dense<0.000000e+00> : vector<16x128xf32>
    %60 = tpu.matmul %58, %59, %cst_23 {dimension_numbers = #tpu.dot_dimension_numbers<[1], [0], [0], [1], [0, 0, 1, 1], [], []>} : vector<16x8xbf16>, vector<8x128xbf16>, vector<16x128xf32> -> vector<16x128xf32>
    %61 = arith.addf %57, %60 : vector<16x128xf32>
    %c127_i32 = arith.constant 127 : i32
    %62 = tpu.dynamic_rotate %1 by %c127_i32 dim 1 : vector<8x128xf32>, i32 -> vector<8x128xf32>
    %c7_i32_24 = arith.constant 7 : i32
    %63 = vector.broadcast %c7_i32_24 : i32 to vector<1x128xi32>
    %64 = arith.cmpi slt, %6, %63 : vector<1x128xi32>
    %cst_25 = arith.constant 0.000000e+00 : f32
    %65 = vector.shape_cast %64 : vector<1x128xi1> to vector<1x128xi1>
    %66 = vector.broadcast %65 : vector<1x128xi1> to vector<8x128xi1>
    %67 = vector.broadcast %cst_25 : f32 to vector<8x128xf32>
    %68 = arith.select %66, %62, %67 : vector<8x128xi1>, vector<8x128xf32>
    %c80 = arith.constant 80 : index
    %c0_26 = arith.constant 0 : index
    %69 = vector.load %arg2[%c80, %c0_26] : memref<144x8xbf16, #tpu.memory_space<vmem>>, vector<16x8xbf16>
    %70 = arith.truncf %68 : vector<8x128xf32> to vector<8x128xbf16>
    %cst_27 = arith.constant dense<0.000000e+00> : vector<16x128xf32>
    %71 = tpu.matmul %69, %70, %cst_27 {dimension_numbers = #tpu.dot_dimension_numbers<[1], [0], [0], [1], [0, 0, 1, 1], [], []>} : vector<16x8xbf16>, vector<8x128xbf16>, vector<16x128xf32> -> vector<16x128xf32>
    %72 = arith.addf %61, %71 : vector<16x128xf32>
    %c121_i32 = arith.constant 121 : i32
    %73 = tpu.dynamic_rotate %1 by %c121_i32 dim 1 : vector<8x128xf32>, i32 -> vector<8x128xf32>
    %c7_i32_28 = arith.constant 7 : i32
    %74 = vector.broadcast %c7_i32_28 : i32 to vector<1x128xi32>
    %75 = arith.cmpi slt, %4, %74 : vector<1x128xi32>
    %c1_i32_29 = arith.constant 1 : i32
    %76 = vector.broadcast %c1_i32_29 : i32 to vector<1x128xi32>
    %77 = arith.cmpi sge, %6, %76 : vector<1x128xi32>
    %78 = arith.andi %75, %77 : vector<1x128xi1>
    %cst_30 = arith.constant 0.000000e+00 : f32
    %79 = vector.shape_cast %78 : vector<1x128xi1> to vector<1x128xi1>
    %80 = vector.broadcast %79 : vector<1x128xi1> to vector<8x128xi1>
    %81 = vector.broadcast %cst_30 : f32 to vector<8x128xf32>
    %82 = arith.select %80, %73, %81 : vector<8x128xi1>, vector<8x128xf32>
    %c96 = arith.constant 96 : index
    %c0_31 = arith.constant 0 : index
    %83 = vector.load %arg2[%c96, %c0_31] : memref<144x8xbf16, #tpu.memory_space<vmem>>, vector<16x8xbf16>
    %84 = arith.truncf %82 : vector<8x128xf32> to vector<8x128xbf16>
    %cst_32 = arith.constant dense<0.000000e+00> : vector<16x128xf32>
    %85 = tpu.matmul %83, %84, %cst_32 {dimension_numbers = #tpu.dot_dimension_numbers<[1], [0], [0], [1], [0, 0, 1, 1], [], []>} : vector<16x8xbf16>, vector<8x128xbf16>, vector<16x128xf32> -> vector<16x128xf32>
    %86 = arith.addf %72, %85 : vector<16x128xf32>
    %c120_i32 = arith.constant 120 : i32
    %87 = tpu.dynamic_rotate %1 by %c120_i32 dim 1 : vector<8x128xf32>, i32 -> vector<8x128xf32>
    %c7_i32_33 = arith.constant 7 : i32
    %88 = vector.broadcast %c7_i32_33 : i32 to vector<1x128xi32>
    %89 = arith.cmpi slt, %4, %88 : vector<1x128xi32>
    %cst_34 = arith.constant 0.000000e+00 : f32
    %90 = vector.shape_cast %89 : vector<1x128xi1> to vector<1x128xi1>
    %91 = vector.broadcast %90 : vector<1x128xi1> to vector<8x128xi1>
    %92 = vector.broadcast %cst_34 : f32 to vector<8x128xf32>
    %93 = arith.select %91, %87, %92 : vector<8x128xi1>, vector<8x128xf32>
    %c112 = arith.constant 112 : index
    %c0_35 = arith.constant 0 : index
    %94 = vector.load %arg2[%c112, %c0_35] : memref<144x8xbf16, #tpu.memory_space<vmem>>, vector<16x8xbf16>
    %95 = arith.truncf %93 : vector<8x128xf32> to vector<8x128xbf16>
    %cst_36 = arith.constant dense<0.000000e+00> : vector<16x128xf32>
    %96 = tpu.matmul %94, %95, %cst_36 {dimension_numbers = #tpu.dot_dimension_numbers<[1], [0], [0], [1], [0, 0, 1, 1], [], []>} : vector<16x8xbf16>, vector<8x128xbf16>, vector<16x128xf32> -> vector<16x128xf32>
    %97 = arith.addf %86, %96 : vector<16x128xf32>
    %c119_i32 = arith.constant 119 : i32
    %98 = tpu.dynamic_rotate %1 by %c119_i32 dim 1 : vector<8x128xf32>, i32 -> vector<8x128xf32>
    %c7_i32_37 = arith.constant 7 : i32
    %99 = vector.broadcast %c7_i32_37 : i32 to vector<1x128xi32>
    %100 = arith.cmpi slt, %4, %99 : vector<1x128xi32>
    %c7_i32_38 = arith.constant 7 : i32
    %101 = vector.broadcast %c7_i32_38 : i32 to vector<1x128xi32>
    %102 = arith.cmpi slt, %6, %101 : vector<1x128xi32>
    %103 = arith.andi %100, %102 : vector<1x128xi1>
    %cst_39 = arith.constant 0.000000e+00 : f32
    %104 = vector.shape_cast %103 : vector<1x128xi1> to vector<1x128xi1>
    %105 = vector.broadcast %104 : vector<1x128xi1> to vector<8x128xi1>
    %106 = vector.broadcast %cst_39 : f32 to vector<8x128xf32>
    %107 = arith.select %105, %98, %106 : vector<8x128xi1>, vector<8x128xf32>
    %c128 = arith.constant 128 : index
    %c0_40 = arith.constant 0 : index
    %108 = vector.load %arg2[%c128, %c0_40] : memref<144x8xbf16, #tpu.memory_space<vmem>>, vector<16x8xbf16>
    %109 = arith.truncf %107 : vector<8x128xf32> to vector<8x128xbf16>
    %cst_41 = arith.constant dense<0.000000e+00> : vector<16x128xf32>
    %110 = tpu.matmul %108, %109, %cst_41 {dimension_numbers = #tpu.dot_dimension_numbers<[1], [0], [0], [1], [0, 0, 1, 1], [], []>} : vector<16x8xbf16>, vector<8x128xbf16>, vector<16x128xf32> -> vector<16x128xf32>
    %111 = arith.addf %97, %110 : vector<16x128xf32>
    %c0_42 = arith.constant 0 : index
    %c0_43 = arith.constant 0 : index
    %112 = vector.load %arg3[%c0_42, %c0_43] : memref<16x1xf32, #tpu.memory_space<vmem>>, vector<16x1xf32>
    %113 = vector.broadcast %112 : vector<16x1xf32> to vector<16x128xf32>
    %114 = arith.addf %111, %113 : vector<16x128xf32>
    %cst_44 = arith.constant 0.000000e+00 : f32
    %115 = vector.broadcast %cst_44 : f32 to vector<16x128xf32>
    %116 = arith.cmpf ogt, %114, %115 : vector<16x128xf32>
    %cst_45 = arith.constant 0.000000e+00 : f32
    %117 = vector.broadcast %cst_45 : f32 to vector<16x128xf32>
    %118 = arith.minimumf %114, %117 : vector<16x128xf32>
    %119 = math.exp %118 : vector<16x128xf32>
    %cst_46 = arith.constant 1.000000e+00 : f32
    %120 = vector.broadcast %cst_46 : f32 to vector<16x128xf32>
    %121 = arith.subf %119, %120 : vector<16x128xf32>
    %cst_47 = arith.constant 1.67326319 : f32
    %122 = vector.broadcast %cst_47 : f32 to vector<16x128xf32>
    %123 = arith.mulf %122, %121 : vector<16x128xf32>
    %124 = arith.select %116, %114, %123 : vector<16x128xi1>, vector<16x128xf32>
    %cst_48 = arith.constant 1.05070102 : f32
    %125 = vector.broadcast %cst_48 : f32 to vector<16x128xf32>
    %126 = arith.mulf %125, %124 : vector<16x128xf32>
    %cst_49 = arith.constant 0.000000e+00 : f32
    %127 = vector.broadcast %cst_49 : f32 to vector<16x128xf32>
    %c9_i32_50 = arith.constant 9 : i32
    %128 = tpu.dynamic_rotate %126 by %c9_i32_50 dim 1 : vector<16x128xf32>, i32 -> vector<16x128xf32>
    %c1_i32_51 = arith.constant 1 : i32
    %129 = vector.broadcast %c1_i32_51 : i32 to vector<1x128xi32>
    %130 = arith.cmpi sge, %4, %129 : vector<1x128xi32>
    %c1_i32_52 = arith.constant 1 : i32
    %131 = vector.broadcast %c1_i32_52 : i32 to vector<1x128xi32>
    %132 = arith.cmpi sge, %6, %131 : vector<1x128xi32>
    %133 = arith.andi %130, %132 : vector<1x128xi1>
    %cst_53 = arith.constant 0.000000e+00 : f32
    %134 = vector.shape_cast %133 : vector<1x128xi1> to vector<1x128xi1>
    %135 = vector.broadcast %134 : vector<1x128xi1> to vector<16x128xi1>
    %136 = vector.broadcast %cst_53 : f32 to vector<16x128xf32>
    %137 = arith.select %135, %128, %136 : vector<16x128xi1>, vector<16x128xf32>
    %c0_54 = arith.constant 0 : index
    %c0_55 = arith.constant 0 : index
    %138 = vector.load %arg4[%c0_54, %c0_55] : memref<144x16xbf16, #tpu.memory_space<vmem>>, vector<16x16xbf16>
    %139 = arith.truncf %137 : vector<16x128xf32> to vector<16x128xbf16>
    %cst_56 = arith.constant dense<0.000000e+00> : vector<16x128xf32>
    %140 = tpu.matmul %138, %139, %cst_56 {dimension_numbers = #tpu.dot_dimension_numbers<[1], [0], [0], [1], [0, 0, 1, 1], [], []>} : vector<16x16xbf16>, vector<16x128xbf16>, vector<16x128xf32> -> vector<16x128xf32>
    %141 = arith.addf %127, %140 : vector<16x128xf32>
    %c8_i32_57 = arith.constant 8 : i32
    %142 = tpu.dynamic_rotate %126 by %c8_i32_57 dim 1 : vector<16x128xf32>, i32 -> vector<16x128xf32>
    %c1_i32_58 = arith.constant 1 : i32
    %143 = vector.broadcast %c1_i32_58 : i32 to vector<1x128xi32>
    %144 = arith.cmpi sge, %4, %143 : vector<1x128xi32>
    %cst_59 = arith.constant 0.000000e+00 : f32
    %145 = vector.shape_cast %144 : vector<1x128xi1> to vector<1x128xi1>
    %146 = vector.broadcast %145 : vector<1x128xi1> to vector<16x128xi1>
    %147 = vector.broadcast %cst_59 : f32 to vector<16x128xf32>
    %148 = arith.select %146, %142, %147 : vector<16x128xi1>, vector<16x128xf32>
    %c16_60 = arith.constant 16 : index
    %c0_61 = arith.constant 0 : index
    %149 = vector.load %arg4[%c16_60, %c0_61] : memref<144x16xbf16, #tpu.memory_space<vmem>>, vector<16x16xbf16>
    %150 = arith.truncf %148 : vector<16x128xf32> to vector<16x128xbf16>
    %cst_62 = arith.constant dense<0.000000e+00> : vector<16x128xf32>
    %151 = tpu.matmul %149, %150, %cst_62 {dimension_numbers = #tpu.dot_dimension_numbers<[1], [0], [0], [1], [0, 0, 1, 1], [], []>} : vector<16x16xbf16>, vector<16x128xbf16>, vector<16x128xf32> -> vector<16x128xf32>
    %152 = arith.addf %141, %151 : vector<16x128xf32>
    %c7_i32_63 = arith.constant 7 : i32
    %153 = tpu.dynamic_rotate %126 by %c7_i32_63 dim 1 : vector<16x128xf32>, i32 -> vector<16x128xf32>
    %c1_i32_64 = arith.constant 1 : i32
    %154 = vector.broadcast %c1_i32_64 : i32 to vector<1x128xi32>
    %155 = arith.cmpi sge, %4, %154 : vector<1x128xi32>
    %c7_i32_65 = arith.constant 7 : i32
    %156 = vector.broadcast %c7_i32_65 : i32 to vector<1x128xi32>
    %157 = arith.cmpi slt, %6, %156 : vector<1x128xi32>
    %158 = arith.andi %155, %157 : vector<1x128xi1>
    %cst_66 = arith.constant 0.000000e+00 : f32
    %159 = vector.shape_cast %158 : vector<1x128xi1> to vector<1x128xi1>
    %160 = vector.broadcast %159 : vector<1x128xi1> to vector<16x128xi1>
    %161 = vector.broadcast %cst_66 : f32 to vector<16x128xf32>
    %162 = arith.select %160, %153, %161 : vector<16x128xi1>, vector<16x128xf32>
    %c32_67 = arith.constant 32 : index
    %c0_68 = arith.constant 0 : index
    %163 = vector.load %arg4[%c32_67, %c0_68] : memref<144x16xbf16, #tpu.memory_space<vmem>>, vector<16x16xbf16>
    %164 = arith.truncf %162 : vector<16x128xf32> to vector<16x128xbf16>
    %cst_69 = arith.constant dense<0.000000e+00> : vector<16x128xf32>
    %165 = tpu.matmul %163, %164, %cst_69 {dimension_numbers = #tpu.dot_dimension_numbers<[1], [0], [0], [1], [0, 0, 1, 1], [], []>} : vector<16x16xbf16>, vector<16x128xbf16>, vector<16x128xf32> -> vector<16x128xf32>
    %166 = arith.addf %152, %165 : vector<16x128xf32>
    %c1_i32_70 = arith.constant 1 : i32
    %167 = tpu.dynamic_rotate %126 by %c1_i32_70 dim 1 : vector<16x128xf32>, i32 -> vector<16x128xf32>
    %c1_i32_71 = arith.constant 1 : i32
    %168 = vector.broadcast %c1_i32_71 : i32 to vector<1x128xi32>
    %169 = arith.cmpi sge, %6, %168 : vector<1x128xi32>
    %cst_72 = arith.constant 0.000000e+00 : f32
    %170 = vector.shape_cast %169 : vector<1x128xi1> to vector<1x128xi1>
    %171 = vector.broadcast %170 : vector<1x128xi1> to vector<16x128xi1>
    %172 = vector.broadcast %cst_72 : f32 to vector<16x128xf32>
    %173 = arith.select %171, %167, %172 : vector<16x128xi1>, vector<16x128xf32>
    %c48_73 = arith.constant 48 : index
    %c0_74 = arith.constant 0 : index
    %174 = vector.load %arg4[%c48_73, %c0_74] : memref<144x16xbf16, #tpu.memory_space<vmem>>, vector<16x16xbf16>
    %175 = arith.truncf %173 : vector<16x128xf32> to vector<16x128xbf16>
    %cst_75 = arith.constant dense<0.000000e+00> : vector<16x128xf32>
    %176 = tpu.matmul %174, %175, %cst_75 {dimension_numbers = #tpu.dot_dimension_numbers<[1], [0], [0], [1], [0, 0, 1, 1], [], []>} : vector<16x16xbf16>, vector<16x128xbf16>, vector<16x128xf32> -> vector<16x128xf32>
    %177 = arith.addf %166, %176 : vector<16x128xf32>
    %c64_76 = arith.constant 64 : index
    %c0_77 = arith.constant 0 : index
    %178 = vector.load %arg4[%c64_76, %c0_77] : memref<144x16xbf16, #tpu.memory_space<vmem>>, vector<16x16xbf16>
    %179 = arith.truncf %126 : vector<16x128xf32> to vector<16x128xbf16>
    %cst_78 = arith.constant dense<0.000000e+00> : vector<16x128xf32>
    %180 = tpu.matmul %178, %179, %cst_78 {dimension_numbers = #tpu.dot_dimension_numbers<[1], [0], [0], [1], [0, 0, 1, 1], [], []>} : vector<16x16xbf16>, vector<16x128xbf16>, vector<16x128xf32> -> vector<16x128xf32>
    %181 = arith.addf %177, %180 : vector<16x128xf32>
    %c127_i32_79 = arith.constant 127 : i32
    %182 = tpu.dynamic_rotate %126 by %c127_i32_79 dim 1 : vector<16x128xf32>, i32 -> vector<16x128xf32>
    %c7_i32_80 = arith.constant 7 : i32
    %183 = vector.broadcast %c7_i32_80 : i32 to vector<1x128xi32>
    %184 = arith.cmpi slt, %6, %183 : vector<1x128xi32>
    %cst_81 = arith.constant 0.000000e+00 : f32
    %185 = vector.shape_cast %184 : vector<1x128xi1> to vector<1x128xi1>
    %186 = vector.broadcast %185 : vector<1x128xi1> to vector<16x128xi1>
    %187 = vector.broadcast %cst_81 : f32 to vector<16x128xf32>
    %188 = arith.select %186, %182, %187 : vector<16x128xi1>, vector<16x128xf32>
    %c80_82 = arith.constant 80 : index
    %c0_83 = arith.constant 0 : index
    %189 = vector.load %arg4[%c80_82, %c0_83] : memref<144x16xbf16, #tpu.memory_space<vmem>>, vector<16x16xbf16>
    %190 = arith.truncf %188 : vector<16x128xf32> to vector<16x128xbf16>
    %cst_84 = arith.constant dense<0.000000e+00> : vector<16x128xf32>
    %191 = tpu.matmul %189, %190, %cst_84 {dimension_numbers = #tpu.dot_dimension_numbers<[1], [0], [0], [1], [0, 0, 1, 1], [], []>} : vector<16x16xbf16>, vector<16x128xbf16>, vector<16x128xf32> -> vector<16x128xf32>
    %192 = arith.addf %181, %191 : vector<16x128xf32>
    %c121_i32_85 = arith.constant 121 : i32
    %193 = tpu.dynamic_rotate %126 by %c121_i32_85 dim 1 : vector<16x128xf32>, i32 -> vector<16x128xf32>
    %c7_i32_86 = arith.constant 7 : i32
    %194 = vector.broadcast %c7_i32_86 : i32 to vector<1x128xi32>
    %195 = arith.cmpi slt, %4, %194 : vector<1x128xi32>
    %c1_i32_87 = arith.constant 1 : i32
    %196 = vector.broadcast %c1_i32_87 : i32 to vector<1x128xi32>
    %197 = arith.cmpi sge, %6, %196 : vector<1x128xi32>
    %198 = arith.andi %195, %197 : vector<1x128xi1>
    %cst_88 = arith.constant 0.000000e+00 : f32
    %199 = vector.shape_cast %198 : vector<1x128xi1> to vector<1x128xi1>
    %200 = vector.broadcast %199 : vector<1x128xi1> to vector<16x128xi1>
    %201 = vector.broadcast %cst_88 : f32 to vector<16x128xf32>
    %202 = arith.select %200, %193, %201 : vector<16x128xi1>, vector<16x128xf32>
    %c96_89 = arith.constant 96 : index
    %c0_90 = arith.constant 0 : index
    %203 = vector.load %arg4[%c96_89, %c0_90] : memref<144x16xbf16, #tpu.memory_space<vmem>>, vector<16x16xbf16>
    %204 = arith.truncf %202 : vector<16x128xf32> to vector<16x128xbf16>
    %cst_91 = arith.constant dense<0.000000e+00> : vector<16x128xf32>
    %205 = tpu.matmul %203, %204, %cst_91 {dimension_numbers = #tpu.dot_dimension_numbers<[1], [0], [0], [1], [0, 0, 1, 1], [], []>} : vector<16x16xbf16>, vector<16x128xbf16>, vector<16x128xf32> -> vector<16x128xf32>
    %206 = arith.addf %192, %205 : vector<16x128xf32>
    %c120_i32_92 = arith.constant 120 : i32
    %207 = tpu.dynamic_rotate %126 by %c120_i32_92 dim 1 : vector<16x128xf32>, i32 -> vector<16x128xf32>
    %c7_i32_93 = arith.constant 7 : i32
    %208 = vector.broadcast %c7_i32_93 : i32 to vector<1x128xi32>
    %209 = arith.cmpi slt, %4, %208 : vector<1x128xi32>
    %cst_94 = arith.constant 0.000000e+00 : f32
    %210 = vector.shape_cast %209 : vector<1x128xi1> to vector<1x128xi1>
    %211 = vector.broadcast %210 : vector<1x128xi1> to vector<16x128xi1>
    %212 = vector.broadcast %cst_94 : f32 to vector<16x128xf32>
    %213 = arith.select %211, %207, %212 : vector<16x128xi1>, vector<16x128xf32>
    %c112_95 = arith.constant 112 : index
    %c0_96 = arith.constant 0 : index
    %214 = vector.load %arg4[%c112_95, %c0_96] : memref<144x16xbf16, #tpu.memory_space<vmem>>, vector<16x16xbf16>
    %215 = arith.truncf %213 : vector<16x128xf32> to vector<16x128xbf16>
    %cst_97 = arith.constant dense<0.000000e+00> : vector<16x128xf32>
    %216 = tpu.matmul %214, %215, %cst_97 {dimension_numbers = #tpu.dot_dimension_numbers<[1], [0], [0], [1], [0, 0, 1, 1], [], []>} : vector<16x16xbf16>, vector<16x128xbf16>, vector<16x128xf32> -> vector<16x128xf32>
    %217 = arith.addf %206, %216 : vector<16x128xf32>
    %c119_i32_98 = arith.constant 119 : i32
    %218 = tpu.dynamic_rotate %126 by %c119_i32_98 dim 1 : vector<16x128xf32>, i32 -> vector<16x128xf32>
    %c7_i32_99 = arith.constant 7 : i32
    %219 = vector.broadcast %c7_i32_99 : i32 to vector<1x128xi32>
    %220 = arith.cmpi slt, %4, %219 : vector<1x128xi32>
    %c7_i32_100 = arith.constant 7 : i32
    %221 = vector.broadcast %c7_i32_100 : i32 to vector<1x128xi32>
    %222 = arith.cmpi slt, %6, %221 : vector<1x128xi32>
    %223 = arith.andi %220, %222 : vector<1x128xi1>
    %cst_101 = arith.constant 0.000000e+00 : f32
    %224 = vector.shape_cast %223 : vector<1x128xi1> to vector<1x128xi1>
    %225 = vector.broadcast %224 : vector<1x128xi1> to vector<16x128xi1>
    %226 = vector.broadcast %cst_101 : f32 to vector<16x128xf32>
    %227 = arith.select %225, %218, %226 : vector<16x128xi1>, vector<16x128xf32>
    %c128_102 = arith.constant 128 : index
    %c0_103 = arith.constant 0 : index
    %228 = vector.load %arg4[%c128_102, %c0_103] : memref<144x16xbf16, #tpu.memory_space<vmem>>, vector<16x16xbf16>
    %229 = arith.truncf %227 : vector<16x128xf32> to vector<16x128xbf16>
    %cst_104 = arith.constant dense<0.000000e+00> : vector<16x128xf32>
    %230 = tpu.matmul %228, %229, %cst_104 {dimension_numbers = #tpu.dot_dimension_numbers<[1], [0], [0], [1], [0, 0, 1, 1], [], []>} : vector<16x16xbf16>, vector<16x128xbf16>, vector<16x128xf32> -> vector<16x128xf32>
    %231 = arith.addf %217, %230 : vector<16x128xf32>
    %c0_105 = arith.constant 0 : index
    %c0_106 = arith.constant 0 : index
    %232 = vector.load %arg5[%c0_105, %c0_106] : memref<16x1xf32, #tpu.memory_space<vmem>>, vector<16x1xf32>
    %233 = vector.broadcast %232 : vector<16x1xf32> to vector<16x128xf32>
    %234 = arith.addf %231, %233 : vector<16x128xf32>
    %c0_107 = arith.constant 0 : index
    %c0_108 = arith.constant 0 : index
    %235 = vector.load %arg6[%c0_107, %c0_108] : memref<16x8xbf16, #tpu.memory_space<vmem>>, vector<16x8xbf16>
    %236 = arith.truncf %1 : vector<8x128xf32> to vector<8x128xbf16>
    %cst_109 = arith.constant dense<0.000000e+00> : vector<16x128xf32>
    %237 = tpu.matmul %235, %236, %cst_109 {dimension_numbers = #tpu.dot_dimension_numbers<[1], [0], [0], [1], [0, 0, 1, 1], [], []>} : vector<16x8xbf16>, vector<8x128xbf16>, vector<16x128xf32> -> vector<16x128xf32>
    %238 = arith.addf %234, %237 : vector<16x128xf32>
    %c0_110 = arith.constant 0 : index
    %c0_111 = arith.constant 0 : index
    %239 = vector.load %arg7[%c0_110, %c0_111] : memref<16x1xf32, #tpu.memory_space<vmem>>, vector<16x1xf32>
    %240 = vector.broadcast %239 : vector<16x1xf32> to vector<16x128xf32>
    %241 = arith.addf %238, %240 : vector<16x128xf32>
    %242 = tpu.iota {dimensions = array<i32: 0>} : vector<128x1xi32>
    %243 = tpu.iota {dimensions = array<i32: 1>} : vector<1x128xi32>
    %c3_i32_112 = arith.constant 3 : i32
    %244 = vector.broadcast %c3_i32_112 : i32 to vector<128x1xi32>
    %245 = arith.shrsi %242, %244 : vector<128x1xi32>
    %c1_i32_113 = arith.constant 1 : i32
    %246 = vector.broadcast %c1_i32_113 : i32 to vector<128x1xi32>
    %247 = arith.shrsi %245, %246 : vector<128x1xi32>
    %c2_i32 = arith.constant 2 : i32
    %248 = vector.broadcast %c2_i32 : i32 to vector<1x128xi32>
    %249 = arith.shrsi %243, %248 : vector<1x128xi32>
    %250 = vector.broadcast %247 : vector<128x1xi32> to vector<128x128xi32>
    %251 = vector.broadcast %249 : vector<1x128xi32> to vector<128x128xi32>
    %252 = arith.cmpi eq, %250, %251 : vector<128x128xi32>
    %c7_i32_114 = arith.constant 7 : i32
    %253 = vector.broadcast %c7_i32_114 : i32 to vector<128x1xi32>
    %254 = arith.andi %242, %253 : vector<128x1xi32>
    %c1_i32_115 = arith.constant 1 : i32
    %255 = vector.broadcast %c1_i32_115 : i32 to vector<128x1xi32>
    %256 = arith.shrsi %254, %255 : vector<128x1xi32>
    %c3_i32_116 = arith.constant 3 : i32
    %257 = vector.broadcast %c3_i32_116 : i32 to vector<1x128xi32>
    %258 = arith.andi %243, %257 : vector<1x128xi32>
    %259 = vector.broadcast %256 : vector<128x1xi32> to vector<128x128xi32>
    %260 = vector.broadcast %258 : vector<1x128xi32> to vector<128x128xi32>
    %261 = arith.cmpi eq, %259, %260 : vector<128x128xi32>
    %262 = arith.andi %252, %261 : vector<128x128xi1>
    %cst_117 = arith.constant 2.500000e-01 : f32
    %cst_118 = arith.constant 0.000000e+00 : f32
    %263 = vector.broadcast %cst_117 : f32 to vector<128x128xf32>
    %264 = vector.broadcast %cst_118 : f32 to vector<128x128xf32>
    %265 = arith.select %262, %263, %264 : vector<128x128xi1>, vector<128x128xf32>
    %cst_119 = arith.constant dense<0.000000e+00> : vector<16x128xf32>
    %266 = tpu.matmul %241, %265, %cst_119 {dimension_numbers = #tpu.dot_dimension_numbers<[1], [0], [0], [1], [0, 0, 1, 1], [], []>} : vector<16x128xf32>, vector<128x128xf32>, vector<16x128xf32> -> vector<16x128xf32>
    %267 = tpu.iota {dimensions = array<i32: 1>} : vector<1x128xi32>
    %c16_i32 = arith.constant 16 : i32
    %268 = vector.broadcast %c16_i32 : i32 to vector<1x128xi32>
    %269 = arith.cmpi slt, %267, %268 : vector<1x128xi32>
    %cst_120 = arith.constant 0.000000e+00 : f32
    %270 = vector.shape_cast %269 : vector<1x128xi1> to vector<1x128xi1>
    %271 = vector.broadcast %270 : vector<1x128xi1> to vector<16x128xi1>
    %272 = vector.broadcast %cst_120 : f32 to vector<16x128xf32>
    %273 = arith.select %271, %266, %272 : vector<16x128xi1>, vector<16x128xf32>
    %c0_121 = arith.constant 0 : index
    %c0_122 = arith.constant 0 : index
    %c0_123 = arith.constant 0 : index
    %274 = vector.load %arg8[%c0_121, %c0_122, %c0_123] : memref<1x16x128xf32, #tpu.memory_space<vmem>>, vector<1x16x128xf32>
    %275 = vector.shape_cast %274 : vector<1x16x128xf32> to vector<16x128xf32>
    %276 = vector.shape_cast %273 : vector<16x128xf32> to vector<1x16x128xf32>
    tpu.vector_store %arg8[%c0_121, %c0_122, %c0_123], %276 {strides = array<i32>} : memref<1x16x128xf32, #tpu.memory_space<vmem>>, vector<1x16x128xf32>,
    return
  }
  func.func @transform_0(%arg0: i32) -> (i32, i32, i32) {
    %c0_i32 = arith.constant 0 : i32
    %c0_i32_0 = arith.constant 0 : i32
    %c0_i32_1 = arith.constant 0 : i32
    return %arg0, %c0_i32, %c0_i32_0 : i32, i32, i32
  }
  func.func @transform_1(%arg0: i32) -> (i32, i32) {
    %c0_i32 = arith.constant 0 : i32
    %c0_i32_0 = arith.constant 0 : i32
    %c0_i32_1 = arith.constant 0 : i32
    return %c0_i32, %c0_i32_0 : i32, i32
  }
  func.func @transform_2(%arg0: i32) -> (i32, i32) {
    %c0_i32 = arith.constant 0 : i32
    %c0_i32_0 = arith.constant 0 : i32
    %c0_i32_1 = arith.constant 0 : i32
    return %c0_i32, %c0_i32_0 : i32, i32
  }
  func.func @transform_3(%arg0: i32) -> (i32, i32) {
    %c0_i32 = arith.constant 0 : i32
    %c0_i32_0 = arith.constant 0 : i32
    %c0_i32_1 = arith.constant 0 : i32
    return %c0_i32, %c0_i32_0 : i32, i32
  }
  func.func @transform_4(%arg0: i32) -> (i32, i32) {
    %c0_i32 = arith.constant 0 : i32
    %c0_i32_0 = arith.constant 0 : i32
    %c0_i32_1 = arith.constant 0 : i32
    return %c0_i32, %c0_i32_0 : i32, i32
  }
  func.func @transform_5(%arg0: i32) -> (i32, i32) {
    %c0_i32 = arith.constant 0 : i32
    %c0_i32_0 = arith.constant 0 : i32
    %c0_i32_1 = arith.constant 0 : i32
    return %c0_i32, %c0_i32_0 : i32, i32
  }
  func.func @transform_6(%arg0: i32) -> (i32, i32) {
    %c0_i32 = arith.constant 0 : i32
    %c0_i32_0 = arith.constant 0 : i32
    %c0_i32_1 = arith.constant 0 : i32
    return %c0_i32, %c0_i32_0 : i32, i32
  }
  func.func @transform_7(%arg0: i32) -> (i32, i32, i32) {
    %c0_i32 = arith.constant 0 : i32
    %c0_i32_0 = arith.constant 0 : i32
    %c0_i32_1 = arith.constant 0 : i32
    return %arg0, %c0_i32, %c0_i32_0 : i32, i32, i32
  }
}

module attributes {stable_mosaic.version = 11 : i64} {
  func.func @_stage_kernel(%arg0: i32, %arg1: memref<1x16x128xf32, #tpu.memory_space<vmem>>, %arg2: memref<288x16xbf16, #tpu.memory_space<vmem>>, %arg3: memref<32x1xf32, #tpu.memory_space<vmem>>, %arg4: memref<288x32xbf16, #tpu.memory_space<vmem>>, %arg5: memref<32x1xf32, #tpu.memory_space<vmem>>, %arg6: memref<32x16xbf16, #tpu.memory_space<vmem>>, %arg7: memref<32x1xf32, #tpu.memory_space<vmem>>, %arg8: memref<1x32x128xf32, #tpu.memory_space<vmem>>) attributes {dimension_semantics = [#tpu.dimension_semantics<parallel>], iteration_bounds = array<i64: 4>, scalar_prefetch = 0 : i64, scratch_operands = 0 : i64, tpu.core_type = #tpu.core_type<tc>, window_params = [{transform_indices = @transform_0, window_bounds = array<i64: 1, 16, 128>}, {pipeline_mode = #tpu.pipeline_mode<synchronous>, transform_indices = @transform_1, window_bounds = array<i64: 288, 16>}, {pipeline_mode = #tpu.pipeline_mode<synchronous>, transform_indices = @transform_2, window_bounds = array<i64: 32, 1>}, {pipeline_mode = #tpu.pipeline_mode<synchronous>, transform_indices = @transform_3, window_bounds = array<i64: 288, 32>}, {pipeline_mode = #tpu.pipeline_mode<synchronous>, transform_indices = @transform_4, window_bounds = array<i64: 32, 1>}, {pipeline_mode = #tpu.pipeline_mode<synchronous>, transform_indices = @transform_5, window_bounds = array<i64: 32, 16>}, {pipeline_mode = #tpu.pipeline_mode<synchronous>, transform_indices = @transform_6, window_bounds = array<i64: 32, 1>}, {transform_indices = @transform_7, window_bounds = array<i64: 1, 32, 128>}]} {
    %c0 = arith.constant 0 : index
    %c0_0 = arith.constant 0 : index
    %c0_1 = arith.constant 0 : index
    %0 = vector.load %arg1[%c0, %c0_0, %c0_1] : memref<1x16x128xf32, #tpu.memory_space<vmem>>, vector<1x16x128xf32>
    %1 = vector.shape_cast %0 : vector<1x16x128xf32> to vector<16x128xf32>
    %2 = tpu.iota {dimensions = array<i32: 1>} : vector<1x128xi32>
    %c2_i32 = arith.constant 2 : i32
    %3 = vector.broadcast %c2_i32 : i32 to vector<1x128xi32>
    %4 = arith.shrsi %2, %3 : vector<1x128xi32>
    %c3_i32 = arith.constant 3 : i32
    %5 = vector.broadcast %c3_i32 : i32 to vector<1x128xi32>
    %6 = arith.andi %2, %5 : vector<1x128xi32>
    %cst = arith.constant 0.000000e+00 : f32
    %7 = vector.broadcast %cst : f32 to vector<32x128xf32>
    %c5_i32 = arith.constant 5 : i32
    %8 = tpu.dynamic_rotate %1 by %c5_i32 dim 1 : vector<16x128xf32>, i32 -> vector<16x128xf32>
    %c1_i32 = arith.constant 1 : i32
    %9 = vector.broadcast %c1_i32 : i32 to vector<1x128xi32>
    %10 = arith.cmpi sge, %4, %9 : vector<1x128xi32>
    %c1_i32_2 = arith.constant 1 : i32
    %11 = vector.broadcast %c1_i32_2 : i32 to vector<1x128xi32>
    %12 = arith.cmpi sge, %6, %11 : vector<1x128xi32>
    %13 = arith.andi %10, %12 : vector<1x128xi1>
    %cst_3 = arith.constant 0.000000e+00 : f32
    %14 = vector.shape_cast %13 : vector<1x128xi1> to vector<1x128xi1>
    %15 = vector.broadcast %14 : vector<1x128xi1> to vector<16x128xi1>
    %16 = vector.broadcast %cst_3 : f32 to vector<16x128xf32>
    %17 = arith.select %15, %8, %16 : vector<16x128xi1>, vector<16x128xf32>
    %c0_4 = arith.constant 0 : index
    %c0_5 = arith.constant 0 : index
    %18 = vector.load %arg2[%c0_4, %c0_5] : memref<288x16xbf16, #tpu.memory_space<vmem>>, vector<32x16xbf16>
    %19 = arith.truncf %17 : vector<16x128xf32> to vector<16x128xbf16>
    %cst_6 = arith.constant dense<0.000000e+00> : vector<32x128xf32>
    %20 = tpu.matmul %18, %19, %cst_6 {dimension_numbers = #tpu.dot_dimension_numbers<[1], [0], [0], [1], [0, 0, 1, 1], [], []>} : vector<32x16xbf16>, vector<16x128xbf16>, vector<32x128xf32> -> vector<32x128xf32>
    %21 = arith.addf %7, %20 : vector<32x128xf32>
    %c4_i32 = arith.constant 4 : i32
    %22 = tpu.dynamic_rotate %1 by %c4_i32 dim 1 : vector<16x128xf32>, i32 -> vector<16x128xf32>
    %c1_i32_7 = arith.constant 1 : i32
    %23 = vector.broadcast %c1_i32_7 : i32 to vector<1x128xi32>
    %24 = arith.cmpi sge, %4, %23 : vector<1x128xi32>
    %cst_8 = arith.constant 0.000000e+00 : f32
    %25 = vector.shape_cast %24 : vector<1x128xi1> to vector<1x128xi1>
    %26 = vector.broadcast %25 : vector<1x128xi1> to vector<16x128xi1>
    %27 = vector.broadcast %cst_8 : f32 to vector<16x128xf32>
    %28 = arith.select %26, %22, %27 : vector<16x128xi1>, vector<16x128xf32>
    %c32 = arith.constant 32 : index
    %c0_9 = arith.constant 0 : index
    %29 = vector.load %arg2[%c32, %c0_9] : memref<288x16xbf16, #tpu.memory_space<vmem>>, vector<32x16xbf16>
    %30 = arith.truncf %28 : vector<16x128xf32> to vector<16x128xbf16>
    %cst_10 = arith.constant dense<0.000000e+00> : vector<32x128xf32>
    %31 = tpu.matmul %29, %30, %cst_10 {dimension_numbers = #tpu.dot_dimension_numbers<[1], [0], [0], [1], [0, 0, 1, 1], [], []>} : vector<32x16xbf16>, vector<16x128xbf16>, vector<32x128xf32> -> vector<32x128xf32>
    %32 = arith.addf %21, %31 : vector<32x128xf32>
    %c3_i32_11 = arith.constant 3 : i32
    %33 = tpu.dynamic_rotate %1 by %c3_i32_11 dim 1 : vector<16x128xf32>, i32 -> vector<16x128xf32>
    %c1_i32_12 = arith.constant 1 : i32
    %34 = vector.broadcast %c1_i32_12 : i32 to vector<1x128xi32>
    %35 = arith.cmpi sge, %4, %34 : vector<1x128xi32>
    %c3_i32_13 = arith.constant 3 : i32
    %36 = vector.broadcast %c3_i32_13 : i32 to vector<1x128xi32>
    %37 = arith.cmpi slt, %6, %36 : vector<1x128xi32>
    %38 = arith.andi %35, %37 : vector<1x128xi1>
    %cst_14 = arith.constant 0.000000e+00 : f32
    %39 = vector.shape_cast %38 : vector<1x128xi1> to vector<1x128xi1>
    %40 = vector.broadcast %39 : vector<1x128xi1> to vector<16x128xi1>
    %41 = vector.broadcast %cst_14 : f32 to vector<16x128xf32>
    %42 = arith.select %40, %33, %41 : vector<16x128xi1>, vector<16x128xf32>
    %c64 = arith.constant 64 : index
    %c0_15 = arith.constant 0 : index
    %43 = vector.load %arg2[%c64, %c0_15] : memref<288x16xbf16, #tpu.memory_space<vmem>>, vector<32x16xbf16>
    %44 = arith.truncf %42 : vector<16x128xf32> to vector<16x128xbf16>
    %cst_16 = arith.constant dense<0.000000e+00> : vector<32x128xf32>
    %45 = tpu.matmul %43, %44, %cst_16 {dimension_numbers = #tpu.dot_dimension_numbers<[1], [0], [0], [1], [0, 0, 1, 1], [], []>} : vector<32x16xbf16>, vector<16x128xbf16>, vector<32x128xf32> -> vector<32x128xf32>
    %46 = arith.addf %32, %45 : vector<32x128xf32>
    %c1_i32_17 = arith.constant 1 : i32
    %47 = tpu.dynamic_rotate %1 by %c1_i32_17 dim 1 : vector<16x128xf32>, i32 -> vector<16x128xf32>
    %c1_i32_18 = arith.constant 1 : i32
    %48 = vector.broadcast %c1_i32_18 : i32 to vector<1x128xi32>
    %49 = arith.cmpi sge, %6, %48 : vector<1x128xi32>
    %cst_19 = arith.constant 0.000000e+00 : f32
    %50 = vector.shape_cast %49 : vector<1x128xi1> to vector<1x128xi1>
    %51 = vector.broadcast %50 : vector<1x128xi1> to vector<16x128xi1>
    %52 = vector.broadcast %cst_19 : f32 to vector<16x128xf32>
    %53 = arith.select %51, %47, %52 : vector<16x128xi1>, vector<16x128xf32>
    %c96 = arith.constant 96 : index
    %c0_20 = arith.constant 0 : index
    %54 = vector.load %arg2[%c96, %c0_20] : memref<288x16xbf16, #tpu.memory_space<vmem>>, vector<32x16xbf16>
    %55 = arith.truncf %53 : vector<16x128xf32> to vector<16x128xbf16>
    %cst_21 = arith.constant dense<0.000000e+00> : vector<32x128xf32>
    %56 = tpu.matmul %54, %55, %cst_21 {dimension_numbers = #tpu.dot_dimension_numbers<[1], [0], [0], [1], [0, 0, 1, 1], [], []>} : vector<32x16xbf16>, vector<16x128xbf16>, vector<32x128xf32> -> vector<32x128xf32>
    %57 = arith.addf %46, %56 : vector<32x128xf32>
    %c128 = arith.constant 128 : index
    %c0_22 = arith.constant 0 : index
    %58 = vector.load %arg2[%c128, %c0_22] : memref<288x16xbf16, #tpu.memory_space<vmem>>, vector<32x16xbf16>
    %59 = arith.truncf %1 : vector<16x128xf32> to vector<16x128xbf16>
    %cst_23 = arith.constant dense<0.000000e+00> : vector<32x128xf32>
    %60 = tpu.matmul %58, %59, %cst_23 {dimension_numbers = #tpu.dot_dimension_numbers<[1], [0], [0], [1], [0, 0, 1, 1], [], []>} : vector<32x16xbf16>, vector<16x128xbf16>, vector<32x128xf32> -> vector<32x128xf32>
    %61 = arith.addf %57, %60 : vector<32x128xf32>
    %c127_i32 = arith.constant 127 : i32
    %62 = tpu.dynamic_rotate %1 by %c127_i32 dim 1 : vector<16x128xf32>, i32 -> vector<16x128xf32>
    %c3_i32_24 = arith.constant 3 : i32
    %63 = vector.broadcast %c3_i32_24 : i32 to vector<1x128xi32>
    %64 = arith.cmpi slt, %6, %63 : vector<1x128xi32>
    %cst_25 = arith.constant 0.000000e+00 : f32
    %65 = vector.shape_cast %64 : vector<1x128xi1> to vector<1x128xi1>
    %66 = vector.broadcast %65 : vector<1x128xi1> to vector<16x128xi1>
    %67 = vector.broadcast %cst_25 : f32 to vector<16x128xf32>
    %68 = arith.select %66, %62, %67 : vector<16x128xi1>, vector<16x128xf32>
    %c160 = arith.constant 160 : index
    %c0_26 = arith.constant 0 : index
    %69 = vector.load %arg2[%c160, %c0_26] : memref<288x16xbf16, #tpu.memory_space<vmem>>, vector<32x16xbf16>
    %70 = arith.truncf %68 : vector<16x128xf32> to vector<16x128xbf16>
    %cst_27 = arith.constant dense<0.000000e+00> : vector<32x128xf32>
    %71 = tpu.matmul %69, %70, %cst_27 {dimension_numbers = #tpu.dot_dimension_numbers<[1], [0], [0], [1], [0, 0, 1, 1], [], []>} : vector<32x16xbf16>, vector<16x128xbf16>, vector<32x128xf32> -> vector<32x128xf32>
    %72 = arith.addf %61, %71 : vector<32x128xf32>
    %c125_i32 = arith.constant 125 : i32
    %73 = tpu.dynamic_rotate %1 by %c125_i32 dim 1 : vector<16x128xf32>, i32 -> vector<16x128xf32>
    %c3_i32_28 = arith.constant 3 : i32
    %74 = vector.broadcast %c3_i32_28 : i32 to vector<1x128xi32>
    %75 = arith.cmpi slt, %4, %74 : vector<1x128xi32>
    %c1_i32_29 = arith.constant 1 : i32
    %76 = vector.broadcast %c1_i32_29 : i32 to vector<1x128xi32>
    %77 = arith.cmpi sge, %6, %76 : vector<1x128xi32>
    %78 = arith.andi %75, %77 : vector<1x128xi1>
    %cst_30 = arith.constant 0.000000e+00 : f32
    %79 = vector.shape_cast %78 : vector<1x128xi1> to vector<1x128xi1>
    %80 = vector.broadcast %79 : vector<1x128xi1> to vector<16x128xi1>
    %81 = vector.broadcast %cst_30 : f32 to vector<16x128xf32>
    %82 = arith.select %80, %73, %81 : vector<16x128xi1>, vector<16x128xf32>
    %c192 = arith.constant 192 : index
    %c0_31 = arith.constant 0 : index
    %83 = vector.load %arg2[%c192, %c0_31] : memref<288x16xbf16, #tpu.memory_space<vmem>>, vector<32x16xbf16>
    %84 = arith.truncf %82 : vector<16x128xf32> to vector<16x128xbf16>
    %cst_32 = arith.constant dense<0.000000e+00> : vector<32x128xf32>
    %85 = tpu.matmul %83, %84, %cst_32 {dimension_numbers = #tpu.dot_dimension_numbers<[1], [0], [0], [1], [0, 0, 1, 1], [], []>} : vector<32x16xbf16>, vector<16x128xbf16>, vector<32x128xf32> -> vector<32x128xf32>
    %86 = arith.addf %72, %85 : vector<32x128xf32>
    %c124_i32 = arith.constant 124 : i32
    %87 = tpu.dynamic_rotate %1 by %c124_i32 dim 1 : vector<16x128xf32>, i32 -> vector<16x128xf32>
    %c3_i32_33 = arith.constant 3 : i32
    %88 = vector.broadcast %c3_i32_33 : i32 to vector<1x128xi32>
    %89 = arith.cmpi slt, %4, %88 : vector<1x128xi32>
    %cst_34 = arith.constant 0.000000e+00 : f32
    %90 = vector.shape_cast %89 : vector<1x128xi1> to vector<1x128xi1>
    %91 = vector.broadcast %90 : vector<1x128xi1> to vector<16x128xi1>
    %92 = vector.broadcast %cst_34 : f32 to vector<16x128xf32>
    %93 = arith.select %91, %87, %92 : vector<16x128xi1>, vector<16x128xf32>
    %c224 = arith.constant 224 : index
    %c0_35 = arith.constant 0 : index
    %94 = vector.load %arg2[%c224, %c0_35] : memref<288x16xbf16, #tpu.memory_space<vmem>>, vector<32x16xbf16>
    %95 = arith.truncf %93 : vector<16x128xf32> to vector<16x128xbf16>
    %cst_36 = arith.constant dense<0.000000e+00> : vector<32x128xf32>
    %96 = tpu.matmul %94, %95, %cst_36 {dimension_numbers = #tpu.dot_dimension_numbers<[1], [0], [0], [1], [0, 0, 1, 1], [], []>} : vector<32x16xbf16>, vector<16x128xbf16>, vector<32x128xf32> -> vector<32x128xf32>
    %97 = arith.addf %86, %96 : vector<32x128xf32>
    %c123_i32 = arith.constant 123 : i32
    %98 = tpu.dynamic_rotate %1 by %c123_i32 dim 1 : vector<16x128xf32>, i32 -> vector<16x128xf32>
    %c3_i32_37 = arith.constant 3 : i32
    %99 = vector.broadcast %c3_i32_37 : i32 to vector<1x128xi32>
    %100 = arith.cmpi slt, %4, %99 : vector<1x128xi32>
    %c3_i32_38 = arith.constant 3 : i32
    %101 = vector.broadcast %c3_i32_38 : i32 to vector<1x128xi32>
    %102 = arith.cmpi slt, %6, %101 : vector<1x128xi32>
    %103 = arith.andi %100, %102 : vector<1x128xi1>
    %cst_39 = arith.constant 0.000000e+00 : f32
    %104 = vector.shape_cast %103 : vector<1x128xi1> to vector<1x128xi1>
    %105 = vector.broadcast %104 : vector<1x128xi1> to vector<16x128xi1>
    %106 = vector.broadcast %cst_39 : f32 to vector<16x128xf32>
    %107 = arith.select %105, %98, %106 : vector<16x128xi1>, vector<16x128xf32>
    %c256 = arith.constant 256 : index
    %c0_40 = arith.constant 0 : index
    %108 = vector.load %arg2[%c256, %c0_40] : memref<288x16xbf16, #tpu.memory_space<vmem>>, vector<32x16xbf16>
    %109 = arith.truncf %107 : vector<16x128xf32> to vector<16x128xbf16>
    %cst_41 = arith.constant dense<0.000000e+00> : vector<32x128xf32>
    %110 = tpu.matmul %108, %109, %cst_41 {dimension_numbers = #tpu.dot_dimension_numbers<[1], [0], [0], [1], [0, 0, 1, 1], [], []>} : vector<32x16xbf16>, vector<16x128xbf16>, vector<32x128xf32> -> vector<32x128xf32>
    %111 = arith.addf %97, %110 : vector<32x128xf32>
    %c0_42 = arith.constant 0 : index
    %c0_43 = arith.constant 0 : index
    %112 = vector.load %arg3[%c0_42, %c0_43] : memref<32x1xf32, #tpu.memory_space<vmem>>, vector<32x1xf32>
    %113 = vector.broadcast %112 : vector<32x1xf32> to vector<32x128xf32>
    %114 = arith.addf %111, %113 : vector<32x128xf32>
    %cst_44 = arith.constant 0.000000e+00 : f32
    %115 = vector.broadcast %cst_44 : f32 to vector<32x128xf32>
    %116 = arith.cmpf ogt, %114, %115 : vector<32x128xf32>
    %cst_45 = arith.constant 0.000000e+00 : f32
    %117 = vector.broadcast %cst_45 : f32 to vector<32x128xf32>
    %118 = arith.minimumf %114, %117 : vector<32x128xf32>
    %119 = math.exp %118 : vector<32x128xf32>
    %cst_46 = arith.constant 1.000000e+00 : f32
    %120 = vector.broadcast %cst_46 : f32 to vector<32x128xf32>
    %121 = arith.subf %119, %120 : vector<32x128xf32>
    %cst_47 = arith.constant 1.67326319 : f32
    %122 = vector.broadcast %cst_47 : f32 to vector<32x128xf32>
    %123 = arith.mulf %122, %121 : vector<32x128xf32>
    %124 = arith.select %116, %114, %123 : vector<32x128xi1>, vector<32x128xf32>
    %cst_48 = arith.constant 1.05070102 : f32
    %125 = vector.broadcast %cst_48 : f32 to vector<32x128xf32>
    %126 = arith.mulf %125, %124 : vector<32x128xf32>
    %cst_49 = arith.constant 0.000000e+00 : f32
    %127 = vector.broadcast %cst_49 : f32 to vector<32x128xf32>
    %c5_i32_50 = arith.constant 5 : i32
    %128 = tpu.dynamic_rotate %126 by %c5_i32_50 dim 1 : vector<32x128xf32>, i32 -> vector<32x128xf32>
    %c1_i32_51 = arith.constant 1 : i32
    %129 = vector.broadcast %c1_i32_51 : i32 to vector<1x128xi32>
    %130 = arith.cmpi sge, %4, %129 : vector<1x128xi32>
    %c1_i32_52 = arith.constant 1 : i32
    %131 = vector.broadcast %c1_i32_52 : i32 to vector<1x128xi32>
    %132 = arith.cmpi sge, %6, %131 : vector<1x128xi32>
    %133 = arith.andi %130, %132 : vector<1x128xi1>
    %cst_53 = arith.constant 0.000000e+00 : f32
    %134 = vector.shape_cast %133 : vector<1x128xi1> to vector<1x128xi1>
    %135 = vector.broadcast %134 : vector<1x128xi1> to vector<32x128xi1>
    %136 = vector.broadcast %cst_53 : f32 to vector<32x128xf32>
    %137 = arith.select %135, %128, %136 : vector<32x128xi1>, vector<32x128xf32>
    %c0_54 = arith.constant 0 : index
    %c0_55 = arith.constant 0 : index
    %138 = vector.load %arg4[%c0_54, %c0_55] : memref<288x32xbf16, #tpu.memory_space<vmem>>, vector<32x32xbf16>
    %139 = arith.truncf %137 : vector<32x128xf32> to vector<32x128xbf16>
    %cst_56 = arith.constant dense<0.000000e+00> : vector<32x128xf32>
    %140 = tpu.matmul %138, %139, %cst_56 {dimension_numbers = #tpu.dot_dimension_numbers<[1], [0], [0], [1], [0, 0, 1, 1], [], []>} : vector<32x32xbf16>, vector<32x128xbf16>, vector<32x128xf32> -> vector<32x128xf32>
    %141 = arith.addf %127, %140 : vector<32x128xf32>
    %c4_i32_57 = arith.constant 4 : i32
    %142 = tpu.dynamic_rotate %126 by %c4_i32_57 dim 1 : vector<32x128xf32>, i32 -> vector<32x128xf32>
    %c1_i32_58 = arith.constant 1 : i32
    %143 = vector.broadcast %c1_i32_58 : i32 to vector<1x128xi32>
    %144 = arith.cmpi sge, %4, %143 : vector<1x128xi32>
    %cst_59 = arith.constant 0.000000e+00 : f32
    %145 = vector.shape_cast %144 : vector<1x128xi1> to vector<1x128xi1>
    %146 = vector.broadcast %145 : vector<1x128xi1> to vector<32x128xi1>
    %147 = vector.broadcast %cst_59 : f32 to vector<32x128xf32>
    %148 = arith.select %146, %142, %147 : vector<32x128xi1>, vector<32x128xf32>
    %c32_60 = arith.constant 32 : index
    %c0_61 = arith.constant 0 : index
    %149 = vector.load %arg4[%c32_60, %c0_61] : memref<288x32xbf16, #tpu.memory_space<vmem>>, vector<32x32xbf16>
    %150 = arith.truncf %148 : vector<32x128xf32> to vector<32x128xbf16>
    %cst_62 = arith.constant dense<0.000000e+00> : vector<32x128xf32>
    %151 = tpu.matmul %149, %150, %cst_62 {dimension_numbers = #tpu.dot_dimension_numbers<[1], [0], [0], [1], [0, 0, 1, 1], [], []>} : vector<32x32xbf16>, vector<32x128xbf16>, vector<32x128xf32> -> vector<32x128xf32>
    %152 = arith.addf %141, %151 : vector<32x128xf32>
    %c3_i32_63 = arith.constant 3 : i32
    %153 = tpu.dynamic_rotate %126 by %c3_i32_63 dim 1 : vector<32x128xf32>, i32 -> vector<32x128xf32>
    %c1_i32_64 = arith.constant 1 : i32
    %154 = vector.broadcast %c1_i32_64 : i32 to vector<1x128xi32>
    %155 = arith.cmpi sge, %4, %154 : vector<1x128xi32>
    %c3_i32_65 = arith.constant 3 : i32
    %156 = vector.broadcast %c3_i32_65 : i32 to vector<1x128xi32>
    %157 = arith.cmpi slt, %6, %156 : vector<1x128xi32>
    %158 = arith.andi %155, %157 : vector<1x128xi1>
    %cst_66 = arith.constant 0.000000e+00 : f32
    %159 = vector.shape_cast %158 : vector<1x128xi1> to vector<1x128xi1>
    %160 = vector.broadcast %159 : vector<1x128xi1> to vector<32x128xi1>
    %161 = vector.broadcast %cst_66 : f32 to vector<32x128xf32>
    %162 = arith.select %160, %153, %161 : vector<32x128xi1>, vector<32x128xf32>
    %c64_67 = arith.constant 64 : index
    %c0_68 = arith.constant 0 : index
    %163 = vector.load %arg4[%c64_67, %c0_68] : memref<288x32xbf16, #tpu.memory_space<vmem>>, vector<32x32xbf16>
    %164 = arith.truncf %162 : vector<32x128xf32> to vector<32x128xbf16>
    %cst_69 = arith.constant dense<0.000000e+00> : vector<32x128xf32>
    %165 = tpu.matmul %163, %164, %cst_69 {dimension_numbers = #tpu.dot_dimension_numbers<[1], [0], [0], [1], [0, 0, 1, 1], [], []>} : vector<32x32xbf16>, vector<32x128xbf16>, vector<32x128xf32> -> vector<32x128xf32>
    %166 = arith.addf %152, %165 : vector<32x128xf32>
    %c1_i32_70 = arith.constant 1 : i32
    %167 = tpu.dynamic_rotate %126 by %c1_i32_70 dim 1 : vector<32x128xf32>, i32 -> vector<32x128xf32>
    %c1_i32_71 = arith.constant 1 : i32
    %168 = vector.broadcast %c1_i32_71 : i32 to vector<1x128xi32>
    %169 = arith.cmpi sge, %6, %168 : vector<1x128xi32>
    %cst_72 = arith.constant 0.000000e+00 : f32
    %170 = vector.shape_cast %169 : vector<1x128xi1> to vector<1x128xi1>
    %171 = vector.broadcast %170 : vector<1x128xi1> to vector<32x128xi1>
    %172 = vector.broadcast %cst_72 : f32 to vector<32x128xf32>
    %173 = arith.select %171, %167, %172 : vector<32x128xi1>, vector<32x128xf32>
    %c96_73 = arith.constant 96 : index
    %c0_74 = arith.constant 0 : index
    %174 = vector.load %arg4[%c96_73, %c0_74] : memref<288x32xbf16, #tpu.memory_space<vmem>>, vector<32x32xbf16>
    %175 = arith.truncf %173 : vector<32x128xf32> to vector<32x128xbf16>
    %cst_75 = arith.constant dense<0.000000e+00> : vector<32x128xf32>
    %176 = tpu.matmul %174, %175, %cst_75 {dimension_numbers = #tpu.dot_dimension_numbers<[1], [0], [0], [1], [0, 0, 1, 1], [], []>} : vector<32x32xbf16>, vector<32x128xbf16>, vector<32x128xf32> -> vector<32x128xf32>
    %177 = arith.addf %166, %176 : vector<32x128xf32>
    %c128_76 = arith.constant 128 : index
    %c0_77 = arith.constant 0 : index
    %178 = vector.load %arg4[%c128_76, %c0_77] : memref<288x32xbf16, #tpu.memory_space<vmem>>, vector<32x32xbf16>
    %179 = arith.truncf %126 : vector<32x128xf32> to vector<32x128xbf16>
    %cst_78 = arith.constant dense<0.000000e+00> : vector<32x128xf32>
    %180 = tpu.matmul %178, %179, %cst_78 {dimension_numbers = #tpu.dot_dimension_numbers<[1], [0], [0], [1], [0, 0, 1, 1], [], []>} : vector<32x32xbf16>, vector<32x128xbf16>, vector<32x128xf32> -> vector<32x128xf32>
    %181 = arith.addf %177, %180 : vector<32x128xf32>
    %c127_i32_79 = arith.constant 127 : i32
    %182 = tpu.dynamic_rotate %126 by %c127_i32_79 dim 1 : vector<32x128xf32>, i32 -> vector<32x128xf32>
    %c3_i32_80 = arith.constant 3 : i32
    %183 = vector.broadcast %c3_i32_80 : i32 to vector<1x128xi32>
    %184 = arith.cmpi slt, %6, %183 : vector<1x128xi32>
    %cst_81 = arith.constant 0.000000e+00 : f32
    %185 = vector.shape_cast %184 : vector<1x128xi1> to vector<1x128xi1>
    %186 = vector.broadcast %185 : vector<1x128xi1> to vector<32x128xi1>
    %187 = vector.broadcast %cst_81 : f32 to vector<32x128xf32>
    %188 = arith.select %186, %182, %187 : vector<32x128xi1>, vector<32x128xf32>
    %c160_82 = arith.constant 160 : index
    %c0_83 = arith.constant 0 : index
    %189 = vector.load %arg4[%c160_82, %c0_83] : memref<288x32xbf16, #tpu.memory_space<vmem>>, vector<32x32xbf16>
    %190 = arith.truncf %188 : vector<32x128xf32> to vector<32x128xbf16>
    %cst_84 = arith.constant dense<0.000000e+00> : vector<32x128xf32>
    %191 = tpu.matmul %189, %190, %cst_84 {dimension_numbers = #tpu.dot_dimension_numbers<[1], [0], [0], [1], [0, 0, 1, 1], [], []>} : vector<32x32xbf16>, vector<32x128xbf16>, vector<32x128xf32> -> vector<32x128xf32>
    %192 = arith.addf %181, %191 : vector<32x128xf32>
    %c125_i32_85 = arith.constant 125 : i32
    %193 = tpu.dynamic_rotate %126 by %c125_i32_85 dim 1 : vector<32x128xf32>, i32 -> vector<32x128xf32>
    %c3_i32_86 = arith.constant 3 : i32
    %194 = vector.broadcast %c3_i32_86 : i32 to vector<1x128xi32>
    %195 = arith.cmpi slt, %4, %194 : vector<1x128xi32>
    %c1_i32_87 = arith.constant 1 : i32
    %196 = vector.broadcast %c1_i32_87 : i32 to vector<1x128xi32>
    %197 = arith.cmpi sge, %6, %196 : vector<1x128xi32>
    %198 = arith.andi %195, %197 : vector<1x128xi1>
    %cst_88 = arith.constant 0.000000e+00 : f32
    %199 = vector.shape_cast %198 : vector<1x128xi1> to vector<1x128xi1>
    %200 = vector.broadcast %199 : vector<1x128xi1> to vector<32x128xi1>
    %201 = vector.broadcast %cst_88 : f32 to vector<32x128xf32>
    %202 = arith.select %200, %193, %201 : vector<32x128xi1>, vector<32x128xf32>
    %c192_89 = arith.constant 192 : index
    %c0_90 = arith.constant 0 : index
    %203 = vector.load %arg4[%c192_89, %c0_90] : memref<288x32xbf16, #tpu.memory_space<vmem>>, vector<32x32xbf16>
    %204 = arith.truncf %202 : vector<32x128xf32> to vector<32x128xbf16>
    %cst_91 = arith.constant dense<0.000000e+00> : vector<32x128xf32>
    %205 = tpu.matmul %203, %204, %cst_91 {dimension_numbers = #tpu.dot_dimension_numbers<[1], [0], [0], [1], [0, 0, 1, 1], [], []>} : vector<32x32xbf16>, vector<32x128xbf16>, vector<32x128xf32> -> vector<32x128xf32>
    %206 = arith.addf %192, %205 : vector<32x128xf32>
    %c124_i32_92 = arith.constant 124 : i32
    %207 = tpu.dynamic_rotate %126 by %c124_i32_92 dim 1 : vector<32x128xf32>, i32 -> vector<32x128xf32>
    %c3_i32_93 = arith.constant 3 : i32
    %208 = vector.broadcast %c3_i32_93 : i32 to vector<1x128xi32>
    %209 = arith.cmpi slt, %4, %208 : vector<1x128xi32>
    %cst_94 = arith.constant 0.000000e+00 : f32
    %210 = vector.shape_cast %209 : vector<1x128xi1> to vector<1x128xi1>
    %211 = vector.broadcast %210 : vector<1x128xi1> to vector<32x128xi1>
    %212 = vector.broadcast %cst_94 : f32 to vector<32x128xf32>
    %213 = arith.select %211, %207, %212 : vector<32x128xi1>, vector<32x128xf32>
    %c224_95 = arith.constant 224 : index
    %c0_96 = arith.constant 0 : index
    %214 = vector.load %arg4[%c224_95, %c0_96] : memref<288x32xbf16, #tpu.memory_space<vmem>>, vector<32x32xbf16>
    %215 = arith.truncf %213 : vector<32x128xf32> to vector<32x128xbf16>
    %cst_97 = arith.constant dense<0.000000e+00> : vector<32x128xf32>
    %216 = tpu.matmul %214, %215, %cst_97 {dimension_numbers = #tpu.dot_dimension_numbers<[1], [0], [0], [1], [0, 0, 1, 1], [], []>} : vector<32x32xbf16>, vector<32x128xbf16>, vector<32x128xf32> -> vector<32x128xf32>
    %217 = arith.addf %206, %216 : vector<32x128xf32>
    %c123_i32_98 = arith.constant 123 : i32
    %218 = tpu.dynamic_rotate %126 by %c123_i32_98 dim 1 : vector<32x128xf32>, i32 -> vector<32x128xf32>
    %c3_i32_99 = arith.constant 3 : i32
    %219 = vector.broadcast %c3_i32_99 : i32 to vector<1x128xi32>
    %220 = arith.cmpi slt, %4, %219 : vector<1x128xi32>
    %c3_i32_100 = arith.constant 3 : i32
    %221 = vector.broadcast %c3_i32_100 : i32 to vector<1x128xi32>
    %222 = arith.cmpi slt, %6, %221 : vector<1x128xi32>
    %223 = arith.andi %220, %222 : vector<1x128xi1>
    %cst_101 = arith.constant 0.000000e+00 : f32
    %224 = vector.shape_cast %223 : vector<1x128xi1> to vector<1x128xi1>
    %225 = vector.broadcast %224 : vector<1x128xi1> to vector<32x128xi1>
    %226 = vector.broadcast %cst_101 : f32 to vector<32x128xf32>
    %227 = arith.select %225, %218, %226 : vector<32x128xi1>, vector<32x128xf32>
    %c256_102 = arith.constant 256 : index
    %c0_103 = arith.constant 0 : index
    %228 = vector.load %arg4[%c256_102, %c0_103] : memref<288x32xbf16, #tpu.memory_space<vmem>>, vector<32x32xbf16>
    %229 = arith.truncf %227 : vector<32x128xf32> to vector<32x128xbf16>
    %cst_104 = arith.constant dense<0.000000e+00> : vector<32x128xf32>
    %230 = tpu.matmul %228, %229, %cst_104 {dimension_numbers = #tpu.dot_dimension_numbers<[1], [0], [0], [1], [0, 0, 1, 1], [], []>} : vector<32x32xbf16>, vector<32x128xbf16>, vector<32x128xf32> -> vector<32x128xf32>
    %231 = arith.addf %217, %230 : vector<32x128xf32>
    %c0_105 = arith.constant 0 : index
    %c0_106 = arith.constant 0 : index
    %232 = vector.load %arg5[%c0_105, %c0_106] : memref<32x1xf32, #tpu.memory_space<vmem>>, vector<32x1xf32>
    %233 = vector.broadcast %232 : vector<32x1xf32> to vector<32x128xf32>
    %234 = arith.addf %231, %233 : vector<32x128xf32>
    %c0_107 = arith.constant 0 : index
    %c0_108 = arith.constant 0 : index
    %235 = vector.load %arg6[%c0_107, %c0_108] : memref<32x16xbf16, #tpu.memory_space<vmem>>, vector<32x16xbf16>
    %236 = arith.truncf %1 : vector<16x128xf32> to vector<16x128xbf16>
    %cst_109 = arith.constant dense<0.000000e+00> : vector<32x128xf32>
    %237 = tpu.matmul %235, %236, %cst_109 {dimension_numbers = #tpu.dot_dimension_numbers<[1], [0], [0], [1], [0, 0, 1, 1], [], []>} : vector<32x16xbf16>, vector<16x128xbf16>, vector<32x128xf32> -> vector<32x128xf32>
    %238 = arith.addf %234, %237 : vector<32x128xf32>
    %c0_110 = arith.constant 0 : index
    %c0_111 = arith.constant 0 : index
    %239 = vector.load %arg7[%c0_110, %c0_111] : memref<32x1xf32, #tpu.memory_space<vmem>>, vector<32x1xf32>
    %240 = vector.broadcast %239 : vector<32x1xf32> to vector<32x128xf32>
    %241 = arith.addf %238, %240 : vector<32x128xf32>
    %242 = tpu.iota {dimensions = array<i32: 0>} : vector<128x1xi32>
    %243 = tpu.iota {dimensions = array<i32: 1>} : vector<1x128xi32>
    %c2_i32_112 = arith.constant 2 : i32
    %244 = vector.broadcast %c2_i32_112 : i32 to vector<128x1xi32>
    %245 = arith.shrsi %242, %244 : vector<128x1xi32>
    %c1_i32_113 = arith.constant 1 : i32
    %246 = vector.broadcast %c1_i32_113 : i32 to vector<128x1xi32>
    %247 = arith.shrsi %245, %246 : vector<128x1xi32>
    %c1_i32_114 = arith.constant 1 : i32
    %248 = vector.broadcast %c1_i32_114 : i32 to vector<1x128xi32>
    %249 = arith.shrsi %243, %248 : vector<1x128xi32>
    %250 = vector.broadcast %247 : vector<128x1xi32> to vector<128x128xi32>
    %251 = vector.broadcast %249 : vector<1x128xi32> to vector<128x128xi32>
    %252 = arith.cmpi eq, %250, %251 : vector<128x128xi32>
    %c3_i32_115 = arith.constant 3 : i32
    %253 = vector.broadcast %c3_i32_115 : i32 to vector<128x1xi32>
    %254 = arith.andi %242, %253 : vector<128x1xi32>
    %c1_i32_116 = arith.constant 1 : i32
    %255 = vector.broadcast %c1_i32_116 : i32 to vector<128x1xi32>
    %256 = arith.shrsi %254, %255 : vector<128x1xi32>
    %c1_i32_117 = arith.constant 1 : i32
    %257 = vector.broadcast %c1_i32_117 : i32 to vector<1x128xi32>
    %258 = arith.andi %243, %257 : vector<1x128xi32>
    %259 = vector.broadcast %256 : vector<128x1xi32> to vector<128x128xi32>
    %260 = vector.broadcast %258 : vector<1x128xi32> to vector<128x128xi32>
    %261 = arith.cmpi eq, %259, %260 : vector<128x128xi32>
    %262 = arith.andi %252, %261 : vector<128x128xi1>
    %cst_118 = arith.constant 2.500000e-01 : f32
    %cst_119 = arith.constant 0.000000e+00 : f32
    %263 = vector.broadcast %cst_118 : f32 to vector<128x128xf32>
    %264 = vector.broadcast %cst_119 : f32 to vector<128x128xf32>
    %265 = arith.select %262, %263, %264 : vector<128x128xi1>, vector<128x128xf32>
    %cst_120 = arith.constant dense<0.000000e+00> : vector<32x128xf32>
    %266 = tpu.matmul %241, %265, %cst_120 {dimension_numbers = #tpu.dot_dimension_numbers<[1], [0], [0], [1], [0, 0, 1, 1], [], []>} : vector<32x128xf32>, vector<128x128xf32>, vector<32x128xf32> -> vector<32x128xf32>
    %267 = tpu.iota {dimensions = array<i32: 1>} : vector<1x128xi32>
    %c4_i32_121 = arith.constant 4 : i32
    %268 = vector.broadcast %c4_i32_121 : i32 to vector<1x128xi32>
    %269 = arith.cmpi slt, %267, %268 : vector<1x128xi32>
    %cst_122 = arith.constant 0.000000e+00 : f32
    %270 = vector.shape_cast %269 : vector<1x128xi1> to vector<1x128xi1>
    %271 = vector.broadcast %270 : vector<1x128xi1> to vector<32x128xi1>
    %272 = vector.broadcast %cst_122 : f32 to vector<32x128xf32>
    %273 = arith.select %271, %266, %272 : vector<32x128xi1>, vector<32x128xf32>
    %c0_123 = arith.constant 0 : index
    %c0_124 = arith.constant 0 : index
    %c0_125 = arith.constant 0 : index
    %274 = vector.load %arg8[%c0_123, %c0_124, %c0_125] : memref<1x32x128xf32, #tpu.memory_space<vmem>>, vector<1x32x128xf32>
    %275 = vector.shape_cast %274 : vector<1x32x128xf32> to vector<32x128xf32>
    %276 = vector.shape_cast %273 : vector<32x128xf32> to vector<1x32x128xf32>
    tpu.vector_store %arg8[%c0_123, %c0_124, %c0_125], %276 {strides = array<i32>} : memref<1x32x128xf32, #tpu.memory_space<vmem>>, vector<1x32x128xf32>,
    return
  }
  func.func @transform_0(%arg0: i32) -> (i32, i32, i32) {
    %c0_i32 = arith.constant 0 : i32
    %c0_i32_0 = arith.constant 0 : i32
    %c0_i32_1 = arith.constant 0 : i32
    return %arg0, %c0_i32, %c0_i32_0 : i32, i32, i32
  }
  func.func @transform_1(%arg0: i32) -> (i32, i32) {
    %c0_i32 = arith.constant 0 : i32
    %c0_i32_0 = arith.constant 0 : i32
    %c0_i32_1 = arith.constant 0 : i32
    return %c0_i32, %c0_i32_0 : i32, i32
  }
  func.func @transform_2(%arg0: i32) -> (i32, i32) {
    %c0_i32 = arith.constant 0 : i32
    %c0_i32_0 = arith.constant 0 : i32
    %c0_i32_1 = arith.constant 0 : i32
    return %c0_i32, %c0_i32_0 : i32, i32
  }
  func.func @transform_3(%arg0: i32) -> (i32, i32) {
    %c0_i32 = arith.constant 0 : i32
    %c0_i32_0 = arith.constant 0 : i32
    %c0_i32_1 = arith.constant 0 : i32
    return %c0_i32, %c0_i32_0 : i32, i32
  }
  func.func @transform_4(%arg0: i32) -> (i32, i32) {
    %c0_i32 = arith.constant 0 : i32
    %c0_i32_0 = arith.constant 0 : i32
    %c0_i32_1 = arith.constant 0 : i32
    return %c0_i32, %c0_i32_0 : i32, i32
  }
  func.func @transform_5(%arg0: i32) -> (i32, i32) {
    %c0_i32 = arith.constant 0 : i32
    %c0_i32_0 = arith.constant 0 : i32
    %c0_i32_1 = arith.constant 0 : i32
    return %c0_i32, %c0_i32_0 : i32, i32
  }
  func.func @transform_6(%arg0: i32) -> (i32, i32) {
    %c0_i32 = arith.constant 0 : i32
    %c0_i32_0 = arith.constant 0 : i32
    %c0_i32_1 = arith.constant 0 : i32
    return %c0_i32, %c0_i32_0 : i32, i32
  }
  func.func @transform_7(%arg0: i32) -> (i32, i32, i32) {
    %c0_i32 = arith.constant 0 : i32
    %c0_i32_0 = arith.constant 0 : i32
    %c0_i32_1 = arith.constant 0 : i32
    return %arg0, %c0_i32, %c0_i32_0 : i32, i32, i32
  }
}

module attributes {stable_mosaic.version = 11 : i64} {
  func.func @_stage_kernel(%arg0: i32, %arg1: memref<1x32x128xf32, #tpu.memory_space<vmem>>, %arg2: memref<144x32xbf16, #tpu.memory_space<vmem>>, %arg3: memref<16x1xf32, #tpu.memory_space<vmem>>, %arg4: memref<144x16xbf16, #tpu.memory_space<vmem>>, %arg5: memref<16x1xf32, #tpu.memory_space<vmem>>, %arg6: memref<16x32xbf16, #tpu.memory_space<vmem>>, %arg7: memref<16x1xf32, #tpu.memory_space<vmem>>, %arg8: memref<1x16x128xf32, #tpu.memory_space<vmem>>) attributes {dimension_semantics = [#tpu.dimension_semantics<parallel>], iteration_bounds = array<i64: 4>, scalar_prefetch = 0 : i64, scratch_operands = 0 : i64, tpu.core_type = #tpu.core_type<tc>, window_params = [{transform_indices = @transform_0, window_bounds = array<i64: 1, 32, 128>}, {pipeline_mode = #tpu.pipeline_mode<synchronous>, transform_indices = @transform_1, window_bounds = array<i64: 144, 32>}, {pipeline_mode = #tpu.pipeline_mode<synchronous>, transform_indices = @transform_2, window_bounds = array<i64: 16, 1>}, {pipeline_mode = #tpu.pipeline_mode<synchronous>, transform_indices = @transform_3, window_bounds = array<i64: 144, 16>}, {pipeline_mode = #tpu.pipeline_mode<synchronous>, transform_indices = @transform_4, window_bounds = array<i64: 16, 1>}, {pipeline_mode = #tpu.pipeline_mode<synchronous>, transform_indices = @transform_5, window_bounds = array<i64: 16, 32>}, {pipeline_mode = #tpu.pipeline_mode<synchronous>, transform_indices = @transform_6, window_bounds = array<i64: 16, 1>}, {transform_indices = @transform_7, window_bounds = array<i64: 1, 16, 128>}]} {
    %c0 = arith.constant 0 : index
    %c0_0 = arith.constant 0 : index
    %c0_1 = arith.constant 0 : index
    %0 = vector.load %arg1[%c0, %c0_0, %c0_1] : memref<1x32x128xf32, #tpu.memory_space<vmem>>, vector<1x32x128xf32>
    %1 = vector.shape_cast %0 : vector<1x32x128xf32> to vector<32x128xf32>
    %2 = tpu.iota {dimensions = array<i32: 1>} : vector<1x128xi32>
    %c1_i32 = arith.constant 1 : i32
    %3 = vector.broadcast %c1_i32 : i32 to vector<1x128xi32>
    %4 = arith.shrsi %2, %3 : vector<1x128xi32>
    %c1_i32_2 = arith.constant 1 : i32
    %5 = vector.broadcast %c1_i32_2 : i32 to vector<1x128xi32>
    %6 = arith.andi %2, %5 : vector<1x128xi32>
    %cst = arith.constant 0.000000e+00 : f32
    %7 = vector.broadcast %cst : f32 to vector<16x128xf32>
    %c3_i32 = arith.constant 3 : i32
    %8 = tpu.dynamic_rotate %1 by %c3_i32 dim 1 : vector<32x128xf32>, i32 -> vector<32x128xf32>
    %c1_i32_3 = arith.constant 1 : i32
    %9 = vector.broadcast %c1_i32_3 : i32 to vector<1x128xi32>
    %10 = arith.cmpi sge, %4, %9 : vector<1x128xi32>
    %c1_i32_4 = arith.constant 1 : i32
    %11 = vector.broadcast %c1_i32_4 : i32 to vector<1x128xi32>
    %12 = arith.cmpi sge, %6, %11 : vector<1x128xi32>
    %13 = arith.andi %10, %12 : vector<1x128xi1>
    %cst_5 = arith.constant 0.000000e+00 : f32
    %14 = vector.shape_cast %13 : vector<1x128xi1> to vector<1x128xi1>
    %15 = vector.broadcast %14 : vector<1x128xi1> to vector<32x128xi1>
    %16 = vector.broadcast %cst_5 : f32 to vector<32x128xf32>
    %17 = arith.select %15, %8, %16 : vector<32x128xi1>, vector<32x128xf32>
    %c0_6 = arith.constant 0 : index
    %c0_7 = arith.constant 0 : index
    %18 = vector.load %arg2[%c0_6, %c0_7] : memref<144x32xbf16, #tpu.memory_space<vmem>>, vector<16x32xbf16>
    %19 = arith.truncf %17 : vector<32x128xf32> to vector<32x128xbf16>
    %cst_8 = arith.constant dense<0.000000e+00> : vector<16x128xf32>
    %20 = tpu.matmul %18, %19, %cst_8 {dimension_numbers = #tpu.dot_dimension_numbers<[1], [0], [0], [1], [0, 0, 1, 1], [], []>} : vector<16x32xbf16>, vector<32x128xbf16>, vector<16x128xf32> -> vector<16x128xf32>
    %21 = arith.addf %7, %20 : vector<16x128xf32>
    %c2_i32 = arith.constant 2 : i32
    %22 = tpu.dynamic_rotate %1 by %c2_i32 dim 1 : vector<32x128xf32>, i32 -> vector<32x128xf32>
    %c1_i32_9 = arith.constant 1 : i32
    %23 = vector.broadcast %c1_i32_9 : i32 to vector<1x128xi32>
    %24 = arith.cmpi sge, %4, %23 : vector<1x128xi32>
    %cst_10 = arith.constant 0.000000e+00 : f32
    %25 = vector.shape_cast %24 : vector<1x128xi1> to vector<1x128xi1>
    %26 = vector.broadcast %25 : vector<1x128xi1> to vector<32x128xi1>
    %27 = vector.broadcast %cst_10 : f32 to vector<32x128xf32>
    %28 = arith.select %26, %22, %27 : vector<32x128xi1>, vector<32x128xf32>
    %c16 = arith.constant 16 : index
    %c0_11 = arith.constant 0 : index
    %29 = vector.load %arg2[%c16, %c0_11] : memref<144x32xbf16, #tpu.memory_space<vmem>>, vector<16x32xbf16>
    %30 = arith.truncf %28 : vector<32x128xf32> to vector<32x128xbf16>
    %cst_12 = arith.constant dense<0.000000e+00> : vector<16x128xf32>
    %31 = tpu.matmul %29, %30, %cst_12 {dimension_numbers = #tpu.dot_dimension_numbers<[1], [0], [0], [1], [0, 0, 1, 1], [], []>} : vector<16x32xbf16>, vector<32x128xbf16>, vector<16x128xf32> -> vector<16x128xf32>
    %32 = arith.addf %21, %31 : vector<16x128xf32>
    %c1_i32_13 = arith.constant 1 : i32
    %33 = tpu.dynamic_rotate %1 by %c1_i32_13 dim 1 : vector<32x128xf32>, i32 -> vector<32x128xf32>
    %c1_i32_14 = arith.constant 1 : i32
    %34 = vector.broadcast %c1_i32_14 : i32 to vector<1x128xi32>
    %35 = arith.cmpi sge, %4, %34 : vector<1x128xi32>
    %c1_i32_15 = arith.constant 1 : i32
    %36 = vector.broadcast %c1_i32_15 : i32 to vector<1x128xi32>
    %37 = arith.cmpi slt, %6, %36 : vector<1x128xi32>
    %38 = arith.andi %35, %37 : vector<1x128xi1>
    %cst_16 = arith.constant 0.000000e+00 : f32
    %39 = vector.shape_cast %38 : vector<1x128xi1> to vector<1x128xi1>
    %40 = vector.broadcast %39 : vector<1x128xi1> to vector<32x128xi1>
    %41 = vector.broadcast %cst_16 : f32 to vector<32x128xf32>
    %42 = arith.select %40, %33, %41 : vector<32x128xi1>, vector<32x128xf32>
    %c32 = arith.constant 32 : index
    %c0_17 = arith.constant 0 : index
    %43 = vector.load %arg2[%c32, %c0_17] : memref<144x32xbf16, #tpu.memory_space<vmem>>, vector<16x32xbf16>
    %44 = arith.truncf %42 : vector<32x128xf32> to vector<32x128xbf16>
    %cst_18 = arith.constant dense<0.000000e+00> : vector<16x128xf32>
    %45 = tpu.matmul %43, %44, %cst_18 {dimension_numbers = #tpu.dot_dimension_numbers<[1], [0], [0], [1], [0, 0, 1, 1], [], []>} : vector<16x32xbf16>, vector<32x128xbf16>, vector<16x128xf32> -> vector<16x128xf32>
    %46 = arith.addf %32, %45 : vector<16x128xf32>
    %c1_i32_19 = arith.constant 1 : i32
    %47 = tpu.dynamic_rotate %1 by %c1_i32_19 dim 1 : vector<32x128xf32>, i32 -> vector<32x128xf32>
    %c1_i32_20 = arith.constant 1 : i32
    %48 = vector.broadcast %c1_i32_20 : i32 to vector<1x128xi32>
    %49 = arith.cmpi sge, %6, %48 : vector<1x128xi32>
    %cst_21 = arith.constant 0.000000e+00 : f32
    %50 = vector.shape_cast %49 : vector<1x128xi1> to vector<1x128xi1>
    %51 = vector.broadcast %50 : vector<1x128xi1> to vector<32x128xi1>
    %52 = vector.broadcast %cst_21 : f32 to vector<32x128xf32>
    %53 = arith.select %51, %47, %52 : vector<32x128xi1>, vector<32x128xf32>
    %c48 = arith.constant 48 : index
    %c0_22 = arith.constant 0 : index
    %54 = vector.load %arg2[%c48, %c0_22] : memref<144x32xbf16, #tpu.memory_space<vmem>>, vector<16x32xbf16>
    %55 = arith.truncf %53 : vector<32x128xf32> to vector<32x128xbf16>
    %cst_23 = arith.constant dense<0.000000e+00> : vector<16x128xf32>
    %56 = tpu.matmul %54, %55, %cst_23 {dimension_numbers = #tpu.dot_dimension_numbers<[1], [0], [0], [1], [0, 0, 1, 1], [], []>} : vector<16x32xbf16>, vector<32x128xbf16>, vector<16x128xf32> -> vector<16x128xf32>
    %57 = arith.addf %46, %56 : vector<16x128xf32>
    %c64 = arith.constant 64 : index
    %c0_24 = arith.constant 0 : index
    %58 = vector.load %arg2[%c64, %c0_24] : memref<144x32xbf16, #tpu.memory_space<vmem>>, vector<16x32xbf16>
    %59 = arith.truncf %1 : vector<32x128xf32> to vector<32x128xbf16>
    %cst_25 = arith.constant dense<0.000000e+00> : vector<16x128xf32>
    %60 = tpu.matmul %58, %59, %cst_25 {dimension_numbers = #tpu.dot_dimension_numbers<[1], [0], [0], [1], [0, 0, 1, 1], [], []>} : vector<16x32xbf16>, vector<32x128xbf16>, vector<16x128xf32> -> vector<16x128xf32>
    %61 = arith.addf %57, %60 : vector<16x128xf32>
    %c127_i32 = arith.constant 127 : i32
    %62 = tpu.dynamic_rotate %1 by %c127_i32 dim 1 : vector<32x128xf32>, i32 -> vector<32x128xf32>
    %c1_i32_26 = arith.constant 1 : i32
    %63 = vector.broadcast %c1_i32_26 : i32 to vector<1x128xi32>
    %64 = arith.cmpi slt, %6, %63 : vector<1x128xi32>
    %cst_27 = arith.constant 0.000000e+00 : f32
    %65 = vector.shape_cast %64 : vector<1x128xi1> to vector<1x128xi1>
    %66 = vector.broadcast %65 : vector<1x128xi1> to vector<32x128xi1>
    %67 = vector.broadcast %cst_27 : f32 to vector<32x128xf32>
    %68 = arith.select %66, %62, %67 : vector<32x128xi1>, vector<32x128xf32>
    %c80 = arith.constant 80 : index
    %c0_28 = arith.constant 0 : index
    %69 = vector.load %arg2[%c80, %c0_28] : memref<144x32xbf16, #tpu.memory_space<vmem>>, vector<16x32xbf16>
    %70 = arith.truncf %68 : vector<32x128xf32> to vector<32x128xbf16>
    %cst_29 = arith.constant dense<0.000000e+00> : vector<16x128xf32>
    %71 = tpu.matmul %69, %70, %cst_29 {dimension_numbers = #tpu.dot_dimension_numbers<[1], [0], [0], [1], [0, 0, 1, 1], [], []>} : vector<16x32xbf16>, vector<32x128xbf16>, vector<16x128xf32> -> vector<16x128xf32>
    %72 = arith.addf %61, %71 : vector<16x128xf32>
    %c127_i32_30 = arith.constant 127 : i32
    %73 = tpu.dynamic_rotate %1 by %c127_i32_30 dim 1 : vector<32x128xf32>, i32 -> vector<32x128xf32>
    %c1_i32_31 = arith.constant 1 : i32
    %74 = vector.broadcast %c1_i32_31 : i32 to vector<1x128xi32>
    %75 = arith.cmpi slt, %4, %74 : vector<1x128xi32>
    %c1_i32_32 = arith.constant 1 : i32
    %76 = vector.broadcast %c1_i32_32 : i32 to vector<1x128xi32>
    %77 = arith.cmpi sge, %6, %76 : vector<1x128xi32>
    %78 = arith.andi %75, %77 : vector<1x128xi1>
    %cst_33 = arith.constant 0.000000e+00 : f32
    %79 = vector.shape_cast %78 : vector<1x128xi1> to vector<1x128xi1>
    %80 = vector.broadcast %79 : vector<1x128xi1> to vector<32x128xi1>
    %81 = vector.broadcast %cst_33 : f32 to vector<32x128xf32>
    %82 = arith.select %80, %73, %81 : vector<32x128xi1>, vector<32x128xf32>
    %c96 = arith.constant 96 : index
    %c0_34 = arith.constant 0 : index
    %83 = vector.load %arg2[%c96, %c0_34] : memref<144x32xbf16, #tpu.memory_space<vmem>>, vector<16x32xbf16>
    %84 = arith.truncf %82 : vector<32x128xf32> to vector<32x128xbf16>
    %cst_35 = arith.constant dense<0.000000e+00> : vector<16x128xf32>
    %85 = tpu.matmul %83, %84, %cst_35 {dimension_numbers = #tpu.dot_dimension_numbers<[1], [0], [0], [1], [0, 0, 1, 1], [], []>} : vector<16x32xbf16>, vector<32x128xbf16>, vector<16x128xf32> -> vector<16x128xf32>
    %86 = arith.addf %72, %85 : vector<16x128xf32>
    %c126_i32 = arith.constant 126 : i32
    %87 = tpu.dynamic_rotate %1 by %c126_i32 dim 1 : vector<32x128xf32>, i32 -> vector<32x128xf32>
    %c1_i32_36 = arith.constant 1 : i32
    %88 = vector.broadcast %c1_i32_36 : i32 to vector<1x128xi32>
    %89 = arith.cmpi slt, %4, %88 : vector<1x128xi32>
    %cst_37 = arith.constant 0.000000e+00 : f32
    %90 = vector.shape_cast %89 : vector<1x128xi1> to vector<1x128xi1>
    %91 = vector.broadcast %90 : vector<1x128xi1> to vector<32x128xi1>
    %92 = vector.broadcast %cst_37 : f32 to vector<32x128xf32>
    %93 = arith.select %91, %87, %92 : vector<32x128xi1>, vector<32x128xf32>
    %c112 = arith.constant 112 : index
    %c0_38 = arith.constant 0 : index
    %94 = vector.load %arg2[%c112, %c0_38] : memref<144x32xbf16, #tpu.memory_space<vmem>>, vector<16x32xbf16>
    %95 = arith.truncf %93 : vector<32x128xf32> to vector<32x128xbf16>
    %cst_39 = arith.constant dense<0.000000e+00> : vector<16x128xf32>
    %96 = tpu.matmul %94, %95, %cst_39 {dimension_numbers = #tpu.dot_dimension_numbers<[1], [0], [0], [1], [0, 0, 1, 1], [], []>} : vector<16x32xbf16>, vector<32x128xbf16>, vector<16x128xf32> -> vector<16x128xf32>
    %97 = arith.addf %86, %96 : vector<16x128xf32>
    %c125_i32 = arith.constant 125 : i32
    %98 = tpu.dynamic_rotate %1 by %c125_i32 dim 1 : vector<32x128xf32>, i32 -> vector<32x128xf32>
    %c1_i32_40 = arith.constant 1 : i32
    %99 = vector.broadcast %c1_i32_40 : i32 to vector<1x128xi32>
    %100 = arith.cmpi slt, %4, %99 : vector<1x128xi32>
    %c1_i32_41 = arith.constant 1 : i32
    %101 = vector.broadcast %c1_i32_41 : i32 to vector<1x128xi32>
    %102 = arith.cmpi slt, %6, %101 : vector<1x128xi32>
    %103 = arith.andi %100, %102 : vector<1x128xi1>
    %cst_42 = arith.constant 0.000000e+00 : f32
    %104 = vector.shape_cast %103 : vector<1x128xi1> to vector<1x128xi1>
    %105 = vector.broadcast %104 : vector<1x128xi1> to vector<32x128xi1>
    %106 = vector.broadcast %cst_42 : f32 to vector<32x128xf32>
    %107 = arith.select %105, %98, %106 : vector<32x128xi1>, vector<32x128xf32>
    %c128 = arith.constant 128 : index
    %c0_43 = arith.constant 0 : index
    %108 = vector.load %arg2[%c128, %c0_43] : memref<144x32xbf16, #tpu.memory_space<vmem>>, vector<16x32xbf16>
    %109 = arith.truncf %107 : vector<32x128xf32> to vector<32x128xbf16>
    %cst_44 = arith.constant dense<0.000000e+00> : vector<16x128xf32>
    %110 = tpu.matmul %108, %109, %cst_44 {dimension_numbers = #tpu.dot_dimension_numbers<[1], [0], [0], [1], [0, 0, 1, 1], [], []>} : vector<16x32xbf16>, vector<32x128xbf16>, vector<16x128xf32> -> vector<16x128xf32>
    %111 = arith.addf %97, %110 : vector<16x128xf32>
    %c0_45 = arith.constant 0 : index
    %c0_46 = arith.constant 0 : index
    %112 = vector.load %arg3[%c0_45, %c0_46] : memref<16x1xf32, #tpu.memory_space<vmem>>, vector<16x1xf32>
    %113 = vector.broadcast %112 : vector<16x1xf32> to vector<16x128xf32>
    %114 = arith.addf %111, %113 : vector<16x128xf32>
    %cst_47 = arith.constant 0.000000e+00 : f32
    %115 = vector.broadcast %cst_47 : f32 to vector<16x128xf32>
    %116 = arith.cmpf ogt, %114, %115 : vector<16x128xf32>
    %cst_48 = arith.constant 0.000000e+00 : f32
    %117 = vector.broadcast %cst_48 : f32 to vector<16x128xf32>
    %118 = arith.minimumf %114, %117 : vector<16x128xf32>
    %119 = math.exp %118 : vector<16x128xf32>
    %cst_49 = arith.constant 1.000000e+00 : f32
    %120 = vector.broadcast %cst_49 : f32 to vector<16x128xf32>
    %121 = arith.subf %119, %120 : vector<16x128xf32>
    %cst_50 = arith.constant 1.67326319 : f32
    %122 = vector.broadcast %cst_50 : f32 to vector<16x128xf32>
    %123 = arith.mulf %122, %121 : vector<16x128xf32>
    %124 = arith.select %116, %114, %123 : vector<16x128xi1>, vector<16x128xf32>
    %cst_51 = arith.constant 1.05070102 : f32
    %125 = vector.broadcast %cst_51 : f32 to vector<16x128xf32>
    %126 = arith.mulf %125, %124 : vector<16x128xf32>
    %cst_52 = arith.constant 0.000000e+00 : f32
    %127 = vector.broadcast %cst_52 : f32 to vector<16x128xf32>
    %c3_i32_53 = arith.constant 3 : i32
    %128 = tpu.dynamic_rotate %126 by %c3_i32_53 dim 1 : vector<16x128xf32>, i32 -> vector<16x128xf32>
    %c1_i32_54 = arith.constant 1 : i32
    %129 = vector.broadcast %c1_i32_54 : i32 to vector<1x128xi32>
    %130 = arith.cmpi sge, %4, %129 : vector<1x128xi32>
    %c1_i32_55 = arith.constant 1 : i32
    %131 = vector.broadcast %c1_i32_55 : i32 to vector<1x128xi32>
    %132 = arith.cmpi sge, %6, %131 : vector<1x128xi32>
    %133 = arith.andi %130, %132 : vector<1x128xi1>
    %cst_56 = arith.constant 0.000000e+00 : f32
    %134 = vector.shape_cast %133 : vector<1x128xi1> to vector<1x128xi1>
    %135 = vector.broadcast %134 : vector<1x128xi1> to vector<16x128xi1>
    %136 = vector.broadcast %cst_56 : f32 to vector<16x128xf32>
    %137 = arith.select %135, %128, %136 : vector<16x128xi1>, vector<16x128xf32>
    %c0_57 = arith.constant 0 : index
    %c0_58 = arith.constant 0 : index
    %138 = vector.load %arg4[%c0_57, %c0_58] : memref<144x16xbf16, #tpu.memory_space<vmem>>, vector<16x16xbf16>
    %139 = arith.truncf %137 : vector<16x128xf32> to vector<16x128xbf16>
    %cst_59 = arith.constant dense<0.000000e+00> : vector<16x128xf32>
    %140 = tpu.matmul %138, %139, %cst_59 {dimension_numbers = #tpu.dot_dimension_numbers<[1], [0], [0], [1], [0, 0, 1, 1], [], []>} : vector<16x16xbf16>, vector<16x128xbf16>, vector<16x128xf32> -> vector<16x128xf32>
    %141 = arith.addf %127, %140 : vector<16x128xf32>
    %c2_i32_60 = arith.constant 2 : i32
    %142 = tpu.dynamic_rotate %126 by %c2_i32_60 dim 1 : vector<16x128xf32>, i32 -> vector<16x128xf32>
    %c1_i32_61 = arith.constant 1 : i32
    %143 = vector.broadcast %c1_i32_61 : i32 to vector<1x128xi32>
    %144 = arith.cmpi sge, %4, %143 : vector<1x128xi32>
    %cst_62 = arith.constant 0.000000e+00 : f32
    %145 = vector.shape_cast %144 : vector<1x128xi1> to vector<1x128xi1>
    %146 = vector.broadcast %145 : vector<1x128xi1> to vector<16x128xi1>
    %147 = vector.broadcast %cst_62 : f32 to vector<16x128xf32>
    %148 = arith.select %146, %142, %147 : vector<16x128xi1>, vector<16x128xf32>
    %c16_63 = arith.constant 16 : index
    %c0_64 = arith.constant 0 : index
    %149 = vector.load %arg4[%c16_63, %c0_64] : memref<144x16xbf16, #tpu.memory_space<vmem>>, vector<16x16xbf16>
    %150 = arith.truncf %148 : vector<16x128xf32> to vector<16x128xbf16>
    %cst_65 = arith.constant dense<0.000000e+00> : vector<16x128xf32>
    %151 = tpu.matmul %149, %150, %cst_65 {dimension_numbers = #tpu.dot_dimension_numbers<[1], [0], [0], [1], [0, 0, 1, 1], [], []>} : vector<16x16xbf16>, vector<16x128xbf16>, vector<16x128xf32> -> vector<16x128xf32>
    %152 = arith.addf %141, %151 : vector<16x128xf32>
    %c1_i32_66 = arith.constant 1 : i32
    %153 = tpu.dynamic_rotate %126 by %c1_i32_66 dim 1 : vector<16x128xf32>, i32 -> vector<16x128xf32>
    %c1_i32_67 = arith.constant 1 : i32
    %154 = vector.broadcast %c1_i32_67 : i32 to vector<1x128xi32>
    %155 = arith.cmpi sge, %4, %154 : vector<1x128xi32>
    %c1_i32_68 = arith.constant 1 : i32
    %156 = vector.broadcast %c1_i32_68 : i32 to vector<1x128xi32>
    %157 = arith.cmpi slt, %6, %156 : vector<1x128xi32>
    %158 = arith.andi %155, %157 : vector<1x128xi1>
    %cst_69 = arith.constant 0.000000e+00 : f32
    %159 = vector.shape_cast %158 : vector<1x128xi1> to vector<1x128xi1>
    %160 = vector.broadcast %159 : vector<1x128xi1> to vector<16x128xi1>
    %161 = vector.broadcast %cst_69 : f32 to vector<16x128xf32>
    %162 = arith.select %160, %153, %161 : vector<16x128xi1>, vector<16x128xf32>
    %c32_70 = arith.constant 32 : index
    %c0_71 = arith.constant 0 : index
    %163 = vector.load %arg4[%c32_70, %c0_71] : memref<144x16xbf16, #tpu.memory_space<vmem>>, vector<16x16xbf16>
    %164 = arith.truncf %162 : vector<16x128xf32> to vector<16x128xbf16>
    %cst_72 = arith.constant dense<0.000000e+00> : vector<16x128xf32>
    %165 = tpu.matmul %163, %164, %cst_72 {dimension_numbers = #tpu.dot_dimension_numbers<[1], [0], [0], [1], [0, 0, 1, 1], [], []>} : vector<16x16xbf16>, vector<16x128xbf16>, vector<16x128xf32> -> vector<16x128xf32>
    %166 = arith.addf %152, %165 : vector<16x128xf32>
    %c1_i32_73 = arith.constant 1 : i32
    %167 = tpu.dynamic_rotate %126 by %c1_i32_73 dim 1 : vector<16x128xf32>, i32 -> vector<16x128xf32>
    %c1_i32_74 = arith.constant 1 : i32
    %168 = vector.broadcast %c1_i32_74 : i32 to vector<1x128xi32>
    %169 = arith.cmpi sge, %6, %168 : vector<1x128xi32>
    %cst_75 = arith.constant 0.000000e+00 : f32
    %170 = vector.shape_cast %169 : vector<1x128xi1> to vector<1x128xi1>
    %171 = vector.broadcast %170 : vector<1x128xi1> to vector<16x128xi1>
    %172 = vector.broadcast %cst_75 : f32 to vector<16x128xf32>
    %173 = arith.select %171, %167, %172 : vector<16x128xi1>, vector<16x128xf32>
    %c48_76 = arith.constant 48 : index
    %c0_77 = arith.constant 0 : index
    %174 = vector.load %arg4[%c48_76, %c0_77] : memref<144x16xbf16, #tpu.memory_space<vmem>>, vector<16x16xbf16>
    %175 = arith.truncf %173 : vector<16x128xf32> to vector<16x128xbf16>
    %cst_78 = arith.constant dense<0.000000e+00> : vector<16x128xf32>
    %176 = tpu.matmul %174, %175, %cst_78 {dimension_numbers = #tpu.dot_dimension_numbers<[1], [0], [0], [1], [0, 0, 1, 1], [], []>} : vector<16x16xbf16>, vector<16x128xbf16>, vector<16x128xf32> -> vector<16x128xf32>
    %177 = arith.addf %166, %176 : vector<16x128xf32>
    %c64_79 = arith.constant 64 : index
    %c0_80 = arith.constant 0 : index
    %178 = vector.load %arg4[%c64_79, %c0_80] : memref<144x16xbf16, #tpu.memory_space<vmem>>, vector<16x16xbf16>
    %179 = arith.truncf %126 : vector<16x128xf32> to vector<16x128xbf16>
    %cst_81 = arith.constant dense<0.000000e+00> : vector<16x128xf32>
    %180 = tpu.matmul %178, %179, %cst_81 {dimension_numbers = #tpu.dot_dimension_numbers<[1], [0], [0], [1], [0, 0, 1, 1], [], []>} : vector<16x16xbf16>, vector<16x128xbf16>, vector<16x128xf32> -> vector<16x128xf32>
    %181 = arith.addf %177, %180 : vector<16x128xf32>
    %c127_i32_82 = arith.constant 127 : i32
    %182 = tpu.dynamic_rotate %126 by %c127_i32_82 dim 1 : vector<16x128xf32>, i32 -> vector<16x128xf32>
    %c1_i32_83 = arith.constant 1 : i32
    %183 = vector.broadcast %c1_i32_83 : i32 to vector<1x128xi32>
    %184 = arith.cmpi slt, %6, %183 : vector<1x128xi32>
    %cst_84 = arith.constant 0.000000e+00 : f32
    %185 = vector.shape_cast %184 : vector<1x128xi1> to vector<1x128xi1>
    %186 = vector.broadcast %185 : vector<1x128xi1> to vector<16x128xi1>
    %187 = vector.broadcast %cst_84 : f32 to vector<16x128xf32>
    %188 = arith.select %186, %182, %187 : vector<16x128xi1>, vector<16x128xf32>
    %c80_85 = arith.constant 80 : index
    %c0_86 = arith.constant 0 : index
    %189 = vector.load %arg4[%c80_85, %c0_86] : memref<144x16xbf16, #tpu.memory_space<vmem>>, vector<16x16xbf16>
    %190 = arith.truncf %188 : vector<16x128xf32> to vector<16x128xbf16>
    %cst_87 = arith.constant dense<0.000000e+00> : vector<16x128xf32>
    %191 = tpu.matmul %189, %190, %cst_87 {dimension_numbers = #tpu.dot_dimension_numbers<[1], [0], [0], [1], [0, 0, 1, 1], [], []>} : vector<16x16xbf16>, vector<16x128xbf16>, vector<16x128xf32> -> vector<16x128xf32>
    %192 = arith.addf %181, %191 : vector<16x128xf32>
    %c127_i32_88 = arith.constant 127 : i32
    %193 = tpu.dynamic_rotate %126 by %c127_i32_88 dim 1 : vector<16x128xf32>, i32 -> vector<16x128xf32>
    %c1_i32_89 = arith.constant 1 : i32
    %194 = vector.broadcast %c1_i32_89 : i32 to vector<1x128xi32>
    %195 = arith.cmpi slt, %4, %194 : vector<1x128xi32>
    %c1_i32_90 = arith.constant 1 : i32
    %196 = vector.broadcast %c1_i32_90 : i32 to vector<1x128xi32>
    %197 = arith.cmpi sge, %6, %196 : vector<1x128xi32>
    %198 = arith.andi %195, %197 : vector<1x128xi1>
    %cst_91 = arith.constant 0.000000e+00 : f32
    %199 = vector.shape_cast %198 : vector<1x128xi1> to vector<1x128xi1>
    %200 = vector.broadcast %199 : vector<1x128xi1> to vector<16x128xi1>
    %201 = vector.broadcast %cst_91 : f32 to vector<16x128xf32>
    %202 = arith.select %200, %193, %201 : vector<16x128xi1>, vector<16x128xf32>
    %c96_92 = arith.constant 96 : index
    %c0_93 = arith.constant 0 : index
    %203 = vector.load %arg4[%c96_92, %c0_93] : memref<144x16xbf16, #tpu.memory_space<vmem>>, vector<16x16xbf16>
    %204 = arith.truncf %202 : vector<16x128xf32> to vector<16x128xbf16>
    %cst_94 = arith.constant dense<0.000000e+00> : vector<16x128xf32>
    %205 = tpu.matmul %203, %204, %cst_94 {dimension_numbers = #tpu.dot_dimension_numbers<[1], [0], [0], [1], [0, 0, 1, 1], [], []>} : vector<16x16xbf16>, vector<16x128xbf16>, vector<16x128xf32> -> vector<16x128xf32>
    %206 = arith.addf %192, %205 : vector<16x128xf32>
    %c126_i32_95 = arith.constant 126 : i32
    %207 = tpu.dynamic_rotate %126 by %c126_i32_95 dim 1 : vector<16x128xf32>, i32 -> vector<16x128xf32>
    %c1_i32_96 = arith.constant 1 : i32
    %208 = vector.broadcast %c1_i32_96 : i32 to vector<1x128xi32>
    %209 = arith.cmpi slt, %4, %208 : vector<1x128xi32>
    %cst_97 = arith.constant 0.000000e+00 : f32
    %210 = vector.shape_cast %209 : vector<1x128xi1> to vector<1x128xi1>
    %211 = vector.broadcast %210 : vector<1x128xi1> to vector<16x128xi1>
    %212 = vector.broadcast %cst_97 : f32 to vector<16x128xf32>
    %213 = arith.select %211, %207, %212 : vector<16x128xi1>, vector<16x128xf32>
    %c112_98 = arith.constant 112 : index
    %c0_99 = arith.constant 0 : index
    %214 = vector.load %arg4[%c112_98, %c0_99] : memref<144x16xbf16, #tpu.memory_space<vmem>>, vector<16x16xbf16>
    %215 = arith.truncf %213 : vector<16x128xf32> to vector<16x128xbf16>
    %cst_100 = arith.constant dense<0.000000e+00> : vector<16x128xf32>
    %216 = tpu.matmul %214, %215, %cst_100 {dimension_numbers = #tpu.dot_dimension_numbers<[1], [0], [0], [1], [0, 0, 1, 1], [], []>} : vector<16x16xbf16>, vector<16x128xbf16>, vector<16x128xf32> -> vector<16x128xf32>
    %217 = arith.addf %206, %216 : vector<16x128xf32>
    %c125_i32_101 = arith.constant 125 : i32
    %218 = tpu.dynamic_rotate %126 by %c125_i32_101 dim 1 : vector<16x128xf32>, i32 -> vector<16x128xf32>
    %c1_i32_102 = arith.constant 1 : i32
    %219 = vector.broadcast %c1_i32_102 : i32 to vector<1x128xi32>
    %220 = arith.cmpi slt, %4, %219 : vector<1x128xi32>
    %c1_i32_103 = arith.constant 1 : i32
    %221 = vector.broadcast %c1_i32_103 : i32 to vector<1x128xi32>
    %222 = arith.cmpi slt, %6, %221 : vector<1x128xi32>
    %223 = arith.andi %220, %222 : vector<1x128xi1>
    %cst_104 = arith.constant 0.000000e+00 : f32
    %224 = vector.shape_cast %223 : vector<1x128xi1> to vector<1x128xi1>
    %225 = vector.broadcast %224 : vector<1x128xi1> to vector<16x128xi1>
    %226 = vector.broadcast %cst_104 : f32 to vector<16x128xf32>
    %227 = arith.select %225, %218, %226 : vector<16x128xi1>, vector<16x128xf32>
    %c128_105 = arith.constant 128 : index
    %c0_106 = arith.constant 0 : index
    %228 = vector.load %arg4[%c128_105, %c0_106] : memref<144x16xbf16, #tpu.memory_space<vmem>>, vector<16x16xbf16>
    %229 = arith.truncf %227 : vector<16x128xf32> to vector<16x128xbf16>
    %cst_107 = arith.constant dense<0.000000e+00> : vector<16x128xf32>
    %230 = tpu.matmul %228, %229, %cst_107 {dimension_numbers = #tpu.dot_dimension_numbers<[1], [0], [0], [1], [0, 0, 1, 1], [], []>} : vector<16x16xbf16>, vector<16x128xbf16>, vector<16x128xf32> -> vector<16x128xf32>
    %231 = arith.addf %217, %230 : vector<16x128xf32>
    %c0_108 = arith.constant 0 : index
    %c0_109 = arith.constant 0 : index
    %232 = vector.load %arg5[%c0_108, %c0_109] : memref<16x1xf32, #tpu.memory_space<vmem>>, vector<16x1xf32>
    %233 = vector.broadcast %232 : vector<16x1xf32> to vector<16x128xf32>
    %234 = arith.addf %231, %233 : vector<16x128xf32>
    %c0_110 = arith.constant 0 : index
    %c0_111 = arith.constant 0 : index
    %235 = vector.load %arg6[%c0_110, %c0_111] : memref<16x32xbf16, #tpu.memory_space<vmem>>, vector<16x32xbf16>
    %236 = arith.truncf %1 : vector<32x128xf32> to vector<32x128xbf16>
    %cst_112 = arith.constant dense<0.000000e+00> : vector<16x128xf32>
    %237 = tpu.matmul %235, %236, %cst_112 {dimension_numbers = #tpu.dot_dimension_numbers<[1], [0], [0], [1], [0, 0, 1, 1], [], []>} : vector<16x32xbf16>, vector<32x128xbf16>, vector<16x128xf32> -> vector<16x128xf32>
    %238 = arith.addf %234, %237 : vector<16x128xf32>
    %c0_113 = arith.constant 0 : index
    %c0_114 = arith.constant 0 : index
    %239 = vector.load %arg7[%c0_113, %c0_114] : memref<16x1xf32, #tpu.memory_space<vmem>>, vector<16x1xf32>
    %240 = vector.broadcast %239 : vector<16x1xf32> to vector<16x128xf32>
    %241 = arith.addf %238, %240 : vector<16x128xf32>
    %242 = tpu.iota {dimensions = array<i32: 1>} : vector<1x128xi32>
    %c4_i32 = arith.constant 4 : i32
    %243 = vector.broadcast %c4_i32 : i32 to vector<1x128xi32>
    %244 = arith.cmpi slt, %242, %243 : vector<1x128xi32>
    %cst_115 = arith.constant 0.000000e+00 : f32
    %245 = vector.shape_cast %244 : vector<1x128xi1> to vector<1x128xi1>
    %246 = vector.broadcast %245 : vector<1x128xi1> to vector<16x128xi1>
    %247 = vector.broadcast %cst_115 : f32 to vector<16x128xf32>
    %248 = arith.select %246, %241, %247 : vector<16x128xi1>, vector<16x128xf32>
    %c0_116 = arith.constant 0 : index
    %c0_117 = arith.constant 0 : index
    %c0_118 = arith.constant 0 : index
    %249 = vector.load %arg8[%c0_116, %c0_117, %c0_118] : memref<1x16x128xf32, #tpu.memory_space<vmem>>, vector<1x16x128xf32>
    %250 = vector.shape_cast %249 : vector<1x16x128xf32> to vector<16x128xf32>
    %251 = vector.shape_cast %248 : vector<16x128xf32> to vector<1x16x128xf32>
    tpu.vector_store %arg8[%c0_116, %c0_117, %c0_118], %251 {strides = array<i32>} : memref<1x16x128xf32, #tpu.memory_space<vmem>>, vector<1x16x128xf32>,
    return
  }
  func.func @transform_0(%arg0: i32) -> (i32, i32, i32) {
    %c0_i32 = arith.constant 0 : i32
    %c0_i32_0 = arith.constant 0 : i32
    %c0_i32_1 = arith.constant 0 : i32
    return %arg0, %c0_i32, %c0_i32_0 : i32, i32, i32
  }
  func.func @transform_1(%arg0: i32) -> (i32, i32) {
    %c0_i32 = arith.constant 0 : i32
    %c0_i32_0 = arith.constant 0 : i32
    %c0_i32_1 = arith.constant 0 : i32
    return %c0_i32, %c0_i32_0 : i32, i32
  }
  func.func @transform_2(%arg0: i32) -> (i32, i32) {
    %c0_i32 = arith.constant 0 : i32
    %c0_i32_0 = arith.constant 0 : i32
    %c0_i32_1 = arith.constant 0 : i32
    return %c0_i32, %c0_i32_0 : i32, i32
  }
  func.func @transform_3(%arg0: i32) -> (i32, i32) {
    %c0_i32 = arith.constant 0 : i32
    %c0_i32_0 = arith.constant 0 : i32
    %c0_i32_1 = arith.constant 0 : i32
    return %c0_i32, %c0_i32_0 : i32, i32
  }
  func.func @transform_4(%arg0: i32) -> (i32, i32) {
    %c0_i32 = arith.constant 0 : i32
    %c0_i32_0 = arith.constant 0 : i32
    %c0_i32_1 = arith.constant 0 : i32
    return %c0_i32, %c0_i32_0 : i32, i32
  }
  func.func @transform_5(%arg0: i32) -> (i32, i32) {
    %c0_i32 = arith.constant 0 : i32
    %c0_i32_0 = arith.constant 0 : i32
    %c0_i32_1 = arith.constant 0 : i32
    return %c0_i32, %c0_i32_0 : i32, i32
  }
  func.func @transform_6(%arg0: i32) -> (i32, i32) {
    %c0_i32 = arith.constant 0 : i32
    %c0_i32_0 = arith.constant 0 : i32
    %c0_i32_1 = arith.constant 0 : i32
    return %c0_i32, %c0_i32_0 : i32, i32
  }
  func.func @transform_7(%arg0: i32) -> (i32, i32, i32) {
    %c0_i32 = arith.constant 0 : i32
    %c0_i32_0 = arith.constant 0 : i32
    %c0_i32_1 = arith.constant 0 : i32
    return %arg0, %c0_i32, %c0_i32_0 : i32, i32, i32
  }
}

module attributes {stable_mosaic.version = 11 : i64} {
  func.func @_mlp_kernel(%arg0: i32, %arg1: memref<4x2048xf32, #tpu.memory_space<vmem>>, %arg2: memref<2048x32xbf16, #tpu.memory_space<vmem>>, %arg3: memref<1x32xf32, #tpu.memory_space<vmem>>, %arg4: memref<32x16xbf16, #tpu.memory_space<vmem>>, %arg5: memref<1x16xf32, #tpu.memory_space<vmem>>, %arg6: memref<4x16xf32, #tpu.memory_space<vmem>>) attributes {dimension_semantics = [#tpu.dimension_semantics<arbitrary>], iteration_bounds = array<i64: 1>, scalar_prefetch = 0 : i64, scratch_operands = 0 : i64, tpu.core_type = #tpu.core_type<tc>, window_params = [{pipeline_mode = #tpu.pipeline_mode<synchronous>, transform_indices = @transform_0, window_bounds = array<i64: 4, 2048>}, {pipeline_mode = #tpu.pipeline_mode<synchronous>, transform_indices = @transform_1, window_bounds = array<i64: 2048, 32>}, {pipeline_mode = #tpu.pipeline_mode<synchronous>, transform_indices = @transform_2, window_bounds = array<i64: 1, 32>}, {pipeline_mode = #tpu.pipeline_mode<synchronous>, transform_indices = @transform_3, window_bounds = array<i64: 32, 16>}, {pipeline_mode = #tpu.pipeline_mode<synchronous>, transform_indices = @transform_4, window_bounds = array<i64: 1, 16>}, {pipeline_mode = #tpu.pipeline_mode<synchronous>, transform_indices = @transform_5, window_bounds = array<i64: 4, 16>}]} {
    %c0 = arith.constant 0 : index
    %c0_0 = arith.constant 0 : index
    %0 = vector.load %arg1[%c0, %c0_0] : memref<4x2048xf32, #tpu.memory_space<vmem>>, vector<4x2048xf32>
    %1 = arith.truncf %0 : vector<4x2048xf32> to vector<4x2048xbf16>
    %c0_1 = arith.constant 0 : index
    %c0_2 = arith.constant 0 : index
    %2 = vector.load %arg2[%c0_1, %c0_2] : memref<2048x32xbf16, #tpu.memory_space<vmem>>, vector<2048x32xbf16>
    %cst = arith.constant dense<0.000000e+00> : vector<4x32xf32>
    %3 = tpu.matmul %1, %2, %cst {dimension_numbers = #tpu.dot_dimension_numbers<[1], [0], [0], [1], [0, 0, 1, 1], [], []>} : vector<4x2048xbf16>, vector<2048x32xbf16>, vector<4x32xf32> -> vector<4x32xf32>
    %c0_3 = arith.constant 0 : index
    %c0_4 = arith.constant 0 : index
    %4 = vector.load %arg3[%c0_3, %c0_4] : memref<1x32xf32, #tpu.memory_space<vmem>>, vector<1x32xf32>
    %5 = vector.broadcast %4 : vector<1x32xf32> to vector<4x32xf32>
    %6 = arith.addf %3, %5 : vector<4x32xf32>
    %cst_5 = arith.constant 0.000000e+00 : f32
    %7 = vector.broadcast %cst_5 : f32 to vector<4x32xf32>
    %8 = arith.cmpf ogt, %6, %7 : vector<4x32xf32>
    %cst_6 = arith.constant 0.000000e+00 : f32
    %9 = vector.broadcast %cst_6 : f32 to vector<4x32xf32>
    %10 = arith.minimumf %6, %9 : vector<4x32xf32>
    %11 = math.exp %10 : vector<4x32xf32>
    %cst_7 = arith.constant 1.000000e+00 : f32
    %12 = vector.broadcast %cst_7 : f32 to vector<4x32xf32>
    %13 = arith.subf %11, %12 : vector<4x32xf32>
    %cst_8 = arith.constant 1.67326319 : f32
    %14 = vector.broadcast %cst_8 : f32 to vector<4x32xf32>
    %15 = arith.mulf %14, %13 : vector<4x32xf32>
    %16 = arith.select %8, %6, %15 : vector<4x32xi1>, vector<4x32xf32>
    %cst_9 = arith.constant 1.05070102 : f32
    %17 = vector.broadcast %cst_9 : f32 to vector<4x32xf32>
    %18 = arith.mulf %17, %16 : vector<4x32xf32>
    %19 = arith.truncf %18 : vector<4x32xf32> to vector<4x32xbf16>
    %c0_10 = arith.constant 0 : index
    %c0_11 = arith.constant 0 : index
    %20 = vector.load %arg4[%c0_10, %c0_11] : memref<32x16xbf16, #tpu.memory_space<vmem>>, vector<32x16xbf16>
    %cst_12 = arith.constant dense<0.000000e+00> : vector<4x16xf32>
    %21 = tpu.matmul %19, %20, %cst_12 {dimension_numbers = #tpu.dot_dimension_numbers<[1], [0], [0], [1], [0, 0, 1, 1], [], []>} : vector<4x32xbf16>, vector<32x16xbf16>, vector<4x16xf32> -> vector<4x16xf32>
    %c0_13 = arith.constant 0 : index
    %c0_14 = arith.constant 0 : index
    %22 = vector.load %arg5[%c0_13, %c0_14] : memref<1x16xf32, #tpu.memory_space<vmem>>, vector<1x16xf32>
    %23 = vector.broadcast %22 : vector<1x16xf32> to vector<4x16xf32>
    %24 = arith.addf %21, %23 : vector<4x16xf32>
    %c0_15 = arith.constant 0 : index
    %c0_16 = arith.constant 0 : index
    %25 = vector.load %arg6[%c0_15, %c0_16] : memref<4x16xf32, #tpu.memory_space<vmem>>, vector<4x16xf32>
    tpu.vector_store %arg6[%c0_15, %c0_16], %24 {strides = array<i32>} : memref<4x16xf32, #tpu.memory_space<vmem>>, vector<4x16xf32>,
    return
  }
  func.func @transform_0(%arg0: i32) -> (i32, i32) {
    %c0_i32 = arith.constant 0 : i32
    %c0_i32_0 = arith.constant 0 : i32
    %c0_i32_1 = arith.constant 0 : i32
    return %c0_i32, %c0_i32_0 : i32, i32
  }
  func.func @transform_1(%arg0: i32) -> (i32, i32) {
    %c0_i32 = arith.constant 0 : i32
    %c0_i32_0 = arith.constant 0 : i32
    %c0_i32_1 = arith.constant 0 : i32
    return %c0_i32, %c0_i32_0 : i32, i32
  }
  func.func @transform_2(%arg0: i32) -> (i32, i32) {
    %c0_i32 = arith.constant 0 : i32
    %c0_i32_0 = arith.constant 0 : i32
    %c0_i32_1 = arith.constant 0 : i32
    return %c0_i32, %c0_i32_0 : i32, i32
  }
  func.func @transform_3(%arg0: i32) -> (i32, i32) {
    %c0_i32 = arith.constant 0 : i32
    %c0_i32_0 = arith.constant 0 : i32
    %c0_i32_1 = arith.constant 0 : i32
    return %c0_i32, %c0_i32_0 : i32, i32
  }
  func.func @transform_4(%arg0: i32) -> (i32, i32) {
    %c0_i32 = arith.constant 0 : i32
    %c0_i32_0 = arith.constant 0 : i32
    %c0_i32_1 = arith.constant 0 : i32
    return %c0_i32, %c0_i32_0 : i32, i32
  }
  func.func @transform_5(%arg0: i32) -> (i32, i32) {
    %c0_i32 = arith.constant 0 : i32
    %c0_i32_0 = arith.constant 0 : i32
    %c0_i32_1 = arith.constant 0 : i32
    return %c0_i32, %c0_i32_0 : i32, i32
  }
}

</mosaic_0001>

<llo_original>
// kernel: encoder_forward.8
$region0: #{encoder_forward.8}
  #allocation0 [shape = 'u32[]', space=smem, size = 0x4, offset = 0x4, fixed_abs, tag = 'smem constant byte address 0x4 - core index']
  #allocation1 [shape = 'u32[144,128]{1,0:T(1,128)}', space=vmem, size = 0x12000, scoped, tag = 'internal scratch']
  %s0 = inlined_call_operand.vmem [shape: f32[4,32,128], index: 0, kind: input, shape index: {}]
  %s1 = inlined_call_operand.vmem [shape: bf16[144,32], index: 1, kind: input, shape index: {}]
  %s2 = inlined_call_operand.vmem [shape: f32[16,1], index: 2, kind: input, shape index: {}]
  %s3 = inlined_call_operand.vmem [shape: bf16[144,16], index: 3, kind: input, shape index: {}]
  %s4 = inlined_call_operand.vmem [shape: f32[16,1], index: 4, kind: input, shape index: {}]
  %s5 = inlined_call_operand.vmem [shape: bf16[16,32], index: 5, kind: input, shape index: {}]
  %s6 = inlined_call_operand.vmem [shape: f32[16,1], index: 6, kind: input, shape index: {}]
  %s7 = inlined_call_operand.vmem [shape: f32[4,16,128], index: 7, kind: output, shape index: {}]
  %s8 = sld [smem:[#allocation0]]
  $region61: #{encoder_forward.8} parent=0
    _
  %s10 = ssub.s32 1, %s8
  %s11 = scalar_select 0, %s10, %s8
  loop: start=0, step=1, limit=6
  $region2: #{encoder_forward.8} parent=0 // loop_pre_header
    _
  $region3: #{encoder_forward.8} parent=0 // loop_header
    %s13 = sphi 0, %s17
    %p14 = scmp.ge.s32.totalorder %s13, 6
    %s23 = sphi 0, %s25
    %s26 = sphi 0, %s23
    %s27 = sphi 0, %s26
    %s43 = sphi 0, %s27
    %s47 = sphi 0, %s47
    %s49 = sphi 0, %s47
    %s50 = sphi 0, %s49
    %s64 = sphi 0, %s50
    %s68 = sphi 0, %s68
    %s70 = sphi 0, %s68
    %s71 = sphi 0, %s70
    %s85 = sphi 0, %s71
    %s89 = sphi 0, %s89
    %s91 = sphi 0, %s89
    %s92 = sphi 0, %s91
    %s106 = sphi 0, %s92
    %s110 = sphi 0, %s110
    %s112 = sphi 0, %s110
    %s113 = sphi 0, %s112
    %s127 = sphi 0, %s113
    %s131 = sphi 0, %s131
    %s133 = sphi 0, %s131
    %s134 = sphi 0, %s133
    %s148 = sphi 0, %s134
    %s152 = sphi 0, %s152
    %s154 = sphi 0, %s152
    %s155 = sphi 0, %s154
    %s169 = sphi 0, %s155
    %s175 = sphi 0, %s177
    %s178 = sphi 0, %s175
    %s179 = sphi 0, %s178
    %s195 = sphi 0, %s179
  $region4: #{encoder_forward.8} parent=0 // loop_header_branch
    %16 = sbr.rel (%p14) target = $region8
  $region5: #{encoder_forward.8} parent=0 // loop_body
    %s18 = ssub.s32 %s13, 1
    %s19 = ssub.s32 %s13, 2
    %s20 = sadd.s32 %s13, 1
    %s21 = ssub.s32 %s13, %s20
    %p22 = scmp.eq.s32.totalorder %s21, 0
    %s24 = sadd.s32 %s23, 1
    %s25 = scalar_select %p22, %s23, %s24
    %p28 = pneg %p22
    %p29 = scmp.eq.s32.totalorder %s13, 3
    %p30 = por %p28, %p29
    %p31 = scmp.ne.s32.totalorder %s23, %s26
    %p32 = scmp.eq.s32.totalorder %s13, 0
    %p33 = por %p31, %p32
    %p34 = scmp.ne.s32.totalorder %s23, %s26
    %p35 = scmp.eq.s32.totalorder %s18, 3
    %p36 = por %p34, %p35
    %p37 = scmp.ne.s32.totalorder %s26, %s27
    %p38 = scmp.eq.s32.totalorder %s18, 0
    %p39 = por %p37, %p38
    %p40 = scmp.ne.s32.totalorder %s26, %s27
    %p41 = scmp.eq.s32.totalorder %s19, 3
    %p42 = por %p40, %p41
    %p44 = scmp.ne.s32.totalorder %s27, %s43
    %p45 = scmp.eq.s32.totalorder %s19, 0
    %p46 = por %p44, %p45
    %s48 = sadd.s32 %s47, 1
    %p51 = scmp.eq.s32.totalorder %s13, 3
    %p52 = scmp.ne.s32.totalorder %s47, %s49
    %p53 = scmp.eq.s32.totalorder %s13, 0
    %p54 = por %p52, %p53
    %p55 = scmp.ne.s32.totalorder %s47, %s49
    %p56 = scmp.eq.s32.totalorder %s18, 3
    %p57 = por %p55, %p56
    %p58 = scmp.ne.s32.totalorder %s49, %s50
    %p59 = scmp.eq.s32.totalorder %s18, 0
    %p60 = por %p58, %p59
    %p61 = scmp.ne.s32.totalorder %s49, %s50
    %p62 = scmp.eq.s32.totalorder %s19, 3
    %p63 = por %p61, %p62
    %p65 = scmp.ne.s32.totalorder %s50, %s64
    %p66 = scmp.eq.s32.totalorder %s19, 0
    %p67 = por %p65, %p66
    %s69 = sadd.s32 %s68, 1
    %p72 = scmp.eq.s32.totalorder %s13, 3
    %p73 = scmp.ne.s32.totalorder %s68, %s70
    %p74 = scmp.eq.s32.totalorder %s13, 0
    %p75 = por %p73, %p74
    %p76 = scmp.ne.s32.totalorder %s68, %s70
    %p77 = scmp.eq.s32.totalorder %s18, 3
    %p78 = por %p76, %p77
    %p79 = scmp.ne.s32.totalorder %s70, %s71
    %p80 = scmp.eq.s32.totalorder %s18, 0
    %p81 = por %p79, %p80
    %p82 = scmp.ne.s32.totalorder %s70, %s71
    %p83 = scmp.eq.s32.totalorder %s19, 3
    %p84 = por %p82, %p83
    %p86 = scmp.ne.s32.totalorder %s71, %s85
    %p87 = scmp.eq.s32.totalorder %s19, 0
    %p88 = por %p86, %p87
    %s90 = sadd.s32 %s89, 1
    %p93 = scmp.eq.s32.totalorder %s13, 3
    %p94 = scmp.ne.s32.totalorder %s89, %s91
    %p95 = scmp.eq.s32.totalorder %s13, 0
    %p96 = por %p94, %p95
    %p97 = scmp.ne.s32.totalorder %s89, %s91
    %p98 = scmp.eq.s32.totalorder %s18, 3
    %p99 = por %p97, %p98
    %p100 = scmp.ne.s32.totalorder %s91, %s92
    %p101 = scmp.eq.s32.totalorder %s18, 0
    %p102 = por %p100, %p101
    %p103 = scmp.ne.s32.totalorder %s91, %s92
    %p104 = scmp.eq.s32.totalorder %s19, 3
    %p105 = por %p103, %p104
    %p107 = scmp.ne.s32.totalorder %s92, %s106
    %p108 = scmp.eq.s32.totalorder %s19, 0
    %p109 = por %p107, %p108
    %s111 = sadd.s32 %s110, 1
    %p114 = scmp.eq.s32.totalorder %s13, 3
    %p115 = scmp.ne.s32.totalorder %s110, %s112
    %p116 = scmp.eq.s32.totalorder %s13, 0
    %p117 = por %p115, %p116
    %p118 = scmp.ne.s32.totalorder %s110, %s112
    %p119 = scmp.eq.s32.totalorder %s18, 3
    %p120 = por %p118, %p119
    %p121 = scmp.ne.s32.totalorder %s112, %s113
    %p122 = scmp.eq.s32.totalorder %s18, 0
    %p123 = por %p121, %p122
    %p124 = scmp.ne.s32.totalorder %s112, %s113
    %p125 = scmp.eq.s32.totalorder %s19, 3
    %p126 = por %p124, %p125
    %p128 = scmp.ne.s32.totalorder %s113, %s127
    %p129 = scmp.eq.s32.totalorder %s19, 0
    %p130 = por %p128, %p129
    %s132 = sadd.s32 %s131, 1
    %p135 = scmp.eq.s32.totalorder %s13, 3
    %p136 = scmp.ne.s32.totalorder %s131, %s133
    %p137 = scmp.eq.s32.totalorder %s13, 0
    %p138 = por %p136, %p137
    %p139 = scmp.ne.s32.totalorder %s131, %s133
    %p140 = scmp.eq.s32.totalorder %s18, 3
    %p141 = por %p139, %p140
    %p142 = scmp.ne.s32.totalorder %s133, %s134
    %p143 = scmp.eq.s32.totalorder %s18, 0
    %p144 = por %p142, %p143
    %p145 = scmp.ne.s32.totalorder %s133, %s134
    %p146 = scmp.eq.s32.totalorder %s19, 3
    %p147 = por %p145, %p146
    %p149 = scmp.ne.s32.totalorder %s134, %s148
    %p150 = scmp.eq.s32.totalorder %s19, 0
    %p151 = por %p149, %p150
    %s153 = sadd.s32 %s152, 1
    %p156 = scmp.eq.s32.totalorder %s13, 3
    %p157 = scmp.ne.s32.totalorder %s152, %s154
    %p158 = scmp.eq.s32.totalorder %s13, 0
    %p159 = por %p157, %p158
    %p160 = scmp.ne.s32.totalorder %s152, %s154
    %p161 = scmp.eq.s32.totalorder %s18, 3
    %p162 = por %p160, %p161
    %p163 = scmp.ne.s32.totalorder %s154, %s155
    %p164 = scmp.eq.s32.totalorder %s18, 0
    %p165 = por %p163, %p164
    %p166 = scmp.ne.s32.totalorder %s154, %s155
    %p167 = scmp.eq.s32.totalorder %s19, 3
    %p168 = por %p166, %p167
    %p170 = scmp.ne.s32.totalorder %s155, %s169
    %p171 = scmp.eq.s32.totalorder %s19, 0
    %p172 = por %p170, %p171
    %s173 = ssub.s32 %s13, %s20
    %p174 = scmp.eq.s32.totalorder %s173, 0
    %s176 = sadd.s32 %s175, 1
    %s177 = scalar_select %p174, %s175, %s176
    %p180 = pneg %p174
    %p181 = scmp.eq.s32.totalorder %s13, 3
    %p182 = por %p180, %p181
    %p183 = scmp.ne.s32.totalorder %s175, %s178
    %p184 = scmp.eq.s32.totalorder %s13, 0
    %p185 = por %p183, %p184
    %p186 = scmp.ne.s32.totalorder %s175, %s178
    %p187 = scmp.eq.s32.totalorder %s18, 3
    %p188 = por %p186, %p187
    %p189 = scmp.ne.s32.totalorder %s178, %s179
    %p190 = scmp.eq.s32.totalorder %s18, 0
    %p191 = por %p189, %p190
    %p192 = scmp.ne.s32.totalorder %s178, %s179
    %p193 = scmp.eq.s32.totalorder %s19, 3
    %p194 = por %p192, %p193
    %p196 = scmp.ne.s32.totalorder %s179, %s195
    %p197 = scmp.eq.s32.totalorder %s19, 0
    %p198 = por %p196, %p197
    %p199 = scmp.le.s32.totalorder 1, %s13
    %p200 = scmp.lt.s32.totalorder %s13, 5
    %p201 = pnand %p199, %p200
    %p202 = pneg %p201
    // Predicated region
    $region9: #{encoder_forward.8} parent=5 // pred_check
      _
    $region10: #{encoder_forward.8} parent=5 // pred_check_branch
      %204 = sbr.rel (%p201) target = $region12
    $region11: #{encoder_forward.8} parent=5 // pred_region
      %s205 = ssub.s32 %s13, 1
      // Predicated region
      $region13: #{encoder_forward.8} parent=11 // pred_check
        %p206 = pneg %p60
      $region14: #{encoder_forward.8} parent=11 // pred_check_branch
        %208 = sbr.rel (%p206) target = $region16
      $region15: #{encoder_forward.8} parent=11 // pred_region
        _
      $region16: #{encoder_forward.8} parent=11 // pred_fallthru
        _
      // Predicated region
      $region17: #{encoder_forward.8} parent=11 // pred_check
        %p209 = pneg %p81
      $region18: #{encoder_forward.8} parent=11 // pred_check_branch
        %211 = sbr.rel (%p209) target = $region20
      $region19: #{encoder_forward.8} parent=11 // pred_region
        _
      $region20: #{encoder_forward.8} parent=11 // pred_fallthru
        _
      // Predicated region
      $region21: #{encoder_forward.8} parent=11 // pred_check
        %p212 = pneg %p102
      $region22: #{encoder_forward.8} parent=11 // pred_check_branch
        %214 = sbr.rel (%p212) target = $region24
      $region23: #{encoder_forward.8} parent=11 // pred_region
        _
      $region24: #{encoder_forward.8} parent=11 // pred_fallthru
        _
      // Predicated region
      $region25: #{encoder_forward.8} parent=11 // pred_check
        %p215 = pneg %p123
      $region26: #{encoder_forward.8} parent=11 // pred_check_branch
        %217 = sbr.rel (%p215) target = $region28
      $region27: #{encoder_forward.8} parent=11 // pred_region
        _
      $region28: #{encoder_forward.8} parent=11 // pred_fallthru
        _
      // Predicated region
      $region29: #{encoder_forward.8} parent=11 // pred_check
        %p218 = pneg %p144
      $region30: #{encoder_forward.8} parent=11 // pred_check_branch
        %220 = sbr.rel (%p218) target = $region32
      $region31: #{encoder_forward.8} parent=11 // pred_region
        _
      $region32: #{encoder_forward.8} parent=11 // pred_fallthru
        _
      // Predicated region
      $region33: #{encoder_forward.8} parent=11 // pred_check
        %p221 = pneg %p165
      $region34: #{encoder_forward.8} parent=11 // pred_check_branch
        %223 = sbr.rel (%p221) target = $region36
      $region35: #{encoder_forward.8} parent=11 // pred_region
        _
      $region36: #{encoder_forward.8} parent=11 // pred_fallthru
        _
    $region12: #{encoder_forward.8} parent=5 // pred_fallthru
      _
    %p224 = scmp.lt.s32.totalorder %s13, 4
    // Predicated region
    $region37: #{encoder_forward.8} parent=5 // pred_check
      %p225 = pneg %p224
    $region38: #{encoder_forward.8} parent=5 // pred_check_branch
      %227 = sbr.rel (%p225) target = $region40
    $region39: #{encoder_forward.8} parent=5 // pred_region
      // Predicated region
      $region41: #{encoder_forward.8} parent=39 // pred_check
        %p228 = pneg %p33
      $region42: #{encoder_forward.8} parent=39 // pred_check_branch
        %230 = sbr.rel (%p228) target = $region44
      $region43: #{encoder_forward.8} parent=39 // pred_region
        %p231 = scmp.lt.s32.totalorder %s13, 3
        %s232 = scalar_select %p231, %s13, 3
        %s233 = smul.addr %s232, 4
        %s234 = smul.addr %s233, 8
        %s235 = scalar_lea.vmem %s0, %s234
      $region44: #{encoder_forward.8} parent=39 // pred_fallthru
        _
    $region40: #{encoder_forward.8} parent=5 // pred_fallthru
      _
    %p236 = scmp.le.s32.totalorder 1, %s13
    %p237 = scmp.lt.s32.totalorder %s13, 5
    %p238 = pnand %p236, %p237
    %p239 = pneg %p238
    // Predicated region
    $region45: #{encoder_forward.8} parent=5 // pred_check
      _
    $region46: #{encoder_forward.8} parent=5 // pred_check_branch
      %241 = sbr.rel (%p238) target = $region48
    $region47: #{encoder_forward.8} parent=5 // pred_region
      %s242 = ssub.s32 %s13, 1
      %p243 = scmp.lt.s32.totalorder %s18, 3
      %s244 = scalar_select %p243, %s18, 3
      %s245 = smul.addr %s244, 4
      %s246 = smul.addr %s245, 8
      %s247 = scalar_lea.vmem %s0, %s246
      %p248 = pneg %p39
      %p249 = pneg %p36
      %p250 = pneg %p60
      %p251 = pneg %p57
      %p252 = pneg %p81
      %p253 = pneg %p78
      %p254 = pneg %p102
      %p255 = pneg %p99
      %p256 = pneg %p123
      %p257 = pneg %p120
      %p258 = pneg %p144
      %p259 = pneg %p141
      %p260 = pneg %p165
      %p261 = pneg %p162
      %p262 = pneg %p191
      %p263 = pneg %p188
      %p264 = scmp.lt.s32.totalorder %s18, 3
      %s265 = scalar_select %p264, %s18, 3
      %s266 = smul.addr %s265, 2
      %s267 = smul.addr %s266, 8
      %s268 = scalar_lea.vmem %s7, %s267
      %p269 = scmp.lt.s32.totalorder %s18, 3
      %s270 = scalar_select %p269, %s18, 3
      %s271 = smul.addr %s270, 4
      %s272 = smul.addr %s271, 8
      %s273 = scalar_lea.vmem %s0, %s272
      %p274 = scmp.lt.s32.totalorder %s18, 3
      %s275 = scalar_select %p274, %s18, 3
      %s276 = smul.addr %s275, 2
      %s277 = smul.addr %s276, 8
      %s278 = scalar_lea.vmem %s7, %s277
      %v280 = vld [vmem:[%s273] sm:$0xff]
      %v281 = vld [vmem:[%s273 + $0x8] sm:$0xff]
      %v282 = vld [vmem:[%s273 + $0x10] sm:$0xff]
      %v283 = vld [vmem:[%s273 + $0x18] sm:$0xff]
      %v284 = vlaneseq
      %v285 = vand.u32 %v284, 127
      %v286 = vshra.s32 %v285, 1
      %v287 = vand.u32 %v285, 1
      %288 = vrot.lane.b32.xlu0 %v280, 3
      %v289 = vpop.permute.xlu0 %288
      %290 = vrot.lane.b32.xlu0 %v281, 3
      %v291 = vpop.permute.xlu0 %290
      %292 = vrot.lane.b32.xlu0 %v282, 3
      %v293 = vpop.permute.xlu0 %292
      %294 = vrot.lane.b32.xlu0 %v283, 3
      %v295 = vpop.permute.xlu0 %294
      %vm296 = vcmp.ge.s32.totalorder %v286, 1
      %vm297 = vcmp.ge.s32.totalorder %v287, 1
      %vm298 = vmand %vm296, %vm297
      %v299 = vsel %vm298, 1, 0
      %vm300 = vcmp.eq.s32.totalorder %v299, 1
      %v301 = vsel %vm300, %v289, 0.0
      %v302 = vsel %vm300, %v291, 0.0
      %v303 = vsel %vm300, %v293, 0.0
      %v304 = vsel %vm300, %v295, 0.0
      %v305 = vld [vmem:[%s1] sm:$0xf]
      %v306 = vld [vmem:[%s1 + $0x4] sm:$0xf]
      %v307 = vpack.c.bf16 %v302, %v301
      %v308 = vpack.c.bf16 %v304, %v303
      %309 = vrot.lane.b32.xlu0 %v280, 2
      %v310 = vpop.permute.xlu0 %309
      %311 = vrot.lane.b32.xlu0 %v281, 2
      %v312 = vpop.permute.xlu0 %311
      %313 = vrot.lane.b32.xlu0 %v282, 2
      %v314 = vpop.permute.xlu0 %313
      %315 = vrot.lane.b32.xlu0 %v283, 2
      %v316 = vpop.permute.xlu0 %315
      %v317 = vsel %vm296, 1, 0
      %vm318 = vcmp.eq.s32.totalorder %v317, 1
      %v319 = vsel %vm318, %v310, 0.0
      %v320 = vsel %vm318, %v312, 0.0
      %v321 = vsel %vm318, %v314, 0.0
      %v322 = vsel %vm318, %v316, 0.0
      %v323 = vld [vmem:[%s1 + $0x8] sm:$0xf]
      %v324 = vld [vmem:[%s1 + $0xc] sm:$0xf]
      %v325 = vpack.c.bf16 %v320, %v319
      %v326 = vpack.c.bf16 %v322, %v321
      %v329 = vunpack.c.l.b16 %v323
      %v330 = vunpack.c.l.b16 %v324
      %v331 = vpack.c.b16 %v330, %v329
      %vm332 = vcmask 261120
      %v334 = vsel %vm332, %v331, 0
      %336 = vmatprep.subr.bf16.mxu0 0
      %337 = vmatpush1.bf16.msra.mxu0 0
      %338 = vmatprep.subr.bf16.mxu0 0
      %339 = vmatpush1.bf16.msra.mxu0 0
      %340 = vmatprep.subr.bf16.mxu0 0
      %341 = vmatpush1.bf16.msra.mxu0 0
      %342 = vmatprep.subr.bf16.mxu0 0
      %343 = vmatpush1.bf16.msra.mxu0 0
      %344 = vmatprep.subr.bf16.mxu0 0
      %345 = vmatpush1.bf16.msra.mxu0 0
      %346 = vmatprep.subr.bf16.mxu0 0
      %347 = vmatpush1.bf16.msra.mxu0 0
      %348 = vmatprep.subr.bf16.mxu0 0
      %349 = vmatpush1.bf16.msra.mxu0 %v326
      %350 = vmatprep.subr.bf16.mxu0 0
      %351 = vmatpush1.bf16.msra.mxu0 %v325
      %352 = vmatprep.subr.bf16.mxu0 0
      %353 = vmatpush2.bf16.msra.mxu0 0
      %354 = vmatprep.subr.bf16.mxu0 0
      %355 = vmatpush2.bf16.msra.mxu0 0
      %356 = vmatprep.subr.bf16.mxu0 0
      %357 = vmatpush2.bf16.msra.mxu0 0
      %358 = vmatprep.subr.bf16.mxu0 0
      %359 = vmatpush2.bf16.msra.mxu0 0
      %360 = vmatprep.subr.bf16.mxu0 0
      %361 = vmatpush2.bf16.msra.mxu0 0
      %362 = vmatprep.subr.bf16.mxu0 0
      %363 = vmatpush2.bf16.msra.mxu0 0
      %364 = vmatprep.subr.bf16.mxu0 0
      %365 = vmatpush2.bf16.msra.mxu0 0
      %366 = vmatprep.subr.bf16.mxu0 0
      %367 = vmatpush2.bf16.msra.mxu0 0
      %368 = vmatprep.mubr.bf16.mxu0 0
      %369 = vmatmul.mubr.bf16.gmra.mxu0 %v334
      %v370 = vpop.f32.mrf.mxu0
      %v371 = vadd.f32 0.0, %v370
      %v372 = vpop.f32.mrf.mxu0
      %v373 = vpop.f32.mrf.mxu0
      %v374 = vadd.f32 0.0, %v373
      %v375 = vpop.f32.mrf.mxu0
      %376 = vdwg.mxu0
      %v379 = vunpack.c.l.b16 %v305
      %v380 = vunpack.c.l.b16 %v306
      %v381 = vpack.c.b16 %v380, %v379
      %v383 = vsel %vm332, %v381, 0
      %385 = vmatprep.subr.bf16.mxu0 0
      %386 = vmatpush1.bf16.msra.mxu0 0
      %387 = vmatprep.subr.bf16.mxu0 0
      %388 = vmatpush1.bf16.msra.mxu0 0
      %389 = vmatprep.subr.bf16.mxu0 0
      %390 = vmatpush1.bf16.msra.mxu0 0
      %391 = vmatprep.subr.bf16.mxu0 0
      %392 = vmatpush1.bf16.msra.mxu0 0
      %393 = vmatprep.subr.bf16.mxu0 0
      %394 = vmatpush1.bf16.msra.mxu0 0
      %395 = vmatprep.subr.bf16.mxu0 0
      %396 = vmatpush1.bf16.msra.mxu0 0
      %397 = vmatprep.subr.bf16.mxu0 0
      %398 = vmatpush1.bf16.msra.mxu0 %v308
      %399 = vmatprep.subr.bf16.mxu0 0
      %400 = vmatpush1.bf16.msra.mxu0 %v307
      %401 = vmatprep.subr.bf16.mxu0 0
      %402 = vmatpush2.bf16.msra.mxu0 0
      %403 = vmatprep.subr.bf16.mxu0 0
      %404 = vmatpush2.bf16.msra.mxu0 0
      %405 = vmatprep.subr.bf16.mxu0 0
      %406 = vmatpush2.bf16.msra.mxu0 0
      %407 = vmatprep.subr.bf16.mxu0 0
      %408 = vmatpush2.bf16.msra.mxu0 0
      %409 = vmatprep.subr.bf16.mxu0 0
      %410 = vmatpush2.bf16.msra.mxu0 0
      %411 = vmatprep.subr.bf16.mxu0 0
      %412 = vmatpush2.bf16.msra.mxu0 0
      %413 = vmatprep.subr.bf16.mxu0 0
      %414 = vmatpush2.bf16.msra.mxu0 0
      %415 = vmatprep.subr.bf16.mxu0 0
      %416 = vmatpush2.bf16.msra.mxu0 0
      %417 = vmatprep.mubr.bf16.mxu0 0
      %418 = vmatmul.mubr.bf16.gmra.mxu0 %v383
      %v419 = vpop.f32.mrf.mxu0
      %v420 = vadd.f32 %v371, %v419
      %v421 = vpop.f32.mrf.mxu0
      %v422 = vpop.f32.mrf.mxu0
      %v423 = vadd.f32 %v374, %v422
      %v424 = vpop.f32.mrf.mxu0
      %425 = vdwg.mxu0
      %426 = vrot.lane.b32.xlu0 %v280, 1
      %v427 = vpop.permute.xlu0 %426
      %428 = vrot.lane.b32.xlu0 %v281, 1
      %v429 = vpop.permute.xlu0 %428
      %430 = vrot.lane.b32.xlu0 %v282, 1
      %v431 = vpop.permute.xlu0 %430
      %432 = vrot.lane.b32.xlu0 %v283, 1
      %v433 = vpop.permute.xlu0 %432
      %vm434 = vcmp.lt.s32.totalorder %v287, 1
      %vm435 = vmand %vm296, %vm434
      %v436 = vsel %vm435, 1, 0
      %vm437 = vcmp.eq.s32.totalorder %v436, 1
      %v438 = vsel %vm437, %v427, 0.0
      %v439 = vsel %vm437, %v429, 0.0
      %v440 = vsel %vm437, %v431, 0.0
      %v441 = vsel %vm437, %v433, 0.0
      %v442 = vld [vmem:[%s1 + $0x10] sm:$0xf]
      %v443 = vld [vmem:[%s1 + $0x14] sm:$0xf]
      %v444 = vpack.c.bf16 %v439, %v438
      %v445 = vpack.c.bf16 %v441, %v440
      %v448 = vunpack.c.l.b16 %v442
      %v449 = vunpack.c.l.b16 %v443
      %v450 = vpack.c.b16 %v449, %v448
      %v452 = vsel %vm332, %v450, 0
      %454 = vmatprep.subr.bf16.mxu0 0
      %455 = vmatpush1.bf16.msra.mxu0 0
      %456 = vmatprep.subr.bf16.mxu0 0
      %457 = vmatpush1.bf16.msra.mxu0 0
      %458 = vmatprep.subr.bf16.mxu0 0
      %459 = vmatpush1.bf16.msra.mxu0 0
      %460 = vmatprep.subr.bf16.mxu0 0
      %461 = vmatpush1.bf16.msra.mxu0 0
      %462 = vmatprep.subr.bf16.mxu0 0
      %463 = vmatpush1.bf16.msra.mxu0 0
      %464 = vmatprep.subr.bf16.mxu0 0
      %465 = vmatpush1.bf16.msra.mxu0 0
      %466 = vmatprep.subr.bf16.mxu0 0
      %467 = vmatpush1.bf16.msra.mxu0 %v445
      %468 = vmatprep.subr.bf16.mxu0 0
      %469 = vmatpush1.bf16.msra.mxu0 %v444
      %470 = vmatprep.subr.bf16.mxu0 0
      %471 = vmatpush2.bf16.msra.mxu0 0
      %472 = vmatprep.subr.bf16.mxu0 0
      %473 = vmatpush2.bf16.msra.mxu0 0
      %474 = vmatprep.subr.bf16.mxu0 0
      %475 = vmatpush2.bf16.msra.mxu0 0
      %476 = vmatprep.subr.bf16.mxu0 0
      %477 = vmatpush2.bf16.msra.mxu0 0
      %478 = vmatprep.subr.bf16.mxu0 0
      %479 = vmatpush2.bf16.msra.mxu0 0
      %480 = vmatprep.subr.bf16.mxu0 0
      %481 = vmatpush2.bf16.msra.mxu0 0
      %482 = vmatprep.subr.bf16.mxu0 0
      %483 = vmatpush2.bf16.msra.mxu0 0
      %484 = vmatprep.subr.bf16.mxu0 0
      %485 = vmatpush2.bf16.msra.mxu0 0
      %486 = vmatprep.mubr.bf16.mxu0 0
      %487 = vmatmul.mubr.bf16.gmra.mxu0 %v452
      %v488 = vpop.f32.mrf.mxu0
      %v489 = vadd.f32 0.0, %v488
      %v490 = vpop.f32.mrf.mxu0
      %v491 = vpop.f32.mrf.mxu0
      %v492 = vadd.f32 0.0, %v491
      %v493 = vpop.f32.mrf.mxu0
      %494 = vdwg.mxu0
      %v495 = vadd.f32 %v420, %v489
      %v496 = vadd.f32 %v423, %v492
      %v497 = vsel %vm297, 1, 0
      %vm498 = vcmp.eq.s32.totalorder %v497, 1
      %v499 = vsel %vm498, %v427, 0.0
      %v500 = vsel %vm498, %v429, 0.0
      %v501 = vsel %vm498, %v431, 0.0
      %v502 = vsel %vm498, %v433, 0.0
      %v503 = vld [vmem:[%s1 + $0x18] sm:$0xf]
      %v504 = vld [vmem:[%s1 + $0x1c] sm:$0xf]
      %v505 = vpack.c.bf16 %v500, %v499
      %v506 = vpack.c.bf16 %v502, %v501
      %v509 = vunpack.c.l.b16 %v503
      %v510 = vunpack.c.l.b16 %v504
      %v511 = vpack.c.b16 %v510, %v509
      %v513 = vsel %vm332, %v511, 0
      %515 = vmatprep.subr.bf16.mxu0 0
      %516 = vmatpush1.bf16.msra.mxu0 0
      %517 = vmatprep.subr.bf16.mxu0 0
      %518 = vmatpush1.bf16.msra.mxu0 0
      %519 = vmatprep.subr.bf16.mxu0 0
      %520 = vmatpush1.bf16.msra.mxu0 0
      %521 = vmatprep.subr.bf16.mxu0 0
      %522 = vmatpush1.bf16.msra.mxu0 0
      %523 = vmatprep.subr.bf16.mxu0 0
      %524 = vmatpush1.bf16.msra.mxu0 0
      %525 = vmatprep.subr.bf16.mxu0 0
      %526 = vmatpush1.bf16.msra.mxu0 0
      %527 = vmatprep.subr.bf16.mxu0 0
      %528 = vmatpush1.bf16.msra.mxu0 %v506
      %529 = vmatprep.subr.bf16.mxu0 0
      %530 = vmatpush1.bf16.msra.mxu0 %v505
      %531 = vmatprep.subr.bf16.mxu0 0
      %532 = vmatpush2.bf16.msra.mxu0 0
      %533 = vmatprep.subr.bf16.mxu0 0
      %534 = vmatpush2.bf16.msra.mxu0 0
      %535 = vmatprep.subr.bf16.mxu0 0
      %536 = vmatpush2.bf16.msra.mxu0 0
      %537 = vmatprep.subr.bf16.mxu0 0
      %538 = vmatpush2.bf16.msra.mxu0 0
      %539 = vmatprep.subr.bf16.mxu0 0
      %540 = vmatpush2.bf16.msra.mxu0 0
      %541 = vmatprep.subr.bf16.mxu0 0
      %542 = vmatpush2.bf16.msra.mxu0 0
      %543 = vmatprep.subr.bf16.mxu0 0
      %544 = vmatpush2.bf16.msra.mxu0 0
      %545 = vmatprep.subr.bf16.mxu0 0
      %546 = vmatpush2.bf16.msra.mxu0 0
      %547 = vmatprep.mubr.bf16.mxu0 0
      %548 = vmatmul.mubr.bf16.gmra.mxu0 %v513
      %v549 = vpop.f32.mrf.mxu0
      %v550 = vadd.f32 0.0, %v549
      %v551 = vpop.f32.mrf.mxu0
      %v552 = vpop.f32.mrf.mxu0
      %v553 = vadd.f32 0.0, %v552
      %v554 = vpop.f32.mrf.mxu0
      %555 = vdwg.mxu0
      %v556 = vadd.f32 %v495, %v550
      %v557 = vadd.f32 %v496, %v553
      %v558 = vld [vmem:[%s1 + $0x20] sm:$0xf]
      %v559 = vld [vmem:[%s1 + $0x24] sm:$0xf]
      %v560 = vpack.c.bf16 %v281, %v280
      %v561 = vpack.c.bf16 %v283, %v282
      %v564 = vunpack.c.l.b16 %v558
      %v565 = vunpack.c.l.b16 %v559
      %v566 = vpack.c.b16 %v565, %v564
      %v568 = vsel %vm332, %v566, 0
      %570 = vmatprep.subr.bf16.mxu0 0
      %571 = vmatpush1.bf16.msra.mxu0 0
      %572 = vmatprep.subr.bf16.mxu0 0
      %573 = vmatpush1.bf16.msra.mxu0 0
      %574 = vmatprep.subr.bf16.mxu0 0
      %575 = vmatpush1.bf16.msra.mxu0 0
      %576 = vmatprep.subr.bf16.mxu0 0
      %577 = vmatpush1.bf16.msra.mxu0 0
      %578 = vmatprep.subr.bf16.mxu0 0
      %579 = vmatpush1.bf16.msra.mxu0 0
      %580 = vmatprep.subr.bf16.mxu0 0
      %581 = vmatpush1.bf16.msra.mxu0 0
      %582 = vmatprep.subr.bf16.mxu0 0
      %583 = vmatpush1.bf16.msra.mxu0 %v561
      %584 = vmatprep.subr.bf16.mxu0 0
      %585 = vmatpush1.bf16.msra.mxu0 %v560
      %586 = vmatprep.subr.bf16.mxu0 0
      %587 = vmatpush2.bf16.msra.mxu0 0
      %588 = vmatprep.subr.bf16.mxu0 0
      %589 = vmatpush2.bf16.msra.mxu0 0
      %590 = vmatprep.subr.bf16.mxu0 0
      %591 = vmatpush2.bf16.msra.mxu0 0
      %592 = vmatprep.subr.bf16.mxu0 0
      %593 = vmatpush2.bf16.msra.mxu0 0
      %594 = vmatprep.subr.bf16.mxu0 0
      %595 = vmatpush2.bf16.msra.mxu0 0
      %596 = vmatprep.subr.bf16.mxu0 0
      %597 = vmatpush2.bf16.msra.mxu0 0
      %598 = vmatprep.subr.bf16.mxu0 0
      %599 = vmatpush2.bf16.msra.mxu0 0
      %600 = vmatprep.subr.bf16.mxu0 0
      %601 = vmatpush2.bf16.msra.mxu0 0
      %602 = vmatprep.mubr.bf16.mxu0 0
      %603 = vmatmul.mubr.bf16.gmra.mxu0 %v568
      %v604 = vpop.f32.mrf.mxu0
      %v605 = vadd.f32 0.0, %v604
      %v606 = vpop.f32.mrf.mxu0
      %v607 = vpop.f32.mrf.mxu0
      %v608 = vadd.f32 0.0, %v607
      %v609 = vpop.f32.mrf.mxu0
      %610 = vdwg.mxu0
      %v611 = vadd.f32 %v556, %v605
      %v612 = vadd.f32 %v557, %v608
      %613 = vrot.lane.b32.xlu0 %v280, 127
      %v614 = vpop.permute.xlu0 %613
      %615 = vrot.lane.b32.xlu0 %v281, 127
      %v616 = vpop.permute.xlu0 %615
      %617 = vrot.lane.b32.xlu0 %v282, 127
      %v618 = vpop.permute.xlu0 %617
      %619 = vrot.lane.b32.xlu0 %v283, 127
      %v620 = vpop.permute.xlu0 %619
      %v621 = vsel %vm434, 1, 0
      %vm622 = vcmp.eq.s32.totalorder %v621, 1
      %v623 = vsel %vm622, %v614, 0.0
      %v624 = vsel %vm622, %v616, 0.0
      %v625 = vsel %vm622, %v618, 0.0
      %v626 = vsel %vm622, %v620, 0.0
      %v627 = vld [vmem:[%s1 + $0x28] sm:$0xf]
      %v628 = vld [vmem:[%s1 + $0x2c] sm:$0xf]
      %v629 = vpack.c.bf16 %v624, %v623
      %v630 = vpack.c.bf16 %v626, %v625
      %v633 = vunpack.c.l.b16 %v627
      %v634 = vunpack.c.l.b16 %v628
      %v635 = vpack.c.b16 %v634, %v633
      %v637 = vsel %vm332, %v635, 0
      %639 = vmatprep.subr.bf16.mxu0 0
      %640 = vmatpush1.bf16.msra.mxu0 0
      %641 = vmatprep.subr.bf16.mxu0 0
      %642 = vmatpush1.bf16.msra.mxu0 0
      %643 = vmatprep.subr.bf16.mxu0 0
      %644 = vmatpush1.bf16.msra.mxu0 0
      %645 = vmatprep.subr.bf16.mxu0 0
      %646 = vmatpush1.bf16.msra.mxu0 0
      %647 = vmatprep.subr.bf16.mxu0 0
      %648 = vmatpush1.bf16.msra.mxu0 0
      %649 = vmatprep.subr.bf16.mxu0 0
      %650 = vmatpush1.bf16.msra.mxu0 0
      %651 = vmatprep.subr.bf16.mxu0 0
      %652 = vmatpush1.bf16.msra.mxu0 %v630
      %653 = vmatprep.subr.bf16.mxu0 0
      %654 = vmatpush1.bf16.msra.mxu0 %v629
      %655 = vmatprep.subr.bf16.mxu0 0
      %656 = vmatpush2.bf16.msra.mxu0 0
      %657 = vmatprep.subr.bf16.mxu0 0
      %658 = vmatpush2.bf16.msra.mxu0 0
      %659 = vmatprep.subr.bf16.mxu0 0
      %660 = vmatpush2.bf16.msra.mxu0 0
      %661 = vmatprep.subr.bf16.mxu0 0
      %662 = vmatpush2.bf16.msra.mxu0 0
      %663 = vmatprep.subr.bf16.mxu0 0
      %664 = vmatpush2.bf16.msra.mxu0 0
      %665 = vmatprep.subr.bf16.mxu0 0
      %666 = vmatpush2.bf16.msra.mxu0 0
      %667 = vmatprep.subr.bf16.mxu0 0
      %668 = vmatpush2.bf16.msra.mxu0 0
      %669 = vmatprep.subr.bf16.mxu0 0
      %670 = vmatpush2.bf16.msra.mxu0 0
      %671 = vmatprep.mubr.bf16.mxu0 0
      %672 = vmatmul.mubr.bf16.gmra.mxu0 %v637
      %v673 = vpop.f32.mrf.mxu0
      %v674 = vadd.f32 0.0, %v673
      %v675 = vpop.f32.mrf.mxu0
      %v676 = vpop.f32.mrf.mxu0
      %v677 = vadd.f32 0.0, %v676
      %v678 = vpop.f32.mrf.mxu0
      %679 = vdwg.mxu0
      %v680 = vadd.f32 %v611, %v674
      %v681 = vadd.f32 %v612, %v677
      %vm682 = vcmp.lt.s32.totalorder %v286, 1
      %vm683 = vmand %vm682, %vm297
      %v684 = vsel %vm683, 1, 0
      %vm685 = vcmp.eq.s32.totalorder %v684, 1
      %v686 = vsel %vm685, %v614, 0.0
      %v687 = vsel %vm685, %v616, 0.0
      %v688 = vsel %vm685, %v618, 0.0
      %v689 = vsel %vm685, %v620, 0.0
      %v690 = vld [vmem:[%s1 + $0x30] sm:$0xf]
      %v691 = vld [vmem:[%s1 + $0x34] sm:$0xf]
      %v692 = vpack.c.bf16 %v687, %v686
      %v693 = vpack.c.bf16 %v689, %v688
      %v696 = vunpack.c.l.b16 %v690
      %v697 = vunpack.c.l.b16 %v691
      %v698 = vpack.c.b16 %v697, %v696
      %v700 = vsel %vm332, %v698, 0
      %702 = vmatprep.subr.bf16.mxu0 0
      %703 = vmatpush1.bf16.msra.mxu0 0
      %704 = vmatprep.subr.bf16.mxu0 0
      %705 = vmatpush1.bf16.msra.mxu0 0
      %706 = vmatprep.subr.bf16.mxu0 0
      %707 = vmatpush1.bf16.msra.mxu0 0
      %708 = vmatprep.subr.bf16.mxu0 0
      %709 = vmatpush1.bf16.msra.mxu0 0
      %710 = vmatprep.subr.bf16.mxu0 0
      %711 = vmatpush1.bf16.msra.mxu0 0
      %712 = vmatprep.subr.bf16.mxu0 0
      %713 = vmatpush1.bf16.msra.mxu0 0
      %714 = vmatprep.subr.bf16.mxu0 0
      %715 = vmatpush1.bf16.msra.mxu0 %v693
      %716 = vmatprep.subr.bf16.mxu0 0
      %717 = vmatpush1.bf16.msra.mxu0 %v692
      %718 = vmatprep.subr.bf16.mxu0 0
      %719 = vmatpush2.bf16.msra.mxu0 0
      %720 = vmatprep.subr.bf16.mxu0 0
      %721 = vmatpush2.bf16.msra.mxu0 0
      %722 = vmatprep.subr.bf16.mxu0 0
      %723 = vmatpush2.bf16.msra.mxu0 0
      %724 = vmatprep.subr.bf16.mxu0 0
      %725 = vmatpush2.bf16.msra.mxu0 0
      %726 = vmatprep.subr.bf16.mxu0 0
      %727 = vmatpush2.bf16.msra.mxu0 0
      %728 = vmatprep.subr.bf16.mxu0 0
      %729 = vmatpush2.bf16.msra.mxu0 0
      %730 = vmatprep.subr.bf16.mxu0 0
      %731 = vmatpush2.bf16.msra.mxu0 0
      %732 = vmatprep.subr.bf16.mxu0 0
      %733 = vmatpush2.bf16.msra.mxu0 0
      %734 = vmatprep.mubr.bf16.mxu0 0
      %735 = vmatmul.mubr.bf16.gmra.mxu0 %v700
      %v736 = vpop.f32.mrf.mxu0
      %v737 = vadd.f32 0.0, %v736
      %v738 = vpop.f32.mrf.mxu0
      %v739 = vpop.f32.mrf.mxu0
      %v740 = vadd.f32 0.0, %v739
      %v741 = vpop.f32.mrf.mxu0
      %742 = vdwg.mxu0
      %v743 = vadd.f32 %v680, %v737
      %v744 = vadd.f32 %v681, %v740
      %745 = vrot.lane.b32.xlu0 %v280, 126
      %v746 = vpop.permute.xlu0 %745
      %747 = vrot.lane.b32.xlu0 %v281, 126
      %v748 = vpop.permute.xlu0 %747
      %749 = vrot.lane.b32.xlu0 %v282, 126
      %v750 = vpop.permute.xlu0 %749
      %751 = vrot.lane.b32.xlu0 %v283, 126
      %v752 = vpop.permute.xlu0 %751
      %v753 = vsel %vm682, 1, 0
      %vm754 = vcmp.eq.s32.totalorder %v753, 1
      %v755 = vsel %vm754, %v746, 0.0
      %v756 = vsel %vm754, %v748, 0.0
      %v757 = vsel %vm754, %v750, 0.0
      %v758 = vsel %vm754, %v752, 0.0
      %v759 = vld [vmem:[%s1 + $0x38] sm:$0xf]
      %v760 = vld [vmem:[%s1 + $0x3c] sm:$0xf]
      %v761 = vpack.c.bf16 %v756, %v755
      %v762 = vpack.c.bf16 %v758, %v757
      %v765 = vunpack.c.l.b16 %v759
      %v766 = vunpack.c.l.b16 %v760
      %v767 = vpack.c.b16 %v766, %v765
      %v769 = vsel %vm332, %v767, 0
      %771 = vmatprep.subr.bf16.mxu0 0
      %772 = vmatpush1.bf16.msra.mxu0 0
      %773 = vmatprep.subr.bf16.mxu0 0
      %774 = vmatpush1.bf16.msra.mxu0 0
      %775 = vmatprep.subr.bf16.mxu0 0
      %776 = vmatpush1.bf16.msra.mxu0 0
      %777 = vmatprep.subr.bf16.mxu0 0
      %778 = vmatpush1.bf16.msra.mxu0 0
      %779 = vmatprep.subr.bf16.mxu0 0
      %780 = vmatpush1.bf16.msra.mxu0 0
      %781 = vmatprep.subr.bf16.mxu0 0
      %782 = vmatpush1.bf16.msra.mxu0 0
      %783 = vmatprep.subr.bf16.mxu0 0
      %784 = vmatpush1.bf16.msra.mxu0 %v762
      %785 = vmatprep.subr.bf16.mxu0 0
      %786 = vmatpush1.bf16.msra.mxu0 %v761
      %787 = vmatprep.subr.bf16.mxu0 0
      %788 = vmatpush2.bf16.msra.mxu0 0
      %789 = vmatprep.subr.bf16.mxu0 0
      %790 = vmatpush2.bf16.msra.mxu0 0
      %791 = vmatprep.subr.bf16.mxu0 0
      %792 = vmatpush2.bf16.msra.mxu0 0
      %793 = vmatprep.subr.bf16.mxu0 0
      %794 = vmatpush2.bf16.msra.mxu0 0
      %795 = vmatprep.subr.bf16.mxu0 0
      %796 = vmatpush2.bf16.msra.mxu0 0
      %797 = vmatprep.subr.bf16.mxu0 0
      %798 = vmatpush2.bf16.msra.mxu0 0
      %799 = vmatprep.subr.bf16.mxu0 0
      %800 = vmatpush2.bf16.msra.mxu0 0
      %801 = vmatprep.subr.bf16.mxu0 0
      %802 = vmatpush2.bf16.msra.mxu0 0
      %803 = vmatprep.mubr.bf16.mxu0 0
      %804 = vmatmul.mubr.bf16.gmra.mxu0 %v769
      %v805 = vpop.f32.mrf.mxu0
      %v806 = vadd.f32 0.0, %v805
      %v807 = vpop.f32.mrf.mxu0
      %v808 = vpop.f32.mrf.mxu0
      %v809 = vadd.f32 0.0, %v808
      %v810 = vpop.f32.mrf.mxu0
      %811 = vdwg.mxu0
      %v812 = vadd.f32 %v743, %v806
      %v813 = vadd.f32 %v744, %v809
      %814 = vrot.lane.b32.xlu0 %v280, 125
      %v815 = vpop.permute.xlu0 %814
      %816 = vrot.lane.b32.xlu0 %v281, 125
      %v817 = vpop.permute.xlu0 %816
      %818 = vrot.lane.b32.xlu0 %v282, 125
      %v819 = vpop.permute.xlu0 %818
      %820 = vrot.lane.b32.xlu0 %v283, 125
      %v821 = vpop.permute.xlu0 %820
      %vm822 = vmand %vm682, %vm434
      %v823 = vsel %vm822, 1, 0
      %vm824 = vcmp.eq.s32.totalorder %v823, 1
      %v825 = vsel %vm824, %v815, 0.0
      %v826 = vsel %vm824, %v817, 0.0
      %v827 = vsel %vm824, %v819, 0.0
      %v828 = vsel %vm824, %v821, 0.0
      %v829 = vld [vmem:[%s1 + $0x40] sm:$0xf]
      %v830 = vld [vmem:[%s1 + $0x44] sm:$0xf]
      %v831 = vpack.c.bf16 %v826, %v825
      %v832 = vpack.c.bf16 %v828, %v827
      %v835 = vunpack.c.l.b16 %v829
      %v836 = vunpack.c.l.b16 %v830
      %v837 = vpack.c.b16 %v836, %v835
      %v839 = vsel %vm332, %v837, 0
      %841 = vmatprep.subr.bf16.mxu0 0
      %842 = vmatpush1.bf16.msra.mxu0 0
      %843 = vmatprep.subr.bf16.mxu0 0
      %844 = vmatpush1.bf16.msra.mxu0 0
      %845 = vmatprep.subr.bf16.mxu0 0
      %846 = vmatpush1.bf16.msra.mxu0 0
      %847 = vmatprep.subr.bf16.mxu0 0
      %848 = vmatpush1.bf16.msra.mxu0 0
      %849 = vmatprep.subr.bf16.mxu0 0
      %850 = vmatpush1.bf16.msra.mxu0 0
      %851 = vmatprep.subr.bf16.mxu0 0
      %852 = vmatpush1.bf16.msra.mxu0 0
      %853 = vmatprep.subr.bf16.mxu0 0
      %854 = vmatpush1.bf16.msra.mxu0 %v832
      %855 = vmatprep.subr.bf16.mxu0 0
      %856 = vmatpush1.bf16.msra.mxu0 %v831
      %857 = vmatprep.subr.bf16.mxu0 0
      %858 = vmatpush2.bf16.msra.mxu0 0
      %859 = vmatprep.subr.bf16.mxu0 0
      %860 = vmatpush2.bf16.msra.mxu0 0
      %861 = vmatprep.subr.bf16.mxu0 0
      %862 = vmatpush2.bf16.msra.mxu0 0
      %863 = vmatprep.subr.bf16.mxu0 0
      %864 = vmatpush2.bf16.msra.mxu0 0
      %865 = vmatprep.subr.bf16.mxu0 0
      %866 = vmatpush2.bf16.msra.mxu0 0
      %867 = vmatprep.subr.bf16.mxu0 0
      %868 = vmatpush2.bf16.msra.mxu0 0
      %869 = vmatprep.subr.bf16.mxu0 0
      %870 = vmatpush2.bf16.msra.mxu0 0
      %871 = vmatprep.subr.bf16.mxu0 0
      %872 = vmatpush2.bf16.msra.mxu0 0
      %873 = vmatprep.mubr.bf16.mxu0 0
      %874 = vmatmul.mubr.bf16.gmra.mxu0 %v839
      %v875 = vpop.f32.mrf.mxu0
      %v876 = vadd.f32 0.0, %v875
      %v877 = vpop.f32.mrf.mxu0
      %v878 = vpop.f32.mrf.mxu0
      %v879 = vadd.f32 0.0, %v878
      %v880 = vpop.f32.mrf.mxu0
      %881 = vdwg.mxu0
      %v882 = vadd.f32 %v812, %v876
      %v883 = vadd.f32 %v813, %v879
      %v884 = vld [vmem:[%s2] sm:$0xff]
      %v885 = vld [vmem:[%s2 + $0x8] sm:$0xff]
      %887 = vset.pattern.permute.xlu0 0
      %888 = vperm.xlu0 %887, %v884
      %v889 = vpop.permute.xlu0 %888
      %892 = vset.pattern.permute.xlu0 0
      %893 = vperm.xlu0 %892, %v885
      %v894 = vpop.permute.xlu0 %893
      %v896 = vadd.f32 %v882, %v889
      %v897 = vadd.f32 %v883, %v894
      %vm898 = vcmp.gt.f32.partialorder %v896, 0.0
      %vm899 = vcmp.gt.f32.partialorder %v897, 0.0
      %v900 = vmin.f32 %v896, 0.0
      %v901 = vmin.f32 %v897, 0.0
      %v902 = vmul.f32 %v900, 1.442695
      %v903 = vpow.pop %v902
      %v904 = vmul.f32 %v901, 1.442695
      %v905 = vpow.pop %v904
      %v906 = vsub.f32 %v903, 1.0
      %v907 = vsub.f32 %v905, 1.0
      %v908 = vmul.f32 %v906, 1.6732632
      %v909 = vmul.f32 %v907, 1.6732632
      %v910 = vsel %vm898, %v896, %v908
      %v911 = vsel %vm899, %v897, %v909
      %v912 = vmul.f32 %v910, 1.050701
      %v913 = vmul.f32 %v911, 1.050701
      %914 = vrot.lane.b32.xlu0 %v912, 3
      %v915 = vpop.permute.xlu0 %914
      %916 = vrot.lane.b32.xlu0 %v913, 3
      %v917 = vpop.permute.xlu0 %916
      %v918 = vsel %vm300, %v915, 0.0
      %v919 = vsel %vm300, %v917, 0.0
      %v920 = vld [vmem:[%s3] sm:$0xf]
      %v921 = vld [vmem:[%s3 + $0x4] sm:$0xf]
      %v922 = vpack.c.bf16 %v919, %v918
      %923 = vrot.lane.b32.xlu0 %v912, 2
      %v924 = vpop.permute.xlu0 %923
      %925 = vrot.lane.b32.xlu0 %v913, 2
      %v926 = vpop.permute.xlu0 %925
      %v927 = vsel %vm318, %v924, 0.0
      %v928 = vsel %vm318, %v926, 0.0
      %v929 = vld [vmem:[%s3 + $0x8] sm:$0xf]
      %v930 = vld [vmem:[%s3 + $0xc] sm:$0xf]
      %v931 = vpack.c.bf16 %v928, %v927
      %v934 = vunpack.c.l.b16 %v929
      %v935 = vunpack.c.l.b16 %v930
      %v936 = vpack.c.b16 %v935, %v934
      %vm937 = vcmask 130048
      %v939 = vsel %vm937, %v936, 0
      %941 = vmatprep.subr.bf16.mxu0 0
      %942 = vmatpush1.bf16.msra.mxu0 0
      %943 = vmatprep.subr.bf16.mxu0 0
      %944 = vmatpush1.bf16.msra.mxu0 0
      %945 = vmatprep.subr.bf16.mxu0 0
      %946 = vmatpush1.bf16.msra.mxu0 0
      %947 = vmatprep.subr.bf16.mxu0 0
      %948 = vmatpush1.bf16.msra.mxu0 0
      %949 = vmatprep.subr.bf16.mxu0 0
      %950 = vmatpush1.bf16.msra.mxu0 0
      %951 = vmatprep.subr.bf16.mxu0 0
      %952 = vmatpush1.bf16.msra.mxu0 0
      %953 = vmatprep.subr.bf16.mxu0 0
      %954 = vmatpush1.bf16.msra.mxu0 0
      %955 = vmatprep.subr.bf16.mxu0 0
      %956 = vmatpush1.bf16.msra.mxu0 %v931
      %957 = vmatprep.subr.bf16.mxu0 0
      %958 = vmatpush2.bf16.msra.mxu0 0
      %959 = vmatprep.subr.bf16.mxu0 0
      %960 = vmatpush2.bf16.msra.mxu0 0
      %961 = vmatprep.subr.bf16.mxu0 0
      %962 = vmatpush2.bf16.msra.mxu0 0
      %963 = vmatprep.subr.bf16.mxu0 0
      %964 = vmatpush2.bf16.msra.mxu0 0
      %965 = vmatprep.subr.bf16.mxu0 0
      %966 = vmatpush2.bf16.msra.mxu0 0
      %967 = vmatprep.subr.bf16.mxu0 0
      %968 = vmatpush2.bf16.msra.mxu0 0
      %969 = vmatprep.subr.bf16.mxu0 0
      %970 = vmatpush2.bf16.msra.mxu0 0
      %971 = vmatprep.subr.bf16.mxu0 0
      %972 = vmatpush2.bf16.msra.mxu0 0
      %973 = vmatprep.mubr.bf16.mxu0 0
      %974 = vmatmul.mubr.bf16.gmra.mxu0 %v939
      %v975 = vpop.f32.mrf.mxu0
      %v976 = vadd.f32 0.0, %v975
      %v977 = vpop.f32.mrf.mxu0
      %v978 = vpop.f32.mrf.mxu0
      %v979 = vadd.f32 0.0, %v978
      %v980 = vpop.f32.mrf.mxu0
      %981 = vdwg.mxu0
      %v984 = vunpack.c.l.b16 %v920
      %v985 = vunpack.c.l.b16 %v921
      %v986 = vpack.c.b16 %v985, %v984
      %v988 = vsel %vm937, %v986, 0
      %990 = vmatprep.subr.bf16.mxu0 0
      %991 = vmatpush1.bf16.msra.mxu0 0
      %992 = vmatprep.subr.bf16.mxu0 0
      %993 = vmatpush1.bf16.msra.mxu0 0
      %994 = vmatprep.subr.bf16.mxu0 0
      %995 = vmatpush1.bf16.msra.mxu0 0
      %996 = vmatprep.subr.bf16.mxu0 0
      %997 = vmatpush1.bf16.msra.mxu0 0
      %998 = vmatprep.subr.bf16.mxu0 0
      %999 = vmatpush1.bf16.msra.mxu0 0
      %1000 = vmatprep.subr.bf16.mxu0 0
      %1001 = vmatpush1.bf16.msra.mxu0 0
      %1002 = vmatprep.subr.bf16.mxu0 0
      %1003 = vmatpush1.bf16.msra.mxu0 0
      %1004 = vmatprep.subr.bf16.mxu0 0
      %1005 = vmatpush1.bf16.msra.mxu0 %v922
      %1006 = vmatprep.subr.bf16.mxu0 0
      %1007 = vmatpush2.bf16.msra.mxu0 0
      %1008 = vmatprep.subr.bf16.mxu0 0
      %1009 = vmatpush2.bf16.msra.mxu0 0
      %1010 = vmatprep.subr.bf16.mxu0 0
      %1011 = vmatpush2.bf16.msra.mxu0 0
      %1012 = vmatprep.subr.bf16.mxu0 0
      %1013 = vmatpush2.bf16.msra.mxu0 0
      %1014 = vmatprep.subr.bf16.mxu0 0
      %1015 = vmatpush2.bf16.msra.mxu0 0
      %1016 = vmatprep.subr.bf16.mxu0 0
      %1017 = vmatpush2.bf16.msra.mxu0 0
      %1018 = vmatprep.subr.bf16.mxu0 0
      %1019 = vmatpush2.bf16.msra.mxu0 0
      %1020 = vmatprep.subr.bf16.mxu0 0
      %1021 = vmatpush2.bf16.msra.mxu0 0
      %1022 = vmatprep.mubr.bf16.mxu0 0
      %1023 = vmatmul.mubr.bf16.gmra.mxu0 %v988
      %v1024 = vpop.f32.mrf.mxu0
      %v1025 = vadd.f32 %v976, %v1024
      %v1026 = vpop.f32.mrf.mxu0
      %v1027 = vpop.f32.mrf.mxu0
      %v1028 = vadd.f32 %v979, %v1027
      %v1029 = vpop.f32.mrf.mxu0
      %1030 = vdwg.mxu0
      %1031 = vrot.lane.b32.xlu0 %v912, 1
      %v1032 = vpop.permute.xlu0 %1031
      %1033 = vrot.lane.b32.xlu0 %v913, 1
      %v1034 = vpop.permute.xlu0 %1033
      %v1035 = vsel %vm437, %v1032, 0.0
      %v1036 = vsel %vm437, %v1034, 0.0
      %v1037 = vld [vmem:[%s3 + $0x10] sm:$0xf]
      %v1038 = vld [vmem:[%s3 + $0x14] sm:$0xf]
      %v1039 = vpack.c.bf16 %v1036, %v1035
      %v1042 = vunpack.c.l.b16 %v1037
      %v1043 = vunpack.c.l.b16 %v1038
      %v1044 = vpack.c.b16 %v1043, %v1042
      %v1046 = vsel %vm937, %v1044, 0
      %1048 = vmatprep.subr.bf16.mxu0 0
      %1049 = vmatpush1.bf16.msra.mxu0 0
      %1050 = vmatprep.subr.bf16.mxu0 0
      %1051 = vmatpush1.bf16.msra.mxu0 0
      %1052 = vmatprep.subr.bf16.mxu0 0
      %1053 = vmatpush1.bf16.msra.mxu0 0
      %1054 = vmatprep.subr.bf16.mxu0 0
      %1055 = vmatpush1.bf16.msra.mxu0 0
      %1056 = vmatprep.subr.bf16.mxu0 0
      %1057 = vmatpush1.bf16.msra.mxu0 0
      %1058 = vmatprep.subr.bf16.mxu0 0
      %1059 = vmatpush1.bf16.msra.mxu0 0
      %1060 = vmatprep.subr.bf16.mxu0 0
      %1061 = vmatpush1.bf16.msra.mxu0 0
      %1062 = vmatprep.subr.bf16.mxu0 0
      %1063 = vmatpush1.bf16.msra.mxu0 %v1039
      %1064 = vmatprep.subr.bf16.mxu0 0
      %1065 = vmatpush2.bf16.msra.mxu0 0
      %1066 = vmatprep.subr.bf16.mxu0 0
      %1067 = vmatpush2.bf16.msra.mxu0 0
      %1068 = vmatprep.subr.bf16.mxu0 0
      %1069 = vmatpush2.bf16.msra.mxu0 0
      %1070 = vmatprep.subr.bf16.mxu0 0
      %1071 = vmatpush2.bf16.msra.mxu0 0
      %1072 = vmatprep.subr.bf16.mxu0 0
      %1073 = vmatpush2.bf16.msra.mxu0 0
      %1074 = vmatprep.subr.bf16.mxu0 0
      %1075 = vmatpush2.bf16.msra.mxu0 0
      %1076 = vmatprep.subr.bf16.mxu0 0
      %1077 = vmatpush2.bf16.msra.mxu0 0
      %1078 = vmatprep.subr.bf16.mxu0 0
      %1079 = vmatpush2.bf16.msra.mxu0 0
      %1080 = vmatprep.mubr.bf16.mxu0 0
      %1081 = vmatmul.mubr.bf16.gmra.mxu0 %v1046
      %v1082 = vpop.f32.mrf.mxu0
      %v1083 = vadd.f32 0.0, %v1082
      %v1084 = vpop.f32.mrf.mxu0
      %v1085 = vpop.f32.mrf.mxu0
      %v1086 = vadd.f32 0.0, %v1085
      %v1087 = vpop.f32.mrf.mxu0
      %1088 = vdwg.mxu0
      %v1089 = vadd.f32 %v1025, %v1083
      %v1090 = vadd.f32 %v1028, %v1086
      %v1091 = vsel %vm498, %v1032, 0.0
      %v1092 = vsel %vm498, %v1034, 0.0
      %v1093 = vld [vmem:[%s3 + $0x18] sm:$0xf]
      %v1094 = vld [vmem:[%s3 + $0x1c] sm:$0xf]
      %v1095 = vpack.c.bf16 %v1092, %v1091
      %v1098 = vunpack.c.l.b16 %v1093
      %v1099 = vunpack.c.l.b16 %v1094
      %v1100 = vpack.c.b16 %v1099, %v1098
      %v1102 = vsel %vm937, %v1100, 0
      %1104 = vmatprep.subr.bf16.mxu0 0
      %1105 = vmatpush1.bf16.msra.mxu0 0
      %1106 = vmatprep.subr.bf16.mxu0 0
      %1107 = vmatpush1.bf16.msra.mxu0 0
      %1108 = vmatprep.subr.bf16.mxu0 0
      %1109 = vmatpush1.bf16.msra.mxu0 0
      %1110 = vmatprep.subr.bf16.mxu0 0
      %1111 = vmatpush1.bf16.msra.mxu0 0
      %1112 = vmatprep.subr.bf16.mxu0 0
      %1113 = vmatpush1.bf16.msra.mxu0 0
      %1114 = vmatprep.subr.bf16.mxu0 0
      %1115 = vmatpush1.bf16.msra.mxu0 0
      %1116 = vmatprep.subr.bf16.mxu0 0
      %1117 = vmatpush1.bf16.msra.mxu0 0
      %1118 = vmatprep.subr.bf16.mxu0 0
      %1119 = vmatpush1.bf16.msra.mxu0 %v1095
      %1120 = vmatprep.subr.bf16.mxu0 0
      %1121 = vmatpush2.bf16.msra.mxu0 0
      %1122 = vmatprep.subr.bf16.mxu0 0
      %1123 = vmatpush2.bf16.msra.mxu0 0
      %1124 = vmatprep.subr.bf16.mxu0 0
      %1125 = vmatpush2.bf16.msra.mxu0 0
      %1126 = vmatprep.subr.bf16.mxu0 0
      %1127 = vmatpush2.bf16.msra.mxu0 0
      %1128 = vmatprep.subr.bf16.mxu0 0
      %1129 = vmatpush2.bf16.msra.mxu0 0
      %1130 = vmatprep.subr.bf16.mxu0 0
      %1131 = vmatpush2.bf16.msra.mxu0 0
      %1132 = vmatprep.subr.bf16.mxu0 0
      %1133 = vmatpush2.bf16.msra.mxu0 0
      %1134 = vmatprep.subr.bf16.mxu0 0
      %1135 = vmatpush2.bf16.msra.mxu0 0
      %1136 = vmatprep.mubr.bf16.mxu0 0
      %1137 = vmatmul.mubr.bf16.gmra.mxu0 %v1102
      %v1138 = vpop.f32.mrf.mxu0
      %v1139 = vadd.f32 0.0, %v1138
      %v1140 = vpop.f32.mrf.mxu0
      %v1141 = vpop.f32.mrf.mxu0
      %v1142 = vadd.f32 0.0, %v1141
      %v1143 = vpop.f32.mrf.mxu0
      %1144 = vdwg.mxu0
      %v1145 = vadd.f32 %v1089, %v1139
      %v1146 = vadd.f32 %v1090, %v1142
      %v1147 = vld [vmem:[%s3 + $0x20] sm:$0xf]
      %v1148 = vld [vmem:[%s3 + $0x24] sm:$0xf]
      %v1149 = vpack.c.bf16 %v913, %v912
      %v1152 = vunpack.c.l.b16 %v1147
      %v1153 = vunpack.c.l.b16 %v1148
      %v1154 = vpack.c.b16 %v1153, %v1152
      %v1156 = vsel %vm937, %v1154, 0
      %1158 = vmatprep.subr.bf16.mxu0 0
      %1159 = vmatpush1.bf16.msra.mxu0 0
      %1160 = vmatprep.subr.bf16.mxu0 0
      %1161 = vmatpush1.bf16.msra.mxu0 0
      %1162 = vmatprep.subr.bf16.mxu0 0
      %1163 = vmatpush1.bf16.msra.mxu0 0
      %1164 = vmatprep.subr.bf16.mxu0 0
      %1165 = vmatpush1.bf16.msra.mxu0 0
      %1166 = vmatprep.subr.bf16.mxu0 0
      %1167 = vmatpush1.bf16.msra.mxu0 0
      %1168 = vmatprep.subr.bf16.mxu0 0
      %1169 = vmatpush1.bf16.msra.mxu0 0
      %1170 = vmatprep.subr.bf16.mxu0 0
      %1171 = vmatpush1.bf16.msra.mxu0 0
      %1172 = vmatprep.subr.bf16.mxu0 0
      %1173 = vmatpush1.bf16.msra.mxu0 %v1149
      %1174 = vmatprep.subr.bf16.mxu0 0
      %1175 = vmatpush2.bf16.msra.mxu0 0
      %1176 = vmatprep.subr.bf16.mxu0 0
      %1177 = vmatpush2.bf16.msra.mxu0 0
      %1178 = vmatprep.subr.bf16.mxu0 0
      %1179 = vmatpush2.bf16.msra.mxu0 0
      %1180 = vmatprep.subr.bf16.mxu0 0
      %1181 = vmatpush2.bf16.msra.mxu0 0
      %1182 = vmatprep.subr.bf16.mxu0 0
      %1183 = vmatpush2.bf16.msra.mxu0 0
      %1184 = vmatprep.subr.bf16.mxu0 0
      %1185 = vmatpush2.bf16.msra.mxu0 0
      %1186 = vmatprep.subr.bf16.mxu0 0
      %1187 = vmatpush2.bf16.msra.mxu0 0
      %1188 = vmatprep.subr.bf16.mxu0 0
      %1189 = vmatpush2.bf16.msra.mxu0 0
      %1190 = vmatprep.mubr.bf16.mxu0 0
      %1191 = vmatmul.mubr.bf16.gmra.mxu0 %v1156
      %v1192 = vpop.f32.mrf.mxu0
      %v1193 = vadd.f32 0.0, %v1192
      %v1194 = vpop.f32.mrf.mxu0
      %v1195 = vpop.f32.mrf.mxu0
      %v1196 = vadd.f32 0.0, %v1195
      %v1197 = vpop.f32.mrf.mxu0
      %1198 = vdwg.mxu0
      %v1199 = vadd.f32 %v1145, %v1193
      %v1200 = vadd.f32 %v1146, %v1196
      %1201 = vrot.lane.b32.xlu0 %v912, 127
      %v1202 = vpop.permute.xlu0 %1201
      %1203 = vrot.lane.b32.xlu0 %v913, 127
      %v1204 = vpop.permute.xlu0 %1203
      %v1205 = vsel %vm622, %v1202, 0.0
      %v1206 = vsel %vm622, %v1204, 0.0
      %v1207 = vld [vmem:[%s3 + $0x28] sm:$0xf]
      %v1208 = vld [vmem:[%s3 + $0x2c] sm:$0xf]
      %v1209 = vpack.c.bf16 %v1206, %v1205
      %v1212 = vunpack.c.l.b16 %v1207
      %v1213 = vunpack.c.l.b16 %v1208
      %v1214 = vpack.c.b16 %v1213, %v1212
      %v1216 = vsel %vm937, %v1214, 0
      %1218 = vmatprep.subr.bf16.mxu0 0
      %1219 = vmatpush1.bf16.msra.mxu0 0
      %1220 = vmatprep.subr.bf16.mxu0 0
      %1221 = vmatpush1.bf16.msra.mxu0 0
      %1222 = vmatprep.subr.bf16.mxu0 0
      %1223 = vmatpush1.bf16.msra.mxu0 0
      %1224 = vmatprep.subr.bf16.mxu0 0
      %1225 = vmatpush1.bf16.msra.mxu0 0
      %1226 = vmatprep.subr.bf16.mxu0 0
      %1227 = vmatpush1.bf16.msra.mxu0 0
      %1228 = vmatprep.subr.bf16.mxu0 0
      %1229 = vmatpush1.bf16.msra.mxu0 0
      %1230 = vmatprep.subr.bf16.mxu0 0
      %1231 = vmatpush1.bf16.msra.mxu0 0
      %1232 = vmatprep.subr.bf16.mxu0 0
      %1233 = vmatpush1.bf16.msra.mxu0 %v1209
      %1234 = vmatprep.subr.bf16.mxu0 0
      %1235 = vmatpush2.bf16.msra.mxu0 0
      %1236 = vmatprep.subr.bf16.mxu0 0
      %1237 = vmatpush2.bf16.msra.mxu0 0
      %1238 = vmatprep.subr.bf16.mxu0 0
      %1239 = vmatpush2.bf16.msra.mxu0 0
      %1240 = vmatprep.subr.bf16.mxu0 0
      %1241 = vmatpush2.bf16.msra.mxu0 0
      %1242 = vmatprep.subr.bf16.mxu0 0
      %1243 = vmatpush2.bf16.msra.mxu0 0
      %1244 = vmatprep.subr.bf16.mxu0 0
      %1245 = vmatpush2.bf16.msra.mxu0 0
      %1246 = vmatprep.subr.bf16.mxu0 0
      %1247 = vmatpush2.bf16.msra.mxu0 0
      %1248 = vmatprep.subr.bf16.mxu0 0
      %1249 = vmatpush2.bf16.msra.mxu0 0
      %1250 = vmatprep.mubr.bf16.mxu0 0
      %1251 = vmatmul.mubr.bf16.gmra.mxu0 %v1216
      %v1252 = vpop.f32.mrf.mxu0
      %v1253 = vadd.f32 0.0, %v1252
      %v1254 = vpop.f32.mrf.mxu0
      %v1255 = vpop.f32.mrf.mxu0
      %v1256 = vadd.f32 0.0, %v1255
      %v1257 = vpop.f32.mrf.mxu0
      %1258 = vdwg.mxu0
      %v1259 = vadd.f32 %v1199, %v1253
      %v1260 = vadd.f32 %v1200, %v1256
      %v1261 = vsel %vm685, %v1202, 0.0
      %v1262 = vsel %vm685, %v1204, 0.0
      %v1263 = vld [vmem:[%s3 + $0x30] sm:$0xf]
      %v1264 = vld [vmem:[%s3 + $0x34] sm:$0xf]
      %v1265 = vpack.c.bf16 %v1262, %v1261
      %v1268 = vunpack.c.l.b16 %v1263
      %v1269 = vunpack.c.l.b16 %v1264
      %v1270 = vpack.c.b16 %v1269, %v1268
      %v1272 = vsel %vm937, %v1270, 0
      %1274 = vmatprep.subr.bf16.mxu0 0
      %1275 = vmatpush1.bf16.msra.mxu0 0
      %1276 = vmatprep.subr.bf16.mxu0 0
      %1277 = vmatpush1.bf16.msra.mxu0 0
      %1278 = vmatprep.subr.bf16.mxu0 0
      %1279 = vmatpush1.bf16.msra.mxu0 0
      %1280 = vmatprep.subr.bf16.mxu0 0
      %1281 = vmatpush1.bf16.msra.mxu0 0
      %1282 = vmatprep.subr.bf16.mxu0 0
      %1283 = vmatpush1.bf16.msra.mxu0 0
      %1284 = vmatprep.subr.bf16.mxu0 0
      %1285 = vmatpush1.bf16.msra.mxu0 0
      %1286 = vmatprep.subr.bf16.mxu0 0
      %1287 = vmatpush1.bf16.msra.mxu0 0
      %1288 = vmatprep.subr.bf16.mxu0 0
      %1289 = vmatpush1.bf16.msra.mxu0 %v1265
      %1290 = vmatprep.subr.bf16.mxu0 0
      %1291 = vmatpush2.bf16.msra.mxu0 0
      %1292 = vmatprep.subr.bf16.mxu0 0
      %1293 = vmatpush2.bf16.msra.mxu0 0
      %1294 = vmatprep.subr.bf16.mxu0 0
      %1295 = vmatpush2.bf16.msra.mxu0 0
      %1296 = vmatprep.subr.bf16.mxu0 0
      %1297 = vmatpush2.bf16.msra.mxu0 0
      %1298 = vmatprep.subr.bf16.mxu0 0
      %1299 = vmatpush2.bf16.msra.mxu0 0
      %1300 = vmatprep.subr.bf16.mxu0 0
      %1301 = vmatpush2.bf16.msra.mxu0 0
      %1302 = vmatprep.subr.bf16.mxu0 0
      %1303 = vmatpush2.bf16.msra.mxu0 0
      %1304 = vmatprep.subr.bf16.mxu0 0
      %1305 = vmatpush2.bf16.msra.mxu0 0
      %1306 = vmatprep.mubr.bf16.mxu0 0
      %1307 = vmatmul.mubr.bf16.gmra.mxu0 %v1272
      %v1308 = vpop.f32.mrf.mxu0
      %v1309 = vadd.f32 0.0, %v1308
      %v1310 = vpop.f32.mrf.mxu0
      %v1311 = vpop.f32.mrf.mxu0
      %v1312 = vadd.f32 0.0, %v1311
      %v1313 = vpop.f32.mrf.mxu0
      %1314 = vdwg.mxu0
      %v1315 = vadd.f32 %v1259, %v1309
      %v1316 = vadd.f32 %v1260, %v1312
      %1317 = vrot.lane.b32.xlu0 %v912, 126
      %v1318 = vpop.permute.xlu0 %1317
      %1319 = vrot.lane.b32.xlu0 %v913, 126
      %v1320 = vpop.permute.xlu0 %1319
      %v1321 = vsel %vm754, %v1318, 0.0
      %v1322 = vsel %vm754, %v1320, 0.0
      %v1323 = vld [vmem:[%s3 + $0x38] sm:$0xf]
      %v1324 = vld [vmem:[%s3 + $0x3c] sm:$0xf]
      %v1325 = vpack.c.bf16 %v1322, %v1321
      %v1328 = vunpack.c.l.b16 %v1323
      %v1329 = vunpack.c.l.b16 %v1324
      %v1330 = vpack.c.b16 %v1329, %v1328
      %v1332 = vsel %vm937, %v1330, 0
      %1334 = vmatprep.subr.bf16.mxu0 0
      %1335 = vmatpush1.bf16.msra.mxu0 0
      %1336 = vmatprep.subr.bf16.mxu0 0
      %1337 = vmatpush1.bf16.msra.mxu0 0
      %1338 = vmatprep.subr.bf16.mxu0 0
      %1339 = vmatpush1.bf16.msra.mxu0 0
      %1340 = vmatprep.subr.bf16.mxu0 0
      %1341 = vmatpush1.bf16.msra.mxu0 0
      %1342 = vmatprep.subr.bf16.mxu0 0
      %1343 = vmatpush1.bf16.msra.mxu0 0
      %1344 = vmatprep.subr.bf16.mxu0 0
      %1345 = vmatpush1.bf16.msra.mxu0 0
      %1346 = vmatprep.subr.bf16.mxu0 0
      %1347 = vmatpush1.bf16.msra.mxu0 0
      %1348 = vmatprep.subr.bf16.mxu0 0
      %1349 = vmatpush1.bf16.msra.mxu0 %v1325
      %1350 = vmatprep.subr.bf16.mxu0 0
      %1351 = vmatpush2.bf16.msra.mxu0 0
      %1352 = vmatprep.subr.bf16.mxu0 0
      %1353 = vmatpush2.bf16.msra.mxu0 0
      %1354 = vmatprep.subr.bf16.mxu0 0
      %1355 = vmatpush2.bf16.msra.mxu0 0
      %1356 = vmatprep.subr.bf16.mxu0 0
      %1357 = vmatpush2.bf16.msra.mxu0 0
      %1358 = vmatprep.subr.bf16.mxu0 0
      %1359 = vmatpush2.bf16.msra.mxu0 0
      %1360 = vmatprep.subr.bf16.mxu0 0
      %1361 = vmatpush2.bf16.msra.mxu0 0
      %1362 = vmatprep.subr.bf16.mxu0 0
      %1363 = vmatpush2.bf16.msra.mxu0 0
      %1364 = vmatprep.subr.bf16.mxu0 0
      %1365 = vmatpush2.bf16.msra.mxu0 0
      %1366 = vmatprep.mubr.bf16.mxu0 0
      %1367 = vmatmul.mubr.bf16.gmra.mxu0 %v1332
      %v1368 = vpop.f32.mrf.mxu0
      %v1369 = vadd.f32 0.0, %v1368
      %v1370 = vpop.f32.mrf.mxu0
      %v1371 = vpop.f32.mrf.mxu0
      %v1372 = vadd.f32 0.0, %v1371
      %v1373 = vpop.f32.mrf.mxu0
      %1374 = vdwg.mxu0
      %v1375 = vadd.f32 %v1315, %v1369
      %v1376 = vadd.f32 %v1316, %v1372
      %1377 = vrot.lane.b32.xlu0 %v912, 125
      %v1378 = vpop.permute.xlu0 %1377
      %1379 = vrot.lane.b32.xlu0 %v913, 125
      %v1380 = vpop.permute.xlu0 %1379
      %v1381 = vsel %vm824, %v1378, 0.0
      %v1382 = vsel %vm824, %v1380, 0.0
      %v1383 = vld [vmem:[%s3 + $0x40] sm:$0xf]
      %v1384 = vld [vmem:[%s3 + $0x44] sm:$0xf]
      %v1385 = vpack.c.bf16 %v1382, %v1381
      %v1388 = vunpack.c.l.b16 %v1383
      %v1389 = vunpack.c.l.b16 %v1384
      %v1390 = vpack.c.b16 %v1389, %v1388
      %v1392 = vsel %vm937, %v1390, 0
      %1394 = vmatprep.subr.bf16.mxu0 0
      %1395 = vmatpush1.bf16.msra.mxu0 0
      %1396 = vmatprep.subr.bf16.mxu0 0
      %1397 = vmatpush1.bf16.msra.mxu0 0
      %1398 = vmatprep.subr.bf16.mxu0 0
      %1399 = vmatpush1.bf16.msra.mxu0 0
      %1400 = vmatprep.subr.bf16.mxu0 0
      %1401 = vmatpush1.bf16.msra.mxu0 0
      %1402 = vmatprep.subr.bf16.mxu0 0
      %1403 = vmatpush1.bf16.msra.mxu0 0
      %1404 = vmatprep.subr.bf16.mxu0 0
      %1405 = vmatpush1.bf16.msra.mxu0 0
      %1406 = vmatprep.subr.bf16.mxu0 0
      %1407 = vmatpush1.bf16.msra.mxu0 0
      %1408 = vmatprep.subr.bf16.mxu0 0
      %1409 = vmatpush1.bf16.msra.mxu0 %v1385
      %1410 = vmatprep.subr.bf16.mxu0 0
      %1411 = vmatpush2.bf16.msra.mxu0 0
      %1412 = vmatprep.subr.bf16.mxu0 0
      %1413 = vmatpush2.bf16.msra.mxu0 0
      %1414 = vmatprep.subr.bf16.mxu0 0
      %1415 = vmatpush2.bf16.msra.mxu0 0
      %1416 = vmatprep.subr.bf16.mxu0 0
      %1417 = vmatpush2.bf16.msra.mxu0 0
      %1418 = vmatprep.subr.bf16.mxu0 0
      %1419 = vmatpush2.bf16.msra.mxu0 0
      %1420 = vmatprep.subr.bf16.mxu0 0
      %1421 = vmatpush2.bf16.msra.mxu0 0
      %1422 = vmatprep.subr.bf16.mxu0 0
      %1423 = vmatpush2.bf16.msra.mxu0 0
      %1424 = vmatprep.subr.bf16.mxu0 0
      %1425 = vmatpush2.bf16.msra.mxu0 0
      %1426 = vmatprep.mubr.bf16.mxu0 0
      %1427 = vmatmul.mubr.bf16.gmra.mxu0 %v1392
      %v1428 = vpop.f32.mrf.mxu0
      %v1429 = vadd.f32 0.0, %v1428
      %v1430 = vpop.f32.mrf.mxu0
      %v1431 = vpop.f32.mrf.mxu0
      %v1432 = vadd.f32 0.0, %v1431
      %v1433 = vpop.f32.mrf.mxu0
      %1434 = vdwg.mxu0
      %v1435 = vadd.f32 %v1375, %v1429
      %v1436 = vadd.f32 %v1376, %v1432
      %v1437 = vld [vmem:[%s4] sm:$0xff]
      %v1438 = vld [vmem:[%s4 + $0x8] sm:$0xff]
      %1440 = vset.pattern.permute.xlu0 0
      %1441 = vperm.xlu0 %1440, %v1437
      %v1442 = vpop.permute.xlu0 %1441
      %1445 = vset.pattern.permute.xlu0 0
      %1446 = vperm.xlu0 %1445, %v1438
      %v1447 = vpop.permute.xlu0 %1446
      %v1449 = vadd.f32 %v1435, %v1442
      %v1450 = vadd.f32 %v1436, %v1447
      %v1451 = vld [vmem:[%s5] sm:$0xf]
      %v1452 = vld [vmem:[%s5 + $0x4] sm:$0xf]
      %v1455 = vunpack.c.l.b16 %v1451
      %v1456 = vunpack.c.l.b16 %v1452
      %v1457 = vpack.c.b16 %v1456, %v1455
      %v1459 = vsel %vm332, %v1457, 0
      %1461 = vmatprep.subr.bf16.mxu0 0
      %1462 = vmatpush1.bf16.msra.mxu0 0
      %1463 = vmatprep.subr.bf16.mxu0 0
      %1464 = vmatpush1.bf16.msra.mxu0 0
      %1465 = vmatprep.subr.bf16.mxu0 0
      %1466 = vmatpush1.bf16.msra.mxu0 0
      %1467 = vmatprep.subr.bf16.mxu0 0
      %1468 = vmatpush1.bf16.msra.mxu0 0
      %1469 = vmatprep.subr.bf16.mxu0 0
      %1470 = vmatpush1.bf16.msra.mxu0 0
      %1471 = vmatprep.subr.bf16.mxu0 0
      %1472 = vmatpush1.bf16.msra.mxu0 0
      %1473 = vmatprep.subr.bf16.mxu0 0
      %1474 = vmatpush1.bf16.msra.mxu0 %v561
      %1475 = vmatprep.subr.bf16.mxu0 0
      %1476 = vmatpush1.bf16.msra.mxu0 %v560
      %1477 = vmatprep.subr.bf16.mxu0 0
      %1478 = vmatpush2.bf16.msra.mxu0 0
      %1479 = vmatprep.subr.bf16.mxu0 0
      %1480 = vmatpush2.bf16.msra.mxu0 0
      %1481 = vmatprep.subr.bf16.mxu0 0
      %1482 = vmatpush2.bf16.msra.mxu0 0
      %1483 = vmatprep.subr.bf16.mxu0 0
      %1484 = vmatpush2.bf16.msra.mxu0 0
      %1485 = vmatprep.subr.bf16.mxu0 0
      %1486 = vmatpush2.bf16.msra.mxu0 0
      %1487 = vmatprep.subr.bf16.mxu0 0
      %1488 = vmatpush2.bf16.msra.mxu0 0
      %1489 = vmatprep.subr.bf16.mxu0 0
      %1490 = vmatpush2.bf16.msra.mxu0 0
      %1491 = vmatprep.subr.bf16.mxu0 0
      %1492 = vmatpush2.bf16.msra.mxu0 0
      %1493 = vmatprep.mubr.bf16.mxu0 0
      %1494 = vmatmul.mubr.bf16.gmra.mxu0 %v1459
      %v1495 = vpop.f32.mrf.mxu0
      %v1496 = vadd.f32 0.0, %v1495
      %v1497 = vpop.f32.mrf.mxu0
      %v1498 = vpop.f32.mrf.mxu0
      %v1499 = vadd.f32 0.0, %v1498
      %v1500 = vpop.f32.mrf.mxu0
      %1501 = vdwg.mxu0
      %v1502 = vadd.f32 %v1449, %v1496
      %v1503 = vadd.f32 %v1450, %v1499
      %v1504 = vld [vmem:[%s6] sm:$0xff]
      %v1505 = vld [vmem:[%s6 + $0x8] sm:$0xff]
      %1507 = vset.pattern.permute.xlu0 0
      %1508 = vperm.xlu0 %1507, %v1504
      %v1509 = vpop.permute.xlu0 %1508
      %1512 = vset.pattern.permute.xlu0 0
      %1513 = vperm.xlu0 %1512, %v1505
      %v1514 = vpop.permute.xlu0 %1513
      %v1516 = vadd.f32 %v1502, %v1509
      %v1517 = vadd.f32 %v1503, %v1514
      %vm1518 = vcmp.lt.s32.totalorder %v285, 4
      %v1519 = vsel %vm1518, 1, 0
      %vm1520 = vcmp.eq.s32.totalorder %v1519, 1
      %v1521 = vsel %vm1520, %v1516, 0.0
      %v1522 = vsel %vm1520, %v1517, 0.0
      %1523 = vst [vmem:[%s278] sm:$0xff] %v1521
      %1524 = vst [vmem:[%s278 + $0x8] sm:$0xff] %v1522
      %p1525 = scmp.lt.s32.totalorder %s18, 3
      %s1526 = scalar_select %p1525, %s18, 3
      %s1527 = smul.addr %s1526, 2
      %s1528 = smul.addr %s1527, 8
      %s1529 = scalar_lea.vmem %s7, %s1528
      // Predicated region
      $region49: #{encoder_forward.8} parent=47 // pred_check
        %p1530 = pneg %p188
      $region50: #{encoder_forward.8} parent=47 // pred_check_branch
        %1532 = sbr.rel (%p1530) target = $region52
      $region51: #{encoder_forward.8} parent=47 // pred_region
        _
      $region52: #{encoder_forward.8} parent=47 // pred_fallthru
        _
    $region48: #{encoder_forward.8} parent=5 // pred_fallthru
      _
    %p1533 = scmp.le.s32.totalorder 2, %s13
    // Predicated region
    $region53: #{encoder_forward.8} parent=5 // pred_check
      %p1534 = pneg %p1533
    $region54: #{encoder_forward.8} parent=5 // pred_check_branch
      %1536 = sbr.rel (%p1534) target = $region56
    $region55: #{encoder_forward.8} parent=5 // pred_region
      %s1537 = ssub.s32 %s13, 2
      // Predicated region
      $region57: #{encoder_forward.8} parent=55 // pred_check
        %p1538 = pneg %p194
      $region58: #{encoder_forward.8} parent=55 // pred_check_branch
        %1540 = sbr.rel (%p1538) target = $region60
      $region59: #{encoder_forward.8} parent=55 // pred_region
        %p1541 = scmp.lt.s32.totalorder %s19, 3
        %s1542 = scalar_select %p1541, %s19, 3
        %s1543 = smul.addr %s1542, 2
        %s1544 = smul.addr %s1543, 8
        %s1545 = scalar_lea.vmem %s7, %s1544
      $region60: #{encoder_forward.8} parent=55 // pred_fallthru
        _
    $region56: #{encoder_forward.8} parent=5 // pred_fallthru
      _
  $region6: #{encoder_forward.8} parent=0 // loop_footer
    %s17 = sadd.s32 1, %s13
  $region7: #{encoder_forward.8} parent=0 // loop_footer_branch
    %12 = sbr.rel target = $region3
  $region8: #{encoder_forward.8} parent=0 // loop_exit
    _

// kernel: encoder_forward.6
$region0: #{encoder_forward.6}
  #allocation0 [shape = 'u32[]', space=smem, size = 0x4, offset = 0x4, fixed_abs, tag = 'smem constant byte address 0x4 - core index']
  #allocation1 [shape = 'u32[144,128]{1,0:T(1,128)}', space=vmem, size = 0x12000, scoped, tag = 'internal scratch']
  %s0 = inlined_call_operand.vmem [shape: f32[4,8,128], index: 0, kind: input, shape index: {}]
  %s1 = inlined_call_operand.vmem [shape: bf16[144,8], index: 1, kind: input, shape index: {}]
  %s2 = inlined_call_operand.vmem [shape: f32[16,1], index: 2, kind: input, shape index: {}]
  %s3 = inlined_call_operand.vmem [shape: bf16[144,16], index: 3, kind: input, shape index: {}]
  %s4 = inlined_call_operand.vmem [shape: f32[16,1], index: 4, kind: input, shape index: {}]
  %s5 = inlined_call_operand.vmem [shape: bf16[16,8], index: 5, kind: input, shape index: {}]
  %s6 = inlined_call_operand.vmem [shape: f32[16,1], index: 6, kind: input, shape index: {}]
  %s7 = inlined_call_operand.vmem [shape: f32[4,16,128], index: 7, kind: output, shape index: {}]
  %s8 = sld [smem:[#allocation0]]
  $region61: #{encoder_forward.6} parent=0
    _
  %s10 = ssub.s32 1, %s8
  %s11 = scalar_select 0, %s10, %s8
  loop: start=0, step=1, limit=6
  $region2: #{encoder_forward.6} parent=0 // loop_pre_header
    _
  $region3: #{encoder_forward.6} parent=0 // loop_header
    %s13 = sphi 0, %s17
    %p14 = scmp.ge.s32.totalorder %s13, 6
    %s23 = sphi 0, %s25
    %s26 = sphi 0, %s23
    %s27 = sphi 0, %s26
    %s43 = sphi 0, %s27
    %s47 = sphi 0, %s47
    %s49 = sphi 0, %s47
    %s50 = sphi 0, %s49
    %s64 = sphi 0, %s50
    %s68 = sphi 0, %s68
    %s70 = sphi 0, %s68
    %s71 = sphi 0, %s70
    %s85 = sphi 0, %s71
    %s89 = sphi 0, %s89
    %s91 = sphi 0, %s89
    %s92 = sphi 0, %s91
    %s106 = sphi 0, %s92
    %s110 = sphi 0, %s110
    %s112 = sphi 0, %s110
    %s113 = sphi 0, %s112
    %s127 = sphi 0, %s113
    %s131 = sphi 0, %s131
    %s133 = sphi 0, %s131
    %s134 = sphi 0, %s133
    %s148 = sphi 0, %s134
    %s152 = sphi 0, %s152
    %s154 = sphi 0, %s152
    %s155 = sphi 0, %s154
    %s169 = sphi 0, %s155
    %s175 = sphi 0, %s177
    %s178 = sphi 0, %s175
    %s179 = sphi 0, %s178
    %s195 = sphi 0, %s179
  $region4: #{encoder_forward.6} parent=0 // loop_header_branch
    %16 = sbr.rel (%p14) target = $region8
  $region5: #{encoder_forward.6} parent=0 // loop_body
    %s18 = ssub.s32 %s13, 1
    %s19 = ssub.s32 %s13, 2
    %s20 = sadd.s32 %s13, 1
    %s21 = ssub.s32 %s13, %s20
    %p22 = scmp.eq.s32.totalorder %s21, 0
    %s24 = sadd.s32 %s23, 1
    %s25 = scalar_select %p22, %s23, %s24
    %p28 = pneg %p22
    %p29 = scmp.eq.s32.totalorder %s13, 3
    %p30 = por %p28, %p29
    %p31 = scmp.ne.s32.totalorder %s23, %s26
    %p32 = scmp.eq.s32.totalorder %s13, 0
    %p33 = por %p31, %p32
    %p34 = scmp.ne.s32.totalorder %s23, %s26
    %p35 = scmp.eq.s32.totalorder %s18, 3
    %p36 = por %p34, %p35
    %p37 = scmp.ne.s32.totalorder %s26, %s27
    %p38 = scmp.eq.s32.totalorder %s18, 0
    %p39 = por %p37, %p38
    %p40 = scmp.ne.s32.totalorder %s26, %s27
    %p41 = scmp.eq.s32.totalorder %s19, 3
    %p42 = por %p40, %p41
    %p44 = scmp.ne.s32.totalorder %s27, %s43
    %p45 = scmp.eq.s32.totalorder %s19, 0
    %p46 = por %p44, %p45
    %s48 = sadd.s32 %s47, 1
    %p51 = scmp.eq.s32.totalorder %s13, 3
    %p52 = scmp.ne.s32.totalorder %s47, %s49
    %p53 = scmp.eq.s32.totalorder %s13, 0
    %p54 = por %p52, %p53
    %p55 = scmp.ne.s32.totalorder %s47, %s49
    %p56 = scmp.eq.s32.totalorder %s18, 3
    %p57 = por %p55, %p56
    %p58 = scmp.ne.s32.totalorder %s49, %s50
    %p59 = scmp.eq.s32.totalorder %s18, 0
    %p60 = por %p58, %p59
    %p61 = scmp.ne.s32.totalorder %s49, %s50
    %p62 = scmp.eq.s32.totalorder %s19, 3
    %p63 = por %p61, %p62
    %p65 = scmp.ne.s32.totalorder %s50, %s64
    %p66 = scmp.eq.s32.totalorder %s19, 0
    %p67 = por %p65, %p66
    %s69 = sadd.s32 %s68, 1
    %p72 = scmp.eq.s32.totalorder %s13, 3
    %p73 = scmp.ne.s32.totalorder %s68, %s70
    %p74 = scmp.eq.s32.totalorder %s13, 0
    %p75 = por %p73, %p74
    %p76 = scmp.ne.s32.totalorder %s68, %s70
    %p77 = scmp.eq.s32.totalorder %s18, 3
    %p78 = por %p76, %p77
    %p79 = scmp.ne.s32.totalorder %s70, %s71
    %p80 = scmp.eq.s32.totalorder %s18, 0
    %p81 = por %p79, %p80
    %p82 = scmp.ne.s32.totalorder %s70, %s71
    %p83 = scmp.eq.s32.totalorder %s19, 3
    %p84 = por %p82, %p83
    %p86 = scmp.ne.s32.totalorder %s71, %s85
    %p87 = scmp.eq.s32.totalorder %s19, 0
    %p88 = por %p86, %p87
    %s90 = sadd.s32 %s89, 1
    %p93 = scmp.eq.s32.totalorder %s13, 3
    %p94 = scmp.ne.s32.totalorder %s89, %s91
    %p95 = scmp.eq.s32.totalorder %s13, 0
    %p96 = por %p94, %p95
    %p97 = scmp.ne.s32.totalorder %s89, %s91
    %p98 = scmp.eq.s32.totalorder %s18, 3
    %p99 = por %p97, %p98
    %p100 = scmp.ne.s32.totalorder %s91, %s92
    %p101 = scmp.eq.s32.totalorder %s18, 0
    %p102 = por %p100, %p101
    %p103 = scmp.ne.s32.totalorder %s91, %s92
    %p104 = scmp.eq.s32.totalorder %s19, 3
    %p105 = por %p103, %p104
    %p107 = scmp.ne.s32.totalorder %s92, %s106
    %p108 = scmp.eq.s32.totalorder %s19, 0
    %p109 = por %p107, %p108
    %s111 = sadd.s32 %s110, 1
    %p114 = scmp.eq.s32.totalorder %s13, 3
    %p115 = scmp.ne.s32.totalorder %s110, %s112
    %p116 = scmp.eq.s32.totalorder %s13, 0
    %p117 = por %p115, %p116
    %p118 = scmp.ne.s32.totalorder %s110, %s112
    %p119 = scmp.eq.s32.totalorder %s18, 3
    %p120 = por %p118, %p119
    %p121 = scmp.ne.s32.totalorder %s112, %s113
    %p122 = scmp.eq.s32.totalorder %s18, 0
    %p123 = por %p121, %p122
    %p124 = scmp.ne.s32.totalorder %s112, %s113
    %p125 = scmp.eq.s32.totalorder %s19, 3
    %p126 = por %p124, %p125
    %p128 = scmp.ne.s32.totalorder %s113, %s127
    %p129 = scmp.eq.s32.totalorder %s19, 0
    %p130 = por %p128, %p129
    %s132 = sadd.s32 %s131, 1
    %p135 = scmp.eq.s32.totalorder %s13, 3
    %p136 = scmp.ne.s32.totalorder %s131, %s133
    %p137 = scmp.eq.s32.totalorder %s13, 0
    %p138 = por %p136, %p137
    %p139 = scmp.ne.s32.totalorder %s131, %s133
    %p140 = scmp.eq.s32.totalorder %s18, 3
    %p141 = por %p139, %p140
    %p142 = scmp.ne.s32.totalorder %s133, %s134
    %p143 = scmp.eq.s32.totalorder %s18, 0
    %p144 = por %p142, %p143
    %p145 = scmp.ne.s32.totalorder %s133, %s134
    %p146 = scmp.eq.s32.totalorder %s19, 3
    %p147 = por %p145, %p146
    %p149 = scmp.ne.s32.totalorder %s134, %s148
    %p150 = scmp.eq.s32.totalorder %s19, 0
    %p151 = por %p149, %p150
    %s153 = sadd.s32 %s152, 1
    %p156 = scmp.eq.s32.totalorder %s13, 3
    %p157 = scmp.ne.s32.totalorder %s152, %s154
    %p158 = scmp.eq.s32.totalorder %s13, 0
    %p159 = por %p157, %p158
    %p160 = scmp.ne.s32.totalorder %s152, %s154
    %p161 = scmp.eq.s32.totalorder %s18, 3
    %p162 = por %p160, %p161
    %p163 = scmp.ne.s32.totalorder %s154, %s155
    %p164 = scmp.eq.s32.totalorder %s18, 0
    %p165 = por %p163, %p164
    %p166 = scmp.ne.s32.totalorder %s154, %s155
    %p167 = scmp.eq.s32.totalorder %s19, 3
    %p168 = por %p166, %p167
    %p170 = scmp.ne.s32.totalorder %s155, %s169
    %p171 = scmp.eq.s32.totalorder %s19, 0
    %p172 = por %p170, %p171
    %s173 = ssub.s32 %s13, %s20
    %p174 = scmp.eq.s32.totalorder %s173, 0
    %s176 = sadd.s32 %s175, 1
    %s177 = scalar_select %p174, %s175, %s176
    %p180 = pneg %p174
    %p181 = scmp.eq.s32.totalorder %s13, 3
    %p182 = por %p180, %p181
    %p183 = scmp.ne.s32.totalorder %s175, %s178
    %p184 = scmp.eq.s32.totalorder %s13, 0
    %p185 = por %p183, %p184
    %p186 = scmp.ne.s32.totalorder %s175, %s178
    %p187 = scmp.eq.s32.totalorder %s18, 3
    %p188 = por %p186, %p187
    %p189 = scmp.ne.s32.totalorder %s178, %s179
    %p190 = scmp.eq.s32.totalorder %s18, 0
    %p191 = por %p189, %p190
    %p192 = scmp.ne.s32.totalorder %s178, %s179
    %p193 = scmp.eq.s32.totalorder %s19, 3
    %p194 = por %p192, %p193
    %p196 = scmp.ne.s32.totalorder %s179, %s195
    %p197 = scmp.eq.s32.totalorder %s19, 0
    %p198 = por %p196, %p197
    %p199 = scmp.le.s32.totalorder 1, %s13
    %p200 = scmp.lt.s32.totalorder %s13, 5
    %p201 = pnand %p199, %p200
    %p202 = pneg %p201
    // Predicated region
    $region9: #{encoder_forward.6} parent=5 // pred_check
      _
    $region10: #{encoder_forward.6} parent=5 // pred_check_branch
      %204 = sbr.rel (%p201) target = $region12
    $region11: #{encoder_forward.6} parent=5 // pred_region
      %s205 = ssub.s32 %s13, 1
      // Predicated region
      $region13: #{encoder_forward.6} parent=11 // pred_check
        %p206 = pneg %p60
      $region14: #{encoder_forward.6} parent=11 // pred_check_branch
        %208 = sbr.rel (%p206) target = $region16
      $region15: #{encoder_forward.6} parent=11 // pred_region
        _
      $region16: #{encoder_forward.6} parent=11 // pred_fallthru
        _
      // Predicated region
      $region17: #{encoder_forward.6} parent=11 // pred_check
        %p209 = pneg %p81
      $region18: #{encoder_forward.6} parent=11 // pred_check_branch
        %211 = sbr.rel (%p209) target = $region20
      $region19: #{encoder_forward.6} parent=11 // pred_region
        _
      $region20: #{encoder_forward.6} parent=11 // pred_fallthru
        _
      // Predicated region
      $region21: #{encoder_forward.6} parent=11 // pred_check
        %p212 = pneg %p102
      $region22: #{encoder_forward.6} parent=11 // pred_check_branch
        %214 = sbr.rel (%p212) target = $region24
      $region23: #{encoder_forward.6} parent=11 // pred_region
        _
      $region24: #{encoder_forward.6} parent=11 // pred_fallthru
        _
      // Predicated region
      $region25: #{encoder_forward.6} parent=11 // pred_check
        %p215 = pneg %p123
      $region26: #{encoder_forward.6} parent=11 // pred_check_branch
        %217 = sbr.rel (%p215) target = $region28
      $region27: #{encoder_forward.6} parent=11 // pred_region
        _
      $region28: #{encoder_forward.6} parent=11 // pred_fallthru
        _
      // Predicated region
      $region29: #{encoder_forward.6} parent=11 // pred_check
        %p218 = pneg %p144
      $region30: #{encoder_forward.6} parent=11 // pred_check_branch
        %220 = sbr.rel (%p218) target = $region32
      $region31: #{encoder_forward.6} parent=11 // pred_region
        _
      $region32: #{encoder_forward.6} parent=11 // pred_fallthru
        _
      // Predicated region
      $region33: #{encoder_forward.6} parent=11 // pred_check
        %p221 = pneg %p165
      $region34: #{encoder_forward.6} parent=11 // pred_check_branch
        %223 = sbr.rel (%p221) target = $region36
      $region35: #{encoder_forward.6} parent=11 // pred_region
        _
      $region36: #{encoder_forward.6} parent=11 // pred_fallthru
        _
    $region12: #{encoder_forward.6} parent=5 // pred_fallthru
      _
    %p224 = scmp.lt.s32.totalorder %s13, 4
    // Predicated region
    $region37: #{encoder_forward.6} parent=5 // pred_check
      %p225 = pneg %p224
    $region38: #{encoder_forward.6} parent=5 // pred_check_branch
      %227 = sbr.rel (%p225) target = $region40
    $region39: #{encoder_forward.6} parent=5 // pred_region
      // Predicated region
      $region41: #{encoder_forward.6} parent=39 // pred_check
        %p228 = pneg %p33
      $region42: #{encoder_forward.6} parent=39 // pred_check_branch
        %230 = sbr.rel (%p228) target = $region44
      $region43: #{encoder_forward.6} parent=39 // pred_region
        %p231 = scmp.lt.s32.totalorder %s13, 3
        %s232 = scalar_select %p231, %s13, 3
        %s233 = smul.addr %s232, 8
        %s234 = scalar_lea.vmem %s0, %s233
      $region44: #{encoder_forward.6} parent=39 // pred_fallthru
        _
    $region40: #{encoder_forward.6} parent=5 // pred_fallthru
      _
    %p235 = scmp.le.s32.totalorder 1, %s13
    %p236 = scmp.lt.s32.totalorder %s13, 5
    %p237 = pnand %p235, %p236
    %p238 = pneg %p237
    // Predicated region
    $region45: #{encoder_forward.6} parent=5 // pred_check
      _
    $region46: #{encoder_forward.6} parent=5 // pred_check_branch
      %240 = sbr.rel (%p237) target = $region48
    $region47: #{encoder_forward.6} parent=5 // pred_region
      %s241 = ssub.s32 %s13, 1
      %p242 = scmp.lt.s32.totalorder %s18, 3
      %s243 = scalar_select %p242, %s18, 3
      %s244 = smul.addr %s243, 8
      %s245 = scalar_lea.vmem %s0, %s244
      %p246 = pneg %p39
      %p247 = pneg %p36
      %p248 = pneg %p60
      %p249 = pneg %p57
      %p250 = pneg %p81
      %p251 = pneg %p78
      %p252 = pneg %p102
      %p253 = pneg %p99
      %p254 = pneg %p123
      %p255 = pneg %p120
      %p256 = pneg %p144
      %p257 = pneg %p141
      %p258 = pneg %p165
      %p259 = pneg %p162
      %p260 = pneg %p191
      %p261 = pneg %p188
      %p262 = scmp.lt.s32.totalorder %s18, 3
      %s263 = scalar_select %p262, %s18, 3
      %s264 = smul.addr %s263, 2
      %s265 = smul.addr %s264, 8
      %s266 = scalar_lea.vmem %s7, %s265
      %p267 = scmp.lt.s32.totalorder %s18, 3
      %s268 = scalar_select %p267, %s18, 3
      %s269 = smul.addr %s268, 8
      %s270 = scalar_lea.vmem %s0, %s269
      %p271 = scmp.lt.s32.totalorder %s18, 3
      %s272 = scalar_select %p271, %s18, 3
      %s273 = smul.addr %s272, 2
      %s274 = smul.addr %s273, 8
      %s275 = scalar_lea.vmem %s7, %s274
      %v277 = vld [vmem:[%s270] sm:$0xff]
      %v278 = vlaneseq
      %v279 = vand.u32 %v278, 127
      %v280 = vshra.s32 %v279, 3
      %v281 = vand.u32 %v279, 7
      %282 = vrot.lane.b32.xlu0 %v277, 9
      %v283 = vpop.permute.xlu0 %282
      %vm284 = vcmp.ge.s32.totalorder %v280, 1
      %vm285 = vcmp.ge.s32.totalorder %v281, 1
      %vm286 = vmand %vm284, %vm285
      %v287 = vsel %vm286, 1, 0
      %vm288 = vcmp.eq.s32.totalorder %v287, 1
      %v289 = vsel %vm288, %v283, 0.0
      %v290 = vld [vmem:[%s1] sm:$0xf]
      %v291 = vld [vmem:[%s1 + $0x4] sm:$0xf]
      %v292 = vpack.c.bf16 %v289, %v289
      %293 = vrot.lane.b32.xlu0 %v277, 8
      %v294 = vpop.permute.xlu0 %293
      %v295 = vsel %vm284, 1, 0
      %vm296 = vcmp.eq.s32.totalorder %v295, 1
      %v297 = vsel %vm296, %v294, 0.0
      %v298 = vld [vmem:[%s1 + $0x8] sm:$0xf]
      %v299 = vld [vmem:[%s1 + $0xc] sm:$0xf]
      %v300 = vpack.c.bf16 %v297, %v297
      %v303 = vunpack.c.l.b16 %v298
      %v304 = vunpack.c.l.b16 %v299
      %v305 = vpack.c.b16 %v304, %v303
      %vm306 = vcmask 64512
      %v308 = vsel %vm306, %v305, 0
      %vm310 = vcmask 1043456
      %v312 = vsel %vm310, %v300, 0
      %314 = vmatprep.subr.bf16.mxu0 0
      %315 = vmatpush1.bf16.msra.mxu0 0
      %316 = vmatprep.subr.bf16.mxu0 0
      %317 = vmatpush1.bf16.msra.mxu0 0
      %318 = vmatprep.subr.bf16.mxu0 0
      %319 = vmatpush1.bf16.msra.mxu0 0
      %320 = vmatprep.subr.bf16.mxu0 0
      %321 = vmatpush1.bf16.msra.mxu0 0
      %322 = vmatprep.subr.bf16.mxu0 0
      %323 = vmatpush1.bf16.msra.mxu0 0
      %324 = vmatprep.subr.bf16.mxu0 0
      %325 = vmatpush1.bf16.msra.mxu0 0
      %326 = vmatprep.subr.bf16.mxu0 0
      %327 = vmatpush1.bf16.msra.mxu0 0
      %328 = vmatprep.subr.bf16.mxu0 0
      %329 = vmatpush1.bf16.msra.mxu0 %v312
      %330 = vmatprep.subr.bf16.mxu0 0
      %331 = vmatpush2.bf16.msra.mxu0 0
      %332 = vmatprep.subr.bf16.mxu0 0
      %333 = vmatpush2.bf16.msra.mxu0 0
      %334 = vmatprep.subr.bf16.mxu0 0
      %335 = vmatpush2.bf16.msra.mxu0 0
      %336 = vmatprep.subr.bf16.mxu0 0
      %337 = vmatpush2.bf16.msra.mxu0 0
      %338 = vmatprep.subr.bf16.mxu0 0
      %339 = vmatpush2.bf16.msra.mxu0 0
      %340 = vmatprep.subr.bf16.mxu0 0
      %341 = vmatpush2.bf16.msra.mxu0 0
      %342 = vmatprep.subr.bf16.mxu0 0
      %343 = vmatpush2.bf16.msra.mxu0 0
      %344 = vmatprep.subr.bf16.mxu0 0
      %345 = vmatpush2.bf16.msra.mxu0 0
      %346 = vmatprep.mubr.bf16.mxu0 0
      %347 = vmatmul.mubr.bf16.gmra.mxu0 %v308
      %v348 = vpop.f32.mrf.mxu0
      %v349 = vadd.f32 0.0, %v348
      %v350 = vpop.f32.mrf.mxu0
      %v351 = vpop.f32.mrf.mxu0
      %v352 = vadd.f32 0.0, %v351
      %v353 = vpop.f32.mrf.mxu0
      %354 = vdwg.mxu0
      %v357 = vunpack.c.l.b16 %v290
      %v358 = vunpack.c.l.b16 %v291
      %v359 = vpack.c.b16 %v358, %v357
      %v361 = vsel %vm306, %v359, 0
      %v364 = vsel %vm310, %v292, 0
      %366 = vmatprep.subr.bf16.mxu0 0
      %367 = vmatpush1.bf16.msra.mxu0 0
      %368 = vmatprep.subr.bf16.mxu0 0
      %369 = vmatpush1.bf16.msra.mxu0 0
      %370 = vmatprep.subr.bf16.mxu0 0
      %371 = vmatpush1.bf16.msra.mxu0 0
      %372 = vmatprep.subr.bf16.mxu0 0
      %373 = vmatpush1.bf16.msra.mxu0 0
      %374 = vmatprep.subr.bf16.mxu0 0
      %375 = vmatpush1.bf16.msra.mxu0 0
      %376 = vmatprep.subr.bf16.mxu0 0
      %377 = vmatpush1.bf16.msra.mxu0 0
      %378 = vmatprep.subr.bf16.mxu0 0
      %379 = vmatpush1.bf16.msra.mxu0 0
      %380 = vmatprep.subr.bf16.mxu0 0
      %381 = vmatpush1.bf16.msra.mxu0 %v364
      %382 = vmatprep.subr.bf16.mxu0 0
      %383 = vmatpush2.bf16.msra.mxu0 0
      %384 = vmatprep.subr.bf16.mxu0 0
      %385 = vmatpush2.bf16.msra.mxu0 0
      %386 = vmatprep.subr.bf16.mxu0 0
      %387 = vmatpush2.bf16.msra.mxu0 0
      %388 = vmatprep.subr.bf16.mxu0 0
      %389 = vmatpush2.bf16.msra.mxu0 0
      %390 = vmatprep.subr.bf16.mxu0 0
      %391 = vmatpush2.bf16.msra.mxu0 0
      %392 = vmatprep.subr.bf16.mxu0 0
      %393 = vmatpush2.bf16.msra.mxu0 0
      %394 = vmatprep.subr.bf16.mxu0 0
      %395 = vmatpush2.bf16.msra.mxu0 0
      %396 = vmatprep.subr.bf16.mxu0 0
      %397 = vmatpush2.bf16.msra.mxu0 0
      %398 = vmatprep.mubr.bf16.mxu0 0
      %399 = vmatmul.mubr.bf16.gmra.mxu0 %v361
      %v400 = vpop.f32.mrf.mxu0
      %v401 = vadd.f32 %v349, %v400
      %v402 = vpop.f32.mrf.mxu0
      %v403 = vpop.f32.mrf.mxu0
      %v404 = vadd.f32 %v352, %v403
      %v405 = vpop.f32.mrf.mxu0
      %406 = vdwg.mxu0
      %407 = vrot.lane.b32.xlu0 %v277, 7
      %v408 = vpop.permute.xlu0 %407
      %vm409 = vcmp.lt.s32.totalorder %v281, 7
      %vm410 = vmand %vm284, %vm409
      %v411 = vsel %vm410, 1, 0
      %vm412 = vcmp.eq.s32.totalorder %v411, 1
      %v413 = vsel %vm412, %v408, 0.0
      %v414 = vld [vmem:[%s1 + $0x10] sm:$0xf]
      %v415 = vld [vmem:[%s1 + $0x14] sm:$0xf]
      %v416 = vpack.c.bf16 %v413, %v413
      %v419 = vunpack.c.l.b16 %v414
      %v420 = vunpack.c.l.b16 %v415
      %v421 = vpack.c.b16 %v420, %v419
      %v423 = vsel %vm306, %v421, 0
      %v426 = vsel %vm310, %v416, 0
      %428 = vmatprep.subr.bf16.mxu0 0
      %429 = vmatpush1.bf16.msra.mxu0 0
      %430 = vmatprep.subr.bf16.mxu0 0
      %431 = vmatpush1.bf16.msra.mxu0 0
      %432 = vmatprep.subr.bf16.mxu0 0
      %433 = vmatpush1.bf16.msra.mxu0 0
      %434 = vmatprep.subr.bf16.mxu0 0
      %435 = vmatpush1.bf16.msra.mxu0 0
      %436 = vmatprep.subr.bf16.mxu0 0
      %437 = vmatpush1.bf16.msra.mxu0 0
      %438 = vmatprep.subr.bf16.mxu0 0
      %439 = vmatpush1.bf16.msra.mxu0 0
      %440 = vmatprep.subr.bf16.mxu0 0
      %441 = vmatpush1.bf16.msra.mxu0 0
      %442 = vmatprep.subr.bf16.mxu0 0
      %443 = vmatpush1.bf16.msra.mxu0 %v426
      %444 = vmatprep.subr.bf16.mxu0 0
      %445 = vmatpush2.bf16.msra.mxu0 0
      %446 = vmatprep.subr.bf16.mxu0 0
      %447 = vmatpush2.bf16.msra.mxu0 0
      %448 = vmatprep.subr.bf16.mxu0 0
      %449 = vmatpush2.bf16.msra.mxu0 0
      %450 = vmatprep.subr.bf16.mxu0 0
      %451 = vmatpush2.bf16.msra.mxu0 0
      %452 = vmatprep.subr.bf16.mxu0 0
      %453 = vmatpush2.bf16.msra.mxu0 0
      %454 = vmatprep.subr.bf16.mxu0 0
      %455 = vmatpush2.bf16.msra.mxu0 0
      %456 = vmatprep.subr.bf16.mxu0 0
      %457 = vmatpush2.bf16.msra.mxu0 0
      %458 = vmatprep.subr.bf16.mxu0 0
      %459 = vmatpush2.bf16.msra.mxu0 0
      %460 = vmatprep.mubr.bf16.mxu0 0
      %461 = vmatmul.mubr.bf16.gmra.mxu0 %v423
      %v462 = vpop.f32.mrf.mxu0
      %v463 = vadd.f32 0.0, %v462
      %v464 = vpop.f32.mrf.mxu0
      %v465 = vpop.f32.mrf.mxu0
      %v466 = vadd.f32 0.0, %v465
      %v467 = vpop.f32.mrf.mxu0
      %468 = vdwg.mxu0
      %v469 = vadd.f32 %v401, %v463
      %v470 = vadd.f32 %v404, %v466
      %471 = vrot.lane.b32.xlu0 %v277, 1
      %v472 = vpop.permute.xlu0 %471
      %v473 = vsel %vm285, 1, 0
      %vm474 = vcmp.eq.s32.totalorder %v473, 1
      %v475 = vsel %vm474, %v472, 0.0
      %v476 = vld [vmem:[%s1 + $0x18] sm:$0xf]
      %v477 = vld [vmem:[%s1 + $0x1c] sm:$0xf]
      %v478 = vpack.c.bf16 %v475, %v475
      %v481 = vunpack.c.l.b16 %v476
      %v482 = vunpack.c.l.b16 %v477
      %v483 = vpack.c.b16 %v482, %v481
      %v485 = vsel %vm306, %v483, 0
      %v488 = vsel %vm310, %v478, 0
      %490 = vmatprep.subr.bf16.mxu0 0
      %491 = vmatpush1.bf16.msra.mxu0 0
      %492 = vmatprep.subr.bf16.mxu0 0
      %493 = vmatpush1.bf16.msra.mxu0 0
      %494 = vmatprep.subr.bf16.mxu0 0
      %495 = vmatpush1.bf16.msra.mxu0 0
      %496 = vmatprep.subr.bf16.mxu0 0
      %497 = vmatpush1.bf16.msra.mxu0 0
      %498 = vmatprep.subr.bf16.mxu0 0
      %499 = vmatpush1.bf16.msra.mxu0 0
      %500 = vmatprep.subr.bf16.mxu0 0
      %501 = vmatpush1.bf16.msra.mxu0 0
      %502 = vmatprep.subr.bf16.mxu0 0
      %503 = vmatpush1.bf16.msra.mxu0 0
      %504 = vmatprep.subr.bf16.mxu0 0
      %505 = vmatpush1.bf16.msra.mxu0 %v488
      %506 = vmatprep.subr.bf16.mxu0 0
      %507 = vmatpush2.bf16.msra.mxu0 0
      %508 = vmatprep.subr.bf16.mxu0 0
      %509 = vmatpush2.bf16.msra.mxu0 0
      %510 = vmatprep.subr.bf16.mxu0 0
      %511 = vmatpush2.bf16.msra.mxu0 0
      %512 = vmatprep.subr.bf16.mxu0 0
      %513 = vmatpush2.bf16.msra.mxu0 0
      %514 = vmatprep.subr.bf16.mxu0 0
      %515 = vmatpush2.bf16.msra.mxu0 0
      %516 = vmatprep.subr.bf16.mxu0 0
      %517 = vmatpush2.bf16.msra.mxu0 0
      %518 = vmatprep.subr.bf16.mxu0 0
      %519 = vmatpush2.bf16.msra.mxu0 0
      %520 = vmatprep.subr.bf16.mxu0 0
      %521 = vmatpush2.bf16.msra.mxu0 0
      %522 = vmatprep.mubr.bf16.mxu0 0
      %523 = vmatmul.mubr.bf16.gmra.mxu0 %v485
      %v524 = vpop.f32.mrf.mxu0
      %v525 = vadd.f32 0.0, %v524
      %v526 = vpop.f32.mrf.mxu0
      %v527 = vpop.f32.mrf.mxu0
      %v528 = vadd.f32 0.0, %v527
      %v529 = vpop.f32.mrf.mxu0
      %530 = vdwg.mxu0
      %v531 = vadd.f32 %v469, %v525
      %v532 = vadd.f32 %v470, %v528
      %v533 = vld [vmem:[%s1 + $0x20] sm:$0xf]
      %v534 = vld [vmem:[%s1 + $0x24] sm:$0xf]
      %v535 = vpack.c.bf16 %v277, %v277
      %v538 = vunpack.c.l.b16 %v533
      %v539 = vunpack.c.l.b16 %v534
      %v540 = vpack.c.b16 %v539, %v538
      %v542 = vsel %vm306, %v540, 0
      %v545 = vsel %vm310, %v535, 0
      %547 = vmatprep.subr.bf16.mxu0 0
      %548 = vmatpush1.bf16.msra.mxu0 0
      %549 = vmatprep.subr.bf16.mxu0 0
      %550 = vmatpush1.bf16.msra.mxu0 0
      %551 = vmatprep.subr.bf16.mxu0 0
      %552 = vmatpush1.bf16.msra.mxu0 0
      %553 = vmatprep.subr.bf16.mxu0 0
      %554 = vmatpush1.bf16.msra.mxu0 0
      %555 = vmatprep.subr.bf16.mxu0 0
      %556 = vmatpush1.bf16.msra.mxu0 0
      %557 = vmatprep.subr.bf16.mxu0 0
      %558 = vmatpush1.bf16.msra.mxu0 0
      %559 = vmatprep.subr.bf16.mxu0 0
      %560 = vmatpush1.bf16.msra.mxu0 0
      %561 = vmatprep.subr.bf16.mxu0 0
      %562 = vmatpush1.bf16.msra.mxu0 %v545
      %563 = vmatprep.subr.bf16.mxu0 0
      %564 = vmatpush2.bf16.msra.mxu0 0
      %565 = vmatprep.subr.bf16.mxu0 0
      %566 = vmatpush2.bf16.msra.mxu0 0
      %567 = vmatprep.subr.bf16.mxu0 0
      %568 = vmatpush2.bf16.msra.mxu0 0
      %569 = vmatprep.subr.bf16.mxu0 0
      %570 = vmatpush2.bf16.msra.mxu0 0
      %571 = vmatprep.subr.bf16.mxu0 0
      %572 = vmatpush2.bf16.msra.mxu0 0
      %573 = vmatprep.subr.bf16.mxu0 0
      %574 = vmatpush2.bf16.msra.mxu0 0
      %575 = vmatprep.subr.bf16.mxu0 0
      %576 = vmatpush2.bf16.msra.mxu0 0
      %577 = vmatprep.subr.bf16.mxu0 0
      %578 = vmatpush2.bf16.msra.mxu0 0
      %579 = vmatprep.mubr.bf16.mxu0 0
      %580 = vmatmul.mubr.bf16.gmra.mxu0 %v542
      %v581 = vpop.f32.mrf.mxu0
      %v582 = vadd.f32 0.0, %v581
      %v583 = vpop.f32.mrf.mxu0
      %v584 = vpop.f32.mrf.mxu0
      %v585 = vadd.f32 0.0, %v584
      %v586 = vpop.f32.mrf.mxu0
      %587 = vdwg.mxu0
      %v588 = vadd.f32 %v531, %v582
      %v589 = vadd.f32 %v532, %v585
      %590 = vrot.lane.b32.xlu0 %v277, 127
      %v591 = vpop.permute.xlu0 %590
      %v592 = vsel %vm409, 1, 0
      %vm593 = vcmp.eq.s32.totalorder %v592, 1
      %v594 = vsel %vm593, %v591, 0.0
      %v595 = vld [vmem:[%s1 + $0x28] sm:$0xf]
      %v596 = vld [vmem:[%s1 + $0x2c] sm:$0xf]
      %v597 = vpack.c.bf16 %v594, %v594
      %v600 = vunpack.c.l.b16 %v595
      %v601 = vunpack.c.l.b16 %v596
      %v602 = vpack.c.b16 %v601, %v600
      %v604 = vsel %vm306, %v602, 0
      %v607 = vsel %vm310, %v597, 0
      %609 = vmatprep.subr.bf16.mxu0 0
      %610 = vmatpush1.bf16.msra.mxu0 0
      %611 = vmatprep.subr.bf16.mxu0 0
      %612 = vmatpush1.bf16.msra.mxu0 0
      %613 = vmatprep.subr.bf16.mxu0 0
      %614 = vmatpush1.bf16.msra.mxu0 0
      %615 = vmatprep.subr.bf16.mxu0 0
      %616 = vmatpush1.bf16.msra.mxu0 0
      %617 = vmatprep.subr.bf16.mxu0 0
      %618 = vmatpush1.bf16.msra.mxu0 0
      %619 = vmatprep.subr.bf16.mxu0 0
      %620 = vmatpush1.bf16.msra.mxu0 0
      %621 = vmatprep.subr.bf16.mxu0 0
      %622 = vmatpush1.bf16.msra.mxu0 0
      %623 = vmatprep.subr.bf16.mxu0 0
      %624 = vmatpush1.bf16.msra.mxu0 %v607
      %625 = vmatprep.subr.bf16.mxu0 0
      %626 = vmatpush2.bf16.msra.mxu0 0
      %627 = vmatprep.subr.bf16.mxu0 0
      %628 = vmatpush2.bf16.msra.mxu0 0
      %629 = vmatprep.subr.bf16.mxu0 0
      %630 = vmatpush2.bf16.msra.mxu0 0
      %631 = vmatprep.subr.bf16.mxu0 0
      %632 = vmatpush2.bf16.msra.mxu0 0
      %633 = vmatprep.subr.bf16.mxu0 0
      %634 = vmatpush2.bf16.msra.mxu0 0
      %635 = vmatprep.subr.bf16.mxu0 0
      %636 = vmatpush2.bf16.msra.mxu0 0
      %637 = vmatprep.subr.bf16.mxu0 0
      %638 = vmatpush2.bf16.msra.mxu0 0
      %639 = vmatprep.subr.bf16.mxu0 0
      %640 = vmatpush2.bf16.msra.mxu0 0
      %641 = vmatprep.mubr.bf16.mxu0 0
      %642 = vmatmul.mubr.bf16.gmra.mxu0 %v604
      %v643 = vpop.f32.mrf.mxu0
      %v644 = vadd.f32 0.0, %v643
      %v645 = vpop.f32.mrf.mxu0
      %v646 = vpop.f32.mrf.mxu0
      %v647 = vadd.f32 0.0, %v646
      %v648 = vpop.f32.mrf.mxu0
      %649 = vdwg.mxu0
      %v650 = vadd.f32 %v588, %v644
      %v651 = vadd.f32 %v589, %v647
      %652 = vrot.lane.b32.xlu0 %v277, 121
      %v653 = vpop.permute.xlu0 %652
      %vm654 = vcmp.lt.s32.totalorder %v280, 7
      %vm655 = vmand %vm654, %vm285
      %v656 = vsel %vm655, 1, 0
      %vm657 = vcmp.eq.s32.totalorder %v656, 1
      %v658 = vsel %vm657, %v653, 0.0
      %v659 = vld [vmem:[%s1 + $0x30] sm:$0xf]
      %v660 = vld [vmem:[%s1 + $0x34] sm:$0xf]
      %v661 = vpack.c.bf16 %v658, %v658
      %v664 = vunpack.c.l.b16 %v659
      %v665 = vunpack.c.l.b16 %v660
      %v666 = vpack.c.b16 %v665, %v664
      %v668 = vsel %vm306, %v666, 0
      %v671 = vsel %vm310, %v661, 0
      %673 = vmatprep.subr.bf16.mxu0 0
      %674 = vmatpush1.bf16.msra.mxu0 0
      %675 = vmatprep.subr.bf16.mxu0 0
      %676 = vmatpush1.bf16.msra.mxu0 0
      %677 = vmatprep.subr.bf16.mxu0 0
      %678 = vmatpush1.bf16.msra.mxu0 0
      %679 = vmatprep.subr.bf16.mxu0 0
      %680 = vmatpush1.bf16.msra.mxu0 0
      %681 = vmatprep.subr.bf16.mxu0 0
      %682 = vmatpush1.bf16.msra.mxu0 0
      %683 = vmatprep.subr.bf16.mxu0 0
      %684 = vmatpush1.bf16.msra.mxu0 0
      %685 = vmatprep.subr.bf16.mxu0 0
      %686 = vmatpush1.bf16.msra.mxu0 0
      %687 = vmatprep.subr.bf16.mxu0 0
      %688 = vmatpush1.bf16.msra.mxu0 %v671
      %689 = vmatprep.subr.bf16.mxu0 0
      %690 = vmatpush2.bf16.msra.mxu0 0
      %691 = vmatprep.subr.bf16.mxu0 0
      %692 = vmatpush2.bf16.msra.mxu0 0
      %693 = vmatprep.subr.bf16.mxu0 0
      %694 = vmatpush2.bf16.msra.mxu0 0
      %695 = vmatprep.subr.bf16.mxu0 0
      %696 = vmatpush2.bf16.msra.mxu0 0
      %697 = vmatprep.subr.bf16.mxu0 0
      %698 = vmatpush2.bf16.msra.mxu0 0
      %699 = vmatprep.subr.bf16.mxu0 0
      %700 = vmatpush2.bf16.msra.mxu0 0
      %701 = vmatprep.subr.bf16.mxu0 0
      %702 = vmatpush2.bf16.msra.mxu0 0
      %703 = vmatprep.subr.bf16.mxu0 0
      %704 = vmatpush2.bf16.msra.mxu0 0
      %705 = vmatprep.mubr.bf16.mxu0 0
      %706 = vmatmul.mubr.bf16.gmra.mxu0 %v668
      %v707 = vpop.f32.mrf.mxu0
      %v708 = vadd.f32 0.0, %v707
      %v709 = vpop.f32.mrf.mxu0
      %v710 = vpop.f32.mrf.mxu0
      %v711 = vadd.f32 0.0, %v710
      %v712 = vpop.f32.mrf.mxu0
      %713 = vdwg.mxu0
      %v714 = vadd.f32 %v650, %v708
      %v715 = vadd.f32 %v651, %v711
      %716 = vrot.lane.b32.xlu0 %v277, 120
      %v717 = vpop.permute.xlu0 %716
      %v718 = vsel %vm654, 1, 0
      %vm719 = vcmp.eq.s32.totalorder %v718, 1
      %v720 = vsel %vm719, %v717, 0.0
      %v721 = vld [vmem:[%s1 + $0x38] sm:$0xf]
      %v722 = vld [vmem:[%s1 + $0x3c] sm:$0xf]
      %v723 = vpack.c.bf16 %v720, %v720
      %v726 = vunpack.c.l.b16 %v721
      %v727 = vunpack.c.l.b16 %v722
      %v728 = vpack.c.b16 %v727, %v726
      %v730 = vsel %vm306, %v728, 0
      %v733 = vsel %vm310, %v723, 0
      %735 = vmatprep.subr.bf16.mxu0 0
      %736 = vmatpush1.bf16.msra.mxu0 0
      %737 = vmatprep.subr.bf16.mxu0 0
      %738 = vmatpush1.bf16.msra.mxu0 0
      %739 = vmatprep.subr.bf16.mxu0 0
      %740 = vmatpush1.bf16.msra.mxu0 0
      %741 = vmatprep.subr.bf16.mxu0 0
      %742 = vmatpush1.bf16.msra.mxu0 0
      %743 = vmatprep.subr.bf16.mxu0 0
      %744 = vmatpush1.bf16.msra.mxu0 0
      %745 = vmatprep.subr.bf16.mxu0 0
      %746 = vmatpush1.bf16.msra.mxu0 0
      %747 = vmatprep.subr.bf16.mxu0 0
      %748 = vmatpush1.bf16.msra.mxu0 0
      %749 = vmatprep.subr.bf16.mxu0 0
      %750 = vmatpush1.bf16.msra.mxu0 %v733
      %751 = vmatprep.subr.bf16.mxu0 0
      %752 = vmatpush2.bf16.msra.mxu0 0
      %753 = vmatprep.subr.bf16.mxu0 0
      %754 = vmatpush2.bf16.msra.mxu0 0
      %755 = vmatprep.subr.bf16.mxu0 0
      %756 = vmatpush2.bf16.msra.mxu0 0
      %757 = vmatprep.subr.bf16.mxu0 0
      %758 = vmatpush2.bf16.msra.mxu0 0
      %759 = vmatprep.subr.bf16.mxu0 0
      %760 = vmatpush2.bf16.msra.mxu0 0
      %761 = vmatprep.subr.bf16.mxu0 0
      %762 = vmatpush2.bf16.msra.mxu0 0
      %763 = vmatprep.subr.bf16.mxu0 0
      %764 = vmatpush2.bf16.msra.mxu0 0
      %765 = vmatprep.subr.bf16.mxu0 0
      %766 = vmatpush2.bf16.msra.mxu0 0
      %767 = vmatprep.mubr.bf16.mxu0 0
      %768 = vmatmul.mubr.bf16.gmra.mxu0 %v730
      %v769 = vpop.f32.mrf.mxu0
      %v770 = vadd.f32 0.0, %v769
      %v771 = vpop.f32.mrf.mxu0
      %v772 = vpop.f32.mrf.mxu0
      %v773 = vadd.f32 0.0, %v772
      %v774 = vpop.f32.mrf.mxu0
      %775 = vdwg.mxu0
      %v776 = vadd.f32 %v714, %v770
      %v777 = vadd.f32 %v715, %v773
      %778 = vrot.lane.b32.xlu0 %v277, 119
      %v779 = vpop.permute.xlu0 %778
      %vm780 = vmand %vm654, %vm409
      %v781 = vsel %vm780, 1, 0
      %vm782 = vcmp.eq.s32.totalorder %v781, 1
      %v783 = vsel %vm782, %v779, 0.0
      %v784 = vld [vmem:[%s1 + $0x40] sm:$0xf]
      %v785 = vld [vmem:[%s1 + $0x44] sm:$0xf]
      %v786 = vpack.c.bf16 %v783, %v783
      %v789 = vunpack.c.l.b16 %v784
      %v790 = vunpack.c.l.b16 %v785
      %v791 = vpack.c.b16 %v790, %v789
      %v793 = vsel %vm306, %v791, 0
      %v796 = vsel %vm310, %v786, 0
      %798 = vmatprep.subr.bf16.mxu0 0
      %799 = vmatpush1.bf16.msra.mxu0 0
      %800 = vmatprep.subr.bf16.mxu0 0
      %801 = vmatpush1.bf16.msra.mxu0 0
      %802 = vmatprep.subr.bf16.mxu0 0
      %803 = vmatpush1.bf16.msra.mxu0 0
      %804 = vmatprep.subr.bf16.mxu0 0
      %805 = vmatpush1.bf16.msra.mxu0 0
      %806 = vmatprep.subr.bf16.mxu0 0
      %807 = vmatpush1.bf16.msra.mxu0 0
      %808 = vmatprep.subr.bf16.mxu0 0
      %809 = vmatpush1.bf16.msra.mxu0 0
      %810 = vmatprep.subr.bf16.mxu0 0
      %811 = vmatpush1.bf16.msra.mxu0 0
      %812 = vmatprep.subr.bf16.mxu0 0
      %813 = vmatpush1.bf16.msra.mxu0 %v796
      %814 = vmatprep.subr.bf16.mxu0 0
      %815 = vmatpush2.bf16.msra.mxu0 0
      %816 = vmatprep.subr.bf16.mxu0 0
      %817 = vmatpush2.bf16.msra.mxu0 0
      %818 = vmatprep.subr.bf16.mxu0 0
      %819 = vmatpush2.bf16.msra.mxu0 0
      %820 = vmatprep.subr.bf16.mxu0 0
      %821 = vmatpush2.bf16.msra.mxu0 0
      %822 = vmatprep.subr.bf16.mxu0 0
      %823 = vmatpush2.bf16.msra.mxu0 0
      %824 = vmatprep.subr.bf16.mxu0 0
      %825 = vmatpush2.bf16.msra.mxu0 0
      %826 = vmatprep.subr.bf16.mxu0 0
      %827 = vmatpush2.bf16.msra.mxu0 0
      %828 = vmatprep.subr.bf16.mxu0 0
      %829 = vmatpush2.bf16.msra.mxu0 0
      %830 = vmatprep.mubr.bf16.mxu0 0
      %831 = vmatmul.mubr.bf16.gmra.mxu0 %v793
      %v832 = vpop.f32.mrf.mxu0
      %v833 = vadd.f32 0.0, %v832
      %v834 = vpop.f32.mrf.mxu0
      %v835 = vpop.f32.mrf.mxu0
      %v836 = vadd.f32 0.0, %v835
      %v837 = vpop.f32.mrf.mxu0
      %838 = vdwg.mxu0
      %v839 = vadd.f32 %v776, %v833
      %v840 = vadd.f32 %v777, %v836
      %v841 = vld [vmem:[%s2] sm:$0xff]
      %v842 = vld [vmem:[%s2 + $0x8] sm:$0xff]
      %844 = vset.pattern.permute.xlu0 0
      %845 = vperm.xlu0 %844, %v841
      %v846 = vpop.permute.xlu0 %845
      %849 = vset.pattern.permute.xlu0 0
      %850 = vperm.xlu0 %849, %v842
      %v851 = vpop.permute.xlu0 %850
      %v853 = vadd.f32 %v839, %v846
      %v854 = vadd.f32 %v840, %v851
      %vm855 = vcmp.gt.f32.partialorder %v853, 0.0
      %vm856 = vcmp.gt.f32.partialorder %v854, 0.0
      %v857 = vmin.f32 %v853, 0.0
      %v858 = vmin.f32 %v854, 0.0
      %v859 = vmul.f32 %v857, 1.442695
      %v860 = vpow.pop %v859
      %v861 = vmul.f32 %v858, 1.442695
      %v862 = vpow.pop %v861
      %v863 = vsub.f32 %v860, 1.0
      %v864 = vsub.f32 %v862, 1.0
      %v865 = vmul.f32 %v863, 1.6732632
      %v866 = vmul.f32 %v864, 1.6732632
      %v867 = vsel %vm855, %v853, %v865
      %v868 = vsel %vm856, %v854, %v866
      %v869 = vmul.f32 %v867, 1.050701
      %v870 = vmul.f32 %v868, 1.050701
      %871 = vrot.lane.b32.xlu0 %v869, 9
      %v872 = vpop.permute.xlu0 %871
      %873 = vrot.lane.b32.xlu0 %v870, 9
      %v874 = vpop.permute.xlu0 %873
      %v875 = vsel %vm288, %v872, 0.0
      %v876 = vsel %vm288, %v874, 0.0
      %v877 = vld [vmem:[%s3] sm:$0xf]
      %v878 = vld [vmem:[%s3 + $0x4] sm:$0xf]
      %v879 = vpack.c.bf16 %v876, %v875
      %880 = vrot.lane.b32.xlu0 %v869, 8
      %v881 = vpop.permute.xlu0 %880
      %882 = vrot.lane.b32.xlu0 %v870, 8
      %v883 = vpop.permute.xlu0 %882
      %v884 = vsel %vm296, %v881, 0.0
      %v885 = vsel %vm296, %v883, 0.0
      %v886 = vld [vmem:[%s3 + $0x8] sm:$0xf]
      %v887 = vld [vmem:[%s3 + $0xc] sm:$0xf]
      %v888 = vpack.c.bf16 %v885, %v884
      %v891 = vunpack.c.l.b16 %v886
      %v892 = vunpack.c.l.b16 %v887
      %v893 = vpack.c.b16 %v892, %v891
      %vm894 = vcmask 130048
      %v896 = vsel %vm894, %v893, 0
      %898 = vmatprep.subr.bf16.mxu0 0
      %899 = vmatpush1.bf16.msra.mxu0 0
      %900 = vmatprep.subr.bf16.mxu0 0
      %901 = vmatpush1.bf16.msra.mxu0 0
      %902 = vmatprep.subr.bf16.mxu0 0
      %903 = vmatpush1.bf16.msra.mxu0 0
      %904 = vmatprep.subr.bf16.mxu0 0
      %905 = vmatpush1.bf16.msra.mxu0 0
      %906 = vmatprep.subr.bf16.mxu0 0
      %907 = vmatpush1.bf16.msra.mxu0 0
      %908 = vmatprep.subr.bf16.mxu0 0
      %909 = vmatpush1.bf16.msra.mxu0 0
      %910 = vmatprep.subr.bf16.mxu0 0
      %911 = vmatpush1.bf16.msra.mxu0 0
      %912 = vmatprep.subr.bf16.mxu0 0
      %913 = vmatpush1.bf16.msra.mxu0 %v888
      %914 = vmatprep.subr.bf16.mxu0 0
      %915 = vmatpush2.bf16.msra.mxu0 0
      %916 = vmatprep.subr.bf16.mxu0 0
      %917 = vmatpush2.bf16.msra.mxu0 0
      %918 = vmatprep.subr.bf16.mxu0 0
      %919 = vmatpush2.bf16.msra.mxu0 0
      %920 = vmatprep.subr.bf16.mxu0 0
      %921 = vmatpush2.bf16.msra.mxu0 0
      %922 = vmatprep.subr.bf16.mxu0 0
      %923 = vmatpush2.bf16.msra.mxu0 0
      %924 = vmatprep.subr.bf16.mxu0 0
      %925 = vmatpush2.bf16.msra.mxu0 0
      %926 = vmatprep.subr.bf16.mxu0 0
      %927 = vmatpush2.bf16.msra.mxu0 0
      %928 = vmatprep.subr.bf16.mxu0 0
      %929 = vmatpush2.bf16.msra.mxu0 0
      %930 = vmatprep.mubr.bf16.mxu0 0
      %931 = vmatmul.mubr.bf16.gmra.mxu0 %v896
      %v932 = vpop.f32.mrf.mxu0
      %v933 = vadd.f32 0.0, %v932
      %v934 = vpop.f32.mrf.mxu0
      %v935 = vpop.f32.mrf.mxu0
      %v936 = vadd.f32 0.0, %v935
      %v937 = vpop.f32.mrf.mxu0
      %938 = vdwg.mxu0
      %v941 = vunpack.c.l.b16 %v877
      %v942 = vunpack.c.l.b16 %v878
      %v943 = vpack.c.b16 %v942, %v941
      %v945 = vsel %vm894, %v943, 0
      %947 = vmatprep.subr.bf16.mxu0 0
      %948 = vmatpush1.bf16.msra.mxu0 0
      %949 = vmatprep.subr.bf16.mxu0 0
      %950 = vmatpush1.bf16.msra.mxu0 0
      %951 = vmatprep.subr.bf16.mxu0 0
      %952 = vmatpush1.bf16.msra.mxu0 0
      %953 = vmatprep.subr.bf16.mxu0 0
      %954 = vmatpush1.bf16.msra.mxu0 0
      %955 = vmatprep.subr.bf16.mxu0 0
      %956 = vmatpush1.bf16.msra.mxu0 0
      %957 = vmatprep.subr.bf16.mxu0 0
      %958 = vmatpush1.bf16.msra.mxu0 0
      %959 = vmatprep.subr.bf16.mxu0 0
      %960 = vmatpush1.bf16.msra.mxu0 0
      %961 = vmatprep.subr.bf16.mxu0 0
      %962 = vmatpush1.bf16.msra.mxu0 %v879
      %963 = vmatprep.subr.bf16.mxu0 0
      %964 = vmatpush2.bf16.msra.mxu0 0
      %965 = vmatprep.subr.bf16.mxu0 0
      %966 = vmatpush2.bf16.msra.mxu0 0
      %967 = vmatprep.subr.bf16.mxu0 0
      %968 = vmatpush2.bf16.msra.mxu0 0
      %969 = vmatprep.subr.bf16.mxu0 0
      %970 = vmatpush2.bf16.msra.mxu0 0
      %971 = vmatprep.subr.bf16.mxu0 0
      %972 = vmatpush2.bf16.msra.mxu0 0
      %973 = vmatprep.subr.bf16.mxu0 0
      %974 = vmatpush2.bf16.msra.mxu0 0
      %975 = vmatprep.subr.bf16.mxu0 0
      %976 = vmatpush2.bf16.msra.mxu0 0
      %977 = vmatprep.subr.bf16.mxu0 0
      %978 = vmatpush2.bf16.msra.mxu0 0
      %979 = vmatprep.mubr.bf16.mxu0 0
      %980 = vmatmul.mubr.bf16.gmra.mxu0 %v945
      %v981 = vpop.f32.mrf.mxu0
      %v982 = vadd.f32 %v933, %v981
      %v983 = vpop.f32.mrf.mxu0
      %v984 = vpop.f32.mrf.mxu0
      %v985 = vadd.f32 %v936, %v984
      %v986 = vpop.f32.mrf.mxu0
      %987 = vdwg.mxu0
      %988 = vrot.lane.b32.xlu0 %v869, 7
      %v989 = vpop.permute.xlu0 %988
      %990 = vrot.lane.b32.xlu0 %v870, 7
      %v991 = vpop.permute.xlu0 %990
      %v992 = vsel %vm412, %v989, 0.0
      %v993 = vsel %vm412, %v991, 0.0
      %v994 = vld [vmem:[%s3 + $0x10] sm:$0xf]
      %v995 = vld [vmem:[%s3 + $0x14] sm:$0xf]
      %v996 = vpack.c.bf16 %v993, %v992
      %v999 = vunpack.c.l.b16 %v994
      %v1000 = vunpack.c.l.b16 %v995
      %v1001 = vpack.c.b16 %v1000, %v999
      %v1003 = vsel %vm894, %v1001, 0
      %1005 = vmatprep.subr.bf16.mxu0 0
      %1006 = vmatpush1.bf16.msra.mxu0 0
      %1007 = vmatprep.subr.bf16.mxu0 0
      %1008 = vmatpush1.bf16.msra.mxu0 0
      %1009 = vmatprep.subr.bf16.mxu0 0
      %1010 = vmatpush1.bf16.msra.mxu0 0
      %1011 = vmatprep.subr.bf16.mxu0 0
      %1012 = vmatpush1.bf16.msra.mxu0 0
      %1013 = vmatprep.subr.bf16.mxu0 0
      %1014 = vmatpush1.bf16.msra.mxu0 0
      %1015 = vmatprep.subr.bf16.mxu0 0
      %1016 = vmatpush1.bf16.msra.mxu0 0
      %1017 = vmatprep.subr.bf16.mxu0 0
      %1018 = vmatpush1.bf16.msra.mxu0 0
      %1019 = vmatprep.subr.bf16.mxu0 0
      %1020 = vmatpush1.bf16.msra.mxu0 %v996
      %1021 = vmatprep.subr.bf16.mxu0 0
      %1022 = vmatpush2.bf16.msra.mxu0 0
      %1023 = vmatprep.subr.bf16.mxu0 0
      %1024 = vmatpush2.bf16.msra.mxu0 0
      %1025 = vmatprep.subr.bf16.mxu0 0
      %1026 = vmatpush2.bf16.msra.mxu0 0
      %1027 = vmatprep.subr.bf16.mxu0 0
      %1028 = vmatpush2.bf16.msra.mxu0 0
      %1029 = vmatprep.subr.bf16.mxu0 0
      %1030 = vmatpush2.bf16.msra.mxu0 0
      %1031 = vmatprep.subr.bf16.mxu0 0
      %1032 = vmatpush2.bf16.msra.mxu0 0
      %1033 = vmatprep.subr.bf16.mxu0 0
      %1034 = vmatpush2.bf16.msra.mxu0 0
      %1035 = vmatprep.subr.bf16.mxu0 0
      %1036 = vmatpush2.bf16.msra.mxu0 0
      %1037 = vmatprep.mubr.bf16.mxu0 0
      %1038 = vmatmul.mubr.bf16.gmra.mxu0 %v1003
      %v1039 = vpop.f32.mrf.mxu0
      %v1040 = vadd.f32 0.0, %v1039
      %v1041 = vpop.f32.mrf.mxu0
      %v1042 = vpop.f32.mrf.mxu0
      %v1043 = vadd.f32 0.0, %v1042
      %v1044 = vpop.f32.mrf.mxu0
      %1045 = vdwg.mxu0
      %v1046 = vadd.f32 %v982, %v1040
      %v1047 = vadd.f32 %v985, %v1043
      %1048 = vrot.lane.b32.xlu0 %v869, 1
      %v1049 = vpop.permute.xlu0 %1048
      %1050 = vrot.lane.b32.xlu0 %v870, 1
      %v1051 = vpop.permute.xlu0 %1050
      %v1052 = vsel %vm474, %v1049, 0.0
      %v1053 = vsel %vm474, %v1051, 0.0
      %v1054 = vld [vmem:[%s3 + $0x18] sm:$0xf]
      %v1055 = vld [vmem:[%s3 + $0x1c] sm:$0xf]
      %v1056 = vpack.c.bf16 %v1053, %v1052
      %v1059 = vunpack.c.l.b16 %v1054
      %v1060 = vunpack.c.l.b16 %v1055
      %v1061 = vpack.c.b16 %v1060, %v1059
      %v1063 = vsel %vm894, %v1061, 0
      %1065 = vmatprep.subr.bf16.mxu0 0
      %1066 = vmatpush1.bf16.msra.mxu0 0
      %1067 = vmatprep.subr.bf16.mxu0 0
      %1068 = vmatpush1.bf16.msra.mxu0 0
      %1069 = vmatprep.subr.bf16.mxu0 0
      %1070 = vmatpush1.bf16.msra.mxu0 0
      %1071 = vmatprep.subr.bf16.mxu0 0
      %1072 = vmatpush1.bf16.msra.mxu0 0
      %1073 = vmatprep.subr.bf16.mxu0 0
      %1074 = vmatpush1.bf16.msra.mxu0 0
      %1075 = vmatprep.subr.bf16.mxu0 0
      %1076 = vmatpush1.bf16.msra.mxu0 0
      %1077 = vmatprep.subr.bf16.mxu0 0
      %1078 = vmatpush1.bf16.msra.mxu0 0
      %1079 = vmatprep.subr.bf16.mxu0 0
      %1080 = vmatpush1.bf16.msra.mxu0 %v1056
      %1081 = vmatprep.subr.bf16.mxu0 0
      %1082 = vmatpush2.bf16.msra.mxu0 0
      %1083 = vmatprep.subr.bf16.mxu0 0
      %1084 = vmatpush2.bf16.msra.mxu0 0
      %1085 = vmatprep.subr.bf16.mxu0 0
      %1086 = vmatpush2.bf16.msra.mxu0 0
      %1087 = vmatprep.subr.bf16.mxu0 0
      %1088 = vmatpush2.bf16.msra.mxu0 0
      %1089 = vmatprep.subr.bf16.mxu0 0
      %1090 = vmatpush2.bf16.msra.mxu0 0
      %1091 = vmatprep.subr.bf16.mxu0 0
      %1092 = vmatpush2.bf16.msra.mxu0 0
      %1093 = vmatprep.subr.bf16.mxu0 0
      %1094 = vmatpush2.bf16.msra.mxu0 0
      %1095 = vmatprep.subr.bf16.mxu0 0
      %1096 = vmatpush2.bf16.msra.mxu0 0
      %1097 = vmatprep.mubr.bf16.mxu0 0
      %1098 = vmatmul.mubr.bf16.gmra.mxu0 %v1063
      %v1099 = vpop.f32.mrf.mxu0
      %v1100 = vadd.f32 0.0, %v1099
      %v1101 = vpop.f32.mrf.mxu0
      %v1102 = vpop.f32.mrf.mxu0
      %v1103 = vadd.f32 0.0, %v1102
      %v1104 = vpop.f32.mrf.mxu0
      %1105 = vdwg.mxu0
      %v1106 = vadd.f32 %v1046, %v1100
      %v1107 = vadd.f32 %v1047, %v1103
      %v1108 = vld [vmem:[%s3 + $0x20] sm:$0xf]
      %v1109 = vld [vmem:[%s3 + $0x24] sm:$0xf]
      %v1110 = vpack.c.bf16 %v870, %v869
      %v1113 = vunpack.c.l.b16 %v1108
      %v1114 = vunpack.c.l.b16 %v1109
      %v1115 = vpack.c.b16 %v1114, %v1113
      %v1117 = vsel %vm894, %v1115, 0
      %1119 = vmatprep.subr.bf16.mxu0 0
      %1120 = vmatpush1.bf16.msra.mxu0 0
      %1121 = vmatprep.subr.bf16.mxu0 0
      %1122 = vmatpush1.bf16.msra.mxu0 0
      %1123 = vmatprep.subr.bf16.mxu0 0
      %1124 = vmatpush1.bf16.msra.mxu0 0
      %1125 = vmatprep.subr.bf16.mxu0 0
      %1126 = vmatpush1.bf16.msra.mxu0 0
      %1127 = vmatprep.subr.bf16.mxu0 0
      %1128 = vmatpush1.bf16.msra.mxu0 0
      %1129 = vmatprep.subr.bf16.mxu0 0
      %1130 = vmatpush1.bf16.msra.mxu0 0
      %1131 = vmatprep.subr.bf16.mxu0 0
      %1132 = vmatpush1.bf16.msra.mxu0 0
      %1133 = vmatprep.subr.bf16.mxu0 0
      %1134 = vmatpush1.bf16.msra.mxu0 %v1110
      %1135 = vmatprep.subr.bf16.mxu0 0
      %1136 = vmatpush2.bf16.msra.mxu0 0
      %1137 = vmatprep.subr.bf16.mxu0 0
      %1138 = vmatpush2.bf16.msra.mxu0 0
      %1139 = vmatprep.subr.bf16.mxu0 0
      %1140 = vmatpush2.bf16.msra.mxu0 0
      %1141 = vmatprep.subr.bf16.mxu0 0
      %1142 = vmatpush2.bf16.msra.mxu0 0
      %1143 = vmatprep.subr.bf16.mxu0 0
      %1144 = vmatpush2.bf16.msra.mxu0 0
      %1145 = vmatprep.subr.bf16.mxu0 0
      %1146 = vmatpush2.bf16.msra.mxu0 0
      %1147 = vmatprep.subr.bf16.mxu0 0
      %1148 = vmatpush2.bf16.msra.mxu0 0
      %1149 = vmatprep.subr.bf16.mxu0 0
      %1150 = vmatpush2.bf16.msra.mxu0 0
      %1151 = vmatprep.mubr.bf16.mxu0 0
      %1152 = vmatmul.mubr.bf16.gmra.mxu0 %v1117
      %v1153 = vpop.f32.mrf.mxu0
      %v1154 = vadd.f32 0.0, %v1153
      %v1155 = vpop.f32.mrf.mxu0
      %v1156 = vpop.f32.mrf.mxu0
      %v1157 = vadd.f32 0.0, %v1156
      %v1158 = vpop.f32.mrf.mxu0
      %1159 = vdwg.mxu0
      %v1160 = vadd.f32 %v1106, %v1154
      %v1161 = vadd.f32 %v1107, %v1157
      %1162 = vrot.lane.b32.xlu0 %v869, 127
      %v1163 = vpop.permute.xlu0 %1162
      %1164 = vrot.lane.b32.xlu0 %v870, 127
      %v1165 = vpop.permute.xlu0 %1164
      %v1166 = vsel %vm593, %v1163, 0.0
      %v1167 = vsel %vm593, %v1165, 0.0
      %v1168 = vld [vmem:[%s3 + $0x28] sm:$0xf]
      %v1169 = vld [vmem:[%s3 + $0x2c] sm:$0xf]
      %v1170 = vpack.c.bf16 %v1167, %v1166
      %v1173 = vunpack.c.l.b16 %v1168
      %v1174 = vunpack.c.l.b16 %v1169
      %v1175 = vpack.c.b16 %v1174, %v1173
      %v1177 = vsel %vm894, %v1175, 0
      %1179 = vmatprep.subr.bf16.mxu0 0
      %1180 = vmatpush1.bf16.msra.mxu0 0
      %1181 = vmatprep.subr.bf16.mxu0 0
      %1182 = vmatpush1.bf16.msra.mxu0 0
      %1183 = vmatprep.subr.bf16.mxu0 0
      %1184 = vmatpush1.bf16.msra.mxu0 0
      %1185 = vmatprep.subr.bf16.mxu0 0
      %1186 = vmatpush1.bf16.msra.mxu0 0
      %1187 = vmatprep.subr.bf16.mxu0 0
      %1188 = vmatpush1.bf16.msra.mxu0 0
      %1189 = vmatprep.subr.bf16.mxu0 0
      %1190 = vmatpush1.bf16.msra.mxu0 0
      %1191 = vmatprep.subr.bf16.mxu0 0
      %1192 = vmatpush1.bf16.msra.mxu0 0
      %1193 = vmatprep.subr.bf16.mxu0 0
      %1194 = vmatpush1.bf16.msra.mxu0 %v1170
      %1195 = vmatprep.subr.bf16.mxu0 0
      %1196 = vmatpush2.bf16.msra.mxu0 0
      %1197 = vmatprep.subr.bf16.mxu0 0
      %1198 = vmatpush2.bf16.msra.mxu0 0
      %1199 = vmatprep.subr.bf16.mxu0 0
      %1200 = vmatpush2.bf16.msra.mxu0 0
      %1201 = vmatprep.subr.bf16.mxu0 0
      %1202 = vmatpush2.bf16.msra.mxu0 0
      %1203 = vmatprep.subr.bf16.mxu0 0
      %1204 = vmatpush2.bf16.msra.mxu0 0
      %1205 = vmatprep.subr.bf16.mxu0 0
      %1206 = vmatpush2.bf16.msra.mxu0 0
      %1207 = vmatprep.subr.bf16.mxu0 0
      %1208 = vmatpush2.bf16.msra.mxu0 0
      %1209 = vmatprep.subr.bf16.mxu0 0
      %1210 = vmatpush2.bf16.msra.mxu0 0
      %1211 = vmatprep.mubr.bf16.mxu0 0
      %1212 = vmatmul.mubr.bf16.gmra.mxu0 %v1177
      %v1213 = vpop.f32.mrf.mxu0
      %v1214 = vadd.f32 0.0, %v1213
      %v1215 = vpop.f32.mrf.mxu0
      %v1216 = vpop.f32.mrf.mxu0
      %v1217 = vadd.f32 0.0, %v1216
      %v1218 = vpop.f32.mrf.mxu0
      %1219 = vdwg.mxu0
      %v1220 = vadd.f32 %v1160, %v1214
      %v1221 = vadd.f32 %v1161, %v1217
      %1222 = vrot.lane.b32.xlu0 %v869, 121
      %v1223 = vpop.permute.xlu0 %1222
      %1224 = vrot.lane.b32.xlu0 %v870, 121
      %v1225 = vpop.permute.xlu0 %1224
      %v1226 = vsel %vm657, %v1223, 0.0
      %v1227 = vsel %vm657, %v1225, 0.0
      %v1228 = vld [vmem:[%s3 + $0x30] sm:$0xf]
      %v1229 = vld [vmem:[%s3 + $0x34] sm:$0xf]
      %v1230 = vpack.c.bf16 %v1227, %v1226
      %v1233 = vunpack.c.l.b16 %v1228
      %v1234 = vunpack.c.l.b16 %v1229
      %v1235 = vpack.c.b16 %v1234, %v1233
      %v1237 = vsel %vm894, %v1235, 0
      %1239 = vmatprep.subr.bf16.mxu0 0
      %1240 = vmatpush1.bf16.msra.mxu0 0
      %1241 = vmatprep.subr.bf16.mxu0 0
      %1242 = vmatpush1.bf16.msra.mxu0 0
      %1243 = vmatprep.subr.bf16.mxu0 0
      %1244 = vmatpush1.bf16.msra.mxu0 0
      %1245 = vmatprep.subr.bf16.mxu0 0
      %1246 = vmatpush1.bf16.msra.mxu0 0
      %1247 = vmatprep.subr.bf16.mxu0 0
      %1248 = vmatpush1.bf16.msra.mxu0 0
      %1249 = vmatprep.subr.bf16.mxu0 0
      %1250 = vmatpush1.bf16.msra.mxu0 0
      %1251 = vmatprep.subr.bf16.mxu0 0
      %1252 = vmatpush1.bf16.msra.mxu0 0
      %1253 = vmatprep.subr.bf16.mxu0 0
      %1254 = vmatpush1.bf16.msra.mxu0 %v1230
      %1255 = vmatprep.subr.bf16.mxu0 0
      %1256 = vmatpush2.bf16.msra.mxu0 0
      %1257 = vmatprep.subr.bf16.mxu0 0
      %1258 = vmatpush2.bf16.msra.mxu0 0
      %1259 = vmatprep.subr.bf16.mxu0 0
      %1260 = vmatpush2.bf16.msra.mxu0 0
      %1261 = vmatprep.subr.bf16.mxu0 0
      %1262 = vmatpush2.bf16.msra.mxu0 0
      %1263 = vmatprep.subr.bf16.mxu0 0
      %1264 = vmatpush2.bf16.msra.mxu0 0
      %1265 = vmatprep.subr.bf16.mxu0 0
      %1266 = vmatpush2.bf16.msra.mxu0 0
      %1267 = vmatprep.subr.bf16.mxu0 0
      %1268 = vmatpush2.bf16.msra.mxu0 0
      %1269 = vmatprep.subr.bf16.mxu0 0
      %1270 = vmatpush2.bf16.msra.mxu0 0
      %1271 = vmatprep.mubr.bf16.mxu0 0
      %1272 = vmatmul.mubr.bf16.gmra.mxu0 %v1237
      %v1273 = vpop.f32.mrf.mxu0
      %v1274 = vadd.f32 0.0, %v1273
      %v1275 = vpop.f32.mrf.mxu0
      %v1276 = vpop.f32.mrf.mxu0
      %v1277 = vadd.f32 0.0, %v1276
      %v1278 = vpop.f32.mrf.mxu0
      %1279 = vdwg.mxu0
      %v1280 = vadd.f32 %v1220, %v1274
      %v1281 = vadd.f32 %v1221, %v1277
      %1282 = vrot.lane.b32.xlu0 %v869, 120
      %v1283 = vpop.permute.xlu0 %1282
      %1284 = vrot.lane.b32.xlu0 %v870, 120
      %v1285 = vpop.permute.xlu0 %1284
      %v1286 = vsel %vm719, %v1283, 0.0
      %v1287 = vsel %vm719, %v1285, 0.0
      %v1288 = vld [vmem:[%s3 + $0x38] sm:$0xf]
      %v1289 = vld [vmem:[%s3 + $0x3c] sm:$0xf]
      %v1290 = vpack.c.bf16 %v1287, %v1286
      %v1293 = vunpack.c.l.b16 %v1288
      %v1294 = vunpack.c.l.b16 %v1289
      %v1295 = vpack.c.b16 %v1294, %v1293
      %v1297 = vsel %vm894, %v1295, 0
      %1299 = vmatprep.subr.bf16.mxu0 0
      %1300 = vmatpush1.bf16.msra.mxu0 0
      %1301 = vmatprep.subr.bf16.mxu0 0
      %1302 = vmatpush1.bf16.msra.mxu0 0
      %1303 = vmatprep.subr.bf16.mxu0 0
      %1304 = vmatpush1.bf16.msra.mxu0 0
      %1305 = vmatprep.subr.bf16.mxu0 0
      %1306 = vmatpush1.bf16.msra.mxu0 0
      %1307 = vmatprep.subr.bf16.mxu0 0
      %1308 = vmatpush1.bf16.msra.mxu0 0
      %1309 = vmatprep.subr.bf16.mxu0 0
      %1310 = vmatpush1.bf16.msra.mxu0 0
      %1311 = vmatprep.subr.bf16.mxu0 0
      %1312 = vmatpush1.bf16.msra.mxu0 0
      %1313 = vmatprep.subr.bf16.mxu0 0
      %1314 = vmatpush1.bf16.msra.mxu0 %v1290
      %1315 = vmatprep.subr.bf16.mxu0 0
      %1316 = vmatpush2.bf16.msra.mxu0 0
      %1317 = vmatprep.subr.bf16.mxu0 0
      %1318 = vmatpush2.bf16.msra.mxu0 0
      %1319 = vmatprep.subr.bf16.mxu0 0
      %1320 = vmatpush2.bf16.msra.mxu0 0
      %1321 = vmatprep.subr.bf16.mxu0 0
      %1322 = vmatpush2.bf16.msra.mxu0 0
      %1323 = vmatprep.subr.bf16.mxu0 0
      %1324 = vmatpush2.bf16.msra.mxu0 0
      %1325 = vmatprep.subr.bf16.mxu0 0
      %1326 = vmatpush2.bf16.msra.mxu0 0
      %1327 = vmatprep.subr.bf16.mxu0 0
      %1328 = vmatpush2.bf16.msra.mxu0 0
      %1329 = vmatprep.subr.bf16.mxu0 0
      %1330 = vmatpush2.bf16.msra.mxu0 0
      %1331 = vmatprep.mubr.bf16.mxu0 0
      %1332 = vmatmul.mubr.bf16.gmra.mxu0 %v1297
      %v1333 = vpop.f32.mrf.mxu0
      %v1334 = vadd.f32 0.0, %v1333
      %v1335 = vpop.f32.mrf.mxu0
      %v1336 = vpop.f32.mrf.mxu0
      %v1337 = vadd.f32 0.0, %v1336
      %v1338 = vpop.f32.mrf.mxu0
      %1339 = vdwg.mxu0
      %v1340 = vadd.f32 %v1280, %v1334
      %v1341 = vadd.f32 %v1281, %v1337
      %1342 = vrot.lane.b32.xlu0 %v869, 119
      %v1343 = vpop.permute.xlu0 %1342
      %1344 = vrot.lane.b32.xlu0 %v870, 119
      %v1345 = vpop.permute.xlu0 %1344
      %v1346 = vsel %vm782, %v1343, 0.0
      %v1347 = vsel %vm782, %v1345, 0.0
      %v1348 = vld [vmem:[%s3 + $0x40] sm:$0xf]
      %v1349 = vld [vmem:[%s3 + $0x44] sm:$0xf]
      %v1350 = vpack.c.bf16 %v1347, %v1346
      %v1353 = vunpack.c.l.b16 %v1348
      %v1354 = vunpack.c.l.b16 %v1349
      %v1355 = vpack.c.b16 %v1354, %v1353
      %v1357 = vsel %vm894, %v1355, 0
      %1359 = vmatprep.subr.bf16.mxu0 0
      %1360 = vmatpush1.bf16.msra.mxu0 0
      %1361 = vmatprep.subr.bf16.mxu0 0
      %1362 = vmatpush1.bf16.msra.mxu0 0
      %1363 = vmatprep.subr.bf16.mxu0 0
      %1364 = vmatpush1.bf16.msra.mxu0 0
      %1365 = vmatprep.subr.bf16.mxu0 0
      %1366 = vmatpush1.bf16.msra.mxu0 0
      %1367 = vmatprep.subr.bf16.mxu0 0
      %1368 = vmatpush1.bf16.msra.mxu0 0
      %1369 = vmatprep.subr.bf16.mxu0 0
      %1370 = vmatpush1.bf16.msra.mxu0 0
      %1371 = vmatprep.subr.bf16.mxu0 0
      %1372 = vmatpush1.bf16.msra.mxu0 0
      %1373 = vmatprep.subr.bf16.mxu0 0
      %1374 = vmatpush1.bf16.msra.mxu0 %v1350
      %1375 = vmatprep.subr.bf16.mxu0 0
      %1376 = vmatpush2.bf16.msra.mxu0 0
      %1377 = vmatprep.subr.bf16.mxu0 0
      %1378 = vmatpush2.bf16.msra.mxu0 0
      %1379 = vmatprep.subr.bf16.mxu0 0
      %1380 = vmatpush2.bf16.msra.mxu0 0
      %1381 = vmatprep.subr.bf16.mxu0 0
      %1382 = vmatpush2.bf16.msra.mxu0 0
      %1383 = vmatprep.subr.bf16.mxu0 0
      %1384 = vmatpush2.bf16.msra.mxu0 0
      %1385 = vmatprep.subr.bf16.mxu0 0
      %1386 = vmatpush2.bf16.msra.mxu0 0
      %1387 = vmatprep.subr.bf16.mxu0 0
      %1388 = vmatpush2.bf16.msra.mxu0 0
      %1389 = vmatprep.subr.bf16.mxu0 0
      %1390 = vmatpush2.bf16.msra.mxu0 0
      %1391 = vmatprep.mubr.bf16.mxu0 0
      %1392 = vmatmul.mubr.bf16.gmra.mxu0 %v1357
      %v1393 = vpop.f32.mrf.mxu0
      %v1394 = vadd.f32 0.0, %v1393
      %v1395 = vpop.f32.mrf.mxu0
      %v1396 = vpop.f32.mrf.mxu0
      %v1397 = vadd.f32 0.0, %v1396
      %v1398 = vpop.f32.mrf.mxu0
      %1399 = vdwg.mxu0
      %v1400 = vadd.f32 %v1340, %v1394
      %v1401 = vadd.f32 %v1341, %v1397
      %v1402 = vld [vmem:[%s4] sm:$0xff]
      %v1403 = vld [vmem:[%s4 + $0x8] sm:$0xff]
      %1405 = vset.pattern.permute.xlu0 0
      %1406 = vperm.xlu0 %1405, %v1402
      %v1407 = vpop.permute.xlu0 %1406
      %1410 = vset.pattern.permute.xlu0 0
      %1411 = vperm.xlu0 %1410, %v1403
      %v1412 = vpop.permute.xlu0 %1411
      %v1414 = vadd.f32 %v1400, %v1407
      %v1415 = vadd.f32 %v1401, %v1412
      %v1416 = vld [vmem:[%s5] sm:$0xf]
      %v1417 = vld [vmem:[%s5 + $0x4] sm:$0xf]
      %v1420 = vunpack.c.l.b16 %v1416
      %v1421 = vunpack.c.l.b16 %v1417
      %v1422 = vpack.c.b16 %v1421, %v1420
      %v1424 = vsel %vm306, %v1422, 0
      %1426 = vmatprep.subr.bf16.mxu0 0
      %1427 = vmatpush1.bf16.msra.mxu0 0
      %1428 = vmatprep.subr.bf16.mxu0 0
      %1429 = vmatpush1.bf16.msra.mxu0 0
      %1430 = vmatprep.subr.bf16.mxu0 0
      %1431 = vmatpush1.bf16.msra.mxu0 0
      %1432 = vmatprep.subr.bf16.mxu0 0
      %1433 = vmatpush1.bf16.msra.mxu0 0
      %1434 = vmatprep.subr.bf16.mxu0 0
      %1435 = vmatpush1.bf16.msra.mxu0 0
      %1436 = vmatprep.subr.bf16.mxu0 0
      %1437 = vmatpush1.bf16.msra.mxu0 0
      %1438 = vmatprep.subr.bf16.mxu0 0
      %1439 = vmatpush1.bf16.msra.mxu0 0
      %1440 = vmatprep.subr.bf16.mxu0 0
      %1441 = vmatpush1.bf16.msra.mxu0 %v545
      %1442 = vmatprep.subr.bf16.mxu0 0
      %1443 = vmatpush2.bf16.msra.mxu0 0
      %1444 = vmatprep.subr.bf16.mxu0 0
      %1445 = vmatpush2.bf16.msra.mxu0 0
      %1446 = vmatprep.subr.bf16.mxu0 0
      %1447 = vmatpush2.bf16.msra.mxu0 0
      %1448 = vmatprep.subr.bf16.mxu0 0
      %1449 = vmatpush2.bf16.msra.mxu0 0
      %1450 = vmatprep.subr.bf16.mxu0 0
      %1451 = vmatpush2.bf16.msra.mxu0 0
      %1452 = vmatprep.subr.bf16.mxu0 0
      %1453 = vmatpush2.bf16.msra.mxu0 0
      %1454 = vmatprep.subr.bf16.mxu0 0
      %1455 = vmatpush2.bf16.msra.mxu0 0
      %1456 = vmatprep.subr.bf16.mxu0 0
      %1457 = vmatpush2.bf16.msra.mxu0 0
      %1458 = vmatprep.mubr.bf16.mxu0 0
      %1459 = vmatmul.mubr.bf16.gmra.mxu0 %v1424
      %v1460 = vpop.f32.mrf.mxu0
      %v1461 = vadd.f32 0.0, %v1460
      %v1462 = vpop.f32.mrf.mxu0
      %v1463 = vpop.f32.mrf.mxu0
      %v1464 = vadd.f32 0.0, %v1463
      %v1465 = vpop.f32.mrf.mxu0
      %1466 = vdwg.mxu0
      %v1467 = vadd.f32 %v1414, %v1461
      %v1468 = vadd.f32 %v1415, %v1464
      %v1469 = vld [vmem:[%s6] sm:$0xff]
      %v1470 = vld [vmem:[%s6 + $0x8] sm:$0xff]
      %1472 = vset.pattern.permute.xlu0 0
      %1473 = vperm.xlu0 %1472, %v1469
      %v1474 = vpop.permute.xlu0 %1473
      %1477 = vset.pattern.permute.xlu0 0
      %1478 = vperm.xlu0 %1477, %v1470
      %v1479 = vpop.permute.xlu0 %1478
      %v1481 = vadd.f32 %v1467, %v1474
      %v1482 = vadd.f32 %v1468, %v1479
      %v1483 = vlaneseq
      %v1484 = vshrl.u32 %v1483, 7
      %v1485 = vadd.s32 %v1484, 8
      %v1486 = vadd.s32 %v1484, 16
      %v1487 = vadd.s32 %v1484, 24
      %v1488 = vadd.s32 %v1484, 32
      %v1489 = vadd.s32 %v1484, 40
      %v1490 = vadd.s32 %v1484, 48
      %v1491 = vadd.s32 %v1484, 56
      %v1492 = vadd.s32 %v1484, 64
      %v1493 = vadd.s32 %v1484, 72
      %v1494 = vadd.s32 %v1484, 80
      %v1495 = vadd.s32 %v1484, 88
      %v1496 = vadd.s32 %v1484, 96
      %v1497 = vadd.s32 %v1484, 104
      %v1498 = vadd.s32 %v1484, 112
      %v1499 = vadd.s32 %v1484, 120
      %v1500 = vshra.s32 %v1484, 3
      %v1501 = vshra.s32 %v1485, 3
      %v1502 = vshra.s32 %v1486, 3
      %v1503 = vshra.s32 %v1487, 3
      %v1504 = vshra.s32 %v1488, 3
      %v1505 = vshra.s32 %v1489, 3
      %v1506 = vshra.s32 %v1490, 3
      %v1507 = vshra.s32 %v1491, 3
      %v1508 = vshra.s32 %v1492, 3
      %v1509 = vshra.s32 %v1493, 3
      %v1510 = vshra.s32 %v1494, 3
      %v1511 = vshra.s32 %v1495, 3
      %v1512 = vshra.s32 %v1496, 3
      %v1513 = vshra.s32 %v1497, 3
      %v1514 = vshra.s32 %v1498, 3
      %v1515 = vshra.s32 %v1499, 3
      %v1516 = vshra.s32 %v1500, 1
      %v1517 = vshra.s32 %v1501, 1
      %v1518 = vshra.s32 %v1502, 1
      %v1519 = vshra.s32 %v1503, 1
      %v1520 = vshra.s32 %v1504, 1
      %v1521 = vshra.s32 %v1505, 1
      %v1522 = vshra.s32 %v1506, 1
      %v1523 = vshra.s32 %v1507, 1
      %v1524 = vshra.s32 %v1508, 1
      %v1525 = vshra.s32 %v1509, 1
      %v1526 = vshra.s32 %v1510, 1
      %v1527 = vshra.s32 %v1511, 1
      %v1528 = vshra.s32 %v1512, 1
      %v1529 = vshra.s32 %v1513, 1
      %v1530 = vshra.s32 %v1514, 1
      %v1531 = vshra.s32 %v1515, 1
      %v1532 = vshra.s32 %v279, 2
      %vm1533 = vcmp.eq.s32.totalorder %v1516, %v1532
      %vm1534 = vcmp.eq.s32.totalorder %v1517, %v1532
      %vm1535 = vcmp.eq.s32.totalorder %v1518, %v1532
      %vm1536 = vcmp.eq.s32.totalorder %v1519, %v1532
      %vm1537 = vcmp.eq.s32.totalorder %v1520, %v1532
      %vm1538 = vcmp.eq.s32.totalorder %v1521, %v1532
      %vm1539 = vcmp.eq.s32.totalorder %v1522, %v1532
      %vm1540 = vcmp.eq.s32.totalorder %v1523, %v1532
      %vm1541 = vcmp.eq.s32.totalorder %v1524, %v1532
      %vm1542 = vcmp.eq.s32.totalorder %v1525, %v1532
      %vm1543 = vcmp.eq.s32.totalorder %v1526, %v1532
      %vm1544 = vcmp.eq.s32.totalorder %v1527, %v1532
      %vm1545 = vcmp.eq.s32.totalorder %v1528, %v1532
      %vm1546 = vcmp.eq.s32.totalorder %v1529, %v1532
      %vm1547 = vcmp.eq.s32.totalorder %v1530, %v1532
      %vm1548 = vcmp.eq.s32.totalorder %v1531, %v1532
      %v1549 = vand.u32 %v1484, 7
      %v1550 = vand.u32 %v1485, 7
      %v1551 = vand.u32 %v1486, 7
      %v1552 = vand.u32 %v1487, 7
      %v1553 = vand.u32 %v1488, 7
      %v1554 = vand.u32 %v1489, 7
      %v1555 = vand.u32 %v1490, 7
      %v1556 = vand.u32 %v1491, 7
      %v1557 = vand.u32 %v1492, 7
      %v1558 = vand.u32 %v1493, 7
      %v1559 = vand.u32 %v1494, 7
      %v1560 = vand.u32 %v1495, 7
      %v1561 = vand.u32 %v1496, 7
      %v1562 = vand.u32 %v1497, 7
      %v1563 = vand.u32 %v1498, 7
      %v1564 = vand.u32 %v1499, 7
      %v1565 = vshra.s32 %v1549, 1
      %v1566 = vshra.s32 %v1550, 1
      %v1567 = vshra.s32 %v1551, 1
      %v1568 = vshra.s32 %v1552, 1
      %v1569 = vshra.s32 %v1553, 1
      %v1570 = vshra.s32 %v1554, 1
      %v1571 = vshra.s32 %v1555, 1
      %v1572 = vshra.s32 %v1556, 1
      %v1573 = vshra.s32 %v1557, 1
      %v1574 = vshra.s32 %v1558, 1
      %v1575 = vshra.s32 %v1559, 1
      %v1576 = vshra.s32 %v1560, 1
      %v1577 = vshra.s32 %v1561, 1
      %v1578 = vshra.s32 %v1562, 1
      %v1579 = vshra.s32 %v1563, 1
      %v1580 = vshra.s32 %v1564, 1
      %v1581 = vand.u32 %v279, 3
      %vm1582 = vcmp.eq.s32.totalorder %v1565, %v1581
      %vm1583 = vcmp.eq.s32.totalorder %v1566, %v1581
      %vm1584 = vcmp.eq.s32.totalorder %v1567, %v1581
      %vm1585 = vcmp.eq.s32.totalorder %v1568, %v1581
      %vm1586 = vcmp.eq.s32.totalorder %v1569, %v1581
      %vm1587 = vcmp.eq.s32.totalorder %v1570, %v1581
      %vm1588 = vcmp.eq.s32.totalorder %v1571, %v1581
      %vm1589 = vcmp.eq.s32.totalorder %v1572, %v1581
      %vm1590 = vcmp.eq.s32.totalorder %v1573, %v1581
      %vm1591 = vcmp.eq.s32.totalorder %v1574, %v1581
      %vm1592 = vcmp.eq.s32.totalorder %v1575, %v1581
      %vm1593 = vcmp.eq.s32.totalorder %v1576, %v1581
      %vm1594 = vcmp.eq.s32.totalorder %v1577, %v1581
      %vm1595 = vcmp.eq.s32.totalorder %v1578, %v1581
      %vm1596 = vcmp.eq.s32.totalorder %v1579, %v1581
      %vm1597 = vcmp.eq.s32.totalorder %v1580, %v1581
      %vm1598 = vmand %vm1533, %vm1582
      %vm1599 = vmand %vm1534, %vm1583
      %vm1600 = vmand %vm1535, %vm1584
      %vm1601 = vmand %vm1536, %vm1585
      %vm1602 = vmand %vm1537, %vm1586
      %vm1603 = vmand %vm1538, %vm1587
      %vm1604 = vmand %vm1539, %vm1588
      %vm1605 = vmand %vm1540, %vm1589
      %vm1606 = vmand %vm1541, %vm1590
      %vm1607 = vmand %vm1542, %vm1591
      %vm1608 = vmand %vm1543, %vm1592
      %vm1609 = vmand %vm1544, %vm1593
      %vm1610 = vmand %vm1545, %vm1594
      %vm1611 = vmand %vm1546, %vm1595
      %vm1612 = vmand %vm1547, %vm1596
      %vm1613 = vmand %vm1548, %vm1597
      %v1614 = vsel %vm1598, 0.25, 0.0
      %v1615 = vsel %vm1599, 0.25, 0.0
      %v1616 = vsel %vm1600, 0.25, 0.0
      %v1617 = vsel %vm1601, 0.25, 0.0
      %v1618 = vsel %vm1602, 0.25, 0.0
      %v1619 = vsel %vm1603, 0.25, 0.0
      %v1620 = vsel %vm1604, 0.25, 0.0
      %v1621 = vsel %vm1605, 0.25, 0.0
      %v1622 = vsel %vm1606, 0.25, 0.0
      %v1623 = vsel %vm1607, 0.25, 0.0
      %v1624 = vsel %vm1608, 0.25, 0.0
      %v1625 = vsel %vm1609, 0.25, 0.0
      %v1626 = vsel %vm1610, 0.25, 0.0
      %v1627 = vsel %vm1611, 0.25, 0.0
      %v1628 = vsel %vm1612, 0.25, 0.0
      %v1629 = vsel %vm1613, 0.25, 0.0
      %1630 = vmatprep.subr.mxu0 0.0
      %1631 = vmatpush1.msra.mxu0 %v1629
      %1632 = vmatprep.subr.mxu0 0.0
      %1633 = vmatpush1.msra.mxu0 %v1628
      %1634 = vmatprep.subr.mxu0 0.0
      %1635 = vmatpush1.msra.mxu0 %v1627
      %1636 = vmatprep.subr.mxu0 0.0
      %1637 = vmatpush1.msra.mxu0 %v1626
      %1638 = vmatprep.subr.mxu0 0.0
      %1639 = vmatpush1.msra.mxu0 %v1625
      %1640 = vmatprep.subr.mxu0 0.0
      %1641 = vmatpush1.msra.mxu0 %v1624
      %1642 = vmatprep.subr.mxu0 0.0
      %1643 = vmatpush1.msra.mxu0 %v1623
      %1644 = vmatprep.subr.mxu0 0.0
      %1645 = vmatpush1.msra.mxu0 %v1622
      %1646 = vmatprep.subr.mxu0 0.0
      %1647 = vmatpush1.msra.mxu0 %v1621
      %1648 = vmatprep.subr.mxu0 0.0
      %1649 = vmatpush1.msra.mxu0 %v1620
      %1650 = vmatprep.subr.mxu0 0.0
      %1651 = vmatpush1.msra.mxu0 %v1619
      %1652 = vmatprep.subr.mxu0 0.0
      %1653 = vmatpush1.msra.mxu0 %v1618
      %1654 = vmatprep.subr.mxu0 0.0
      %1655 = vmatpush1.msra.mxu0 %v1617
      %1656 = vmatprep.subr.mxu0 0.0
      %1657 = vmatpush1.msra.mxu0 %v1616
      %1658 = vmatprep.subr.mxu0 0.0
      %1659 = vmatpush1.msra.mxu0 %v1615
      %1660 = vmatprep.subr.mxu0 0.0
      %1661 = vmatpush1.msra.mxu0 %v1614
      %1662 = vmatprep.subr.mxu0 0.0
      %1663 = vmatpush2.msra.mxu0 0.0
      %1664 = vmatprep.subr.mxu0 0.0
      %1665 = vmatpush2.msra.mxu0 0.0
      %1666 = vmatprep.subr.mxu0 0.0
      %1667 = vmatpush2.msra.mxu0 0.0
      %1668 = vmatprep.subr.mxu0 0.0
      %1669 = vmatpush2.msra.mxu0 0.0
      %1670 = vmatprep.subr.mxu0 0.0
      %1671 = vmatpush2.msra.mxu0 0.0
      %1672 = vmatprep.subr.mxu0 0.0
      %1673 = vmatpush2.msra.mxu0 0.0
      %1674 = vmatprep.subr.mxu0 0.0
      %1675 = vmatpush2.msra.mxu0 0.0
      %1676 = vmatprep.subr.mxu0 0.0
      %1677 = vmatpush2.msra.mxu0 0.0
      %1678 = vmatprep.subr.mxu0 0.0
      %1679 = vmatpush2.msra.mxu0 0.0
      %1680 = vmatprep.subr.mxu0 0.0
      %1681 = vmatpush2.msra.mxu0 0.0
      %1682 = vmatprep.subr.mxu0 0.0
      %1683 = vmatpush2.msra.mxu0 0.0
      %1684 = vmatprep.subr.mxu0 0.0
      %1685 = vmatpush2.msra.mxu0 0.0
      %1686 = vmatprep.subr.mxu0 0.0
      %1687 = vmatpush2.msra.mxu0 0.0
      %1688 = vmatprep.subr.mxu0 0.0
      %1689 = vmatpush2.msra.mxu0 0.0
      %1690 = vmatprep.subr.mxu0 0.0
      %1691 = vmatpush2.msra.mxu0 0.0
      %1692 = vmatprep.subr.mxu0 0.0
      %1693 = vmatpush2.msra.mxu0 0.0
      %1694 = vmatprep.mubr.f32.mxu0 0.0
      %1695 = vmatmul.mubr.f32.gmra.mxu0 %v1481
      %v1696 = vpop.f32.mrf.mxu0
      %v1697 = vadd.f32 0.0, %v1696
      %v1698 = vpop.f32.mrf.mxu0
      %1699 = vmatprep.mubr.f32.mxu0 0.0
      %1700 = vmatmul.mubr.f32.gmra.mxu0 %v1482
      %v1701 = vpop.f32.mrf.mxu0
      %v1702 = vadd.f32 0.0, %v1701
      %v1703 = vpop.f32.mrf.mxu0
      %1704 = vdwg.mxu0
      %vm1705 = vcmp.lt.s32.totalorder %v279, 16
      %v1706 = vsel %vm1705, 1, 0
      %vm1707 = vcmp.eq.s32.totalorder %v1706, 1
      %v1708 = vsel %vm1707, %v1697, 0.0
      %v1709 = vsel %vm1707, %v1702, 0.0
      %1710 = vst [vmem:[%s275] sm:$0xff] %v1708
      %1711 = vst [vmem:[%s275 + $0x8] sm:$0xff] %v1709
      %p1712 = scmp.lt.s32.totalorder %s18, 3
      %s1713 = scalar_select %p1712, %s18, 3
      %s1714 = smul.addr %s1713, 2
      %s1715 = smul.addr %s1714, 8
      %s1716 = scalar_lea.vmem %s7, %s1715
      // Predicated region
      $region49: #{encoder_forward.6} parent=47 // pred_check
        %p1717 = pneg %p188
      $region50: #{encoder_forward.6} parent=47 // pred_check_branch
        %1719 = sbr.rel (%p1717) target = $region52
      $region51: #{encoder_forward.6} parent=47 // pred_region
        _
      $region52: #{encoder_forward.6} parent=47 // pred_fallthru
        _
    $region48: #{encoder_forward.6} parent=5 // pred_fallthru
      _
    %p1720 = scmp.le.s32.totalorder 2, %s13
    // Predicated region
    $region53: #{encoder_forward.6} parent=5 // pred_check
      %p1721 = pneg %p1720
    $region54: #{encoder_forward.6} parent=5 // pred_check_branch
      %1723 = sbr.rel (%p1721) target = $region56
    $region55: #{encoder_forward.6} parent=5 // pred_region
      %s1724 = ssub.s32 %s13, 2
      // Predicated region
      $region57: #{encoder_forward.6} parent=55 // pred_check
        %p1725 = pneg %p194
      $region58: #{encoder_forward.6} parent=55 // pred_check_branch
        %1727 = sbr.rel (%p1725) target = $region60
      $region59: #{encoder_forward.6} parent=55 // pred_region
        %p1728 = scmp.lt.s32.totalorder %s19, 3
        %s1729 = scalar_select %p1728, %s19, 3
        %s1730 = smul.addr %s1729, 2
        %s1731 = smul.addr %s1730, 8
        %s1732 = scalar_lea.vmem %s7, %s1731
      $region60: #{encoder_forward.6} parent=55 // pred_fallthru
        _
    $region56: #{encoder_forward.6} parent=5 // pred_fallthru
      _
  $region6: #{encoder_forward.6} parent=0 // loop_footer
    %s17 = sadd.s32 1, %s13
  $region7: #{encoder_forward.6} parent=0 // loop_footer_branch
    %12 = sbr.rel target = $region3
  $region8: #{encoder_forward.6} parent=0 // loop_exit
    _

// kernel: encoder_forward.5
$region0: #{encoder_forward.5}
  #allocation0 [shape = 'u32[]', space=smem, size = 0x4, offset = 0x4, fixed_abs, tag = 'smem constant byte address 0x4 - core index']
  #allocation1 [shape = 'u32[144,128]{1,0:T(1,128)}', space=vmem, size = 0x12000, scoped, tag = 'internal scratch']
  %s0 = inlined_call_operand.vmem [shape: f32[4,3,256], index: 0, kind: input, shape index: {}]
  %s1 = inlined_call_operand.vmem [shape: bf16[72,3], index: 1, kind: input, shape index: {}]
  %s2 = inlined_call_operand.vmem [shape: f32[8,1], index: 2, kind: input, shape index: {}]
  %s3 = inlined_call_operand.vmem [shape: bf16[72,8], index: 3, kind: input, shape index: {}]
  %s4 = inlined_call_operand.vmem [shape: f32[8,1], index: 4, kind: input, shape index: {}]
  %s5 = inlined_call_operand.vmem [shape: bf16[8,3], index: 5, kind: input, shape index: {}]
  %s6 = inlined_call_operand.vmem [shape: f32[8,1], index: 6, kind: input, shape index: {}]
  %s7 = inlined_call_operand.vmem [shape: f32[4,8,128], index: 7, kind: output, shape index: {}]
  %s8 = sld [smem:[#allocation0]]
  $region61: #{encoder_forward.5} parent=0
    _
  %s10 = ssub.s32 1, %s8
  %s11 = scalar_select 0, %s10, %s8
  loop: start=0, step=1, limit=6
  $region2: #{encoder_forward.5} parent=0 // loop_pre_header
    _
  $region3: #{encoder_forward.5} parent=0 // loop_header
    %s13 = sphi 0, %s17
    %p14 = scmp.ge.s32.totalorder %s13, 6
    %s23 = sphi 0, %s25
    %s26 = sphi 0, %s23
    %s27 = sphi 0, %s26
    %s43 = sphi 0, %s27
    %s47 = sphi 0, %s47
    %s49 = sphi 0, %s47
    %s50 = sphi 0, %s49
    %s64 = sphi 0, %s50
    %s68 = sphi 0, %s68
    %s70 = sphi 0, %s68
    %s71 = sphi 0, %s70
    %s85 = sphi 0, %s71
    %s89 = sphi 0, %s89
    %s91 = sphi 0, %s89
    %s92 = sphi 0, %s91
    %s106 = sphi 0, %s92
    %s110 = sphi 0, %s110
    %s112 = sphi 0, %s110
    %s113 = sphi 0, %s112
    %s127 = sphi 0, %s113
    %s131 = sphi 0, %s131
    %s133 = sphi 0, %s131
    %s134 = sphi 0, %s133
    %s148 = sphi 0, %s134
    %s152 = sphi 0, %s152
    %s154 = sphi 0, %s152
    %s155 = sphi 0, %s154
    %s169 = sphi 0, %s155
    %s175 = sphi 0, %s177
    %s178 = sphi 0, %s175
    %s179 = sphi 0, %s178
    %s195 = sphi 0, %s179
  $region4: #{encoder_forward.5} parent=0 // loop_header_branch
    %16 = sbr.rel (%p14) target = $region8
  $region5: #{encoder_forward.5} parent=0 // loop_body
    %s18 = ssub.s32 %s13, 1
    %s19 = ssub.s32 %s13, 2
    %s20 = sadd.s32 %s13, 1
    %s21 = ssub.s32 %s13, %s20
    %p22 = scmp.eq.s32.totalorder %s21, 0
    %s24 = sadd.s32 %s23, 1
    %s25 = scalar_select %p22, %s23, %s24
    %p28 = pneg %p22
    %p29 = scmp.eq.s32.totalorder %s13, 3
    %p30 = por %p28, %p29
    %p31 = scmp.ne.s32.totalorder %s23, %s26
    %p32 = scmp.eq.s32.totalorder %s13, 0
    %p33 = por %p31, %p32
    %p34 = scmp.ne.s32.totalorder %s23, %s26
    %p35 = scmp.eq.s32.totalorder %s18, 3
    %p36 = por %p34, %p35
    %p37 = scmp.ne.s32.totalorder %s26, %s27
    %p38 = scmp.eq.s32.totalorder %s18, 0
    %p39 = por %p37, %p38
    %p40 = scmp.ne.s32.totalorder %s26, %s27
    %p41 = scmp.eq.s32.totalorder %s19, 3
    %p42 = por %p40, %p41
    %p44 = scmp.ne.s32.totalorder %s27, %s43
    %p45 = scmp.eq.s32.totalorder %s19, 0
    %p46 = por %p44, %p45
    %s48 = sadd.s32 %s47, 1
    %p51 = scmp.eq.s32.totalorder %s13, 3
    %p52 = scmp.ne.s32.totalorder %s47, %s49
    %p53 = scmp.eq.s32.totalorder %s13, 0
    %p54 = por %p52, %p53
    %p55 = scmp.ne.s32.totalorder %s47, %s49
    %p56 = scmp.eq.s32.totalorder %s18, 3
    %p57 = por %p55, %p56
    %p58 = scmp.ne.s32.totalorder %s49, %s50
    %p59 = scmp.eq.s32.totalorder %s18, 0
    %p60 = por %p58, %p59
    %p61 = scmp.ne.s32.totalorder %s49, %s50
    %p62 = scmp.eq.s32.totalorder %s19, 3
    %p63 = por %p61, %p62
    %p65 = scmp.ne.s32.totalorder %s50, %s64
    %p66 = scmp.eq.s32.totalorder %s19, 0
    %p67 = por %p65, %p66
    %s69 = sadd.s32 %s68, 1
    %p72 = scmp.eq.s32.totalorder %s13, 3
    %p73 = scmp.ne.s32.totalorder %s68, %s70
    %p74 = scmp.eq.s32.totalorder %s13, 0
    %p75 = por %p73, %p74
    %p76 = scmp.ne.s32.totalorder %s68, %s70
    %p77 = scmp.eq.s32.totalorder %s18, 3
    %p78 = por %p76, %p77
    %p79 = scmp.ne.s32.totalorder %s70, %s71
    %p80 = scmp.eq.s32.totalorder %s18, 0
    %p81 = por %p79, %p80
    %p82 = scmp.ne.s32.totalorder %s70, %s71
    %p83 = scmp.eq.s32.totalorder %s19, 3
    %p84 = por %p82, %p83
    %p86 = scmp.ne.s32.totalorder %s71, %s85
    %p87 = scmp.eq.s32.totalorder %s19, 0
    %p88 = por %p86, %p87
    %s90 = sadd.s32 %s89, 1
    %p93 = scmp.eq.s32.totalorder %s13, 3
    %p94 = scmp.ne.s32.totalorder %s89, %s91
    %p95 = scmp.eq.s32.totalorder %s13, 0
    %p96 = por %p94, %p95
    %p97 = scmp.ne.s32.totalorder %s89, %s91
    %p98 = scmp.eq.s32.totalorder %s18, 3
    %p99 = por %p97, %p98
    %p100 = scmp.ne.s32.totalorder %s91, %s92
    %p101 = scmp.eq.s32.totalorder %s18, 0
    %p102 = por %p100, %p101
    %p103 = scmp.ne.s32.totalorder %s91, %s92
    %p104 = scmp.eq.s32.totalorder %s19, 3
    %p105 = por %p103, %p104
    %p107 = scmp.ne.s32.totalorder %s92, %s106
    %p108 = scmp.eq.s32.totalorder %s19, 0
    %p109 = por %p107, %p108
    %s111 = sadd.s32 %s110, 1
    %p114 = scmp.eq.s32.totalorder %s13, 3
    %p115 = scmp.ne.s32.totalorder %s110, %s112
    %p116 = scmp.eq.s32.totalorder %s13, 0
    %p117 = por %p115, %p116
    %p118 = scmp.ne.s32.totalorder %s110, %s112
    %p119 = scmp.eq.s32.totalorder %s18, 3
    %p120 = por %p118, %p119
    %p121 = scmp.ne.s32.totalorder %s112, %s113
    %p122 = scmp.eq.s32.totalorder %s18, 0
    %p123 = por %p121, %p122
    %p124 = scmp.ne.s32.totalorder %s112, %s113
    %p125 = scmp.eq.s32.totalorder %s19, 3
    %p126 = por %p124, %p125
    %p128 = scmp.ne.s32.totalorder %s113, %s127
    %p129 = scmp.eq.s32.totalorder %s19, 0
    %p130 = por %p128, %p129
    %s132 = sadd.s32 %s131, 1
    %p135 = scmp.eq.s32.totalorder %s13, 3
    %p136 = scmp.ne.s32.totalorder %s131, %s133
    %p137 = scmp.eq.s32.totalorder %s13, 0
    %p138 = por %p136, %p137
    %p139 = scmp.ne.s32.totalorder %s131, %s133
    %p140 = scmp.eq.s32.totalorder %s18, 3
    %p141 = por %p139, %p140
    %p142 = scmp.ne.s32.totalorder %s133, %s134
    %p143 = scmp.eq.s32.totalorder %s18, 0
    %p144 = por %p142, %p143
    %p145 = scmp.ne.s32.totalorder %s133, %s134
    %p146 = scmp.eq.s32.totalorder %s19, 3
    %p147 = por %p145, %p146
    %p149 = scmp.ne.s32.totalorder %s134, %s148
    %p150 = scmp.eq.s32.totalorder %s19, 0
    %p151 = por %p149, %p150
    %s153 = sadd.s32 %s152, 1
    %p156 = scmp.eq.s32.totalorder %s13, 3
    %p157 = scmp.ne.s32.totalorder %s152, %s154
    %p158 = scmp.eq.s32.totalorder %s13, 0
    %p159 = por %p157, %p158
    %p160 = scmp.ne.s32.totalorder %s152, %s154
    %p161 = scmp.eq.s32.totalorder %s18, 3
    %p162 = por %p160, %p161
    %p163 = scmp.ne.s32.totalorder %s154, %s155
    %p164 = scmp.eq.s32.totalorder %s18, 0
    %p165 = por %p163, %p164
    %p166 = scmp.ne.s32.totalorder %s154, %s155
    %p167 = scmp.eq.s32.totalorder %s19, 3
    %p168 = por %p166, %p167
    %p170 = scmp.ne.s32.totalorder %s155, %s169
    %p171 = scmp.eq.s32.totalorder %s19, 0
    %p172 = por %p170, %p171
    %s173 = ssub.s32 %s13, %s20
    %p174 = scmp.eq.s32.totalorder %s173, 0
    %s176 = sadd.s32 %s175, 1
    %s177 = scalar_select %p174, %s175, %s176
    %p180 = pneg %p174
    %p181 = scmp.eq.s32.totalorder %s13, 3
    %p182 = por %p180, %p181
    %p183 = scmp.ne.s32.totalorder %s175, %s178
    %p184 = scmp.eq.s32.totalorder %s13, 0
    %p185 = por %p183, %p184
    %p186 = scmp.ne.s32.totalorder %s175, %s178
    %p187 = scmp.eq.s32.totalorder %s18, 3
    %p188 = por %p186, %p187
    %p189 = scmp.ne.s32.totalorder %s178, %s179
    %p190 = scmp.eq.s32.totalorder %s18, 0
    %p191 = por %p189, %p190
    %p192 = scmp.ne.s32.totalorder %s178, %s179
    %p193 = scmp.eq.s32.totalorder %s19, 3
    %p194 = por %p192, %p193
    %p196 = scmp.ne.s32.totalorder %s179, %s195
    %p197 = scmp.eq.s32.totalorder %s19, 0
    %p198 = por %p196, %p197
    %p199 = scmp.le.s32.totalorder 1, %s13
    %p200 = scmp.lt.s32.totalorder %s13, 5
    %p201 = pnand %p199, %p200
    %p202 = pneg %p201
    // Predicated region
    $region9: #{encoder_forward.5} parent=5 // pred_check
      _
    $region10: #{encoder_forward.5} parent=5 // pred_check_branch
      %204 = sbr.rel (%p201) target = $region12
    $region11: #{encoder_forward.5} parent=5 // pred_region
      %s205 = ssub.s32 %s13, 1
      // Predicated region
      $region13: #{encoder_forward.5} parent=11 // pred_check
        %p206 = pneg %p60
      $region14: #{encoder_forward.5} parent=11 // pred_check_branch
        %208 = sbr.rel (%p206) target = $region16
      $region15: #{encoder_forward.5} parent=11 // pred_region
        _
      $region16: #{encoder_forward.5} parent=11 // pred_fallthru
        _
      // Predicated region
      $region17: #{encoder_forward.5} parent=11 // pred_check
        %p209 = pneg %p81
      $region18: #{encoder_forward.5} parent=11 // pred_check_branch
        %211 = sbr.rel (%p209) target = $region20
      $region19: #{encoder_forward.5} parent=11 // pred_region
        _
      $region20: #{encoder_forward.5} parent=11 // pred_fallthru
        _
      // Predicated region
      $region21: #{encoder_forward.5} parent=11 // pred_check
        %p212 = pneg %p102
      $region22: #{encoder_forward.5} parent=11 // pred_check_branch
        %214 = sbr.rel (%p212) target = $region24
      $region23: #{encoder_forward.5} parent=11 // pred_region
        _
      $region24: #{encoder_forward.5} parent=11 // pred_fallthru
        _
      // Predicated region
      $region25: #{encoder_forward.5} parent=11 // pred_check
        %p215 = pneg %p123
      $region26: #{encoder_forward.5} parent=11 // pred_check_branch
        %217 = sbr.rel (%p215) target = $region28
      $region27: #{encoder_forward.5} parent=11 // pred_region
        _
      $region28: #{encoder_forward.5} parent=11 // pred_fallthru
        _
      // Predicated region
      $region29: #{encoder_forward.5} parent=11 // pred_check
        %p218 = pneg %p144
      $region30: #{encoder_forward.5} parent=11 // pred_check_branch
        %220 = sbr.rel (%p218) target = $region32
      $region31: #{encoder_forward.5} parent=11 // pred_region
        _
      $region32: #{encoder_forward.5} parent=11 // pred_fallthru
        _
      // Predicated region
      $region33: #{encoder_forward.5} parent=11 // pred_check
        %p221 = pneg %p165
      $region34: #{encoder_forward.5} parent=11 // pred_check_branch
        %223 = sbr.rel (%p221) target = $region36
      $region35: #{encoder_forward.5} parent=11 // pred_region
        _
      $region36: #{encoder_forward.5} parent=11 // pred_fallthru
        _
    $region12: #{encoder_forward.5} parent=5 // pred_fallthru
      _
    %p224 = scmp.lt.s32.totalorder %s13, 4
    // Predicated region
    $region37: #{encoder_forward.5} parent=5 // pred_check
      %p225 = pneg %p224
    $region38: #{encoder_forward.5} parent=5 // pred_check_branch
      %227 = sbr.rel (%p225) target = $region40
    $region39: #{encoder_forward.5} parent=5 // pred_region
      // Predicated region
      $region41: #{encoder_forward.5} parent=39 // pred_check
        %p228 = pneg %p33
      $region42: #{encoder_forward.5} parent=39 // pred_check_branch
        %230 = sbr.rel (%p228) target = $region44
      $region43: #{encoder_forward.5} parent=39 // pred_region
        %p231 = scmp.lt.s32.totalorder %s13, 3
        %s232 = scalar_select %p231, %s13, 3
        %s233 = smul.addr %s232, 2
        %s234 = smul.addr %s233, 4
        %s235 = scalar_lea.vmem %s0, %s234
      $region44: #{encoder_forward.5} parent=39 // pred_fallthru
        _
    $region40: #{encoder_forward.5} parent=5 // pred_fallthru
      _
    %p236 = scmp.le.s32.totalorder 1, %s13
    %p237 = scmp.lt.s32.totalorder %s13, 5
    %p238 = pnand %p236, %p237
    %p239 = pneg %p238
    // Predicated region
    $region45: #{encoder_forward.5} parent=5 // pred_check
      _
    $region46: #{encoder_forward.5} parent=5 // pred_check_branch
      %241 = sbr.rel (%p238) target = $region48
    $region47: #{encoder_forward.5} parent=5 // pred_region
      %s242 = ssub.s32 %s13, 1
      %p243 = scmp.lt.s32.totalorder %s18, 3
      %s244 = scalar_select %p243, %s18, 3
      %s245 = smul.addr %s244, 2
      %s246 = smul.addr %s245, 4
      %s247 = scalar_lea.vmem %s0, %s246
      %p248 = pneg %p39
      %p249 = pneg %p36
      %p250 = pneg %p60
      %p251 = pneg %p57
      %p252 = pneg %p81
      %p253 = pneg %p78
      %p254 = pneg %p102
      %p255 = pneg %p99
      %p256 = pneg %p123
      %p257 = pneg %p120
      %p258 = pneg %p144
      %p259 = pneg %p141
      %p260 = pneg %p165
      %p261 = pneg %p162
      %p262 = pneg %p191
      %p263 = pneg %p188
      %p264 = scmp.lt.s32.totalorder %s18, 3
      %s265 = scalar_select %p264, %s18, 3
      %s266 = smul.addr %s265, 8
      %s267 = scalar_lea.vmem %s7, %s266
      %p268 = scmp.lt.s32.totalorder %s18, 3
      %s269 = scalar_select %p268, %s18, 3
      %s270 = smul.addr %s269, 2
      %s271 = smul.addr %s270, 4
      %s272 = scalar_lea.vmem %s0, %s271
      %p273 = scmp.lt.s32.totalorder %s18, 3
      %s274 = scalar_select %p273, %s18, 3
      %s275 = smul.addr %s274, 8
      %s276 = scalar_lea.vmem %s7, %s275
      %v278 = vld [vmem:[%s272] sm:$0x77]
      %v279 = vlaneseq
      %v280 = vand.u32 %v279, 127
      %v281 = vadd.s32 %v280, 128
      %v282 = vshra.s32 %v280, 4
      %v283 = vshra.s32 %v281, 4
      %v284 = vand.u32 %v280, 15
      %v285 = vand.u32 %v281, 15
      %v287 = vcombine.high %v278, %v278
      %289 = vrot.lane.b32.xlu0 %v278, 17
      %v290 = vpop.permute.xlu0 %289
      %291 = vrot.lane.b32.xlu0 %v287, 17
      %v292 = vpop.permute.xlu0 %291
      %vm293 = vcmp.lt.s32.totalorder %v280, 17
      %v294 = vsel %vm293, %v290, %v292
      %v295 = vsel %vm293, %v292, %v290
      %vm296 = vcmp.ge.s32.totalorder %v282, 1
      %vm297 = vcmp.ge.s32.totalorder %v283, 1
      %vm298 = vcmp.ge.s32.totalorder %v284, 1
      %vm299 = vcmp.ge.s32.totalorder %v285, 1
      %vm300 = vmand %vm296, %vm298
      %vm301 = vmand %vm297, %vm299
      %v302 = vsel %vm300, 1, 0
      %v303 = vsel %vm301, 1, 0
      %vm304 = vcmp.eq.s32.totalorder %v302, 1
      %vm305 = vcmp.eq.s32.totalorder %v303, 1
      %v306 = vsel %vm304, %v295, 0.0
      %v307 = vsel %vm305, %v294, 0.0
      %v308 = vld [vmem:[%s1] sm:$0xf]
      %v309 = vpack.c.bf16 %v306, %v306
      %v310 = vpack.c.bf16 %v307, %v307
      %311 = vrot.lane.b32.xlu0 %v278, 16
      %v312 = vpop.permute.xlu0 %311
      %313 = vrot.lane.b32.xlu0 %v287, 16
      %v314 = vpop.permute.xlu0 %313
      %vm315 = vcmp.lt.s32.totalorder %v280, 16
      %v316 = vsel %vm315, %v312, %v314
      %v317 = vsel %vm315, %v314, %v312
      %v318 = vsel %vm296, 1, 0
      %v319 = vsel %vm297, 1, 0
      %vm320 = vcmp.eq.s32.totalorder %v318, 1
      %vm321 = vcmp.eq.s32.totalorder %v319, 1
      %v322 = vsel %vm320, %v317, 0.0
      %v323 = vsel %vm321, %v316, 0.0
      %v324 = vld [vmem:[%s1 + $0x4] sm:$0xf]
      %v325 = vpack.c.bf16 %v322, %v322
      %v326 = vpack.c.bf16 %v323, %v323
      %vm327 = vcmask 23552
      %v329 = vsel %vm327, %v324, 0
      %vm331 = vcmask 1040384
      %vm332 = vcmask 1041408
      %v333 = vsel %vm331, 4294967295, 65535
      %v334 = vsel %vm332, %v333, 0
      %v336 = vand.u32 %v325, %v334
      %v339 = vand.u32 %v326, %v334
      %341 = vmatprep.subr.bf16.mxu0 0
      %342 = vmatpush1.bf16.msra.mxu0 0
      %343 = vmatprep.subr.bf16.mxu0 0
      %344 = vmatpush1.bf16.msra.mxu0 0
      %345 = vmatprep.subr.bf16.mxu0 0
      %346 = vmatpush1.bf16.msra.mxu0 0
      %347 = vmatprep.subr.bf16.mxu0 0
      %348 = vmatpush1.bf16.msra.mxu0 0
      %349 = vmatprep.subr.bf16.mxu0 0
      %350 = vmatpush1.bf16.msra.mxu0 0
      %351 = vmatprep.subr.bf16.mxu0 0
      %352 = vmatpush1.bf16.msra.mxu0 0
      %353 = vmatprep.subr.bf16.mxu0 0
      %354 = vmatpush1.bf16.msra.mxu0 0
      %355 = vmatprep.subr.bf16.mxu0 %v339
      %356 = vmatpush1.bf16.msra.mxu0 %v336
      %357 = vmatprep.subr.bf16.mxu0 0
      %358 = vmatpush2.bf16.msra.mxu0 0
      %359 = vmatprep.subr.bf16.mxu0 0
      %360 = vmatpush2.bf16.msra.mxu0 0
      %361 = vmatprep.subr.bf16.mxu0 0
      %362 = vmatpush2.bf16.msra.mxu0 0
      %363 = vmatprep.subr.bf16.mxu0 0
      %364 = vmatpush2.bf16.msra.mxu0 0
      %365 = vmatprep.subr.bf16.mxu0 0
      %366 = vmatpush2.bf16.msra.mxu0 0
      %367 = vmatprep.subr.bf16.mxu0 0
      %368 = vmatpush2.bf16.msra.mxu0 0
      %369 = vmatprep.subr.bf16.mxu0 0
      %370 = vmatpush2.bf16.msra.mxu0 0
      %371 = vmatprep.subr.bf16.mxu0 0
      %372 = vmatpush2.bf16.msra.mxu0 0
      %373 = vmatprep.mubr.bf16.mxu0 0
      %374 = vmatmul.mubr.bf16.gmra.mxu0 %v329
      %v375 = vpop.f32.mrf.mxu0
      %v376 = vadd.f32 0.0, %v375
      %v377 = vpop.f32.mrf.mxu0
      %v378 = vadd.f32 0.0, %v377
      %v379 = vpop.f32.mrf.mxu0
      %v380 = vpop.f32.mrf.mxu0
      %381 = vdwg.mxu0
      %v383 = vsel %vm327, %v308, 0
      %v386 = vand.u32 %v309, %v334
      %v389 = vand.u32 %v310, %v334
      %391 = vmatprep.subr.bf16.mxu0 0
      %392 = vmatpush1.bf16.msra.mxu0 0
      %393 = vmatprep.subr.bf16.mxu0 0
      %394 = vmatpush1.bf16.msra.mxu0 0
      %395 = vmatprep.subr.bf16.mxu0 0
      %396 = vmatpush1.bf16.msra.mxu0 0
      %397 = vmatprep.subr.bf16.mxu0 0
      %398 = vmatpush1.bf16.msra.mxu0 0
      %399 = vmatprep.subr.bf16.mxu0 0
      %400 = vmatpush1.bf16.msra.mxu0 0
      %401 = vmatprep.subr.bf16.mxu0 0
      %402 = vmatpush1.bf16.msra.mxu0 0
      %403 = vmatprep.subr.bf16.mxu0 0
      %404 = vmatpush1.bf16.msra.mxu0 0
      %405 = vmatprep.subr.bf16.mxu0 %v389
      %406 = vmatpush1.bf16.msra.mxu0 %v386
      %407 = vmatprep.subr.bf16.mxu0 0
      %408 = vmatpush2.bf16.msra.mxu0 0
      %409 = vmatprep.subr.bf16.mxu0 0
      %410 = vmatpush2.bf16.msra.mxu0 0
      %411 = vmatprep.subr.bf16.mxu0 0
      %412 = vmatpush2.bf16.msra.mxu0 0
      %413 = vmatprep.subr.bf16.mxu0 0
      %414 = vmatpush2.bf16.msra.mxu0 0
      %415 = vmatprep.subr.bf16.mxu0 0
      %416 = vmatpush2.bf16.msra.mxu0 0
      %417 = vmatprep.subr.bf16.mxu0 0
      %418 = vmatpush2.bf16.msra.mxu0 0
      %419 = vmatprep.subr.bf16.mxu0 0
      %420 = vmatpush2.bf16.msra.mxu0 0
      %421 = vmatprep.subr.bf16.mxu0 0
      %422 = vmatpush2.bf16.msra.mxu0 0
      %423 = vmatprep.mubr.bf16.mxu0 0
      %424 = vmatmul.mubr.bf16.gmra.mxu0 %v383
      %v425 = vpop.f32.mrf.mxu0
      %v426 = vadd.f32 %v376, %v425
      %v427 = vpop.f32.mrf.mxu0
      %v428 = vadd.f32 %v378, %v427
      %v429 = vpop.f32.mrf.mxu0
      %v430 = vpop.f32.mrf.mxu0
      %431 = vdwg.mxu0
      %432 = vrot.lane.b32.xlu0 %v278, 15
      %v433 = vpop.permute.xlu0 %432
      %434 = vrot.lane.b32.xlu0 %v287, 15
      %v435 = vpop.permute.xlu0 %434
      %vm436 = vcmp.lt.s32.totalorder %v280, 15
      %v437 = vsel %vm436, %v433, %v435
      %v438 = vsel %vm436, %v435, %v433
      %vm439 = vcmp.lt.s32.totalorder %v284, 15
      %vm440 = vcmp.lt.s32.totalorder %v285, 15
      %vm441 = vmand %vm296, %vm439
      %vm442 = vmand %vm297, %vm440
      %v443 = vsel %vm441, 1, 0
      %v444 = vsel %vm442, 1, 0
      %vm445 = vcmp.eq.s32.totalorder %v443, 1
      %vm446 = vcmp.eq.s32.totalorder %v444, 1
      %v447 = vsel %vm445, %v438, 0.0
      %v448 = vsel %vm446, %v437, 0.0
      %v449 = vld [vmem:[%s1 + $0x8] sm:$0xf]
      %v450 = vpack.c.bf16 %v447, %v447
      %v451 = vpack.c.bf16 %v448, %v448
      %v453 = vsel %vm327, %v449, 0
      %v456 = vand.u32 %v450, %v334
      %v459 = vand.u32 %v451, %v334
      %461 = vmatprep.subr.bf16.mxu0 0
      %462 = vmatpush1.bf16.msra.mxu0 0
      %463 = vmatprep.subr.bf16.mxu0 0
      %464 = vmatpush1.bf16.msra.mxu0 0
      %465 = vmatprep.subr.bf16.mxu0 0
      %466 = vmatpush1.bf16.msra.mxu0 0
      %467 = vmatprep.subr.bf16.mxu0 0
      %468 = vmatpush1.bf16.msra.mxu0 0
      %469 = vmatprep.subr.bf16.mxu0 0
      %470 = vmatpush1.bf16.msra.mxu0 0
      %471 = vmatprep.subr.bf16.mxu0 0
      %472 = vmatpush1.bf16.msra.mxu0 0
      %473 = vmatprep.subr.bf16.mxu0 0
      %474 = vmatpush1.bf16.msra.mxu0 0
      %475 = vmatprep.subr.bf16.mxu0 %v459
      %476 = vmatpush1.bf16.msra.mxu0 %v456
      %477 = vmatprep.subr.bf16.mxu0 0
      %478 = vmatpush2.bf16.msra.mxu0 0
      %479 = vmatprep.subr.bf16.mxu0 0
      %480 = vmatpush2.bf16.msra.mxu0 0
      %481 = vmatprep.subr.bf16.mxu0 0
      %482 = vmatpush2.bf16.msra.mxu0 0
      %483 = vmatprep.subr.bf16.mxu0 0
      %484 = vmatpush2.bf16.msra.mxu0 0
      %485 = vmatprep.subr.bf16.mxu0 0
      %486 = vmatpush2.bf16.msra.mxu0 0
      %487 = vmatprep.subr.bf16.mxu0 0
      %488 = vmatpush2.bf16.msra.mxu0 0
      %489 = vmatprep.subr.bf16.mxu0 0
      %490 = vmatpush2.bf16.msra.mxu0 0
      %491 = vmatprep.subr.bf16.mxu0 0
      %492 = vmatpush2.bf16.msra.mxu0 0
      %493 = vmatprep.mubr.bf16.mxu0 0
      %494 = vmatmul.mubr.bf16.gmra.mxu0 %v453
      %v495 = vpop.f32.mrf.mxu0
      %v496 = vadd.f32 0.0, %v495
      %v497 = vpop.f32.mrf.mxu0
      %v498 = vadd.f32 0.0, %v497
      %v499 = vpop.f32.mrf.mxu0
      %v500 = vpop.f32.mrf.mxu0
      %501 = vdwg.mxu0
      %v502 = vadd.f32 %v426, %v496
      %v503 = vadd.f32 %v428, %v498
      %504 = vrot.lane.b32.xlu0 %v278, 1
      %v505 = vpop.permute.xlu0 %504
      %506 = vrot.lane.b32.xlu0 %v287, 1
      %v507 = vpop.permute.xlu0 %506
      %vm508 = vcmp.lt.s32.totalorder %v280, 1
      %v509 = vsel %vm508, %v505, %v507
      %v510 = vsel %vm508, %v507, %v505
      %v511 = vsel %vm298, 1, 0
      %v512 = vsel %vm299, 1, 0
      %vm513 = vcmp.eq.s32.totalorder %v511, 1
      %vm514 = vcmp.eq.s32.totalorder %v512, 1
      %v515 = vsel %vm513, %v510, 0.0
      %v516 = vsel %vm514, %v509, 0.0
      %v517 = vld [vmem:[%s1 + $0xc] sm:$0xf]
      %v518 = vpack.c.bf16 %v515, %v515
      %v519 = vpack.c.bf16 %v516, %v516
      %v521 = vsel %vm327, %v517, 0
      %v524 = vand.u32 %v518, %v334
      %v527 = vand.u32 %v519, %v334
      %529 = vmatprep.subr.bf16.mxu0 0
      %530 = vmatpush1.bf16.msra.mxu0 0
      %531 = vmatprep.subr.bf16.mxu0 0
      %532 = vmatpush1.bf16.msra.mxu0 0
      %533 = vmatprep.subr.bf16.mxu0 0
      %534 = vmatpush1.bf16.msra.mxu0 0
      %535 = vmatprep.subr.bf16.mxu0 0
      %536 = vmatpush1.bf16.msra.mxu0 0
      %537 = vmatprep.subr.bf16.mxu0 0
      %538 = vmatpush1.bf16.msra.mxu0 0
      %539 = vmatprep.subr.bf16.mxu0 0
      %540 = vmatpush1.bf16.msra.mxu0 0
      %541 = vmatprep.subr.bf16.mxu0 0
      %542 = vmatpush1.bf16.msra.mxu0 0
      %543 = vmatprep.subr.bf16.mxu0 %v527
      %544 = vmatpush1.bf16.msra.mxu0 %v524
      %545 = vmatprep.subr.bf16.mxu0 0
      %546 = vmatpush2.bf16.msra.mxu0 0
      %547 = vmatprep.subr.bf16.mxu0 0
      %548 = vmatpush2.bf16.msra.mxu0 0
      %549 = vmatprep.subr.bf16.mxu0 0
      %550 = vmatpush2.bf16.msra.mxu0 0
      %551 = vmatprep.subr.bf16.mxu0 0
      %552 = vmatpush2.bf16.msra.mxu0 0
      %553 = vmatprep.subr.bf16.mxu0 0
      %554 = vmatpush2.bf16.msra.mxu0 0
      %555 = vmatprep.subr.bf16.mxu0 0
      %556 = vmatpush2.bf16.msra.mxu0 0
      %557 = vmatprep.subr.bf16.mxu0 0
      %558 = vmatpush2.bf16.msra.mxu0 0
      %559 = vmatprep.subr.bf16.mxu0 0
      %560 = vmatpush2.bf16.msra.mxu0 0
      %561 = vmatprep.mubr.bf16.mxu0 0
      %562 = vmatmul.mubr.bf16.gmra.mxu0 %v521
      %v563 = vpop.f32.mrf.mxu0
      %v564 = vadd.f32 0.0, %v563
      %v565 = vpop.f32.mrf.mxu0
      %v566 = vadd.f32 0.0, %v565
      %v567 = vpop.f32.mrf.mxu0
      %v568 = vpop.f32.mrf.mxu0
      %569 = vdwg.mxu0
      %v570 = vadd.f32 %v502, %v564
      %v571 = vadd.f32 %v503, %v566
      %v572 = vld [vmem:[%s1 + $0x10] sm:$0xf]
      %v573 = vpack.c.bf16 %v278, %v278
      %v574 = vpack.c.bf16 %v287, %v287
      %v576 = vsel %vm327, %v572, 0
      %v579 = vand.u32 %v573, %v334
      %v582 = vand.u32 %v574, %v334
      %584 = vmatprep.subr.bf16.mxu0 0
      %585 = vmatpush1.bf16.msra.mxu0 0
      %586 = vmatprep.subr.bf16.mxu0 0
      %587 = vmatpush1.bf16.msra.mxu0 0
      %588 = vmatprep.subr.bf16.mxu0 0
      %589 = vmatpush1.bf16.msra.mxu0 0
      %590 = vmatprep.subr.bf16.mxu0 0
      %591 = vmatpush1.bf16.msra.mxu0 0
      %592 = vmatprep.subr.bf16.mxu0 0
      %593 = vmatpush1.bf16.msra.mxu0 0
      %594 = vmatprep.subr.bf16.mxu0 0
      %595 = vmatpush1.bf16.msra.mxu0 0
      %596 = vmatprep.subr.bf16.mxu0 0
      %597 = vmatpush1.bf16.msra.mxu0 0
      %598 = vmatprep.subr.bf16.mxu0 %v582
      %599 = vmatpush1.bf16.msra.mxu0 %v579
      %600 = vmatprep.subr.bf16.mxu0 0
      %601 = vmatpush2.bf16.msra.mxu0 0
      %602 = vmatprep.subr.bf16.mxu0 0
      %603 = vmatpush2.bf16.msra.mxu0 0
      %604 = vmatprep.subr.bf16.mxu0 0
      %605 = vmatpush2.bf16.msra.mxu0 0
      %606 = vmatprep.subr.bf16.mxu0 0
      %607 = vmatpush2.bf16.msra.mxu0 0
      %608 = vmatprep.subr.bf16.mxu0 0
      %609 = vmatpush2.bf16.msra.mxu0 0
      %610 = vmatprep.subr.bf16.mxu0 0
      %611 = vmatpush2.bf16.msra.mxu0 0
      %612 = vmatprep.subr.bf16.mxu0 0
      %613 = vmatpush2.bf16.msra.mxu0 0
      %614 = vmatprep.subr.bf16.mxu0 0
      %615 = vmatpush2.bf16.msra.mxu0 0
      %616 = vmatprep.mubr.bf16.mxu0 0
      %617 = vmatmul.mubr.bf16.gmra.mxu0 %v576
      %v618 = vpop.f32.mrf.mxu0
      %v619 = vadd.f32 0.0, %v618
      %v620 = vpop.f32.mrf.mxu0
      %v621 = vadd.f32 0.0, %v620
      %v622 = vpop.f32.mrf.mxu0
      %v623 = vpop.f32.mrf.mxu0
      %624 = vdwg.mxu0
      %v625 = vadd.f32 %v570, %v619
      %v626 = vadd.f32 %v571, %v621
      %627 = vrot.lane.b32.xlu0 %v278, 127
      %v628 = vpop.permute.xlu0 %627
      %629 = vrot.lane.b32.xlu0 %v287, 127
      %v630 = vpop.permute.xlu0 %629
      %vm631 = vcmp.lt.s32.totalorder %v280, 127
      %v632 = vsel %vm631, %v628, %v630
      %v633 = vsel %vm631, %v630, %v628
      %v634 = vsel %vm439, 1, 0
      %v635 = vsel %vm440, 1, 0
      %vm636 = vcmp.eq.s32.totalorder %v634, 1
      %vm637 = vcmp.eq.s32.totalorder %v635, 1
      %v638 = vsel %vm636, %v632, 0.0
      %v639 = vsel %vm637, %v633, 0.0
      %v640 = vld [vmem:[%s1 + $0x14] sm:$0xf]
      %v641 = vpack.c.bf16 %v638, %v638
      %v642 = vpack.c.bf16 %v639, %v639
      %v644 = vsel %vm327, %v640, 0
      %v647 = vand.u32 %v641, %v334
      %v650 = vand.u32 %v642, %v334
      %652 = vmatprep.subr.bf16.mxu0 0
      %653 = vmatpush1.bf16.msra.mxu0 0
      %654 = vmatprep.subr.bf16.mxu0 0
      %655 = vmatpush1.bf16.msra.mxu0 0
      %656 = vmatprep.subr.bf16.mxu0 0
      %657 = vmatpush1.bf16.msra.mxu0 0
      %658 = vmatprep.subr.bf16.mxu0 0
      %659 = vmatpush1.bf16.msra.mxu0 0
      %660 = vmatprep.subr.bf16.mxu0 0
      %661 = vmatpush1.bf16.msra.mxu0 0
      %662 = vmatprep.subr.bf16.mxu0 0
      %663 = vmatpush1.bf16.msra.mxu0 0
      %664 = vmatprep.subr.bf16.mxu0 0
      %665 = vmatpush1.bf16.msra.mxu0 0
      %666 = vmatprep.subr.bf16.mxu0 %v650
      %667 = vmatpush1.bf16.msra.mxu0 %v647
      %668 = vmatprep.subr.bf16.mxu0 0
      %669 = vmatpush2.bf16.msra.mxu0 0
      %670 = vmatprep.subr.bf16.mxu0 0
      %671 = vmatpush2.bf16.msra.mxu0 0
      %672 = vmatprep.subr.bf16.mxu0 0
      %673 = vmatpush2.bf16.msra.mxu0 0
      %674 = vmatprep.subr.bf16.mxu0 0
      %675 = vmatpush2.bf16.msra.mxu0 0
      %676 = vmatprep.subr.bf16.mxu0 0
      %677 = vmatpush2.bf16.msra.mxu0 0
      %678 = vmatprep.subr.bf16.mxu0 0
      %679 = vmatpush2.bf16.msra.mxu0 0
      %680 = vmatprep.subr.bf16.mxu0 0
      %681 = vmatpush2.bf16.msra.mxu0 0
      %682 = vmatprep.subr.bf16.mxu0 0
      %683 = vmatpush2.bf16.msra.mxu0 0
      %684 = vmatprep.mubr.bf16.mxu0 0
      %685 = vmatmul.mubr.bf16.gmra.mxu0 %v644
      %v686 = vpop.f32.mrf.mxu0
      %v687 = vadd.f32 0.0, %v686
      %v688 = vpop.f32.mrf.mxu0
      %v689 = vadd.f32 0.0, %v688
      %v690 = vpop.f32.mrf.mxu0
      %v691 = vpop.f32.mrf.mxu0
      %692 = vdwg.mxu0
      %v693 = vadd.f32 %v625, %v687
      %v694 = vadd.f32 %v626, %v689
      %695 = vrot.lane.b32.xlu0 %v278, 113
      %v696 = vpop.permute.xlu0 %695
      %697 = vrot.lane.b32.xlu0 %v287, 113
      %v698 = vpop.permute.xlu0 %697
      %vm699 = vcmp.lt.s32.totalorder %v280, 113
      %v700 = vsel %vm699, %v696, %v698
      %v701 = vsel %vm699, %v698, %v696
      %vm702 = vcmp.lt.s32.totalorder %v282, 15
      %vm703 = vcmp.lt.s32.totalorder %v283, 15
      %vm704 = vmand %vm702, %vm298
      %vm705 = vmand %vm703, %vm299
      %v706 = vsel %vm704, 1, 0
      %v707 = vsel %vm705, 1, 0
      %vm708 = vcmp.eq.s32.totalorder %v706, 1
      %vm709 = vcmp.eq.s32.totalorder %v707, 1
      %v710 = vsel %vm708, %v700, 0.0
      %v711 = vsel %vm709, %v701, 0.0
      %v712 = vld [vmem:[%s1 + $0x18] sm:$0xf]
      %v713 = vpack.c.bf16 %v710, %v710
      %v714 = vpack.c.bf16 %v711, %v711
      %v716 = vsel %vm327, %v712, 0
      %v719 = vand.u32 %v713, %v334
      %v722 = vand.u32 %v714, %v334
      %724 = vmatprep.subr.bf16.mxu0 0
      %725 = vmatpush1.bf16.msra.mxu0 0
      %726 = vmatprep.subr.bf16.mxu0 0
      %727 = vmatpush1.bf16.msra.mxu0 0
      %728 = vmatprep.subr.bf16.mxu0 0
      %729 = vmatpush1.bf16.msra.mxu0 0
      %730 = vmatprep.subr.bf16.mxu0 0
      %731 = vmatpush1.bf16.msra.mxu0 0
      %732 = vmatprep.subr.bf16.mxu0 0
      %733 = vmatpush1.bf16.msra.mxu0 0
      %734 = vmatprep.subr.bf16.mxu0 0
      %735 = vmatpush1.bf16.msra.mxu0 0
      %736 = vmatprep.subr.bf16.mxu0 0
      %737 = vmatpush1.bf16.msra.mxu0 0
      %738 = vmatprep.subr.bf16.mxu0 %v722
      %739 = vmatpush1.bf16.msra.mxu0 %v719
      %740 = vmatprep.subr.bf16.mxu0 0
      %741 = vmatpush2.bf16.msra.mxu0 0
      %742 = vmatprep.subr.bf16.mxu0 0
      %743 = vmatpush2.bf16.msra.mxu0 0
      %744 = vmatprep.subr.bf16.mxu0 0
      %745 = vmatpush2.bf16.msra.mxu0 0
      %746 = vmatprep.subr.bf16.mxu0 0
      %747 = vmatpush2.bf16.msra.mxu0 0
      %748 = vmatprep.subr.bf16.mxu0 0
      %749 = vmatpush2.bf16.msra.mxu0 0
      %750 = vmatprep.subr.bf16.mxu0 0
      %751 = vmatpush2.bf16.msra.mxu0 0
      %752 = vmatprep.subr.bf16.mxu0 0
      %753 = vmatpush2.bf16.msra.mxu0 0
      %754 = vmatprep.subr.bf16.mxu0 0
      %755 = vmatpush2.bf16.msra.mxu0 0
      %756 = vmatprep.mubr.bf16.mxu0 0
      %757 = vmatmul.mubr.bf16.gmra.mxu0 %v716
      %v758 = vpop.f32.mrf.mxu0
      %v759 = vadd.f32 0.0, %v758
      %v760 = vpop.f32.mrf.mxu0
      %v761 = vadd.f32 0.0, %v760
      %v762 = vpop.f32.mrf.mxu0
      %v763 = vpop.f32.mrf.mxu0
      %764 = vdwg.mxu0
      %v765 = vadd.f32 %v693, %v759
      %v766 = vadd.f32 %v694, %v761
      %767 = vrot.lane.b32.xlu0 %v278, 112
      %v768 = vpop.permute.xlu0 %767
      %769 = vrot.lane.b32.xlu0 %v287, 112
      %v770 = vpop.permute.xlu0 %769
      %vm771 = vcmp.lt.s32.totalorder %v280, 112
      %v772 = vsel %vm771, %v768, %v770
      %v773 = vsel %vm771, %v770, %v768
      %v774 = vsel %vm702, 1, 0
      %v775 = vsel %vm703, 1, 0
      %vm776 = vcmp.eq.s32.totalorder %v774, 1
      %vm777 = vcmp.eq.s32.totalorder %v775, 1
      %v778 = vsel %vm776, %v772, 0.0
      %v779 = vsel %vm777, %v773, 0.0
      %v780 = vld [vmem:[%s1 + $0x1c] sm:$0xf]
      %v781 = vpack.c.bf16 %v778, %v778
      %v782 = vpack.c.bf16 %v779, %v779
      %v784 = vsel %vm327, %v780, 0
      %v787 = vand.u32 %v781, %v334
      %v790 = vand.u32 %v782, %v334
      %792 = vmatprep.subr.bf16.mxu0 0
      %793 = vmatpush1.bf16.msra.mxu0 0
      %794 = vmatprep.subr.bf16.mxu0 0
      %795 = vmatpush1.bf16.msra.mxu0 0
      %796 = vmatprep.subr.bf16.mxu0 0
      %797 = vmatpush1.bf16.msra.mxu0 0
      %798 = vmatprep.subr.bf16.mxu0 0
      %799 = vmatpush1.bf16.msra.mxu0 0
      %800 = vmatprep.subr.bf16.mxu0 0
      %801 = vmatpush1.bf16.msra.mxu0 0
      %802 = vmatprep.subr.bf16.mxu0 0
      %803 = vmatpush1.bf16.msra.mxu0 0
      %804 = vmatprep.subr.bf16.mxu0 0
      %805 = vmatpush1.bf16.msra.mxu0 0
      %806 = vmatprep.subr.bf16.mxu0 %v790
      %807 = vmatpush1.bf16.msra.mxu0 %v787
      %808 = vmatprep.subr.bf16.mxu0 0
      %809 = vmatpush2.bf16.msra.mxu0 0
      %810 = vmatprep.subr.bf16.mxu0 0
      %811 = vmatpush2.bf16.msra.mxu0 0
      %812 = vmatprep.subr.bf16.mxu0 0
      %813 = vmatpush2.bf16.msra.mxu0 0
      %814 = vmatprep.subr.bf16.mxu0 0
      %815 = vmatpush2.bf16.msra.mxu0 0
      %816 = vmatprep.subr.bf16.mxu0 0
      %817 = vmatpush2.bf16.msra.mxu0 0
      %818 = vmatprep.subr.bf16.mxu0 0
      %819 = vmatpush2.bf16.msra.mxu0 0
      %820 = vmatprep.subr.bf16.mxu0 0
      %821 = vmatpush2.bf16.msra.mxu0 0
      %822 = vmatprep.subr.bf16.mxu0 0
      %823 = vmatpush2.bf16.msra.mxu0 0
      %824 = vmatprep.mubr.bf16.mxu0 0
      %825 = vmatmul.mubr.bf16.gmra.mxu0 %v784
      %v826 = vpop.f32.mrf.mxu0
      %v827 = vadd.f32 0.0, %v826
      %v828 = vpop.f32.mrf.mxu0
      %v829 = vadd.f32 0.0, %v828
      %v830 = vpop.f32.mrf.mxu0
      %v831 = vpop.f32.mrf.mxu0
      %832 = vdwg.mxu0
      %v833 = vadd.f32 %v765, %v827
      %v834 = vadd.f32 %v766, %v829
      %835 = vrot.lane.b32.xlu0 %v278, 111
      %v836 = vpop.permute.xlu0 %835
      %837 = vrot.lane.b32.xlu0 %v287, 111
      %v838 = vpop.permute.xlu0 %837
      %vm839 = vcmp.lt.s32.totalorder %v280, 111
      %v840 = vsel %vm839, %v836, %v838
      %v841 = vsel %vm839, %v838, %v836
      %vm842 = vmand %vm702, %vm439
      %vm843 = vmand %vm703, %vm440
      %v844 = vsel %vm842, 1, 0
      %v845 = vsel %vm843, 1, 0
      %vm846 = vcmp.eq.s32.totalorder %v844, 1
      %vm847 = vcmp.eq.s32.totalorder %v845, 1
      %v848 = vsel %vm846, %v840, 0.0
      %v849 = vsel %vm847, %v841, 0.0
      %v850 = vld [vmem:[%s1 + $0x20] sm:$0xf]
      %v851 = vpack.c.bf16 %v848, %v848
      %v852 = vpack.c.bf16 %v849, %v849
      %v854 = vsel %vm327, %v850, 0
      %v857 = vand.u32 %v851, %v334
      %v860 = vand.u32 %v852, %v334
      %862 = vmatprep.subr.bf16.mxu0 0
      %863 = vmatpush1.bf16.msra.mxu0 0
      %864 = vmatprep.subr.bf16.mxu0 0
      %865 = vmatpush1.bf16.msra.mxu0 0
      %866 = vmatprep.subr.bf16.mxu0 0
      %867 = vmatpush1.bf16.msra.mxu0 0
      %868 = vmatprep.subr.bf16.mxu0 0
      %869 = vmatpush1.bf16.msra.mxu0 0
      %870 = vmatprep.subr.bf16.mxu0 0
      %871 = vmatpush1.bf16.msra.mxu0 0
      %872 = vmatprep.subr.bf16.mxu0 0
      %873 = vmatpush1.bf16.msra.mxu0 0
      %874 = vmatprep.subr.bf16.mxu0 0
      %875 = vmatpush1.bf16.msra.mxu0 0
      %876 = vmatprep.subr.bf16.mxu0 %v860
      %877 = vmatpush1.bf16.msra.mxu0 %v857
      %878 = vmatprep.subr.bf16.mxu0 0
      %879 = vmatpush2.bf16.msra.mxu0 0
      %880 = vmatprep.subr.bf16.mxu0 0
      %881 = vmatpush2.bf16.msra.mxu0 0
      %882 = vmatprep.subr.bf16.mxu0 0
      %883 = vmatpush2.bf16.msra.mxu0 0
      %884 = vmatprep.subr.bf16.mxu0 0
      %885 = vmatpush2.bf16.msra.mxu0 0
      %886 = vmatprep.subr.bf16.mxu0 0
      %887 = vmatpush2.bf16.msra.mxu0 0
      %888 = vmatprep.subr.bf16.mxu0 0
      %889 = vmatpush2.bf16.msra.mxu0 0
      %890 = vmatprep.subr.bf16.mxu0 0
      %891 = vmatpush2.bf16.msra.mxu0 0
      %892 = vmatprep.subr.bf16.mxu0 0
      %893 = vmatpush2.bf16.msra.mxu0 0
      %894 = vmatprep.mubr.bf16.mxu0 0
      %895 = vmatmul.mubr.bf16.gmra.mxu0 %v854
      %v896 = vpop.f32.mrf.mxu0
      %v897 = vadd.f32 0.0, %v896
      %v898 = vpop.f32.mrf.mxu0
      %v899 = vadd.f32 0.0, %v898
      %v900 = vpop.f32.mrf.mxu0
      %v901 = vpop.f32.mrf.mxu0
      %902 = vdwg.mxu0
      %v903 = vadd.f32 %v833, %v897
      %v904 = vadd.f32 %v834, %v899
      %v905 = vld [vmem:[%s2] sm:$0xff]
      %907 = vset.pattern.permute.xlu0 0
      %908 = vperm.xlu0 %907, %v905
      %v909 = vpop.permute.xlu0 %908
      %v911 = vadd.f32 %v903, %v909
      %v912 = vadd.f32 %v904, %v909
      %vm913 = vcmp.gt.f32.partialorder %v911, 0.0
      %vm914 = vcmp.gt.f32.partialorder %v912, 0.0
      %v915 = vmin.f32 %v911, 0.0
      %v916 = vmin.f32 %v912, 0.0
      %v917 = vmul.f32 %v915, 1.442695
      %v918 = vpow.pop %v917
      %v919 = vmul.f32 %v916, 1.442695
      %v920 = vpow.pop %v919
      %v921 = vsub.f32 %v918, 1.0
      %v922 = vsub.f32 %v920, 1.0
      %v923 = vmul.f32 %v921, 1.6732632
      %v924 = vmul.f32 %v922, 1.6732632
      %v925 = vsel %vm913, %v911, %v923
      %v926 = vsel %vm914, %v912, %v924
      %v927 = vmul.f32 %v925, 1.050701
      %v928 = vmul.f32 %v926, 1.050701
      %929 = vrot.lane.b32.xlu0 %v927, 17
      %v930 = vpop.permute.xlu0 %929
      %931 = vrot.lane.b32.xlu0 %v928, 17
      %v932 = vpop.permute.xlu0 %931
      %v933 = vsel %vm293, %v930, %v932
      %v934 = vsel %vm293, %v932, %v930
      %v935 = vsel %vm304, %v934, 0.0
      %v936 = vsel %vm305, %v933, 0.0
      %v937 = vld [vmem:[%s3] sm:$0xf]
      %v938 = vpack.c.bf16 %v935, %v935
      %v939 = vpack.c.bf16 %v936, %v936
      %940 = vrot.lane.b32.xlu0 %v927, 16
      %v941 = vpop.permute.xlu0 %940
      %942 = vrot.lane.b32.xlu0 %v928, 16
      %v943 = vpop.permute.xlu0 %942
      %v944 = vsel %vm315, %v941, %v943
      %v945 = vsel %vm315, %v943, %v941
      %v946 = vsel %vm320, %v945, 0.0
      %v947 = vsel %vm321, %v944, 0.0
      %v948 = vld [vmem:[%s3 + $0x4] sm:$0xf]
      %v949 = vpack.c.bf16 %v946, %v946
      %v950 = vpack.c.bf16 %v947, %v947
      %vm951 = vcmask 64512
      %v953 = vsel %vm951, %v948, 0
      %vm955 = vcmask 1043456
      %v957 = vsel %vm955, %v949, 0
      %v960 = vsel %vm955, %v950, 0
      %962 = vmatprep.subr.bf16.mxu0 0
      %963 = vmatpush1.bf16.msra.mxu0 0
      %964 = vmatprep.subr.bf16.mxu0 0
      %965 = vmatpush1.bf16.msra.mxu0 0
      %966 = vmatprep.subr.bf16.mxu0 0
      %967 = vmatpush1.bf16.msra.mxu0 0
      %968 = vmatprep.subr.bf16.mxu0 0
      %969 = vmatpush1.bf16.msra.mxu0 0
      %970 = vmatprep.subr.bf16.mxu0 0
      %971 = vmatpush1.bf16.msra.mxu0 0
      %972 = vmatprep.subr.bf16.mxu0 0
      %973 = vmatpush1.bf16.msra.mxu0 0
      %974 = vmatprep.subr.bf16.mxu0 0
      %975 = vmatpush1.bf16.msra.mxu0 0
      %976 = vmatprep.subr.bf16.mxu0 %v960
      %977 = vmatpush1.bf16.msra.mxu0 %v957
      %978 = vmatprep.subr.bf16.mxu0 0
      %979 = vmatpush2.bf16.msra.mxu0 0
      %980 = vmatprep.subr.bf16.mxu0 0
      %981 = vmatpush2.bf16.msra.mxu0 0
      %982 = vmatprep.subr.bf16.mxu0 0
      %983 = vmatpush2.bf16.msra.mxu0 0
      %984 = vmatprep.subr.bf16.mxu0 0
      %985 = vmatpush2.bf16.msra.mxu0 0
      %986 = vmatprep.subr.bf16.mxu0 0
      %987 = vmatpush2.bf16.msra.mxu0 0
      %988 = vmatprep.subr.bf16.mxu0 0
      %989 = vmatpush2.bf16.msra.mxu0 0
      %990 = vmatprep.subr.bf16.mxu0 0
      %991 = vmatpush2.bf16.msra.mxu0 0
      %992 = vmatprep.subr.bf16.mxu0 0
      %993 = vmatpush2.bf16.msra.mxu0 0
      %994 = vmatprep.mubr.bf16.mxu0 0
      %995 = vmatmul.mubr.bf16.gmra.mxu0 %v953
      %v996 = vpop.f32.mrf.mxu0
      %v997 = vadd.f32 0.0, %v996
      %v998 = vpop.f32.mrf.mxu0
      %v999 = vadd.f32 0.0, %v998
      %v1000 = vpop.f32.mrf.mxu0
      %v1001 = vpop.f32.mrf.mxu0
      %1002 = vdwg.mxu0
      %v1004 = vsel %vm951, %v937, 0
      %v1007 = vsel %vm955, %v938, 0
      %v1010 = vsel %vm955, %v939, 0
      %1012 = vmatprep.subr.bf16.mxu0 0
      %1013 = vmatpush1.bf16.msra.mxu0 0
      %1014 = vmatprep.subr.bf16.mxu0 0
      %1015 = vmatpush1.bf16.msra.mxu0 0
      %1016 = vmatprep.subr.bf16.mxu0 0
      %1017 = vmatpush1.bf16.msra.mxu0 0
      %1018 = vmatprep.subr.bf16.mxu0 0
      %1019 = vmatpush1.bf16.msra.mxu0 0
      %1020 = vmatprep.subr.bf16.mxu0 0
      %1021 = vmatpush1.bf16.msra.mxu0 0
      %1022 = vmatprep.subr.bf16.mxu0 0
      %1023 = vmatpush1.bf16.msra.mxu0 0
      %1024 = vmatprep.subr.bf16.mxu0 0
      %1025 = vmatpush1.bf16.msra.mxu0 0
      %1026 = vmatprep.subr.bf16.mxu0 %v1010
      %1027 = vmatpush1.bf16.msra.mxu0 %v1007
      %1028 = vmatprep.subr.bf16.mxu0 0
      %1029 = vmatpush2.bf16.msra.mxu0 0
      %1030 = vmatprep.subr.bf16.mxu0 0
      %1031 = vmatpush2.bf16.msra.mxu0 0
      %1032 = vmatprep.subr.bf16.mxu0 0
      %1033 = vmatpush2.bf16.msra.mxu0 0
      %1034 = vmatprep.subr.bf16.mxu0 0
      %1035 = vmatpush2.bf16.msra.mxu0 0
      %1036 = vmatprep.subr.bf16.mxu0 0
      %1037 = vmatpush2.bf16.msra.mxu0 0
      %1038 = vmatprep.subr.bf16.mxu0 0
      %1039 = vmatpush2.bf16.msra.mxu0 0
      %1040 = vmatprep.subr.bf16.mxu0 0
      %1041 = vmatpush2.bf16.msra.mxu0 0
      %1042 = vmatprep.subr.bf16.mxu0 0
      %1043 = vmatpush2.bf16.msra.mxu0 0
      %1044 = vmatprep.mubr.bf16.mxu0 0
      %1045 = vmatmul.mubr.bf16.gmra.mxu0 %v1004
      %v1046 = vpop.f32.mrf.mxu0
      %v1047 = vadd.f32 %v997, %v1046
      %v1048 = vpop.f32.mrf.mxu0
      %v1049 = vadd.f32 %v999, %v1048
      %v1050 = vpop.f32.mrf.mxu0
      %v1051 = vpop.f32.mrf.mxu0
      %1052 = vdwg.mxu0
      %1053 = vrot.lane.b32.xlu0 %v927, 15
      %v1054 = vpop.permute.xlu0 %1053
      %1055 = vrot.lane.b32.xlu0 %v928, 15
      %v1056 = vpop.permute.xlu0 %1055
      %v1057 = vsel %vm436, %v1054, %v1056
      %v1058 = vsel %vm436, %v1056, %v1054
      %v1059 = vsel %vm445, %v1058, 0.0
      %v1060 = vsel %vm446, %v1057, 0.0
      %v1061 = vld [vmem:[%s3 + $0x8] sm:$0xf]
      %v1062 = vpack.c.bf16 %v1059, %v1059
      %v1063 = vpack.c.bf16 %v1060, %v1060
      %v1065 = vsel %vm951, %v1061, 0
      %v1068 = vsel %vm955, %v1062, 0
      %v1071 = vsel %vm955, %v1063, 0
      %1073 = vmatprep.subr.bf16.mxu0 0
      %1074 = vmatpush1.bf16.msra.mxu0 0
      %1075 = vmatprep.subr.bf16.mxu0 0
      %1076 = vmatpush1.bf16.msra.mxu0 0
      %1077 = vmatprep.subr.bf16.mxu0 0
      %1078 = vmatpush1.bf16.msra.mxu0 0
      %1079 = vmatprep.subr.bf16.mxu0 0
      %1080 = vmatpush1.bf16.msra.mxu0 0
      %1081 = vmatprep.subr.bf16.mxu0 0
      %1082 = vmatpush1.bf16.msra.mxu0 0
      %1083 = vmatprep.subr.bf16.mxu0 0
      %1084 = vmatpush1.bf16.msra.mxu0 0
      %1085 = vmatprep.subr.bf16.mxu0 0
      %1086 = vmatpush1.bf16.msra.mxu0 0
      %1087 = vmatprep.subr.bf16.mxu0 %v1071
      %1088 = vmatpush1.bf16.msra.mxu0 %v1068
      %1089 = vmatprep.subr.bf16.mxu0 0
      %1090 = vmatpush2.bf16.msra.mxu0 0
      %1091 = vmatprep.subr.bf16.mxu0 0
      %1092 = vmatpush2.bf16.msra.mxu0 0
      %1093 = vmatprep.subr.bf16.mxu0 0
      %1094 = vmatpush2.bf16.msra.mxu0 0
      %1095 = vmatprep.subr.bf16.mxu0 0
      %1096 = vmatpush2.bf16.msra.mxu0 0
      %1097 = vmatprep.subr.bf16.mxu0 0
      %1098 = vmatpush2.bf16.msra.mxu0 0
      %1099 = vmatprep.subr.bf16.mxu0 0
      %1100 = vmatpush2.bf16.msra.mxu0 0
      %1101 = vmatprep.subr.bf16.mxu0 0
      %1102 = vmatpush2.bf16.msra.mxu0 0
      %1103 = vmatprep.subr.bf16.mxu0 0
      %1104 = vmatpush2.bf16.msra.mxu0 0
      %1105 = vmatprep.mubr.bf16.mxu0 0
      %1106 = vmatmul.mubr.bf16.gmra.mxu0 %v1065
      %v1107 = vpop.f32.mrf.mxu0
      %v1108 = vadd.f32 0.0, %v1107
      %v1109 = vpop.f32.mrf.mxu0
      %v1110 = vadd.f32 0.0, %v1109
      %v1111 = vpop.f32.mrf.mxu0
      %v1112 = vpop.f32.mrf.mxu0
      %1113 = vdwg.mxu0
      %v1114 = vadd.f32 %v1047, %v1108
      %v1115 = vadd.f32 %v1049, %v1110
      %1116 = vrot.lane.b32.xlu0 %v927, 1
      %v1117 = vpop.permute.xlu0 %1116
      %1118 = vrot.lane.b32.xlu0 %v928, 1
      %v1119 = vpop.permute.xlu0 %1118
      %v1120 = vsel %vm508, %v1117, %v1119
      %v1121 = vsel %vm508, %v1119, %v1117
      %v1122 = vsel %vm513, %v1121, 0.0
      %v1123 = vsel %vm514, %v1120, 0.0
      %v1124 = vld [vmem:[%s3 + $0xc] sm:$0xf]
      %v1125 = vpack.c.bf16 %v1122, %v1122
      %v1126 = vpack.c.bf16 %v1123, %v1123
      %v1128 = vsel %vm951, %v1124, 0
      %v1131 = vsel %vm955, %v1125, 0
      %v1134 = vsel %vm955, %v1126, 0
      %1136 = vmatprep.subr.bf16.mxu0 0
      %1137 = vmatpush1.bf16.msra.mxu0 0
      %1138 = vmatprep.subr.bf16.mxu0 0
      %1139 = vmatpush1.bf16.msra.mxu0 0
      %1140 = vmatprep.subr.bf16.mxu0 0
      %1141 = vmatpush1.bf16.msra.mxu0 0
      %1142 = vmatprep.subr.bf16.mxu0 0
      %1143 = vmatpush1.bf16.msra.mxu0 0
      %1144 = vmatprep.subr.bf16.mxu0 0
      %1145 = vmatpush1.bf16.msra.mxu0 0
      %1146 = vmatprep.subr.bf16.mxu0 0
      %1147 = vmatpush1.bf16.msra.mxu0 0
      %1148 = vmatprep.subr.bf16.mxu0 0
      %1149 = vmatpush1.bf16.msra.mxu0 0
      %1150 = vmatprep.subr.bf16.mxu0 %v1134
      %1151 = vmatpush1.bf16.msra.mxu0 %v1131
      %1152 = vmatprep.subr.bf16.mxu0 0
      %1153 = vmatpush2.bf16.msra.mxu0 0
      %1154 = vmatprep.subr.bf16.mxu0 0
      %1155 = vmatpush2.bf16.msra.mxu0 0
      %1156 = vmatprep.subr.bf16.mxu0 0
      %1157 = vmatpush2.bf16.msra.mxu0 0
      %1158 = vmatprep.subr.bf16.mxu0 0
      %1159 = vmatpush2.bf16.msra.mxu0 0
      %1160 = vmatprep.subr.bf16.mxu0 0
      %1161 = vmatpush2.bf16.msra.mxu0 0
      %1162 = vmatprep.subr.bf16.mxu0 0
      %1163 = vmatpush2.bf16.msra.mxu0 0
      %1164 = vmatprep.subr.bf16.mxu0 0
      %1165 = vmatpush2.bf16.msra.mxu0 0
      %1166 = vmatprep.subr.bf16.mxu0 0
      %1167 = vmatpush2.bf16.msra.mxu0 0
      %1168 = vmatprep.mubr.bf16.mxu0 0
      %1169 = vmatmul.mubr.bf16.gmra.mxu0 %v1128
      %v1170 = vpop.f32.mrf.mxu0
      %v1171 = vadd.f32 0.0, %v1170
      %v1172 = vpop.f32.mrf.mxu0
      %v1173 = vadd.f32 0.0, %v1172
      %v1174 = vpop.f32.mrf.mxu0
      %v1175 = vpop.f32.mrf.mxu0
      %1176 = vdwg.mxu0
      %v1177 = vadd.f32 %v1114, %v1171
      %v1178 = vadd.f32 %v1115, %v1173
      %v1179 = vld [vmem:[%s3 + $0x10] sm:$0xf]
      %v1180 = vpack.c.bf16 %v927, %v927
      %v1181 = vpack.c.bf16 %v928, %v928
      %v1183 = vsel %vm951, %v1179, 0
      %v1186 = vsel %vm955, %v1180, 0
      %v1189 = vsel %vm955, %v1181, 0
      %1191 = vmatprep.subr.bf16.mxu0 0
      %1192 = vmatpush1.bf16.msra.mxu0 0
      %1193 = vmatprep.subr.bf16.mxu0 0
      %1194 = vmatpush1.bf16.msra.mxu0 0
      %1195 = vmatprep.subr.bf16.mxu0 0
      %1196 = vmatpush1.bf16.msra.mxu0 0
      %1197 = vmatprep.subr.bf16.mxu0 0
      %1198 = vmatpush1.bf16.msra.mxu0 0
      %1199 = vmatprep.subr.bf16.mxu0 0
      %1200 = vmatpush1.bf16.msra.mxu0 0
      %1201 = vmatprep.subr.bf16.mxu0 0
      %1202 = vmatpush1.bf16.msra.mxu0 0
      %1203 = vmatprep.subr.bf16.mxu0 0
      %1204 = vmatpush1.bf16.msra.mxu0 0
      %1205 = vmatprep.subr.bf16.mxu0 %v1189
      %1206 = vmatpush1.bf16.msra.mxu0 %v1186
      %1207 = vmatprep.subr.bf16.mxu0 0
      %1208 = vmatpush2.bf16.msra.mxu0 0
      %1209 = vmatprep.subr.bf16.mxu0 0
      %1210 = vmatpush2.bf16.msra.mxu0 0
      %1211 = vmatprep.subr.bf16.mxu0 0
      %1212 = vmatpush2.bf16.msra.mxu0 0
      %1213 = vmatprep.subr.bf16.mxu0 0
      %1214 = vmatpush2.bf16.msra.mxu0 0
      %1215 = vmatprep.subr.bf16.mxu0 0
      %1216 = vmatpush2.bf16.msra.mxu0 0
      %1217 = vmatprep.subr.bf16.mxu0 0
      %1218 = vmatpush2.bf16.msra.mxu0 0
      %1219 = vmatprep.subr.bf16.mxu0 0
      %1220 = vmatpush2.bf16.msra.mxu0 0
      %1221 = vmatprep.subr.bf16.mxu0 0
      %1222 = vmatpush2.bf16.msra.mxu0 0
      %1223 = vmatprep.mubr.bf16.mxu0 0
      %1224 = vmatmul.mubr.bf16.gmra.mxu0 %v1183
      %v1225 = vpop.f32.mrf.mxu0
      %v1226 = vadd.f32 0.0, %v1225
      %v1227 = vpop.f32.mrf.mxu0
      %v1228 = vadd.f32 0.0, %v1227
      %v1229 = vpop.f32.mrf.mxu0
      %v1230 = vpop.f32.mrf.mxu0
      %1231 = vdwg.mxu0
      %v1232 = vadd.f32 %v1177, %v1226
      %v1233 = vadd.f32 %v1178, %v1228
      %1234 = vrot.lane.b32.xlu0 %v927, 127
      %v1235 = vpop.permute.xlu0 %1234
      %1236 = vrot.lane.b32.xlu0 %v928, 127
      %v1237 = vpop.permute.xlu0 %1236
      %v1238 = vsel %vm631, %v1235, %v1237
      %v1239 = vsel %vm631, %v1237, %v1235
      %v1240 = vsel %vm636, %v1238, 0.0
      %v1241 = vsel %vm637, %v1239, 0.0
      %v1242 = vld [vmem:[%s3 + $0x14] sm:$0xf]
      %v1243 = vpack.c.bf16 %v1240, %v1240
      %v1244 = vpack.c.bf16 %v1241, %v1241
      %v1246 = vsel %vm951, %v1242, 0
      %v1249 = vsel %vm955, %v1243, 0
      %v1252 = vsel %vm955, %v1244, 0
      %1254 = vmatprep.subr.bf16.mxu0 0
      %1255 = vmatpush1.bf16.msra.mxu0 0
      %1256 = vmatprep.subr.bf16.mxu0 0
      %1257 = vmatpush1.bf16.msra.mxu0 0
      %1258 = vmatprep.subr.bf16.mxu0 0
      %1259 = vmatpush1.bf16.msra.mxu0 0
      %1260 = vmatprep.subr.bf16.mxu0 0
      %1261 = vmatpush1.bf16.msra.mxu0 0
      %1262 = vmatprep.subr.bf16.mxu0 0
      %1263 = vmatpush1.bf16.msra.mxu0 0
      %1264 = vmatprep.subr.bf16.mxu0 0
      %1265 = vmatpush1.bf16.msra.mxu0 0
      %1266 = vmatprep.subr.bf16.mxu0 0
      %1267 = vmatpush1.bf16.msra.mxu0 0
      %1268 = vmatprep.subr.bf16.mxu0 %v1252
      %1269 = vmatpush1.bf16.msra.mxu0 %v1249
      %1270 = vmatprep.subr.bf16.mxu0 0
      %1271 = vmatpush2.bf16.msra.mxu0 0
      %1272 = vmatprep.subr.bf16.mxu0 0
      %1273 = vmatpush2.bf16.msra.mxu0 0
      %1274 = vmatprep.subr.bf16.mxu0 0
      %1275 = vmatpush2.bf16.msra.mxu0 0
      %1276 = vmatprep.subr.bf16.mxu0 0
      %1277 = vmatpush2.bf16.msra.mxu0 0
      %1278 = vmatprep.subr.bf16.mxu0 0
      %1279 = vmatpush2.bf16.msra.mxu0 0
      %1280 = vmatprep.subr.bf16.mxu0 0
      %1281 = vmatpush2.bf16.msra.mxu0 0
      %1282 = vmatprep.subr.bf16.mxu0 0
      %1283 = vmatpush2.bf16.msra.mxu0 0
      %1284 = vmatprep.subr.bf16.mxu0 0
      %1285 = vmatpush2.bf16.msra.mxu0 0
      %1286 = vmatprep.mubr.bf16.mxu0 0
      %1287 = vmatmul.mubr.bf16.gmra.mxu0 %v1246
      %v1288 = vpop.f32.mrf.mxu0
      %v1289 = vadd.f32 0.0, %v1288
      %v1290 = vpop.f32.mrf.mxu0
      %v1291 = vadd.f32 0.0, %v1290
      %v1292 = vpop.f32.mrf.mxu0
      %v1293 = vpop.f32.mrf.mxu0
      %1294 = vdwg.mxu0
      %v1295 = vadd.f32 %v1232, %v1289
      %v1296 = vadd.f32 %v1233, %v1291
      %1297 = vrot.lane.b32.xlu0 %v927, 113
      %v1298 = vpop.permute.xlu0 %1297
      %1299 = vrot.lane.b32.xlu0 %v928, 113
      %v1300 = vpop.permute.xlu0 %1299
      %v1301 = vsel %vm699, %v1298, %v1300
      %v1302 = vsel %vm699, %v1300, %v1298
      %v1303 = vsel %vm708, %v1301, 0.0
      %v1304 = vsel %vm709, %v1302, 0.0
      %v1305 = vld [vmem:[%s3 + $0x18] sm:$0xf]
      %v1306 = vpack.c.bf16 %v1303, %v1303
      %v1307 = vpack.c.bf16 %v1304, %v1304
      %v1309 = vsel %vm951, %v1305, 0
      %v1312 = vsel %vm955, %v1306, 0
      %v1315 = vsel %vm955, %v1307, 0
      %1317 = vmatprep.subr.bf16.mxu0 0
      %1318 = vmatpush1.bf16.msra.mxu0 0
      %1319 = vmatprep.subr.bf16.mxu0 0
      %1320 = vmatpush1.bf16.msra.mxu0 0
      %1321 = vmatprep.subr.bf16.mxu0 0
      %1322 = vmatpush1.bf16.msra.mxu0 0
      %1323 = vmatprep.subr.bf16.mxu0 0
      %1324 = vmatpush1.bf16.msra.mxu0 0
      %1325 = vmatprep.subr.bf16.mxu0 0
      %1326 = vmatpush1.bf16.msra.mxu0 0
      %1327 = vmatprep.subr.bf16.mxu0 0
      %1328 = vmatpush1.bf16.msra.mxu0 0
      %1329 = vmatprep.subr.bf16.mxu0 0
      %1330 = vmatpush1.bf16.msra.mxu0 0
      %1331 = vmatprep.subr.bf16.mxu0 %v1315
      %1332 = vmatpush1.bf16.msra.mxu0 %v1312
      %1333 = vmatprep.subr.bf16.mxu0 0
      %1334 = vmatpush2.bf16.msra.mxu0 0
      %1335 = vmatprep.subr.bf16.mxu0 0
      %1336 = vmatpush2.bf16.msra.mxu0 0
      %1337 = vmatprep.subr.bf16.mxu0 0
      %1338 = vmatpush2.bf16.msra.mxu0 0
      %1339 = vmatprep.subr.bf16.mxu0 0
      %1340 = vmatpush2.bf16.msra.mxu0 0
      %1341 = vmatprep.subr.bf16.mxu0 0
      %1342 = vmatpush2.bf16.msra.mxu0 0
      %1343 = vmatprep.subr.bf16.mxu0 0
      %1344 = vmatpush2.bf16.msra.mxu0 0
      %1345 = vmatprep.subr.bf16.mxu0 0
      %1346 = vmatpush2.bf16.msra.mxu0 0
      %1347 = vmatprep.subr.bf16.mxu0 0
      %1348 = vmatpush2.bf16.msra.mxu0 0
      %1349 = vmatprep.mubr.bf16.mxu0 0
      %1350 = vmatmul.mubr.bf16.gmra.mxu0 %v1309
      %v1351 = vpop.f32.mrf.mxu0
      %v1352 = vadd.f32 0.0, %v1351
      %v1353 = vpop.f32.mrf.mxu0
      %v1354 = vadd.f32 0.0, %v1353
      %v1355 = vpop.f32.mrf.mxu0
      %v1356 = vpop.f32.mrf.mxu0
      %1357 = vdwg.mxu0
      %v1358 = vadd.f32 %v1295, %v1352
      %v1359 = vadd.f32 %v1296, %v1354
      %1360 = vrot.lane.b32.xlu0 %v927, 112
      %v1361 = vpop.permute.xlu0 %1360
      %1362 = vrot.lane.b32.xlu0 %v928, 112
      %v1363 = vpop.permute.xlu0 %1362
      %v1364 = vsel %vm771, %v1361, %v1363
      %v1365 = vsel %vm771, %v1363, %v1361
      %v1366 = vsel %vm776, %v1364, 0.0
      %v1367 = vsel %vm777, %v1365, 0.0
      %v1368 = vld [vmem:[%s3 + $0x1c] sm:$0xf]
      %v1369 = vpack.c.bf16 %v1366, %v1366
      %v1370 = vpack.c.bf16 %v1367, %v1367
      %v1372 = vsel %vm951, %v1368, 0
      %v1375 = vsel %vm955, %v1369, 0
      %v1378 = vsel %vm955, %v1370, 0
      %1380 = vmatprep.subr.bf16.mxu0 0
      %1381 = vmatpush1.bf16.msra.mxu0 0
      %1382 = vmatprep.subr.bf16.mxu0 0
      %1383 = vmatpush1.bf16.msra.mxu0 0
      %1384 = vmatprep.subr.bf16.mxu0 0
      %1385 = vmatpush1.bf16.msra.mxu0 0
      %1386 = vmatprep.subr.bf16.mxu0 0
      %1387 = vmatpush1.bf16.msra.mxu0 0
      %1388 = vmatprep.subr.bf16.mxu0 0
      %1389 = vmatpush1.bf16.msra.mxu0 0
      %1390 = vmatprep.subr.bf16.mxu0 0
      %1391 = vmatpush1.bf16.msra.mxu0 0
      %1392 = vmatprep.subr.bf16.mxu0 0
      %1393 = vmatpush1.bf16.msra.mxu0 0
      %1394 = vmatprep.subr.bf16.mxu0 %v1378
      %1395 = vmatpush1.bf16.msra.mxu0 %v1375
      %1396 = vmatprep.subr.bf16.mxu0 0
      %1397 = vmatpush2.bf16.msra.mxu0 0
      %1398 = vmatprep.subr.bf16.mxu0 0
      %1399 = vmatpush2.bf16.msra.mxu0 0
      %1400 = vmatprep.subr.bf16.mxu0 0
      %1401 = vmatpush2.bf16.msra.mxu0 0
      %1402 = vmatprep.subr.bf16.mxu0 0
      %1403 = vmatpush2.bf16.msra.mxu0 0
      %1404 = vmatprep.subr.bf16.mxu0 0
      %1405 = vmatpush2.bf16.msra.mxu0 0
      %1406 = vmatprep.subr.bf16.mxu0 0
      %1407 = vmatpush2.bf16.msra.mxu0 0
      %1408 = vmatprep.subr.bf16.mxu0 0
      %1409 = vmatpush2.bf16.msra.mxu0 0
      %1410 = vmatprep.subr.bf16.mxu0 0
      %1411 = vmatpush2.bf16.msra.mxu0 0
      %1412 = vmatprep.mubr.bf16.mxu0 0
      %1413 = vmatmul.mubr.bf16.gmra.mxu0 %v1372
      %v1414 = vpop.f32.mrf.mxu0
      %v1415 = vadd.f32 0.0, %v1414
      %v1416 = vpop.f32.mrf.mxu0
      %v1417 = vadd.f32 0.0, %v1416
      %v1418 = vpop.f32.mrf.mxu0
      %v1419 = vpop.f32.mrf.mxu0
      %1420 = vdwg.mxu0
      %v1421 = vadd.f32 %v1358, %v1415
      %v1422 = vadd.f32 %v1359, %v1417
      %1423 = vrot.lane.b32.xlu0 %v927, 111
      %v1424 = vpop.permute.xlu0 %1423
      %1425 = vrot.lane.b32.xlu0 %v928, 111
      %v1426 = vpop.permute.xlu0 %1425
      %v1427 = vsel %vm839, %v1424, %v1426
      %v1428 = vsel %vm839, %v1426, %v1424
      %v1429 = vsel %vm846, %v1427, 0.0
      %v1430 = vsel %vm847, %v1428, 0.0
      %v1431 = vld [vmem:[%s3 + $0x20] sm:$0xf]
      %v1432 = vpack.c.bf16 %v1429, %v1429
      %v1433 = vpack.c.bf16 %v1430, %v1430
      %v1435 = vsel %vm951, %v1431, 0
      %v1438 = vsel %vm955, %v1432, 0
      %v1441 = vsel %vm955, %v1433, 0
      %1443 = vmatprep.subr.bf16.mxu0 0
      %1444 = vmatpush1.bf16.msra.mxu0 0
      %1445 = vmatprep.subr.bf16.mxu0 0
      %1446 = vmatpush1.bf16.msra.mxu0 0
      %1447 = vmatprep.subr.bf16.mxu0 0
      %1448 = vmatpush1.bf16.msra.mxu0 0
      %1449 = vmatprep.subr.bf16.mxu0 0
      %1450 = vmatpush1.bf16.msra.mxu0 0
      %1451 = vmatprep.subr.bf16.mxu0 0
      %1452 = vmatpush1.bf16.msra.mxu0 0
      %1453 = vmatprep.subr.bf16.mxu0 0
      %1454 = vmatpush1.bf16.msra.mxu0 0
      %1455 = vmatprep.subr.bf16.mxu0 0
      %1456 = vmatpush1.bf16.msra.mxu0 0
      %1457 = vmatprep.subr.bf16.mxu0 %v1441
      %1458 = vmatpush1.bf16.msra.mxu0 %v1438
      %1459 = vmatprep.subr.bf16.mxu0 0
      %1460 = vmatpush2.bf16.msra.mxu0 0
      %1461 = vmatprep.subr.bf16.mxu0 0
      %1462 = vmatpush2.bf16.msra.mxu0 0
      %1463 = vmatprep.subr.bf16.mxu0 0
      %1464 = vmatpush2.bf16.msra.mxu0 0
      %1465 = vmatprep.subr.bf16.mxu0 0
      %1466 = vmatpush2.bf16.msra.mxu0 0
      %1467 = vmatprep.subr.bf16.mxu0 0
      %1468 = vmatpush2.bf16.msra.mxu0 0
      %1469 = vmatprep.subr.bf16.mxu0 0
      %1470 = vmatpush2.bf16.msra.mxu0 0
      %1471 = vmatprep.subr.bf16.mxu0 0
      %1472 = vmatpush2.bf16.msra.mxu0 0
      %1473 = vmatprep.subr.bf16.mxu0 0
      %1474 = vmatpush2.bf16.msra.mxu0 0
      %1475 = vmatprep.mubr.bf16.mxu0 0
      %1476 = vmatmul.mubr.bf16.gmra.mxu0 %v1435
      %v1477 = vpop.f32.mrf.mxu0
      %v1478 = vadd.f32 0.0, %v1477
      %v1479 = vpop.f32.mrf.mxu0
      %v1480 = vadd.f32 0.0, %v1479
      %v1481 = vpop.f32.mrf.mxu0
      %v1482 = vpop.f32.mrf.mxu0
      %1483 = vdwg.mxu0
      %v1484 = vadd.f32 %v1421, %v1478
      %v1485 = vadd.f32 %v1422, %v1480
      %v1486 = vld [vmem:[%s4] sm:$0xff]
      %1488 = vset.pattern.permute.xlu0 0
      %1489 = vperm.xlu0 %1488, %v1486
      %v1490 = vpop.permute.xlu0 %1489
      %v1492 = vadd.f32 %v1484, %v1490
      %v1493 = vadd.f32 %v1485, %v1490
      %v1494 = vld [vmem:[%s5] sm:$0xf]
      %v1496 = vsel %vm327, %v1494, 0
      %1498 = vmatprep.subr.bf16.mxu0 0
      %1499 = vmatpush1.bf16.msra.mxu0 0
      %1500 = vmatprep.subr.bf16.mxu0 0
      %1501 = vmatpush1.bf16.msra.mxu0 0
      %1502 = vmatprep.subr.bf16.mxu0 0
      %1503 = vmatpush1.bf16.msra.mxu0 0
      %1504 = vmatprep.subr.bf16.mxu0 0
      %1505 = vmatpush1.bf16.msra.mxu0 0
      %1506 = vmatprep.subr.bf16.mxu0 0
      %1507 = vmatpush1.bf16.msra.mxu0 0
      %1508 = vmatprep.subr.bf16.mxu0 0
      %1509 = vmatpush1.bf16.msra.mxu0 0
      %1510 = vmatprep.subr.bf16.mxu0 0
      %1511 = vmatpush1.bf16.msra.mxu0 0
      %1512 = vmatprep.subr.bf16.mxu0 %v582
      %1513 = vmatpush1.bf16.msra.mxu0 %v579
      %1514 = vmatprep.subr.bf16.mxu0 0
      %1515 = vmatpush2.bf16.msra.mxu0 0
      %1516 = vmatprep.subr.bf16.mxu0 0
      %1517 = vmatpush2.bf16.msra.mxu0 0
      %1518 = vmatprep.subr.bf16.mxu0 0
      %1519 = vmatpush2.bf16.msra.mxu0 0
      %1520 = vmatprep.subr.bf16.mxu0 0
      %1521 = vmatpush2.bf16.msra.mxu0 0
      %1522 = vmatprep.subr.bf16.mxu0 0
      %1523 = vmatpush2.bf16.msra.mxu0 0
      %1524 = vmatprep.subr.bf16.mxu0 0
      %1525 = vmatpush2.bf16.msra.mxu0 0
      %1526 = vmatprep.subr.bf16.mxu0 0
      %1527 = vmatpush2.bf16.msra.mxu0 0
      %1528 = vmatprep.subr.bf16.mxu0 0
      %1529 = vmatpush2.bf16.msra.mxu0 0
      %1530 = vmatprep.mubr.bf16.mxu0 0
      %1531 = vmatmul.mubr.bf16.gmra.mxu0 %v1496
      %v1532 = vpop.f32.mrf.mxu0
      %v1533 = vadd.f32 0.0, %v1532
      %v1534 = vpop.f32.mrf.mxu0
      %v1535 = vadd.f32 0.0, %v1534
      %v1536 = vpop.f32.mrf.mxu0
      %v1537 = vpop.f32.mrf.mxu0
      %1538 = vdwg.mxu0
      %v1539 = vadd.f32 %v1492, %v1533
      %v1540 = vadd.f32 %v1493, %v1535
      %v1541 = vld [vmem:[%s6] sm:$0xff]
      %1543 = vset.pattern.permute.xlu0 0
      %1544 = vperm.xlu0 %1543, %v1541
      %v1545 = vpop.permute.xlu0 %1544
      %v1547 = vadd.f32 %v1539, %v1545
      %v1548 = vadd.f32 %v1540, %v1545
      %vm1549 = vcmp.gt.f32.partialorder %v1547, 0.0
      %vm1550 = vcmp.gt.f32.partialorder %v1548, 0.0
      %v1551 = vmin.f32 %v1547, 0.0
      %v1552 = vmin.f32 %v1548, 0.0
      %v1553 = vmul.f32 %v1551, 1.442695
      %v1554 = vpow.pop %v1553
      %v1555 = vmul.f32 %v1552, 1.442695
      %v1556 = vpow.pop %v1555
      %v1557 = vsub.f32 %v1554, 1.0
      %v1558 = vsub.f32 %v1556, 1.0
      %v1559 = vmul.f32 %v1557, 1.6732632
      %v1560 = vmul.f32 %v1558, 1.6732632
      %v1561 = vsel %vm1549, %v1547, %v1559
      %v1562 = vsel %vm1550, %v1548, %v1560
      %v1563 = vmul.f32 %v1561, 1.050701
      %v1564 = vmul.f32 %v1562, 1.050701
      %v1565 = vlaneseq
      %v1566 = vshrl.u32 %v1565, 7
      %v1567 = vadd.s32 %v1566, 8
      %v1568 = vadd.s32 %v1566, 16
      %v1569 = vadd.s32 %v1566, 24
      %v1570 = vadd.s32 %v1566, 32
      %v1571 = vadd.s32 %v1566, 40
      %v1572 = vadd.s32 %v1566, 48
      %v1573 = vadd.s32 %v1566, 56
      %v1574 = vadd.s32 %v1566, 64
      %v1575 = vadd.s32 %v1566, 72
      %v1576 = vadd.s32 %v1566, 80
      %v1577 = vadd.s32 %v1566, 88
      %v1578 = vadd.s32 %v1566, 96
      %v1579 = vadd.s32 %v1566, 104
      %v1580 = vadd.s32 %v1566, 112
      %v1581 = vadd.s32 %v1566, 120
      %v1582 = vadd.s32 %v1566, 128
      %v1583 = vadd.s32 %v1566, 136
      %v1584 = vadd.s32 %v1566, 144
      %v1585 = vadd.s32 %v1566, 152
      %v1586 = vadd.s32 %v1566, 160
      %v1587 = vadd.s32 %v1566, 168
      %v1588 = vadd.s32 %v1566, 176
      %v1589 = vadd.s32 %v1566, 184
      %v1590 = vadd.s32 %v1566, 192
      %v1591 = vadd.s32 %v1566, 200
      %v1592 = vadd.s32 %v1566, 208
      %v1593 = vadd.s32 %v1566, 216
      %v1594 = vadd.s32 %v1566, 224
      %v1595 = vadd.s32 %v1566, 232
      %v1596 = vadd.s32 %v1566, 240
      %v1597 = vadd.s32 %v1566, 248
      %v1598 = vshra.s32 %v1566, 4
      %v1599 = vshra.s32 %v1567, 4
      %v1600 = vshra.s32 %v1568, 4
      %v1601 = vshra.s32 %v1569, 4
      %v1602 = vshra.s32 %v1570, 4
      %v1603 = vshra.s32 %v1571, 4
      %v1604 = vshra.s32 %v1572, 4
      %v1605 = vshra.s32 %v1573, 4
      %v1606 = vshra.s32 %v1574, 4
      %v1607 = vshra.s32 %v1575, 4
      %v1608 = vshra.s32 %v1576, 4
      %v1609 = vshra.s32 %v1577, 4
      %v1610 = vshra.s32 %v1578, 4
      %v1611 = vshra.s32 %v1579, 4
      %v1612 = vshra.s32 %v1580, 4
      %v1613 = vshra.s32 %v1581, 4
      %v1614 = vshra.s32 %v1582, 4
      %v1615 = vshra.s32 %v1583, 4
      %v1616 = vshra.s32 %v1584, 4
      %v1617 = vshra.s32 %v1585, 4
      %v1618 = vshra.s32 %v1586, 4
      %v1619 = vshra.s32 %v1587, 4
      %v1620 = vshra.s32 %v1588, 4
      %v1621 = vshra.s32 %v1589, 4
      %v1622 = vshra.s32 %v1590, 4
      %v1623 = vshra.s32 %v1591, 4
      %v1624 = vshra.s32 %v1592, 4
      %v1625 = vshra.s32 %v1593, 4
      %v1626 = vshra.s32 %v1594, 4
      %v1627 = vshra.s32 %v1595, 4
      %v1628 = vshra.s32 %v1596, 4
      %v1629 = vshra.s32 %v1597, 4
      %v1630 = vshra.s32 %v1598, 1
      %v1631 = vshra.s32 %v1599, 1
      %v1632 = vshra.s32 %v1600, 1
      %v1633 = vshra.s32 %v1601, 1
      %v1634 = vshra.s32 %v1602, 1
      %v1635 = vshra.s32 %v1603, 1
      %v1636 = vshra.s32 %v1604, 1
      %v1637 = vshra.s32 %v1605, 1
      %v1638 = vshra.s32 %v1606, 1
      %v1639 = vshra.s32 %v1607, 1
      %v1640 = vshra.s32 %v1608, 1
      %v1641 = vshra.s32 %v1609, 1
      %v1642 = vshra.s32 %v1610, 1
      %v1643 = vshra.s32 %v1611, 1
      %v1644 = vshra.s32 %v1612, 1
      %v1645 = vshra.s32 %v1613, 1
      %v1646 = vshra.s32 %v1614, 1
      %v1647 = vshra.s32 %v1615, 1
      %v1648 = vshra.s32 %v1616, 1
      %v1649 = vshra.s32 %v1617, 1
      %v1650 = vshra.s32 %v1618, 1
      %v1651 = vshra.s32 %v1619, 1
      %v1652 = vshra.s32 %v1620, 1
      %v1653 = vshra.s32 %v1621, 1
      %v1654 = vshra.s32 %v1622, 1
      %v1655 = vshra.s32 %v1623, 1
      %v1656 = vshra.s32 %v1624, 1
      %v1657 = vshra.s32 %v1625, 1
      %v1658 = vshra.s32 %v1626, 1
      %v1659 = vshra.s32 %v1627, 1
      %v1660 = vshra.s32 %v1628, 1
      %v1661 = vshra.s32 %v1629, 1
      %v1662 = vshra.s32 %v280, 3
      %vm1663 = vcmp.eq.s32.totalorder %v1630, %v1662
      %vm1664 = vcmp.eq.s32.totalorder %v1631, %v1662
      %vm1665 = vcmp.eq.s32.totalorder %v1632, %v1662
      %vm1666 = vcmp.eq.s32.totalorder %v1633, %v1662
      %vm1667 = vcmp.eq.s32.totalorder %v1634, %v1662
      %vm1668 = vcmp.eq.s32.totalorder %v1635, %v1662
      %vm1669 = vcmp.eq.s32.totalorder %v1636, %v1662
      %vm1670 = vcmp.eq.s32.totalorder %v1637, %v1662
      %vm1671 = vcmp.eq.s32.totalorder %v1638, %v1662
      %vm1672 = vcmp.eq.s32.totalorder %v1639, %v1662
      %vm1673 = vcmp.eq.s32.totalorder %v1640, %v1662
      %vm1674 = vcmp.eq.s32.totalorder %v1641, %v1662
      %vm1675 = vcmp.eq.s32.totalorder %v1642, %v1662
      %vm1676 = vcmp.eq.s32.totalorder %v1643, %v1662
      %vm1677 = vcmp.eq.s32.totalorder %v1644, %v1662
      %vm1678 = vcmp.eq.s32.totalorder %v1645, %v1662
      %vm1679 = vcmp.eq.s32.totalorder %v1646, %v1662
      %vm1680 = vcmp.eq.s32.totalorder %v1647, %v1662
      %vm1681 = vcmp.eq.s32.totalorder %v1648, %v1662
      %vm1682 = vcmp.eq.s32.totalorder %v1649, %v1662
      %vm1683 = vcmp.eq.s32.totalorder %v1650, %v1662
      %vm1684 = vcmp.eq.s32.totalorder %v1651, %v1662
      %vm1685 = vcmp.eq.s32.totalorder %v1652, %v1662
      %vm1686 = vcmp.eq.s32.totalorder %v1653, %v1662
      %vm1687 = vcmp.eq.s32.totalorder %v1654, %v1662
      %vm1688 = vcmp.eq.s32.totalorder %v1655, %v1662
      %vm1689 = vcmp.eq.s32.totalorder %v1656, %v1662
      %vm1690 = vcmp.eq.s32.totalorder %v1657, %v1662
      %vm1691 = vcmp.eq.s32.totalorder %v1658, %v1662
      %vm1692 = vcmp.eq.s32.totalorder %v1659, %v1662
      %vm1693 = vcmp.eq.s32.totalorder %v1660, %v1662
      %vm1694 = vcmp.eq.s32.totalorder %v1661, %v1662
      %v1695 = vand.u32 %v1566, 15
      %v1696 = vand.u32 %v1567, 15
      %v1697 = vand.u32 %v1568, 15
      %v1698 = vand.u32 %v1569, 15
      %v1699 = vand.u32 %v1570, 15
      %v1700 = vand.u32 %v1571, 15
      %v1701 = vand.u32 %v1572, 15
      %v1702 = vand.u32 %v1573, 15
      %v1703 = vand.u32 %v1574, 15
      %v1704 = vand.u32 %v1575, 15
      %v1705 = vand.u32 %v1576, 15
      %v1706 = vand.u32 %v1577, 15
      %v1707 = vand.u32 %v1578, 15
      %v1708 = vand.u32 %v1579, 15
      %v1709 = vand.u32 %v1580, 15
      %v1710 = vand.u32 %v1581, 15
      %v1711 = vand.u32 %v1582, 15
      %v1712 = vand.u32 %v1583, 15
      %v1713 = vand.u32 %v1584, 15
      %v1714 = vand.u32 %v1585, 15
      %v1715 = vand.u32 %v1586, 15
      %v1716 = vand.u32 %v1587, 15
      %v1717 = vand.u32 %v1588, 15
      %v1718 = vand.u32 %v1589, 15
      %v1719 = vand.u32 %v1590, 15
      %v1720 = vand.u32 %v1591, 15
      %v1721 = vand.u32 %v1592, 15
      %v1722 = vand.u32 %v1593, 15
      %v1723 = vand.u32 %v1594, 15
      %v1724 = vand.u32 %v1595, 15
      %v1725 = vand.u32 %v1596, 15
      %v1726 = vand.u32 %v1597, 15
      %v1727 = vshra.s32 %v1695, 1
      %v1728 = vshra.s32 %v1696, 1
      %v1729 = vshra.s32 %v1697, 1
      %v1730 = vshra.s32 %v1698, 1
      %v1731 = vshra.s32 %v1699, 1
      %v1732 = vshra.s32 %v1700, 1
      %v1733 = vshra.s32 %v1701, 1
      %v1734 = vshra.s32 %v1702, 1
      %v1735 = vshra.s32 %v1703, 1
      %v1736 = vshra.s32 %v1704, 1
      %v1737 = vshra.s32 %v1705, 1
      %v1738 = vshra.s32 %v1706, 1
      %v1739 = vshra.s32 %v1707, 1
      %v1740 = vshra.s32 %v1708, 1
      %v1741 = vshra.s32 %v1709, 1
      %v1742 = vshra.s32 %v1710, 1
      %v1743 = vshra.s32 %v1711, 1
      %v1744 = vshra.s32 %v1712, 1
      %v1745 = vshra.s32 %v1713, 1
      %v1746 = vshra.s32 %v1714, 1
      %v1747 = vshra.s32 %v1715, 1
      %v1748 = vshra.s32 %v1716, 1
      %v1749 = vshra.s32 %v1717, 1
      %v1750 = vshra.s32 %v1718, 1
      %v1751 = vshra.s32 %v1719, 1
      %v1752 = vshra.s32 %v1720, 1
      %v1753 = vshra.s32 %v1721, 1
      %v1754 = vshra.s32 %v1722, 1
      %v1755 = vshra.s32 %v1723, 1
      %v1756 = vshra.s32 %v1724, 1
      %v1757 = vshra.s32 %v1725, 1
      %v1758 = vshra.s32 %v1726, 1
      %v1759 = vand.u32 %v280, 7
      %vm1760 = vcmp.eq.s32.totalorder %v1727, %v1759
      %vm1761 = vcmp.eq.s32.totalorder %v1728, %v1759
      %vm1762 = vcmp.eq.s32.totalorder %v1729, %v1759
      %vm1763 = vcmp.eq.s32.totalorder %v1730, %v1759
      %vm1764 = vcmp.eq.s32.totalorder %v1731, %v1759
      %vm1765 = vcmp.eq.s32.totalorder %v1732, %v1759
      %vm1766 = vcmp.eq.s32.totalorder %v1733, %v1759
      %vm1767 = vcmp.eq.s32.totalorder %v1734, %v1759
      %vm1768 = vcmp.eq.s32.totalorder %v1735, %v1759
      %vm1769 = vcmp.eq.s32.totalorder %v1736, %v1759
      %vm1770 = vcmp.eq.s32.totalorder %v1737, %v1759
      %vm1771 = vcmp.eq.s32.totalorder %v1738, %v1759
      %vm1772 = vcmp.eq.s32.totalorder %v1739, %v1759
      %vm1773 = vcmp.eq.s32.totalorder %v1740, %v1759
      %vm1774 = vcmp.eq.s32.totalorder %v1741, %v1759
      %vm1775 = vcmp.eq.s32.totalorder %v1742, %v1759
      %vm1776 = vcmp.eq.s32.totalorder %v1743, %v1759
      %vm1777 = vcmp.eq.s32.totalorder %v1744, %v1759
      %vm1778 = vcmp.eq.s32.totalorder %v1745, %v1759
      %vm1779 = vcmp.eq.s32.totalorder %v1746, %v1759
      %vm1780 = vcmp.eq.s32.totalorder %v1747, %v1759
      %vm1781 = vcmp.eq.s32.totalorder %v1748, %v1759
      %vm1782 = vcmp.eq.s32.totalorder %v1749, %v1759
      %vm1783 = vcmp.eq.s32.totalorder %v1750, %v1759
      %vm1784 = vcmp.eq.s32.totalorder %v1751, %v1759
      %vm1785 = vcmp.eq.s32.totalorder %v1752, %v1759
      %vm1786 = vcmp.eq.s32.totalorder %v1753, %v1759
      %vm1787 = vcmp.eq.s32.totalorder %v1754, %v1759
      %vm1788 = vcmp.eq.s32.totalorder %v1755, %v1759
      %vm1789 = vcmp.eq.s32.totalorder %v1756, %v1759
      %vm1790 = vcmp.eq.s32.totalorder %v1757, %v1759
      %vm1791 = vcmp.eq.s32.totalorder %v1758, %v1759
      %vm1792 = vmand %vm1663, %vm1760
      %vm1793 = vmand %vm1664, %vm1761
      %vm1794 = vmand %vm1665, %vm1762
      %vm1795 = vmand %vm1666, %vm1763
      %vm1796 = vmand %vm1667, %vm1764
      %vm1797 = vmand %vm1668, %vm1765
      %vm1798 = vmand %vm1669, %vm1766
      %vm1799 = vmand %vm1670, %vm1767
      %vm1800 = vmand %vm1671, %vm1768
      %vm1801 = vmand %vm1672, %vm1769
      %vm1802 = vmand %vm1673, %vm1770
      %vm1803 = vmand %vm1674, %vm1771
      %vm1804 = vmand %vm1675, %vm1772
      %vm1805 = vmand %vm1676, %vm1773
      %vm1806 = vmand %vm1677, %vm1774
      %vm1807 = vmand %vm1678, %vm1775
      %vm1808 = vmand %vm1679, %vm1776
      %vm1809 = vmand %vm1680, %vm1777
      %vm1810 = vmand %vm1681, %vm1778
      %vm1811 = vmand %vm1682, %vm1779
      %vm1812 = vmand %vm1683, %vm1780
      %vm1813 = vmand %vm1684, %vm1781
      %vm1814 = vmand %vm1685, %vm1782
      %vm1815 = vmand %vm1686, %vm1783
      %vm1816 = vmand %vm1687, %vm1784
      %vm1817 = vmand %vm1688, %vm1785
      %vm1818 = vmand %vm1689, %vm1786
      %vm1819 = vmand %vm1690, %vm1787
      %vm1820 = vmand %vm1691, %vm1788
      %vm1821 = vmand %vm1692, %vm1789
      %vm1822 = vmand %vm1693, %vm1790
      %vm1823 = vmand %vm1694, %vm1791
      %v1824 = vsel %vm1792, 0.25, 0.0
      %v1825 = vsel %vm1793, 0.25, 0.0
      %v1826 = vsel %vm1794, 0.25, 0.0
      %v1827 = vsel %vm1795, 0.25, 0.0
      %v1828 = vsel %vm1796, 0.25, 0.0
      %v1829 = vsel %vm1797, 0.25, 0.0
      %v1830 = vsel %vm1798, 0.25, 0.0
      %v1831 = vsel %vm1799, 0.25, 0.0
      %v1832 = vsel %vm1800, 0.25, 0.0
      %v1833 = vsel %vm1801, 0.25, 0.0
      %v1834 = vsel %vm1802, 0.25, 0.0
      %v1835 = vsel %vm1803, 0.25, 0.0
      %v1836 = vsel %vm1804, 0.25, 0.0
      %v1837 = vsel %vm1805, 0.25, 0.0
      %v1838 = vsel %vm1806, 0.25, 0.0
      %v1839 = vsel %vm1807, 0.25, 0.0
      %v1840 = vsel %vm1808, 0.25, 0.0
      %v1841 = vsel %vm1809, 0.25, 0.0
      %v1842 = vsel %vm1810, 0.25, 0.0
      %v1843 = vsel %vm1811, 0.25, 0.0
      %v1844 = vsel %vm1812, 0.25, 0.0
      %v1845 = vsel %vm1813, 0.25, 0.0
      %v1846 = vsel %vm1814, 0.25, 0.0
      %v1847 = vsel %vm1815, 0.25, 0.0
      %v1848 = vsel %vm1816, 0.25, 0.0
      %v1849 = vsel %vm1817, 0.25, 0.0
      %v1850 = vsel %vm1818, 0.25, 0.0
      %v1851 = vsel %vm1819, 0.25, 0.0
      %v1852 = vsel %vm1820, 0.25, 0.0
      %v1853 = vsel %vm1821, 0.25, 0.0
      %v1854 = vsel %vm1822, 0.25, 0.0
      %v1855 = vsel %vm1823, 0.25, 0.0
      %1856 = vmatprep.subr.mxu0 0.0
      %1857 = vmatpush1.msra.mxu0 %v1839
      %1858 = vmatprep.subr.mxu0 0.0
      %1859 = vmatpush1.msra.mxu0 %v1838
      %1860 = vmatprep.subr.mxu0 0.0
      %1861 = vmatpush1.msra.mxu0 %v1837
      %1862 = vmatprep.subr.mxu0 0.0
      %1863 = vmatpush1.msra.mxu0 %v1836
      %1864 = vmatprep.subr.mxu0 0.0
      %1865 = vmatpush1.msra.mxu0 %v1835
      %1866 = vmatprep.subr.mxu0 0.0
      %1867 = vmatpush1.msra.mxu0 %v1834
      %1868 = vmatprep.subr.mxu0 0.0
      %1869 = vmatpush1.msra.mxu0 %v1833
      %1870 = vmatprep.subr.mxu0 0.0
      %1871 = vmatpush1.msra.mxu0 %v1832
      %1872 = vmatprep.subr.mxu0 0.0
      %1873 = vmatpush1.msra.mxu0 %v1831
      %1874 = vmatprep.subr.mxu0 0.0
      %1875 = vmatpush1.msra.mxu0 %v1830
      %1876 = vmatprep.subr.mxu0 0.0
      %1877 = vmatpush1.msra.mxu0 %v1829
      %1878 = vmatprep.subr.mxu0 0.0
      %1879 = vmatpush1.msra.mxu0 %v1828
      %1880 = vmatprep.subr.mxu0 0.0
      %1881 = vmatpush1.msra.mxu0 %v1827
      %1882 = vmatprep.subr.mxu0 0.0
      %1883 = vmatpush1.msra.mxu0 %v1826
      %1884 = vmatprep.subr.mxu0 0.0
      %1885 = vmatpush1.msra.mxu0 %v1825
      %1886 = vmatprep.subr.mxu0 0.0
      %1887 = vmatpush1.msra.mxu0 %v1824
      %1888 = vmatprep.subr.mxu0 0.0
      %1889 = vmatpush2.msra.mxu0 %v1855
      %1890 = vmatprep.subr.mxu0 0.0
      %1891 = vmatpush2.msra.mxu0 %v1854
      %1892 = vmatprep.subr.mxu0 0.0
      %1893 = vmatpush2.msra.mxu0 %v1853
      %1894 = vmatprep.subr.mxu0 0.0
      %1895 = vmatpush2.msra.mxu0 %v1852
      %1896 = vmatprep.subr.mxu0 0.0
      %1897 = vmatpush2.msra.mxu0 %v1851
      %1898 = vmatprep.subr.mxu0 0.0
      %1899 = vmatpush2.msra.mxu0 %v1850
      %1900 = vmatprep.subr.mxu0 0.0
      %1901 = vmatpush2.msra.mxu0 %v1849
      %1902 = vmatprep.subr.mxu0 0.0
      %1903 = vmatpush2.msra.mxu0 %v1848
      %1904 = vmatprep.subr.mxu0 0.0
      %1905 = vmatpush2.msra.mxu0 %v1847
      %1906 = vmatprep.subr.mxu0 0.0
      %1907 = vmatpush2.msra.mxu0 %v1846
      %1908 = vmatprep.subr.mxu0 0.0
      %1909 = vmatpush2.msra.mxu0 %v1845
      %1910 = vmatprep.subr.mxu0 0.0
      %1911 = vmatpush2.msra.mxu0 %v1844
      %1912 = vmatprep.subr.mxu0 0.0
      %1913 = vmatpush2.msra.mxu0 %v1843
      %1914 = vmatprep.subr.mxu0 0.0
      %1915 = vmatpush2.msra.mxu0 %v1842
      %1916 = vmatprep.subr.mxu0 0.0
      %1917 = vmatpush2.msra.mxu0 %v1841
      %1918 = vmatprep.subr.mxu0 0.0
      %1919 = vmatpush2.msra.mxu0 %v1840
      %1920 = vmatprep.mubr.f32.mxu0 %v1564
      %1921 = vmatmul.mubr.f32.gmra.mxu0 %v1563
      %v1922 = vpop.f32.mrf.mxu0
      %v1923 = vadd.f32 0.0, %v1922
      %v1924 = vpop.f32.mrf.mxu0
      %1925 = vdwg.mxu0
      %vm1926 = vcmp.lt.s32.totalorder %v280, 64
      %v1927 = vsel %vm1926, 1, 0
      %vm1928 = vcmp.eq.s32.totalorder %v1927, 1
      %v1929 = vsel %vm1928, %v1923, 0.0
      %1930 = vst [vmem:[%s276] sm:$0xff] %v1929
      %p1931 = scmp.lt.s32.totalorder %s18, 3
      %s1932 = scalar_select %p1931, %s18, 3
      %s1933 = smul.addr %s1932, 8
      %s1934 = scalar_lea.vmem %s7, %s1933
      // Predicated region
      $region49: #{encoder_forward.5} parent=47 // pred_check
        %p1935 = pneg %p188
      $region50: #{encoder_forward.5} parent=47 // pred_check_branch
        %1937 = sbr.rel (%p1935) target = $region52
      $region51: #{encoder_forward.5} parent=47 // pred_region
        _
      $region52: #{encoder_forward.5} parent=47 // pred_fallthru
        _
    $region48: #{encoder_forward.5} parent=5 // pred_fallthru
      _
    %p1938 = scmp.le.s32.totalorder 2, %s13
    // Predicated region
    $region53: #{encoder_forward.5} parent=5 // pred_check
      %p1939 = pneg %p1938
    $region54: #{encoder_forward.5} parent=5 // pred_check_branch
      %1941 = sbr.rel (%p1939) target = $region56
    $region55: #{encoder_forward.5} parent=5 // pred_region
      %s1942 = ssub.s32 %s13, 2
      // Predicated region
      $region57: #{encoder_forward.5} parent=55 // pred_check
        %p1943 = pneg %p194
      $region58: #{encoder_forward.5} parent=55 // pred_check_branch
        %1945 = sbr.rel (%p1943) target = $region60
      $region59: #{encoder_forward.5} parent=55 // pred_region
        %p1946 = scmp.lt.s32.totalorder %s19, 3
        %s1947 = scalar_select %p1946, %s19, 3
        %s1948 = smul.addr %s1947, 8
        %s1949 = scalar_lea.vmem %s7, %s1948
      $region60: #{encoder_forward.5} parent=55 // pred_fallthru
        _
    $region56: #{encoder_forward.5} parent=5 // pred_fallthru
      _
  $region6: #{encoder_forward.5} parent=0 // loop_footer
    %s17 = sadd.s32 1, %s13
  $region7: #{encoder_forward.5} parent=0 // loop_footer_branch
    %12 = sbr.rel target = $region3
  $region8: #{encoder_forward.5} parent=0 // loop_exit
    _

// kernel: encoder_forward.7
$region0: #{encoder_forward.7}
  #allocation0 [shape = 'u32[]', space=smem, size = 0x4, offset = 0x4, fixed_abs, tag = 'smem constant byte address 0x4 - core index']
  #allocation1 [shape = 'u32[144,128]{1,0:T(1,128)}', space=vmem, size = 0x12000, scoped, tag = 'internal scratch']
  %s0 = inlined_call_operand.vmem [shape: f32[4,16,128], index: 0, kind: input, shape index: {}]
  %s1 = inlined_call_operand.vmem [shape: bf16[288,16], index: 1, kind: input, shape index: {}]
  %s2 = inlined_call_operand.vmem [shape: f32[32,1], index: 2, kind: input, shape index: {}]
  %s3 = inlined_call_operand.vmem [shape: bf16[288,32], index: 3, kind: input, shape index: {}]
  %s4 = inlined_call_operand.vmem [shape: f32[32,1], index: 4, kind: input, shape index: {}]
  %s5 = inlined_call_operand.vmem [shape: bf16[32,16], index: 5, kind: input, shape index: {}]
  %s6 = inlined_call_operand.vmem [shape: f32[32,1], index: 6, kind: input, shape index: {}]
  %s7 = inlined_call_operand.vmem [shape: f32[4,32,128], index: 7, kind: output, shape index: {}]
  %s8 = sld [smem:[#allocation0]]
  $region61: #{encoder_forward.7} parent=0
    _
  %s10 = ssub.s32 1, %s8
  %s11 = scalar_select 0, %s10, %s8
  loop: start=0, step=1, limit=6
  $region2: #{encoder_forward.7} parent=0 // loop_pre_header
    _
  $region3: #{encoder_forward.7} parent=0 // loop_header
    %s13 = sphi 0, %s17
    %p14 = scmp.ge.s32.totalorder %s13, 6
    %s23 = sphi 0, %s25
    %s26 = sphi 0, %s23
    %s27 = sphi 0, %s26
    %s43 = sphi 0, %s27
    %s47 = sphi 0, %s47
    %s49 = sphi 0, %s47
    %s50 = sphi 0, %s49
    %s64 = sphi 0, %s50
    %s68 = sphi 0, %s68
    %s70 = sphi 0, %s68
    %s71 = sphi 0, %s70
    %s85 = sphi 0, %s71
    %s89 = sphi 0, %s89
    %s91 = sphi 0, %s89
    %s92 = sphi 0, %s91
    %s106 = sphi 0, %s92
    %s110 = sphi 0, %s110
    %s112 = sphi 0, %s110
    %s113 = sphi 0, %s112
    %s127 = sphi 0, %s113
    %s131 = sphi 0, %s131
    %s133 = sphi 0, %s131
    %s134 = sphi 0, %s133
    %s148 = sphi 0, %s134
    %s152 = sphi 0, %s152
    %s154 = sphi 0, %s152
    %s155 = sphi 0, %s154
    %s169 = sphi 0, %s155
    %s175 = sphi 0, %s177
    %s178 = sphi 0, %s175
    %s179 = sphi 0, %s178
    %s195 = sphi 0, %s179
  $region4: #{encoder_forward.7} parent=0 // loop_header_branch
    %16 = sbr.rel (%p14) target = $region8
  $region5: #{encoder_forward.7} parent=0 // loop_body
    %s18 = ssub.s32 %s13, 1
    %s19 = ssub.s32 %s13, 2
    %s20 = sadd.s32 %s13, 1
    %s21 = ssub.s32 %s13, %s20
    %p22 = scmp.eq.s32.totalorder %s21, 0
    %s24 = sadd.s32 %s23, 1
    %s25 = scalar_select %p22, %s23, %s24
    %p28 = pneg %p22
    %p29 = scmp.eq.s32.totalorder %s13, 3
    %p30 = por %p28, %p29
    %p31 = scmp.ne.s32.totalorder %s23, %s26
    %p32 = scmp.eq.s32.totalorder %s13, 0
    %p33 = por %p31, %p32
    %p34 = scmp.ne.s32.totalorder %s23, %s26
    %p35 = scmp.eq.s32.totalorder %s18, 3
    %p36 = por %p34, %p35
    %p37 = scmp.ne.s32.totalorder %s26, %s27
    %p38 = scmp.eq.s32.totalorder %s18, 0
    %p39 = por %p37, %p38
    %p40 = scmp.ne.s32.totalorder %s26, %s27
    %p41 = scmp.eq.s32.totalorder %s19, 3
    %p42 = por %p40, %p41
    %p44 = scmp.ne.s32.totalorder %s27, %s43
    %p45 = scmp.eq.s32.totalorder %s19, 0
    %p46 = por %p44, %p45
    %s48 = sadd.s32 %s47, 1
    %p51 = scmp.eq.s32.totalorder %s13, 3
    %p52 = scmp.ne.s32.totalorder %s47, %s49
    %p53 = scmp.eq.s32.totalorder %s13, 0
    %p54 = por %p52, %p53
    %p55 = scmp.ne.s32.totalorder %s47, %s49
    %p56 = scmp.eq.s32.totalorder %s18, 3
    %p57 = por %p55, %p56
    %p58 = scmp.ne.s32.totalorder %s49, %s50
    %p59 = scmp.eq.s32.totalorder %s18, 0
    %p60 = por %p58, %p59
    %p61 = scmp.ne.s32.totalorder %s49, %s50
    %p62 = scmp.eq.s32.totalorder %s19, 3
    %p63 = por %p61, %p62
    %p65 = scmp.ne.s32.totalorder %s50, %s64
    %p66 = scmp.eq.s32.totalorder %s19, 0
    %p67 = por %p65, %p66
    %s69 = sadd.s32 %s68, 1
    %p72 = scmp.eq.s32.totalorder %s13, 3
    %p73 = scmp.ne.s32.totalorder %s68, %s70
    %p74 = scmp.eq.s32.totalorder %s13, 0
    %p75 = por %p73, %p74
    %p76 = scmp.ne.s32.totalorder %s68, %s70
    %p77 = scmp.eq.s32.totalorder %s18, 3
    %p78 = por %p76, %p77
    %p79 = scmp.ne.s32.totalorder %s70, %s71
    %p80 = scmp.eq.s32.totalorder %s18, 0
    %p81 = por %p79, %p80
    %p82 = scmp.ne.s32.totalorder %s70, %s71
    %p83 = scmp.eq.s32.totalorder %s19, 3
    %p84 = por %p82, %p83
    %p86 = scmp.ne.s32.totalorder %s71, %s85
    %p87 = scmp.eq.s32.totalorder %s19, 0
    %p88 = por %p86, %p87
    %s90 = sadd.s32 %s89, 1
    %p93 = scmp.eq.s32.totalorder %s13, 3
    %p94 = scmp.ne.s32.totalorder %s89, %s91
    %p95 = scmp.eq.s32.totalorder %s13, 0
    %p96 = por %p94, %p95
    %p97 = scmp.ne.s32.totalorder %s89, %s91
    %p98 = scmp.eq.s32.totalorder %s18, 3
    %p99 = por %p97, %p98
    %p100 = scmp.ne.s32.totalorder %s91, %s92
    %p101 = scmp.eq.s32.totalorder %s18, 0
    %p102 = por %p100, %p101
    %p103 = scmp.ne.s32.totalorder %s91, %s92
    %p104 = scmp.eq.s32.totalorder %s19, 3
    %p105 = por %p103, %p104
    %p107 = scmp.ne.s32.totalorder %s92, %s106
    %p108 = scmp.eq.s32.totalorder %s19, 0
    %p109 = por %p107, %p108
    %s111 = sadd.s32 %s110, 1
    %p114 = scmp.eq.s32.totalorder %s13, 3
    %p115 = scmp.ne.s32.totalorder %s110, %s112
    %p116 = scmp.eq.s32.totalorder %s13, 0
    %p117 = por %p115, %p116
    %p118 = scmp.ne.s32.totalorder %s110, %s112
    %p119 = scmp.eq.s32.totalorder %s18, 3
    %p120 = por %p118, %p119
    %p121 = scmp.ne.s32.totalorder %s112, %s113
    %p122 = scmp.eq.s32.totalorder %s18, 0
    %p123 = por %p121, %p122
    %p124 = scmp.ne.s32.totalorder %s112, %s113
    %p125 = scmp.eq.s32.totalorder %s19, 3
    %p126 = por %p124, %p125
    %p128 = scmp.ne.s32.totalorder %s113, %s127
    %p129 = scmp.eq.s32.totalorder %s19, 0
    %p130 = por %p128, %p129
    %s132 = sadd.s32 %s131, 1
    %p135 = scmp.eq.s32.totalorder %s13, 3
    %p136 = scmp.ne.s32.totalorder %s131, %s133
    %p137 = scmp.eq.s32.totalorder %s13, 0
    %p138 = por %p136, %p137
    %p139 = scmp.ne.s32.totalorder %s131, %s133
    %p140 = scmp.eq.s32.totalorder %s18, 3
    %p141 = por %p139, %p140
    %p142 = scmp.ne.s32.totalorder %s133, %s134
    %p143 = scmp.eq.s32.totalorder %s18, 0
    %p144 = por %p142, %p143
    %p145 = scmp.ne.s32.totalorder %s133, %s134
    %p146 = scmp.eq.s32.totalorder %s19, 3
    %p147 = por %p145, %p146
    %p149 = scmp.ne.s32.totalorder %s134, %s148
    %p150 = scmp.eq.s32.totalorder %s19, 0
    %p151 = por %p149, %p150
    %s153 = sadd.s32 %s152, 1
    %p156 = scmp.eq.s32.totalorder %s13, 3
    %p157 = scmp.ne.s32.totalorder %s152, %s154
    %p158 = scmp.eq.s32.totalorder %s13, 0
    %p159 = por %p157, %p158
    %p160 = scmp.ne.s32.totalorder %s152, %s154
    %p161 = scmp.eq.s32.totalorder %s18, 3
    %p162 = por %p160, %p161
    %p163 = scmp.ne.s32.totalorder %s154, %s155
    %p164 = scmp.eq.s32.totalorder %s18, 0
    %p165 = por %p163, %p164
    %p166 = scmp.ne.s32.totalorder %s154, %s155
    %p167 = scmp.eq.s32.totalorder %s19, 3
    %p168 = por %p166, %p167
    %p170 = scmp.ne.s32.totalorder %s155, %s169
    %p171 = scmp.eq.s32.totalorder %s19, 0
    %p172 = por %p170, %p171
    %s173 = ssub.s32 %s13, %s20
    %p174 = scmp.eq.s32.totalorder %s173, 0
    %s176 = sadd.s32 %s175, 1
    %s177 = scalar_select %p174, %s175, %s176
    %p180 = pneg %p174
    %p181 = scmp.eq.s32.totalorder %s13, 3
    %p182 = por %p180, %p181
    %p183 = scmp.ne.s32.totalorder %s175, %s178
    %p184 = scmp.eq.s32.totalorder %s13, 0
    %p185 = por %p183, %p184
    %p186 = scmp.ne.s32.totalorder %s175, %s178
    %p187 = scmp.eq.s32.totalorder %s18, 3
    %p188 = por %p186, %p187
    %p189 = scmp.ne.s32.totalorder %s178, %s179
    %p190 = scmp.eq.s32.totalorder %s18, 0
    %p191 = por %p189, %p190
    %p192 = scmp.ne.s32.totalorder %s178, %s179
    %p193 = scmp.eq.s32.totalorder %s19, 3
    %p194 = por %p192, %p193
    %p196 = scmp.ne.s32.totalorder %s179, %s195
    %p197 = scmp.eq.s32.totalorder %s19, 0
    %p198 = por %p196, %p197
    %p199 = scmp.le.s32.totalorder 1, %s13
    %p200 = scmp.lt.s32.totalorder %s13, 5
    %p201 = pnand %p199, %p200
    %p202 = pneg %p201
    // Predicated region
    $region9: #{encoder_forward.7} parent=5 // pred_check
      _
    $region10: #{encoder_forward.7} parent=5 // pred_check_branch
      %204 = sbr.rel (%p201) target = $region12
    $region11: #{encoder_forward.7} parent=5 // pred_region
      %s205 = ssub.s32 %s13, 1
      // Predicated region
      $region13: #{encoder_forward.7} parent=11 // pred_check
        %p206 = pneg %p60
      $region14: #{encoder_forward.7} parent=11 // pred_check_branch
        %208 = sbr.rel (%p206) target = $region16
      $region15: #{encoder_forward.7} parent=11 // pred_region
        _
      $region16: #{encoder_forward.7} parent=11 // pred_fallthru
        _
      // Predicated region
      $region17: #{encoder_forward.7} parent=11 // pred_check
        %p209 = pneg %p81
      $region18: #{encoder_forward.7} parent=11 // pred_check_branch
        %211 = sbr.rel (%p209) target = $region20
      $region19: #{encoder_forward.7} parent=11 // pred_region
        _
      $region20: #{encoder_forward.7} parent=11 // pred_fallthru
        _
      // Predicated region
      $region21: #{encoder_forward.7} parent=11 // pred_check
        %p212 = pneg %p102
      $region22: #{encoder_forward.7} parent=11 // pred_check_branch
        %214 = sbr.rel (%p212) target = $region24
      $region23: #{encoder_forward.7} parent=11 // pred_region
        _
      $region24: #{encoder_forward.7} parent=11 // pred_fallthru
        _
      // Predicated region
      $region25: #{encoder_forward.7} parent=11 // pred_check
        %p215 = pneg %p123
      $region26: #{encoder_forward.7} parent=11 // pred_check_branch
        %217 = sbr.rel (%p215) target = $region28
      $region27: #{encoder_forward.7} parent=11 // pred_region
        _
      $region28: #{encoder_forward.7} parent=11 // pred_fallthru
        _
      // Predicated region
      $region29: #{encoder_forward.7} parent=11 // pred_check
        %p218 = pneg %p144
      $region30: #{encoder_forward.7} parent=11 // pred_check_branch
        %220 = sbr.rel (%p218) target = $region32
      $region31: #{encoder_forward.7} parent=11 // pred_region
        _
      $region32: #{encoder_forward.7} parent=11 // pred_fallthru
        _
      // Predicated region
      $region33: #{encoder_forward.7} parent=11 // pred_check
        %p221 = pneg %p165
      $region34: #{encoder_forward.7} parent=11 // pred_check_branch
        %223 = sbr.rel (%p221) target = $region36
      $region35: #{encoder_forward.7} parent=11 // pred_region
        _
      $region36: #{encoder_forward.7} parent=11 // pred_fallthru
        _
    $region12: #{encoder_forward.7} parent=5 // pred_fallthru
      _
    %p224 = scmp.lt.s32.totalorder %s13, 4
    // Predicated region
    $region37: #{encoder_forward.7} parent=5 // pred_check
      %p225 = pneg %p224
    $region38: #{encoder_forward.7} parent=5 // pred_check_branch
      %227 = sbr.rel (%p225) target = $region40
    $region39: #{encoder_forward.7} parent=5 // pred_region
      // Predicated region
      $region41: #{encoder_forward.7} parent=39 // pred_check
        %p228 = pneg %p33
      $region42: #{encoder_forward.7} parent=39 // pred_check_branch
        %230 = sbr.rel (%p228) target = $region44
      $region43: #{encoder_forward.7} parent=39 // pred_region
        %p231 = scmp.lt.s32.totalorder %s13, 3
        %s232 = scalar_select %p231, %s13, 3
        %s233 = smul.addr %s232, 2
        %s234 = smul.addr %s233, 8
        %s235 = scalar_lea.vmem %s0, %s234
      $region44: #{encoder_forward.7} parent=39 // pred_fallthru
        _
    $region40: #{encoder_forward.7} parent=5 // pred_fallthru
      _
    %p236 = scmp.le.s32.totalorder 1, %s13
    %p237 = scmp.lt.s32.totalorder %s13, 5
    %p238 = pnand %p236, %p237
    %p239 = pneg %p238
    // Predicated region
    $region45: #{encoder_forward.7} parent=5 // pred_check
      _
    $region46: #{encoder_forward.7} parent=5 // pred_check_branch
      %241 = sbr.rel (%p238) target = $region48
    $region47: #{encoder_forward.7} parent=5 // pred_region
      %s242 = ssub.s32 %s13, 1
      %p243 = scmp.lt.s32.totalorder %s18, 3
      %s244 = scalar_select %p243, %s18, 3
      %s245 = smul.addr %s244, 2
      %s246 = smul.addr %s245, 8
      %s247 = scalar_lea.vmem %s0, %s246
      %p248 = pneg %p39
      %p249 = pneg %p36
      %p250 = pneg %p60
      %p251 = pneg %p57
      %p252 = pneg %p81
      %p253 = pneg %p78
      %p254 = pneg %p102
      %p255 = pneg %p99
      %p256 = pneg %p123
      %p257 = pneg %p120
      %p258 = pneg %p144
      %p259 = pneg %p141
      %p260 = pneg %p165
      %p261 = pneg %p162
      %p262 = pneg %p191
      %p263 = pneg %p188
      %p264 = scmp.lt.s32.totalorder %s18, 3
      %s265 = scalar_select %p264, %s18, 3
      %s266 = smul.addr %s265, 4
      %s267 = smul.addr %s266, 8
      %s268 = scalar_lea.vmem %s7, %s267
      %p269 = scmp.lt.s32.totalorder %s18, 3
      %s270 = scalar_select %p269, %s18, 3
      %s271 = smul.addr %s270, 2
      %s272 = smul.addr %s271, 8
      %s273 = scalar_lea.vmem %s0, %s272
      %p274 = scmp.lt.s32.totalorder %s18, 3
      %s275 = scalar_select %p274, %s18, 3
      %s276 = smul.addr %s275, 4
      %s277 = smul.addr %s276, 8
      %s278 = scalar_lea.vmem %s7, %s277
      %v280 = vld [vmem:[%s273] sm:$0xff]
      %v281 = vld [vmem:[%s273 + $0x8] sm:$0xff]
      %v282 = vlaneseq
      %v283 = vand.u32 %v282, 127
      %v284 = vshra.s32 %v283, 2
      %v285 = vand.u32 %v283, 3
      %286 = vrot.lane.b32.xlu0 %v280, 5
      %v287 = vpop.permute.xlu0 %286
      %288 = vrot.lane.b32.xlu0 %v281, 5
      %v289 = vpop.permute.xlu0 %288
      %vm290 = vcmp.ge.s32.totalorder %v284, 1
      %vm291 = vcmp.ge.s32.totalorder %v285, 1
      %vm292 = vmand %vm290, %vm291
      %v293 = vsel %vm292, 1, 0
      %vm294 = vcmp.eq.s32.totalorder %v293, 1
      %v295 = vsel %vm294, %v287, 0.0
      %v296 = vsel %vm294, %v289, 0.0
      %v297 = vld [vmem:[%s1] sm:$0xf]
      %v298 = vld [vmem:[%s1 + $0x4] sm:$0xf]
      %v299 = vld [vmem:[%s1 + $0x8] sm:$0xf]
      %v300 = vld [vmem:[%s1 + $0xc] sm:$0xf]
      %v301 = vpack.c.bf16 %v296, %v295
      %302 = vrot.lane.b32.xlu0 %v280, 4
      %v303 = vpop.permute.xlu0 %302
      %304 = vrot.lane.b32.xlu0 %v281, 4
      %v305 = vpop.permute.xlu0 %304
      %v306 = vsel %vm290, 1, 0
      %vm307 = vcmp.eq.s32.totalorder %v306, 1
      %v308 = vsel %vm307, %v303, 0.0
      %v309 = vsel %vm307, %v305, 0.0
      %v310 = vld [vmem:[%s1 + $0x10] sm:$0xf]
      %v311 = vld [vmem:[%s1 + $0x14] sm:$0xf]
      %v312 = vld [vmem:[%s1 + $0x18] sm:$0xf]
      %v313 = vld [vmem:[%s1 + $0x1c] sm:$0xf]
      %v314 = vpack.c.bf16 %v309, %v308
      %v319 = vunpack.c.l.b16 %v310
      %v320 = vunpack.c.l.b16 %v311
      %v321 = vunpack.c.l.b16 %v312
      %v322 = vunpack.c.l.b16 %v313
      %v323 = vpack.c.b16 %v320, %v319
      %v324 = vpack.c.b16 %v322, %v321
      %vm325 = vcmask 130048
      %v327 = vsel %vm325, %v323, 0
      %v330 = vsel %vm325, %v324, 0
      %332 = vmatprep.subr.bf16.mxu0 0
      %333 = vmatpush1.bf16.msra.mxu0 0
      %334 = vmatprep.subr.bf16.mxu0 0
      %335 = vmatpush1.bf16.msra.mxu0 0
      %336 = vmatprep.subr.bf16.mxu0 0
      %337 = vmatpush1.bf16.msra.mxu0 0
      %338 = vmatprep.subr.bf16.mxu0 0
      %339 = vmatpush1.bf16.msra.mxu0 0
      %340 = vmatprep.subr.bf16.mxu0 0
      %341 = vmatpush1.bf16.msra.mxu0 0
      %342 = vmatprep.subr.bf16.mxu0 0
      %343 = vmatpush1.bf16.msra.mxu0 0
      %344 = vmatprep.subr.bf16.mxu0 0
      %345 = vmatpush1.bf16.msra.mxu0 0
      %346 = vmatprep.subr.bf16.mxu0 0
      %347 = vmatpush1.bf16.msra.mxu0 %v314
      %348 = vmatprep.subr.bf16.mxu0 0
      %349 = vmatpush2.bf16.msra.mxu0 0
      %350 = vmatprep.subr.bf16.mxu0 0
      %351 = vmatpush2.bf16.msra.mxu0 0
      %352 = vmatprep.subr.bf16.mxu0 0
      %353 = vmatpush2.bf16.msra.mxu0 0
      %354 = vmatprep.subr.bf16.mxu0 0
      %355 = vmatpush2.bf16.msra.mxu0 0
      %356 = vmatprep.subr.bf16.mxu0 0
      %357 = vmatpush2.bf16.msra.mxu0 0
      %358 = vmatprep.subr.bf16.mxu0 0
      %359 = vmatpush2.bf16.msra.mxu0 0
      %360 = vmatprep.subr.bf16.mxu0 0
      %361 = vmatpush2.bf16.msra.mxu0 0
      %362 = vmatprep.subr.bf16.mxu0 0
      %363 = vmatpush2.bf16.msra.mxu0 0
      %364 = vmatprep.mubr.bf16.mxu0 0
      %365 = vmatmul.mubr.bf16.gmra.mxu0 %v327
      %v366 = vpop.f32.mrf.mxu0
      %v367 = vadd.f32 0.0, %v366
      %v368 = vpop.f32.mrf.mxu0
      %v369 = vpop.f32.mrf.mxu0
      %v370 = vadd.f32 0.0, %v369
      %v371 = vpop.f32.mrf.mxu0
      %372 = vmatprep.mubr.bf16.mxu0 0
      %373 = vmatmul.mubr.bf16.gmra.mxu0 %v330
      %v374 = vpop.f32.mrf.mxu0
      %v375 = vadd.f32 0.0, %v374
      %v376 = vpop.f32.mrf.mxu0
      %v377 = vpop.f32.mrf.mxu0
      %v378 = vadd.f32 0.0, %v377
      %v379 = vpop.f32.mrf.mxu0
      %380 = vdwg.mxu0
      %v385 = vunpack.c.l.b16 %v297
      %v386 = vunpack.c.l.b16 %v298
      %v387 = vunpack.c.l.b16 %v299
      %v388 = vunpack.c.l.b16 %v300
      %v389 = vpack.c.b16 %v386, %v385
      %v390 = vpack.c.b16 %v388, %v387
      %v392 = vsel %vm325, %v389, 0
      %v395 = vsel %vm325, %v390, 0
      %397 = vmatprep.subr.bf16.mxu0 0
      %398 = vmatpush1.bf16.msra.mxu0 0
      %399 = vmatprep.subr.bf16.mxu0 0
      %400 = vmatpush1.bf16.msra.mxu0 0
      %401 = vmatprep.subr.bf16.mxu0 0
      %402 = vmatpush1.bf16.msra.mxu0 0
      %403 = vmatprep.subr.bf16.mxu0 0
      %404 = vmatpush1.bf16.msra.mxu0 0
      %405 = vmatprep.subr.bf16.mxu0 0
      %406 = vmatpush1.bf16.msra.mxu0 0
      %407 = vmatprep.subr.bf16.mxu0 0
      %408 = vmatpush1.bf16.msra.mxu0 0
      %409 = vmatprep.subr.bf16.mxu0 0
      %410 = vmatpush1.bf16.msra.mxu0 0
      %411 = vmatprep.subr.bf16.mxu0 0
      %412 = vmatpush1.bf16.msra.mxu0 %v301
      %413 = vmatprep.subr.bf16.mxu0 0
      %414 = vmatpush2.bf16.msra.mxu0 0
      %415 = vmatprep.subr.bf16.mxu0 0
      %416 = vmatpush2.bf16.msra.mxu0 0
      %417 = vmatprep.subr.bf16.mxu0 0
      %418 = vmatpush2.bf16.msra.mxu0 0
      %419 = vmatprep.subr.bf16.mxu0 0
      %420 = vmatpush2.bf16.msra.mxu0 0
      %421 = vmatprep.subr.bf16.mxu0 0
      %422 = vmatpush2.bf16.msra.mxu0 0
      %423 = vmatprep.subr.bf16.mxu0 0
      %424 = vmatpush2.bf16.msra.mxu0 0
      %425 = vmatprep.subr.bf16.mxu0 0
      %426 = vmatpush2.bf16.msra.mxu0 0
      %427 = vmatprep.subr.bf16.mxu0 0
      %428 = vmatpush2.bf16.msra.mxu0 0
      %429 = vmatprep.mubr.bf16.mxu0 0
      %430 = vmatmul.mubr.bf16.gmra.mxu0 %v392
      %v431 = vpop.f32.mrf.mxu0
      %v432 = vadd.f32 %v367, %v431
      %v433 = vpop.f32.mrf.mxu0
      %v434 = vpop.f32.mrf.mxu0
      %v435 = vadd.f32 %v370, %v434
      %v436 = vpop.f32.mrf.mxu0
      %437 = vmatprep.mubr.bf16.mxu0 0
      %438 = vmatmul.mubr.bf16.gmra.mxu0 %v395
      %v439 = vpop.f32.mrf.mxu0
      %v440 = vadd.f32 %v375, %v439
      %v441 = vpop.f32.mrf.mxu0
      %v442 = vpop.f32.mrf.mxu0
      %v443 = vadd.f32 %v378, %v442
      %v444 = vpop.f32.mrf.mxu0
      %445 = vdwg.mxu0
      %446 = vrot.lane.b32.xlu0 %v280, 3
      %v447 = vpop.permute.xlu0 %446
      %448 = vrot.lane.b32.xlu0 %v281, 3
      %v449 = vpop.permute.xlu0 %448
      %vm450 = vcmp.lt.s32.totalorder %v285, 3
      %vm451 = vmand %vm290, %vm450
      %v452 = vsel %vm451, 1, 0
      %vm453 = vcmp.eq.s32.totalorder %v452, 1
      %v454 = vsel %vm453, %v447, 0.0
      %v455 = vsel %vm453, %v449, 0.0
      %v456 = vld [vmem:[%s1 + $0x20] sm:$0xf]
      %v457 = vld [vmem:[%s1 + $0x24] sm:$0xf]
      %v458 = vld [vmem:[%s1 + $0x28] sm:$0xf]
      %v459 = vld [vmem:[%s1 + $0x2c] sm:$0xf]
      %v460 = vpack.c.bf16 %v455, %v454
      %v465 = vunpack.c.l.b16 %v456
      %v466 = vunpack.c.l.b16 %v457
      %v467 = vunpack.c.l.b16 %v458
      %v468 = vunpack.c.l.b16 %v459
      %v469 = vpack.c.b16 %v466, %v465
      %v470 = vpack.c.b16 %v468, %v467
      %v472 = vsel %vm325, %v469, 0
      %v475 = vsel %vm325, %v470, 0
      %477 = vmatprep.subr.bf16.mxu0 0
      %478 = vmatpush1.bf16.msra.mxu0 0
      %479 = vmatprep.subr.bf16.mxu0 0
      %480 = vmatpush1.bf16.msra.mxu0 0
      %481 = vmatprep.subr.bf16.mxu0 0
      %482 = vmatpush1.bf16.msra.mxu0 0
      %483 = vmatprep.subr.bf16.mxu0 0
      %484 = vmatpush1.bf16.msra.mxu0 0
      %485 = vmatprep.subr.bf16.mxu0 0
      %486 = vmatpush1.bf16.msra.mxu0 0
      %487 = vmatprep.subr.bf16.mxu0 0
      %488 = vmatpush1.bf16.msra.mxu0 0
      %489 = vmatprep.subr.bf16.mxu0 0
      %490 = vmatpush1.bf16.msra.mxu0 0
      %491 = vmatprep.subr.bf16.mxu0 0
      %492 = vmatpush1.bf16.msra.mxu0 %v460
      %493 = vmatprep.subr.bf16.mxu0 0
      %494 = vmatpush2.bf16.msra.mxu0 0
      %495 = vmatprep.subr.bf16.mxu0 0
      %496 = vmatpush2.bf16.msra.mxu0 0
      %497 = vmatprep.subr.bf16.mxu0 0
      %498 = vmatpush2.bf16.msra.mxu0 0
      %499 = vmatprep.subr.bf16.mxu0 0
      %500 = vmatpush2.bf16.msra.mxu0 0
      %501 = vmatprep.subr.bf16.mxu0 0
      %502 = vmatpush2.bf16.msra.mxu0 0
      %503 = vmatprep.subr.bf16.mxu0 0
      %504 = vmatpush2.bf16.msra.mxu0 0
      %505 = vmatprep.subr.bf16.mxu0 0
      %506 = vmatpush2.bf16.msra.mxu0 0
      %507 = vmatprep.subr.bf16.mxu0 0
      %508 = vmatpush2.bf16.msra.mxu0 0
      %509 = vmatprep.mubr.bf16.mxu0 0
      %510 = vmatmul.mubr.bf16.gmra.mxu0 %v472
      %v511 = vpop.f32.mrf.mxu0
      %v512 = vadd.f32 0.0, %v511
      %v513 = vpop.f32.mrf.mxu0
      %v514 = vpop.f32.mrf.mxu0
      %v515 = vadd.f32 0.0, %v514
      %v516 = vpop.f32.mrf.mxu0
      %517 = vmatprep.mubr.bf16.mxu0 0
      %518 = vmatmul.mubr.bf16.gmra.mxu0 %v475
      %v519 = vpop.f32.mrf.mxu0
      %v520 = vadd.f32 0.0, %v519
      %v521 = vpop.f32.mrf.mxu0
      %v522 = vpop.f32.mrf.mxu0
      %v523 = vadd.f32 0.0, %v522
      %v524 = vpop.f32.mrf.mxu0
      %525 = vdwg.mxu0
      %v526 = vadd.f32 %v432, %v512
      %v527 = vadd.f32 %v435, %v515
      %v528 = vadd.f32 %v440, %v520
      %v529 = vadd.f32 %v443, %v523
      %530 = vrot.lane.b32.xlu0 %v280, 1
      %v531 = vpop.permute.xlu0 %530
      %532 = vrot.lane.b32.xlu0 %v281, 1
      %v533 = vpop.permute.xlu0 %532
      %v534 = vsel %vm291, 1, 0
      %vm535 = vcmp.eq.s32.totalorder %v534, 1
      %v536 = vsel %vm535, %v531, 0.0
      %v537 = vsel %vm535, %v533, 0.0
      %v538 = vld [vmem:[%s1 + $0x30] sm:$0xf]
      %v539 = vld [vmem:[%s1 + $0x34] sm:$0xf]
      %v540 = vld [vmem:[%s1 + $0x38] sm:$0xf]
      %v541 = vld [vmem:[%s1 + $0x3c] sm:$0xf]
      %v542 = vpack.c.bf16 %v537, %v536
      %v547 = vunpack.c.l.b16 %v538
      %v548 = vunpack.c.l.b16 %v539
      %v549 = vunpack.c.l.b16 %v540
      %v550 = vunpack.c.l.b16 %v541
      %v551 = vpack.c.b16 %v548, %v547
      %v552 = vpack.c.b16 %v550, %v549
      %v554 = vsel %vm325, %v551, 0
      %v557 = vsel %vm325, %v552, 0
      %559 = vmatprep.subr.bf16.mxu0 0
      %560 = vmatpush1.bf16.msra.mxu0 0
      %561 = vmatprep.subr.bf16.mxu0 0
      %562 = vmatpush1.bf16.msra.mxu0 0
      %563 = vmatprep.subr.bf16.mxu0 0
      %564 = vmatpush1.bf16.msra.mxu0 0
      %565 = vmatprep.subr.bf16.mxu0 0
      %566 = vmatpush1.bf16.msra.mxu0 0
      %567 = vmatprep.subr.bf16.mxu0 0
      %568 = vmatpush1.bf16.msra.mxu0 0
      %569 = vmatprep.subr.bf16.mxu0 0
      %570 = vmatpush1.bf16.msra.mxu0 0
      %571 = vmatprep.subr.bf16.mxu0 0
      %572 = vmatpush1.bf16.msra.mxu0 0
      %573 = vmatprep.subr.bf16.mxu0 0
      %574 = vmatpush1.bf16.msra.mxu0 %v542
      %575 = vmatprep.subr.bf16.mxu0 0
      %576 = vmatpush2.bf16.msra.mxu0 0
      %577 = vmatprep.subr.bf16.mxu0 0
      %578 = vmatpush2.bf16.msra.mxu0 0
      %579 = vmatprep.subr.bf16.mxu0 0
      %580 = vmatpush2.bf16.msra.mxu0 0
      %581 = vmatprep.subr.bf16.mxu0 0
      %582 = vmatpush2.bf16.msra.mxu0 0
      %583 = vmatprep.subr.bf16.mxu0 0
      %584 = vmatpush2.bf16.msra.mxu0 0
      %585 = vmatprep.subr.bf16.mxu0 0
      %586 = vmatpush2.bf16.msra.mxu0 0
      %587 = vmatprep.subr.bf16.mxu0 0
      %588 = vmatpush2.bf16.msra.mxu0 0
      %589 = vmatprep.subr.bf16.mxu0 0
      %590 = vmatpush2.bf16.msra.mxu0 0
      %591 = vmatprep.mubr.bf16.mxu0 0
      %592 = vmatmul.mubr.bf16.gmra.mxu0 %v554
      %v593 = vpop.f32.mrf.mxu0
      %v594 = vadd.f32 0.0, %v593
      %v595 = vpop.f32.mrf.mxu0
      %v596 = vpop.f32.mrf.mxu0
      %v597 = vadd.f32 0.0, %v596
      %v598 = vpop.f32.mrf.mxu0
      %599 = vmatprep.mubr.bf16.mxu0 0
      %600 = vmatmul.mubr.bf16.gmra.mxu0 %v557
      %v601 = vpop.f32.mrf.mxu0
      %v602 = vadd.f32 0.0, %v601
      %v603 = vpop.f32.mrf.mxu0
      %v604 = vpop.f32.mrf.mxu0
      %v605 = vadd.f32 0.0, %v604
      %v606 = vpop.f32.mrf.mxu0
      %607 = vdwg.mxu0
      %v608 = vadd.f32 %v526, %v594
      %v609 = vadd.f32 %v527, %v597
      %v610 = vadd.f32 %v528, %v602
      %v611 = vadd.f32 %v529, %v605
      %v612 = vld [vmem:[%s1 + $0x40] sm:$0xf]
      %v613 = vld [vmem:[%s1 + $0x44] sm:$0xf]
      %v614 = vld [vmem:[%s1 + $0x48] sm:$0xf]
      %v615 = vld [vmem:[%s1 + $0x4c] sm:$0xf]
      %v616 = vpack.c.bf16 %v281, %v280
      %v621 = vunpack.c.l.b16 %v612
      %v622 = vunpack.c.l.b16 %v613
      %v623 = vunpack.c.l.b16 %v614
      %v624 = vunpack.c.l.b16 %v615
      %v625 = vpack.c.b16 %v622, %v621
      %v626 = vpack.c.b16 %v624, %v623
      %v628 = vsel %vm325, %v625, 0
      %v631 = vsel %vm325, %v626, 0
      %633 = vmatprep.subr.bf16.mxu0 0
      %634 = vmatpush1.bf16.msra.mxu0 0
      %635 = vmatprep.subr.bf16.mxu0 0
      %636 = vmatpush1.bf16.msra.mxu0 0
      %637 = vmatprep.subr.bf16.mxu0 0
      %638 = vmatpush1.bf16.msra.mxu0 0
      %639 = vmatprep.subr.bf16.mxu0 0
      %640 = vmatpush1.bf16.msra.mxu0 0
      %641 = vmatprep.subr.bf16.mxu0 0
      %642 = vmatpush1.bf16.msra.mxu0 0
      %643 = vmatprep.subr.bf16.mxu0 0
      %644 = vmatpush1.bf16.msra.mxu0 0
      %645 = vmatprep.subr.bf16.mxu0 0
      %646 = vmatpush1.bf16.msra.mxu0 0
      %647 = vmatprep.subr.bf16.mxu0 0
      %648 = vmatpush1.bf16.msra.mxu0 %v616
      %649 = vmatprep.subr.bf16.mxu0 0
      %650 = vmatpush2.bf16.msra.mxu0 0
      %651 = vmatprep.subr.bf16.mxu0 0
      %652 = vmatpush2.bf16.msra.mxu0 0
      %653 = vmatprep.subr.bf16.mxu0 0
      %654 = vmatpush2.bf16.msra.mxu0 0
      %655 = vmatprep.subr.bf16.mxu0 0
      %656 = vmatpush2.bf16.msra.mxu0 0
      %657 = vmatprep.subr.bf16.mxu0 0
      %658 = vmatpush2.bf16.msra.mxu0 0
      %659 = vmatprep.subr.bf16.mxu0 0
      %660 = vmatpush2.bf16.msra.mxu0 0
      %661 = vmatprep.subr.bf16.mxu0 0
      %662 = vmatpush2.bf16.msra.mxu0 0
      %663 = vmatprep.subr.bf16.mxu0 0
      %664 = vmatpush2.bf16.msra.mxu0 0
      %665 = vmatprep.mubr.bf16.mxu0 0
      %666 = vmatmul.mubr.bf16.gmra.mxu0 %v628
      %v667 = vpop.f32.mrf.mxu0
      %v668 = vadd.f32 0.0, %v667
      %v669 = vpop.f32.mrf.mxu0
      %v670 = vpop.f32.mrf.mxu0
      %v671 = vadd.f32 0.0, %v670
      %v672 = vpop.f32.mrf.mxu0
      %673 = vmatprep.mubr.bf16.mxu0 0
      %674 = vmatmul.mubr.bf16.gmra.mxu0 %v631
      %v675 = vpop.f32.mrf.mxu0
      %v676 = vadd.f32 0.0, %v675
      %v677 = vpop.f32.mrf.mxu0
      %v678 = vpop.f32.mrf.mxu0
      %v679 = vadd.f32 0.0, %v678
      %v680 = vpop.f32.mrf.mxu0
      %681 = vdwg.mxu0
      %v682 = vadd.f32 %v608, %v668
      %v683 = vadd.f32 %v609, %v671
      %v684 = vadd.f32 %v610, %v676
      %v685 = vadd.f32 %v611, %v679
      %686 = vrot.lane.b32.xlu0 %v280, 127
      %v687 = vpop.permute.xlu0 %686
      %688 = vrot.lane.b32.xlu0 %v281, 127
      %v689 = vpop.permute.xlu0 %688
      %v690 = vsel %vm450, 1, 0
      %vm691 = vcmp.eq.s32.totalorder %v690, 1
      %v692 = vsel %vm691, %v687, 0.0
      %v693 = vsel %vm691, %v689, 0.0
      %v694 = vld [vmem:[%s1 + $0x50] sm:$0xf]
      %v695 = vld [vmem:[%s1 + $0x54] sm:$0xf]
      %v696 = vld [vmem:[%s1 + $0x58] sm:$0xf]
      %v697 = vld [vmem:[%s1 + $0x5c] sm:$0xf]
      %v698 = vpack.c.bf16 %v693, %v692
      %v703 = vunpack.c.l.b16 %v694
      %v704 = vunpack.c.l.b16 %v695
      %v705 = vunpack.c.l.b16 %v696
      %v706 = vunpack.c.l.b16 %v697
      %v707 = vpack.c.b16 %v704, %v703
      %v708 = vpack.c.b16 %v706, %v705
      %v710 = vsel %vm325, %v707, 0
      %v713 = vsel %vm325, %v708, 0
      %715 = vmatprep.subr.bf16.mxu0 0
      %716 = vmatpush1.bf16.msra.mxu0 0
      %717 = vmatprep.subr.bf16.mxu0 0
      %718 = vmatpush1.bf16.msra.mxu0 0
      %719 = vmatprep.subr.bf16.mxu0 0
      %720 = vmatpush1.bf16.msra.mxu0 0
      %721 = vmatprep.subr.bf16.mxu0 0
      %722 = vmatpush1.bf16.msra.mxu0 0
      %723 = vmatprep.subr.bf16.mxu0 0
      %724 = vmatpush1.bf16.msra.mxu0 0
      %725 = vmatprep.subr.bf16.mxu0 0
      %726 = vmatpush1.bf16.msra.mxu0 0
      %727 = vmatprep.subr.bf16.mxu0 0
      %728 = vmatpush1.bf16.msra.mxu0 0
      %729 = vmatprep.subr.bf16.mxu0 0
      %730 = vmatpush1.bf16.msra.mxu0 %v698
      %731 = vmatprep.subr.bf16.mxu0 0
      %732 = vmatpush2.bf16.msra.mxu0 0
      %733 = vmatprep.subr.bf16.mxu0 0
      %734 = vmatpush2.bf16.msra.mxu0 0
      %735 = vmatprep.subr.bf16.mxu0 0
      %736 = vmatpush2.bf16.msra.mxu0 0
      %737 = vmatprep.subr.bf16.mxu0 0
      %738 = vmatpush2.bf16.msra.mxu0 0
      %739 = vmatprep.subr.bf16.mxu0 0
      %740 = vmatpush2.bf16.msra.mxu0 0
      %741 = vmatprep.subr.bf16.mxu0 0
      %742 = vmatpush2.bf16.msra.mxu0 0
      %743 = vmatprep.subr.bf16.mxu0 0
      %744 = vmatpush2.bf16.msra.mxu0 0
      %745 = vmatprep.subr.bf16.mxu0 0
      %746 = vmatpush2.bf16.msra.mxu0 0
      %747 = vmatprep.mubr.bf16.mxu0 0
      %748 = vmatmul.mubr.bf16.gmra.mxu0 %v710
      %v749 = vpop.f32.mrf.mxu0
      %v750 = vadd.f32 0.0, %v749
      %v751 = vpop.f32.mrf.mxu0
      %v752 = vpop.f32.mrf.mxu0
      %v753 = vadd.f32 0.0, %v752
      %v754 = vpop.f32.mrf.mxu0
      %755 = vmatprep.mubr.bf16.mxu0 0
      %756 = vmatmul.mubr.bf16.gmra.mxu0 %v713
      %v757 = vpop.f32.mrf.mxu0
      %v758 = vadd.f32 0.0, %v757
      %v759 = vpop.f32.mrf.mxu0
      %v760 = vpop.f32.mrf.mxu0
      %v761 = vadd.f32 0.0, %v760
      %v762 = vpop.f32.mrf.mxu0
      %763 = vdwg.mxu0
      %v764 = vadd.f32 %v682, %v750
      %v765 = vadd.f32 %v683, %v753
      %v766 = vadd.f32 %v684, %v758
      %v767 = vadd.f32 %v685, %v761
      %768 = vrot.lane.b32.xlu0 %v280, 125
      %v769 = vpop.permute.xlu0 %768
      %770 = vrot.lane.b32.xlu0 %v281, 125
      %v771 = vpop.permute.xlu0 %770
      %vm772 = vcmp.lt.s32.totalorder %v284, 3
      %vm773 = vmand %vm772, %vm291
      %v774 = vsel %vm773, 1, 0
      %vm775 = vcmp.eq.s32.totalorder %v774, 1
      %v776 = vsel %vm775, %v769, 0.0
      %v777 = vsel %vm775, %v771, 0.0
      %v778 = vld [vmem:[%s1 + $0x60] sm:$0xf]
      %v779 = vld [vmem:[%s1 + $0x64] sm:$0xf]
      %v780 = vld [vmem:[%s1 + $0x68] sm:$0xf]
      %v781 = vld [vmem:[%s1 + $0x6c] sm:$0xf]
      %v782 = vpack.c.bf16 %v777, %v776
      %v787 = vunpack.c.l.b16 %v778
      %v788 = vunpack.c.l.b16 %v779
      %v789 = vunpack.c.l.b16 %v780
      %v790 = vunpack.c.l.b16 %v781
      %v791 = vpack.c.b16 %v788, %v787
      %v792 = vpack.c.b16 %v790, %v789
      %v794 = vsel %vm325, %v791, 0
      %v797 = vsel %vm325, %v792, 0
      %799 = vmatprep.subr.bf16.mxu0 0
      %800 = vmatpush1.bf16.msra.mxu0 0
      %801 = vmatprep.subr.bf16.mxu0 0
      %802 = vmatpush1.bf16.msra.mxu0 0
      %803 = vmatprep.subr.bf16.mxu0 0
      %804 = vmatpush1.bf16.msra.mxu0 0
      %805 = vmatprep.subr.bf16.mxu0 0
      %806 = vmatpush1.bf16.msra.mxu0 0
      %807 = vmatprep.subr.bf16.mxu0 0
      %808 = vmatpush1.bf16.msra.mxu0 0
      %809 = vmatprep.subr.bf16.mxu0 0
      %810 = vmatpush1.bf16.msra.mxu0 0
      %811 = vmatprep.subr.bf16.mxu0 0
      %812 = vmatpush1.bf16.msra.mxu0 0
      %813 = vmatprep.subr.bf16.mxu0 0
      %814 = vmatpush1.bf16.msra.mxu0 %v782
      %815 = vmatprep.subr.bf16.mxu0 0
      %816 = vmatpush2.bf16.msra.mxu0 0
      %817 = vmatprep.subr.bf16.mxu0 0
      %818 = vmatpush2.bf16.msra.mxu0 0
      %819 = vmatprep.subr.bf16.mxu0 0
      %820 = vmatpush2.bf16.msra.mxu0 0
      %821 = vmatprep.subr.bf16.mxu0 0
      %822 = vmatpush2.bf16.msra.mxu0 0
      %823 = vmatprep.subr.bf16.mxu0 0
      %824 = vmatpush2.bf16.msra.mxu0 0
      %825 = vmatprep.subr.bf16.mxu0 0
      %826 = vmatpush2.bf16.msra.mxu0 0
      %827 = vmatprep.subr.bf16.mxu0 0
      %828 = vmatpush2.bf16.msra.mxu0 0
      %829 = vmatprep.subr.bf16.mxu0 0
      %830 = vmatpush2.bf16.msra.mxu0 0
      %831 = vmatprep.mubr.bf16.mxu0 0
      %832 = vmatmul.mubr.bf16.gmra.mxu0 %v794
      %v833 = vpop.f32.mrf.mxu0
      %v834 = vadd.f32 0.0, %v833
      %v835 = vpop.f32.mrf.mxu0
      %v836 = vpop.f32.mrf.mxu0
      %v837 = vadd.f32 0.0, %v836
      %v838 = vpop.f32.mrf.mxu0
      %839 = vmatprep.mubr.bf16.mxu0 0
      %840 = vmatmul.mubr.bf16.gmra.mxu0 %v797
      %v841 = vpop.f32.mrf.mxu0
      %v842 = vadd.f32 0.0, %v841
      %v843 = vpop.f32.mrf.mxu0
      %v844 = vpop.f32.mrf.mxu0
      %v845 = vadd.f32 0.0, %v844
      %v846 = vpop.f32.mrf.mxu0
      %847 = vdwg.mxu0
      %v848 = vadd.f32 %v764, %v834
      %v849 = vadd.f32 %v765, %v837
      %v850 = vadd.f32 %v766, %v842
      %v851 = vadd.f32 %v767, %v845
      %852 = vrot.lane.b32.xlu0 %v280, 124
      %v853 = vpop.permute.xlu0 %852
      %854 = vrot.lane.b32.xlu0 %v281, 124
      %v855 = vpop.permute.xlu0 %854
      %v856 = vsel %vm772, 1, 0
      %vm857 = vcmp.eq.s32.totalorder %v856, 1
      %v858 = vsel %vm857, %v853, 0.0
      %v859 = vsel %vm857, %v855, 0.0
      %v860 = vld [vmem:[%s1 + $0x70] sm:$0xf]
      %v861 = vld [vmem:[%s1 + $0x74] sm:$0xf]
      %v862 = vld [vmem:[%s1 + $0x78] sm:$0xf]
      %v863 = vld [vmem:[%s1 + $0x7c] sm:$0xf]
      %v864 = vpack.c.bf16 %v859, %v858
      %v869 = vunpack.c.l.b16 %v860
      %v870 = vunpack.c.l.b16 %v861
      %v871 = vunpack.c.l.b16 %v862
      %v872 = vunpack.c.l.b16 %v863
      %v873 = vpack.c.b16 %v870, %v869
      %v874 = vpack.c.b16 %v872, %v871
      %v876 = vsel %vm325, %v873, 0
      %v879 = vsel %vm325, %v874, 0
      %881 = vmatprep.subr.bf16.mxu0 0
      %882 = vmatpush1.bf16.msra.mxu0 0
      %883 = vmatprep.subr.bf16.mxu0 0
      %884 = vmatpush1.bf16.msra.mxu0 0
      %885 = vmatprep.subr.bf16.mxu0 0
      %886 = vmatpush1.bf16.msra.mxu0 0
      %887 = vmatprep.subr.bf16.mxu0 0
      %888 = vmatpush1.bf16.msra.mxu0 0
      %889 = vmatprep.subr.bf16.mxu0 0
      %890 = vmatpush1.bf16.msra.mxu0 0
      %891 = vmatprep.subr.bf16.mxu0 0
      %892 = vmatpush1.bf16.msra.mxu0 0
      %893 = vmatprep.subr.bf16.mxu0 0
      %894 = vmatpush1.bf16.msra.mxu0 0
      %895 = vmatprep.subr.bf16.mxu0 0
      %896 = vmatpush1.bf16.msra.mxu0 %v864
      %897 = vmatprep.subr.bf16.mxu0 0
      %898 = vmatpush2.bf16.msra.mxu0 0
      %899 = vmatprep.subr.bf16.mxu0 0
      %900 = vmatpush2.bf16.msra.mxu0 0
      %901 = vmatprep.subr.bf16.mxu0 0
      %902 = vmatpush2.bf16.msra.mxu0 0
      %903 = vmatprep.subr.bf16.mxu0 0
      %904 = vmatpush2.bf16.msra.mxu0 0
      %905 = vmatprep.subr.bf16.mxu0 0
      %906 = vmatpush2.bf16.msra.mxu0 0
      %907 = vmatprep.subr.bf16.mxu0 0
      %908 = vmatpush2.bf16.msra.mxu0 0
      %909 = vmatprep.subr.bf16.mxu0 0
      %910 = vmatpush2.bf16.msra.mxu0 0
      %911 = vmatprep.subr.bf16.mxu0 0
      %912 = vmatpush2.bf16.msra.mxu0 0
      %913 = vmatprep.mubr.bf16.mxu0 0
      %914 = vmatmul.mubr.bf16.gmra.mxu0 %v876
      %v915 = vpop.f32.mrf.mxu0
      %v916 = vadd.f32 0.0, %v915
      %v917 = vpop.f32.mrf.mxu0
      %v918 = vpop.f32.mrf.mxu0
      %v919 = vadd.f32 0.0, %v918
      %v920 = vpop.f32.mrf.mxu0
      %921 = vmatprep.mubr.bf16.mxu0 0
      %922 = vmatmul.mubr.bf16.gmra.mxu0 %v879
      %v923 = vpop.f32.mrf.mxu0
      %v924 = vadd.f32 0.0, %v923
      %v925 = vpop.f32.mrf.mxu0
      %v926 = vpop.f32.mrf.mxu0
      %v927 = vadd.f32 0.0, %v926
      %v928 = vpop.f32.mrf.mxu0
      %929 = vdwg.mxu0
      %v930 = vadd.f32 %v848, %v916
      %v931 = vadd.f32 %v849, %v919
      %v932 = vadd.f32 %v850, %v924
      %v933 = vadd.f32 %v851, %v927
      %934 = vrot.lane.b32.xlu0 %v280, 123
      %v935 = vpop.permute.xlu0 %934
      %936 = vrot.lane.b32.xlu0 %v281, 123
      %v937 = vpop.permute.xlu0 %936
      %vm938 = vmand %vm772, %vm450
      %v939 = vsel %vm938, 1, 0
      %vm940 = vcmp.eq.s32.totalorder %v939, 1
      %v941 = vsel %vm940, %v935, 0.0
      %v942 = vsel %vm940, %v937, 0.0
      %v943 = vld [vmem:[%s1 + $0x80] sm:$0xf]
      %v944 = vld [vmem:[%s1 + $0x84] sm:$0xf]
      %v945 = vld [vmem:[%s1 + $0x88] sm:$0xf]
      %v946 = vld [vmem:[%s1 + $0x8c] sm:$0xf]
      %v947 = vpack.c.bf16 %v942, %v941
      %v952 = vunpack.c.l.b16 %v943
      %v953 = vunpack.c.l.b16 %v944
      %v954 = vunpack.c.l.b16 %v945
      %v955 = vunpack.c.l.b16 %v946
      %v956 = vpack.c.b16 %v953, %v952
      %v957 = vpack.c.b16 %v955, %v954
      %v959 = vsel %vm325, %v956, 0
      %v962 = vsel %vm325, %v957, 0
      %964 = vmatprep.subr.bf16.mxu0 0
      %965 = vmatpush1.bf16.msra.mxu0 0
      %966 = vmatprep.subr.bf16.mxu0 0
      %967 = vmatpush1.bf16.msra.mxu0 0
      %968 = vmatprep.subr.bf16.mxu0 0
      %969 = vmatpush1.bf16.msra.mxu0 0
      %970 = vmatprep.subr.bf16.mxu0 0
      %971 = vmatpush1.bf16.msra.mxu0 0
      %972 = vmatprep.subr.bf16.mxu0 0
      %973 = vmatpush1.bf16.msra.mxu0 0
      %974 = vmatprep.subr.bf16.mxu0 0
      %975 = vmatpush1.bf16.msra.mxu0 0
      %976 = vmatprep.subr.bf16.mxu0 0
      %977 = vmatpush1.bf16.msra.mxu0 0
      %978 = vmatprep.subr.bf16.mxu0 0
      %979 = vmatpush1.bf16.msra.mxu0 %v947
      %980 = vmatprep.subr.bf16.mxu0 0
      %981 = vmatpush2.bf16.msra.mxu0 0
      %982 = vmatprep.subr.bf16.mxu0 0
      %983 = vmatpush2.bf16.msra.mxu0 0
      %984 = vmatprep.subr.bf16.mxu0 0
      %985 = vmatpush2.bf16.msra.mxu0 0
      %986 = vmatprep.subr.bf16.mxu0 0
      %987 = vmatpush2.bf16.msra.mxu0 0
      %988 = vmatprep.subr.bf16.mxu0 0
      %989 = vmatpush2.bf16.msra.mxu0 0
      %990 = vmatprep.subr.bf16.mxu0 0
      %991 = vmatpush2.bf16.msra.mxu0 0
      %992 = vmatprep.subr.bf16.mxu0 0
      %993 = vmatpush2.bf16.msra.mxu0 0
      %994 = vmatprep.subr.bf16.mxu0 0
      %995 = vmatpush2.bf16.msra.mxu0 0
      %996 = vmatprep.mubr.bf16.mxu0 0
      %997 = vmatmul.mubr.bf16.gmra.mxu0 %v959
      %v998 = vpop.f32.mrf.mxu0
      %v999 = vadd.f32 0.0, %v998
      %v1000 = vpop.f32.mrf.mxu0
      %v1001 = vpop.f32.mrf.mxu0
      %v1002 = vadd.f32 0.0, %v1001
      %v1003 = vpop.f32.mrf.mxu0
      %1004 = vmatprep.mubr.bf16.mxu0 0
      %1005 = vmatmul.mubr.bf16.gmra.mxu0 %v962
      %v1006 = vpop.f32.mrf.mxu0
      %v1007 = vadd.f32 0.0, %v1006
      %v1008 = vpop.f32.mrf.mxu0
      %v1009 = vpop.f32.mrf.mxu0
      %v1010 = vadd.f32 0.0, %v1009
      %v1011 = vpop.f32.mrf.mxu0
      %1012 = vdwg.mxu0
      %v1013 = vadd.f32 %v930, %v999
      %v1014 = vadd.f32 %v931, %v1002
      %v1015 = vadd.f32 %v932, %v1007
      %v1016 = vadd.f32 %v933, %v1010
      %v1017 = vld [vmem:[%s2] sm:$0xff]
      %v1018 = vld [vmem:[%s2 + $0x8] sm:$0xff]
      %v1019 = vld [vmem:[%s2 + $0x10] sm:$0xff]
      %v1020 = vld [vmem:[%s2 + $0x18] sm:$0xff]
      %1022 = vset.pattern.permute.xlu0 0
      %1023 = vperm.xlu0 %1022, %v1017
      %v1024 = vpop.permute.xlu0 %1023
      %1027 = vset.pattern.permute.xlu0 0
      %1028 = vperm.xlu0 %1027, %v1018
      %v1029 = vpop.permute.xlu0 %1028
      %1032 = vset.pattern.permute.xlu0 0
      %1033 = vperm.xlu0 %1032, %v1019
      %v1034 = vpop.permute.xlu0 %1033
      %1037 = vset.pattern.permute.xlu0 0
      %1038 = vperm.xlu0 %1037, %v1020
      %v1039 = vpop.permute.xlu0 %1038
      %v1041 = vadd.f32 %v1013, %v1024
      %v1042 = vadd.f32 %v1014, %v1029
      %v1043 = vadd.f32 %v1015, %v1034
      %v1044 = vadd.f32 %v1016, %v1039
      %vm1045 = vcmp.gt.f32.partialorder %v1041, 0.0
      %vm1046 = vcmp.gt.f32.partialorder %v1042, 0.0
      %vm1047 = vcmp.gt.f32.partialorder %v1043, 0.0
      %vm1048 = vcmp.gt.f32.partialorder %v1044, 0.0
      %v1049 = vmin.f32 %v1041, 0.0
      %v1050 = vmin.f32 %v1042, 0.0
      %v1051 = vmin.f32 %v1043, 0.0
      %v1052 = vmin.f32 %v1044, 0.0
      %v1053 = vmul.f32 %v1049, 1.442695
      %v1054 = vpow.pop %v1053
      %v1055 = vmul.f32 %v1050, 1.442695
      %v1056 = vpow.pop %v1055
      %v1057 = vmul.f32 %v1051, 1.442695
      %v1058 = vpow.pop %v1057
      %v1059 = vmul.f32 %v1052, 1.442695
      %v1060 = vpow.pop %v1059
      %v1061 = vsub.f32 %v1054, 1.0
      %v1062 = vsub.f32 %v1056, 1.0
      %v1063 = vsub.f32 %v1058, 1.0
      %v1064 = vsub.f32 %v1060, 1.0
      %v1065 = vmul.f32 %v1061, 1.6732632
      %v1066 = vmul.f32 %v1062, 1.6732632
      %v1067 = vmul.f32 %v1063, 1.6732632
      %v1068 = vmul.f32 %v1064, 1.6732632
      %v1069 = vsel %vm1045, %v1041, %v1065
      %v1070 = vsel %vm1046, %v1042, %v1066
      %v1071 = vsel %vm1047, %v1043, %v1067
      %v1072 = vsel %vm1048, %v1044, %v1068
      %v1073 = vmul.f32 %v1069, 1.050701
      %v1074 = vmul.f32 %v1070, 1.050701
      %v1075 = vmul.f32 %v1071, 1.050701
      %v1076 = vmul.f32 %v1072, 1.050701
      %1077 = vrot.lane.b32.xlu0 %v1073, 5
      %v1078 = vpop.permute.xlu0 %1077
      %1079 = vrot.lane.b32.xlu0 %v1074, 5
      %v1080 = vpop.permute.xlu0 %1079
      %1081 = vrot.lane.b32.xlu0 %v1075, 5
      %v1082 = vpop.permute.xlu0 %1081
      %1083 = vrot.lane.b32.xlu0 %v1076, 5
      %v1084 = vpop.permute.xlu0 %1083
      %v1085 = vsel %vm294, %v1078, 0.0
      %v1086 = vsel %vm294, %v1080, 0.0
      %v1087 = vsel %vm294, %v1082, 0.0
      %v1088 = vsel %vm294, %v1084, 0.0
      %v1089 = vld [vmem:[%s3] sm:$0xf]
      %v1090 = vld [vmem:[%s3 + $0x4] sm:$0xf]
      %v1091 = vld [vmem:[%s3 + $0x8] sm:$0xf]
      %v1092 = vld [vmem:[%s3 + $0xc] sm:$0xf]
      %v1093 = vpack.c.bf16 %v1086, %v1085
      %v1094 = vpack.c.bf16 %v1088, %v1087
      %1095 = vrot.lane.b32.xlu0 %v1073, 4
      %v1096 = vpop.permute.xlu0 %1095
      %1097 = vrot.lane.b32.xlu0 %v1074, 4
      %v1098 = vpop.permute.xlu0 %1097
      %1099 = vrot.lane.b32.xlu0 %v1075, 4
      %v1100 = vpop.permute.xlu0 %1099
      %1101 = vrot.lane.b32.xlu0 %v1076, 4
      %v1102 = vpop.permute.xlu0 %1101
      %v1103 = vsel %vm307, %v1096, 0.0
      %v1104 = vsel %vm307, %v1098, 0.0
      %v1105 = vsel %vm307, %v1100, 0.0
      %v1106 = vsel %vm307, %v1102, 0.0
      %v1107 = vld [vmem:[%s3 + $0x10] sm:$0xf]
      %v1108 = vld [vmem:[%s3 + $0x14] sm:$0xf]
      %v1109 = vld [vmem:[%s3 + $0x18] sm:$0xf]
      %v1110 = vld [vmem:[%s3 + $0x1c] sm:$0xf]
      %v1111 = vpack.c.bf16 %v1104, %v1103
      %v1112 = vpack.c.bf16 %v1106, %v1105
      %v1117 = vunpack.c.l.b16 %v1107
      %v1118 = vunpack.c.l.b16 %v1108
      %v1119 = vunpack.c.l.b16 %v1109
      %v1120 = vunpack.c.l.b16 %v1110
      %v1121 = vpack.c.b16 %v1118, %v1117
      %v1122 = vpack.c.b16 %v1120, %v1119
      %vm1123 = vcmask 261120
      %v1125 = vsel %vm1123, %v1121, 0
      %v1128 = vsel %vm1123, %v1122, 0
      %1130 = vmatprep.subr.bf16.mxu0 0
      %1131 = vmatpush1.bf16.msra.mxu0 0
      %1132 = vmatprep.subr.bf16.mxu0 0
      %1133 = vmatpush1.bf16.msra.mxu0 0
      %1134 = vmatprep.subr.bf16.mxu0 0
      %1135 = vmatpush1.bf16.msra.mxu0 0
      %1136 = vmatprep.subr.bf16.mxu0 0
      %1137 = vmatpush1.bf16.msra.mxu0 0
      %1138 = vmatprep.subr.bf16.mxu0 0
      %1139 = vmatpush1.bf16.msra.mxu0 0
      %1140 = vmatprep.subr.bf16.mxu0 0
      %1141 = vmatpush1.bf16.msra.mxu0 0
      %1142 = vmatprep.subr.bf16.mxu0 0
      %1143 = vmatpush1.bf16.msra.mxu0 %v1112
      %1144 = vmatprep.subr.bf16.mxu0 0
      %1145 = vmatpush1.bf16.msra.mxu0 %v1111
      %1146 = vmatprep.subr.bf16.mxu0 0
      %1147 = vmatpush2.bf16.msra.mxu0 0
      %1148 = vmatprep.subr.bf16.mxu0 0
      %1149 = vmatpush2.bf16.msra.mxu0 0
      %1150 = vmatprep.subr.bf16.mxu0 0
      %1151 = vmatpush2.bf16.msra.mxu0 0
      %1152 = vmatprep.subr.bf16.mxu0 0
      %1153 = vmatpush2.bf16.msra.mxu0 0
      %1154 = vmatprep.subr.bf16.mxu0 0
      %1155 = vmatpush2.bf16.msra.mxu0 0
      %1156 = vmatprep.subr.bf16.mxu0 0
      %1157 = vmatpush2.bf16.msra.mxu0 0
      %1158 = vmatprep.subr.bf16.mxu0 0
      %1159 = vmatpush2.bf16.msra.mxu0 0
      %1160 = vmatprep.subr.bf16.mxu0 0
      %1161 = vmatpush2.bf16.msra.mxu0 0
      %1162 = vmatprep.mubr.bf16.mxu0 0
      %1163 = vmatmul.mubr.bf16.gmra.mxu0 %v1125
      %v1164 = vpop.f32.mrf.mxu0
      %v1165 = vadd.f32 0.0, %v1164
      %v1166 = vpop.f32.mrf.mxu0
      %v1167 = vpop.f32.mrf.mxu0
      %v1168 = vadd.f32 0.0, %v1167
      %v1169 = vpop.f32.mrf.mxu0
      %1170 = vmatprep.mubr.bf16.mxu0 0
      %1171 = vmatmul.mubr.bf16.gmra.mxu0 %v1128
      %v1172 = vpop.f32.mrf.mxu0
      %v1173 = vadd.f32 0.0, %v1172
      %v1174 = vpop.f32.mrf.mxu0
      %v1175 = vpop.f32.mrf.mxu0
      %v1176 = vadd.f32 0.0, %v1175
      %v1177 = vpop.f32.mrf.mxu0
      %1178 = vdwg.mxu0
      %v1183 = vunpack.c.l.b16 %v1089
      %v1184 = vunpack.c.l.b16 %v1090
      %v1185 = vunpack.c.l.b16 %v1091
      %v1186 = vunpack.c.l.b16 %v1092
      %v1187 = vpack.c.b16 %v1184, %v1183
      %v1188 = vpack.c.b16 %v1186, %v1185
      %v1190 = vsel %vm1123, %v1187, 0
      %v1193 = vsel %vm1123, %v1188, 0
      %1195 = vmatprep.subr.bf16.mxu0 0
      %1196 = vmatpush1.bf16.msra.mxu0 0
      %1197 = vmatprep.subr.bf16.mxu0 0
      %1198 = vmatpush1.bf16.msra.mxu0 0
      %1199 = vmatprep.subr.bf16.mxu0 0
      %1200 = vmatpush1.bf16.msra.mxu0 0
      %1201 = vmatprep.subr.bf16.mxu0 0
      %1202 = vmatpush1.bf16.msra.mxu0 0
      %1203 = vmatprep.subr.bf16.mxu0 0
      %1204 = vmatpush1.bf16.msra.mxu0 0
      %1205 = vmatprep.subr.bf16.mxu0 0
      %1206 = vmatpush1.bf16.msra.mxu0 0
      %1207 = vmatprep.subr.bf16.mxu0 0
      %1208 = vmatpush1.bf16.msra.mxu0 %v1094
      %1209 = vmatprep.subr.bf16.mxu0 0
      %1210 = vmatpush1.bf16.msra.mxu0 %v1093
      %1211 = vmatprep.subr.bf16.mxu0 0
      %1212 = vmatpush2.bf16.msra.mxu0 0
      %1213 = vmatprep.subr.bf16.mxu0 0
      %1214 = vmatpush2.bf16.msra.mxu0 0
      %1215 = vmatprep.subr.bf16.mxu0 0
      %1216 = vmatpush2.bf16.msra.mxu0 0
      %1217 = vmatprep.subr.bf16.mxu0 0
      %1218 = vmatpush2.bf16.msra.mxu0 0
      %1219 = vmatprep.subr.bf16.mxu0 0
      %1220 = vmatpush2.bf16.msra.mxu0 0
      %1221 = vmatprep.subr.bf16.mxu0 0
      %1222 = vmatpush2.bf16.msra.mxu0 0
      %1223 = vmatprep.subr.bf16.mxu0 0
      %1224 = vmatpush2.bf16.msra.mxu0 0
      %1225 = vmatprep.subr.bf16.mxu0 0
      %1226 = vmatpush2.bf16.msra.mxu0 0
      %1227 = vmatprep.mubr.bf16.mxu0 0
      %1228 = vmatmul.mubr.bf16.gmra.mxu0 %v1190
      %v1229 = vpop.f32.mrf.mxu0
      %v1230 = vadd.f32 %v1165, %v1229
      %v1231 = vpop.f32.mrf.mxu0
      %v1232 = vpop.f32.mrf.mxu0
      %v1233 = vadd.f32 %v1168, %v1232
      %v1234 = vpop.f32.mrf.mxu0
      %1235 = vmatprep.mubr.bf16.mxu0 0
      %1236 = vmatmul.mubr.bf16.gmra.mxu0 %v1193
      %v1237 = vpop.f32.mrf.mxu0
      %v1238 = vadd.f32 %v1173, %v1237
      %v1239 = vpop.f32.mrf.mxu0
      %v1240 = vpop.f32.mrf.mxu0
      %v1241 = vadd.f32 %v1176, %v1240
      %v1242 = vpop.f32.mrf.mxu0
      %1243 = vdwg.mxu0
      %1244 = vrot.lane.b32.xlu0 %v1073, 3
      %v1245 = vpop.permute.xlu0 %1244
      %1246 = vrot.lane.b32.xlu0 %v1074, 3
      %v1247 = vpop.permute.xlu0 %1246
      %1248 = vrot.lane.b32.xlu0 %v1075, 3
      %v1249 = vpop.permute.xlu0 %1248
      %1250 = vrot.lane.b32.xlu0 %v1076, 3
      %v1251 = vpop.permute.xlu0 %1250
      %v1252 = vsel %vm453, %v1245, 0.0
      %v1253 = vsel %vm453, %v1247, 0.0
      %v1254 = vsel %vm453, %v1249, 0.0
      %v1255 = vsel %vm453, %v1251, 0.0
      %v1256 = vld [vmem:[%s3 + $0x20] sm:$0xf]
      %v1257 = vld [vmem:[%s3 + $0x24] sm:$0xf]
      %v1258 = vld [vmem:[%s3 + $0x28] sm:$0xf]
      %v1259 = vld [vmem:[%s3 + $0x2c] sm:$0xf]
      %v1260 = vpack.c.bf16 %v1253, %v1252
      %v1261 = vpack.c.bf16 %v1255, %v1254
      %v1266 = vunpack.c.l.b16 %v1256
      %v1267 = vunpack.c.l.b16 %v1257
      %v1268 = vunpack.c.l.b16 %v1258
      %v1269 = vunpack.c.l.b16 %v1259
      %v1270 = vpack.c.b16 %v1267, %v1266
      %v1271 = vpack.c.b16 %v1269, %v1268
      %v1273 = vsel %vm1123, %v1270, 0
      %v1276 = vsel %vm1123, %v1271, 0
      %1278 = vmatprep.subr.bf16.mxu0 0
      %1279 = vmatpush1.bf16.msra.mxu0 0
      %1280 = vmatprep.subr.bf16.mxu0 0
      %1281 = vmatpush1.bf16.msra.mxu0 0
      %1282 = vmatprep.subr.bf16.mxu0 0
      %1283 = vmatpush1.bf16.msra.mxu0 0
      %1284 = vmatprep.subr.bf16.mxu0 0
      %1285 = vmatpush1.bf16.msra.mxu0 0
      %1286 = vmatprep.subr.bf16.mxu0 0
      %1287 = vmatpush1.bf16.msra.mxu0 0
      %1288 = vmatprep.subr.bf16.mxu0 0
      %1289 = vmatpush1.bf16.msra.mxu0 0
      %1290 = vmatprep.subr.bf16.mxu0 0
      %1291 = vmatpush1.bf16.msra.mxu0 %v1261
      %1292 = vmatprep.subr.bf16.mxu0 0
      %1293 = vmatpush1.bf16.msra.mxu0 %v1260
      %1294 = vmatprep.subr.bf16.mxu0 0
      %1295 = vmatpush2.bf16.msra.mxu0 0
      %1296 = vmatprep.subr.bf16.mxu0 0
      %1297 = vmatpush2.bf16.msra.mxu0 0
      %1298 = vmatprep.subr.bf16.mxu0 0
      %1299 = vmatpush2.bf16.msra.mxu0 0
      %1300 = vmatprep.subr.bf16.mxu0 0
      %1301 = vmatpush2.bf16.msra.mxu0 0
      %1302 = vmatprep.subr.bf16.mxu0 0
      %1303 = vmatpush2.bf16.msra.mxu0 0
      %1304 = vmatprep.subr.bf16.mxu0 0
      %1305 = vmatpush2.bf16.msra.mxu0 0
      %1306 = vmatprep.subr.bf16.mxu0 0
      %1307 = vmatpush2.bf16.msra.mxu0 0
      %1308 = vmatprep.subr.bf16.mxu0 0
      %1309 = vmatpush2.bf16.msra.mxu0 0
      %1310 = vmatprep.mubr.bf16.mxu0 0
      %1311 = vmatmul.mubr.bf16.gmra.mxu0 %v1273
      %v1312 = vpop.f32.mrf.mxu0
      %v1313 = vadd.f32 0.0, %v1312
      %v1314 = vpop.f32.mrf.mxu0
      %v1315 = vpop.f32.mrf.mxu0
      %v1316 = vadd.f32 0.0, %v1315
      %v1317 = vpop.f32.mrf.mxu0
      %1318 = vmatprep.mubr.bf16.mxu0 0
      %1319 = vmatmul.mubr.bf16.gmra.mxu0 %v1276
      %v1320 = vpop.f32.mrf.mxu0
      %v1321 = vadd.f32 0.0, %v1320
      %v1322 = vpop.f32.mrf.mxu0
      %v1323 = vpop.f32.mrf.mxu0
      %v1324 = vadd.f32 0.0, %v1323
      %v1325 = vpop.f32.mrf.mxu0
      %1326 = vdwg.mxu0
      %v1327 = vadd.f32 %v1230, %v1313
      %v1328 = vadd.f32 %v1233, %v1316
      %v1329 = vadd.f32 %v1238, %v1321
      %v1330 = vadd.f32 %v1241, %v1324
      %1331 = vrot.lane.b32.xlu0 %v1073, 1
      %v1332 = vpop.permute.xlu0 %1331
      %1333 = vrot.lane.b32.xlu0 %v1074, 1
      %v1334 = vpop.permute.xlu0 %1333
      %1335 = vrot.lane.b32.xlu0 %v1075, 1
      %v1336 = vpop.permute.xlu0 %1335
      %1337 = vrot.lane.b32.xlu0 %v1076, 1
      %v1338 = vpop.permute.xlu0 %1337
      %v1339 = vsel %vm535, %v1332, 0.0
      %v1340 = vsel %vm535, %v1334, 0.0
      %v1341 = vsel %vm535, %v1336, 0.0
      %v1342 = vsel %vm535, %v1338, 0.0
      %v1343 = vld [vmem:[%s3 + $0x30] sm:$0xf]
      %v1344 = vld [vmem:[%s3 + $0x34] sm:$0xf]
      %v1345 = vld [vmem:[%s3 + $0x38] sm:$0xf]
      %v1346 = vld [vmem:[%s3 + $0x3c] sm:$0xf]
      %v1347 = vpack.c.bf16 %v1340, %v1339
      %v1348 = vpack.c.bf16 %v1342, %v1341
      %v1353 = vunpack.c.l.b16 %v1343
      %v1354 = vunpack.c.l.b16 %v1344
      %v1355 = vunpack.c.l.b16 %v1345
      %v1356 = vunpack.c.l.b16 %v1346
      %v1357 = vpack.c.b16 %v1354, %v1353
      %v1358 = vpack.c.b16 %v1356, %v1355
      %v1360 = vsel %vm1123, %v1357, 0
      %v1363 = vsel %vm1123, %v1358, 0
      %1365 = vmatprep.subr.bf16.mxu0 0
      %1366 = vmatpush1.bf16.msra.mxu0 0
      %1367 = vmatprep.subr.bf16.mxu0 0
      %1368 = vmatpush1.bf16.msra.mxu0 0
      %1369 = vmatprep.subr.bf16.mxu0 0
      %1370 = vmatpush1.bf16.msra.mxu0 0
      %1371 = vmatprep.subr.bf16.mxu0 0
      %1372 = vmatpush1.bf16.msra.mxu0 0
      %1373 = vmatprep.subr.bf16.mxu0 0
      %1374 = vmatpush1.bf16.msra.mxu0 0
      %1375 = vmatprep.subr.bf16.mxu0 0
      %1376 = vmatpush1.bf16.msra.mxu0 0
      %1377 = vmatprep.subr.bf16.mxu0 0
      %1378 = vmatpush1.bf16.msra.mxu0 %v1348
      %1379 = vmatprep.subr.bf16.mxu0 0
      %1380 = vmatpush1.bf16.msra.mxu0 %v1347
      %1381 = vmatprep.subr.bf16.mxu0 0
      %1382 = vmatpush2.bf16.msra.mxu0 0
      %1383 = vmatprep.subr.bf16.mxu0 0
      %1384 = vmatpush2.bf16.msra.mxu0 0
      %1385 = vmatprep.subr.bf16.mxu0 0
      %1386 = vmatpush2.bf16.msra.mxu0 0
      %1387 = vmatprep.subr.bf16.mxu0 0
      %1388 = vmatpush2.bf16.msra.mxu0 0
      %1389 = vmatprep.subr.bf16.mxu0 0
      %1390 = vmatpush2.bf16.msra.mxu0 0
      %1391 = vmatprep.subr.bf16.mxu0 0
      %1392 = vmatpush2.bf16.msra.mxu0 0
      %1393 = vmatprep.subr.bf16.mxu0 0
      %1394 = vmatpush2.bf16.msra.mxu0 0
      %1395 = vmatprep.subr.bf16.mxu0 0
      %1396 = vmatpush2.bf16.msra.mxu0 0
      %1397 = vmatprep.mubr.bf16.mxu0 0
      %1398 = vmatmul.mubr.bf16.gmra.mxu0 %v1360
      %v1399 = vpop.f32.mrf.mxu0
      %v1400 = vadd.f32 0.0, %v1399
      %v1401 = vpop.f32.mrf.mxu0
      %v1402 = vpop.f32.mrf.mxu0
      %v1403 = vadd.f32 0.0, %v1402
      %v1404 = vpop.f32.mrf.mxu0
      %1405 = vmatprep.mubr.bf16.mxu0 0
      %1406 = vmatmul.mubr.bf16.gmra.mxu0 %v1363
      %v1407 = vpop.f32.mrf.mxu0
      %v1408 = vadd.f32 0.0, %v1407
      %v1409 = vpop.f32.mrf.mxu0
      %v1410 = vpop.f32.mrf.mxu0
      %v1411 = vadd.f32 0.0, %v1410
      %v1412 = vpop.f32.mrf.mxu0
      %1413 = vdwg.mxu0
      %v1414 = vadd.f32 %v1327, %v1400
      %v1415 = vadd.f32 %v1328, %v1403
      %v1416 = vadd.f32 %v1329, %v1408
      %v1417 = vadd.f32 %v1330, %v1411
      %v1418 = vld [vmem:[%s3 + $0x40] sm:$0xf]
      %v1419 = vld [vmem:[%s3 + $0x44] sm:$0xf]
      %v1420 = vld [vmem:[%s3 + $0x48] sm:$0xf]
      %v1421 = vld [vmem:[%s3 + $0x4c] sm:$0xf]
      %v1422 = vpack.c.bf16 %v1074, %v1073
      %v1423 = vpack.c.bf16 %v1076, %v1075
      %v1428 = vunpack.c.l.b16 %v1418
      %v1429 = vunpack.c.l.b16 %v1419
      %v1430 = vunpack.c.l.b16 %v1420
      %v1431 = vunpack.c.l.b16 %v1421
      %v1432 = vpack.c.b16 %v1429, %v1428
      %v1433 = vpack.c.b16 %v1431, %v1430
      %v1435 = vsel %vm1123, %v1432, 0
      %v1438 = vsel %vm1123, %v1433, 0
      %1440 = vmatprep.subr.bf16.mxu0 0
      %1441 = vmatpush1.bf16.msra.mxu0 0
      %1442 = vmatprep.subr.bf16.mxu0 0
      %1443 = vmatpush1.bf16.msra.mxu0 0
      %1444 = vmatprep.subr.bf16.mxu0 0
      %1445 = vmatpush1.bf16.msra.mxu0 0
      %1446 = vmatprep.subr.bf16.mxu0 0
      %1447 = vmatpush1.bf16.msra.mxu0 0
      %1448 = vmatprep.subr.bf16.mxu0 0
      %1449 = vmatpush1.bf16.msra.mxu0 0
      %1450 = vmatprep.subr.bf16.mxu0 0
      %1451 = vmatpush1.bf16.msra.mxu0 0
      %1452 = vmatprep.subr.bf16.mxu0 0
      %1453 = vmatpush1.bf16.msra.mxu0 %v1423
      %1454 = vmatprep.subr.bf16.mxu0 0
      %1455 = vmatpush1.bf16.msra.mxu0 %v1422
      %1456 = vmatprep.subr.bf16.mxu0 0
      %1457 = vmatpush2.bf16.msra.mxu0 0
      %1458 = vmatprep.subr.bf16.mxu0 0
      %1459 = vmatpush2.bf16.msra.mxu0 0
      %1460 = vmatprep.subr.bf16.mxu0 0
      %1461 = vmatpush2.bf16.msra.mxu0 0
      %1462 = vmatprep.subr.bf16.mxu0 0
      %1463 = vmatpush2.bf16.msra.mxu0 0
      %1464 = vmatprep.subr.bf16.mxu0 0
      %1465 = vmatpush2.bf16.msra.mxu0 0
      %1466 = vmatprep.subr.bf16.mxu0 0
      %1467 = vmatpush2.bf16.msra.mxu0 0
      %1468 = vmatprep.subr.bf16.mxu0 0
      %1469 = vmatpush2.bf16.msra.mxu0 0
      %1470 = vmatprep.subr.bf16.mxu0 0
      %1471 = vmatpush2.bf16.msra.mxu0 0
      %1472 = vmatprep.mubr.bf16.mxu0 0
      %1473 = vmatmul.mubr.bf16.gmra.mxu0 %v1435
      %v1474 = vpop.f32.mrf.mxu0
      %v1475 = vadd.f32 0.0, %v1474
      %v1476 = vpop.f32.mrf.mxu0
      %v1477 = vpop.f32.mrf.mxu0
      %v1478 = vadd.f32 0.0, %v1477
      %v1479 = vpop.f32.mrf.mxu0
      %1480 = vmatprep.mubr.bf16.mxu0 0
      %1481 = vmatmul.mubr.bf16.gmra.mxu0 %v1438
      %v1482 = vpop.f32.mrf.mxu0
      %v1483 = vadd.f32 0.0, %v1482
      %v1484 = vpop.f32.mrf.mxu0
      %v1485 = vpop.f32.mrf.mxu0
      %v1486 = vadd.f32 0.0, %v1485
      %v1487 = vpop.f32.mrf.mxu0
      %1488 = vdwg.mxu0
      %v1489 = vadd.f32 %v1414, %v1475
      %v1490 = vadd.f32 %v1415, %v1478
      %v1491 = vadd.f32 %v1416, %v1483
      %v1492 = vadd.f32 %v1417, %v1486
      %1493 = vrot.lane.b32.xlu0 %v1073, 127
      %v1494 = vpop.permute.xlu0 %1493
      %1495 = vrot.lane.b32.xlu0 %v1074, 127
      %v1496 = vpop.permute.xlu0 %1495
      %1497 = vrot.lane.b32.xlu0 %v1075, 127
      %v1498 = vpop.permute.xlu0 %1497
      %1499 = vrot.lane.b32.xlu0 %v1076, 127
      %v1500 = vpop.permute.xlu0 %1499
      %v1501 = vsel %vm691, %v1494, 0.0
      %v1502 = vsel %vm691, %v1496, 0.0
      %v1503 = vsel %vm691, %v1498, 0.0
      %v1504 = vsel %vm691, %v1500, 0.0
      %v1505 = vld [vmem:[%s3 + $0x50] sm:$0xf]
      %v1506 = vld [vmem:[%s3 + $0x54] sm:$0xf]
      %v1507 = vld [vmem:[%s3 + $0x58] sm:$0xf]
      %v1508 = vld [vmem:[%s3 + $0x5c] sm:$0xf]
      %v1509 = vpack.c.bf16 %v1502, %v1501
      %v1510 = vpack.c.bf16 %v1504, %v1503
      %v1515 = vunpack.c.l.b16 %v1505
      %v1516 = vunpack.c.l.b16 %v1506
      %v1517 = vunpack.c.l.b16 %v1507
      %v1518 = vunpack.c.l.b16 %v1508
      %v1519 = vpack.c.b16 %v1516, %v1515
      %v1520 = vpack.c.b16 %v1518, %v1517
      %v1522 = vsel %vm1123, %v1519, 0
      %v1525 = vsel %vm1123, %v1520, 0
      %1527 = vmatprep.subr.bf16.mxu0 0
      %1528 = vmatpush1.bf16.msra.mxu0 0
      %1529 = vmatprep.subr.bf16.mxu0 0
      %1530 = vmatpush1.bf16.msra.mxu0 0
      %1531 = vmatprep.subr.bf16.mxu0 0
      %1532 = vmatpush1.bf16.msra.mxu0 0
      %1533 = vmatprep.subr.bf16.mxu0 0
      %1534 = vmatpush1.bf16.msra.mxu0 0
      %1535 = vmatprep.subr.bf16.mxu0 0
      %1536 = vmatpush1.bf16.msra.mxu0 0
      %1537 = vmatprep.subr.bf16.mxu0 0
      %1538 = vmatpush1.bf16.msra.mxu0 0
      %1539 = vmatprep.subr.bf16.mxu0 0
      %1540 = vmatpush1.bf16.msra.mxu0 %v1510
      %1541 = vmatprep.subr.bf16.mxu0 0
      %1542 = vmatpush1.bf16.msra.mxu0 %v1509
      %1543 = vmatprep.subr.bf16.mxu0 0
      %1544 = vmatpush2.bf16.msra.mxu0 0
      %1545 = vmatprep.subr.bf16.mxu0 0
      %1546 = vmatpush2.bf16.msra.mxu0 0
      %1547 = vmatprep.subr.bf16.mxu0 0
      %1548 = vmatpush2.bf16.msra.mxu0 0
      %1549 = vmatprep.subr.bf16.mxu0 0
      %1550 = vmatpush2.bf16.msra.mxu0 0
      %1551 = vmatprep.subr.bf16.mxu0 0
      %1552 = vmatpush2.bf16.msra.mxu0 0
      %1553 = vmatprep.subr.bf16.mxu0 0
      %1554 = vmatpush2.bf16.msra.mxu0 0
      %1555 = vmatprep.subr.bf16.mxu0 0
      %1556 = vmatpush2.bf16.msra.mxu0 0
      %1557 = vmatprep.subr.bf16.mxu0 0
      %1558 = vmatpush2.bf16.msra.mxu0 0
      %1559 = vmatprep.mubr.bf16.mxu0 0
      %1560 = vmatmul.mubr.bf16.gmra.mxu0 %v1522
      %v1561 = vpop.f32.mrf.mxu0
      %v1562 = vadd.f32 0.0, %v1561
      %v1563 = vpop.f32.mrf.mxu0
      %v1564 = vpop.f32.mrf.mxu0
      %v1565 = vadd.f32 0.0, %v1564
      %v1566 = vpop.f32.mrf.mxu0
      %1567 = vmatprep.mubr.bf16.mxu0 0
      %1568 = vmatmul.mubr.bf16.gmra.mxu0 %v1525
      %v1569 = vpop.f32.mrf.mxu0
      %v1570 = vadd.f32 0.0, %v1569
      %v1571 = vpop.f32.mrf.mxu0
      %v1572 = vpop.f32.mrf.mxu0
      %v1573 = vadd.f32 0.0, %v1572
      %v1574 = vpop.f32.mrf.mxu0
      %1575 = vdwg.mxu0
      %v1576 = vadd.f32 %v1489, %v1562
      %v1577 = vadd.f32 %v1490, %v1565
      %v1578 = vadd.f32 %v1491, %v1570
      %v1579 = vadd.f32 %v1492, %v1573
      %1580 = vrot.lane.b32.xlu0 %v1073, 125
      %v1581 = vpop.permute.xlu0 %1580
      %1582 = vrot.lane.b32.xlu0 %v1074, 125
      %v1583 = vpop.permute.xlu0 %1582
      %1584 = vrot.lane.b32.xlu0 %v1075, 125
      %v1585 = vpop.permute.xlu0 %1584
      %1586 = vrot.lane.b32.xlu0 %v1076, 125
      %v1587 = vpop.permute.xlu0 %1586
      %v1588 = vsel %vm775, %v1581, 0.0
      %v1589 = vsel %vm775, %v1583, 0.0
      %v1590 = vsel %vm775, %v1585, 0.0
      %v1591 = vsel %vm775, %v1587, 0.0
      %v1592 = vld [vmem:[%s3 + $0x60] sm:$0xf]
      %v1593 = vld [vmem:[%s3 + $0x64] sm:$0xf]
      %v1594 = vld [vmem:[%s3 + $0x68] sm:$0xf]
      %v1595 = vld [vmem:[%s3 + $0x6c] sm:$0xf]
      %v1596 = vpack.c.bf16 %v1589, %v1588
      %v1597 = vpack.c.bf16 %v1591, %v1590
      %v1602 = vunpack.c.l.b16 %v1592
      %v1603 = vunpack.c.l.b16 %v1593
      %v1604 = vunpack.c.l.b16 %v1594
      %v1605 = vunpack.c.l.b16 %v1595
      %v1606 = vpack.c.b16 %v1603, %v1602
      %v1607 = vpack.c.b16 %v1605, %v1604
      %v1609 = vsel %vm1123, %v1606, 0
      %v1612 = vsel %vm1123, %v1607, 0
      %1614 = vmatprep.subr.bf16.mxu0 0
      %1615 = vmatpush1.bf16.msra.mxu0 0
      %1616 = vmatprep.subr.bf16.mxu0 0
      %1617 = vmatpush1.bf16.msra.mxu0 0
      %1618 = vmatprep.subr.bf16.mxu0 0
      %1619 = vmatpush1.bf16.msra.mxu0 0
      %1620 = vmatprep.subr.bf16.mxu0 0
      %1621 = vmatpush1.bf16.msra.mxu0 0
      %1622 = vmatprep.subr.bf16.mxu0 0
      %1623 = vmatpush1.bf16.msra.mxu0 0
      %1624 = vmatprep.subr.bf16.mxu0 0
      %1625 = vmatpush1.bf16.msra.mxu0 0
      %1626 = vmatprep.subr.bf16.mxu0 0
      %1627 = vmatpush1.bf16.msra.mxu0 %v1597
      %1628 = vmatprep.subr.bf16.mxu0 0
      %1629 = vmatpush1.bf16.msra.mxu0 %v1596
      %1630 = vmatprep.subr.bf16.mxu0 0
      %1631 = vmatpush2.bf16.msra.mxu0 0
      %1632 = vmatprep.subr.bf16.mxu0 0
      %1633 = vmatpush2.bf16.msra.mxu0 0
      %1634 = vmatprep.subr.bf16.mxu0 0
      %1635 = vmatpush2.bf16.msra.mxu0 0
      %1636 = vmatprep.subr.bf16.mxu0 0
      %1637 = vmatpush2.bf16.msra.mxu0 0
      %1638 = vmatprep.subr.bf16.mxu0 0
      %1639 = vmatpush2.bf16.msra.mxu0 0
      %1640 = vmatprep.subr.bf16.mxu0 0
      %1641 = vmatpush2.bf16.msra.mxu0 0
      %1642 = vmatprep.subr.bf16.mxu0 0
      %1643 = vmatpush2.bf16.msra.mxu0 0
      %1644 = vmatprep.subr.bf16.mxu0 0
      %1645 = vmatpush2.bf16.msra.mxu0 0
      %1646 = vmatprep.mubr.bf16.mxu0 0
      %1647 = vmatmul.mubr.bf16.gmra.mxu0 %v1609
      %v1648 = vpop.f32.mrf.mxu0
      %v1649 = vadd.f32 0.0, %v1648
      %v1650 = vpop.f32.mrf.mxu0
      %v1651 = vpop.f32.mrf.mxu0
      %v1652 = vadd.f32 0.0, %v1651
      %v1653 = vpop.f32.mrf.mxu0
      %1654 = vmatprep.mubr.bf16.mxu0 0
      %1655 = vmatmul.mubr.bf16.gmra.mxu0 %v1612
      %v1656 = vpop.f32.mrf.mxu0
      %v1657 = vadd.f32 0.0, %v1656
      %v1658 = vpop.f32.mrf.mxu0
      %v1659 = vpop.f32.mrf.mxu0
      %v1660 = vadd.f32 0.0, %v1659
      %v1661 = vpop.f32.mrf.mxu0
      %1662 = vdwg.mxu0
      %v1663 = vadd.f32 %v1576, %v1649
      %v1664 = vadd.f32 %v1577, %v1652
      %v1665 = vadd.f32 %v1578, %v1657
      %v1666 = vadd.f32 %v1579, %v1660
      %1667 = vrot.lane.b32.xlu0 %v1073, 124
      %v1668 = vpop.permute.xlu0 %1667
      %1669 = vrot.lane.b32.xlu0 %v1074, 124
      %v1670 = vpop.permute.xlu0 %1669
      %1671 = vrot.lane.b32.xlu0 %v1075, 124
      %v1672 = vpop.permute.xlu0 %1671
      %1673 = vrot.lane.b32.xlu0 %v1076, 124
      %v1674 = vpop.permute.xlu0 %1673
      %v1675 = vsel %vm857, %v1668, 0.0
      %v1676 = vsel %vm857, %v1670, 0.0
      %v1677 = vsel %vm857, %v1672, 0.0
      %v1678 = vsel %vm857, %v1674, 0.0
      %v1679 = vld [vmem:[%s3 + $0x70] sm:$0xf]
      %v1680 = vld [vmem:[%s3 + $0x74] sm:$0xf]
      %v1681 = vld [vmem:[%s3 + $0x78] sm:$0xf]
      %v1682 = vld [vmem:[%s3 + $0x7c] sm:$0xf]
      %v1683 = vpack.c.bf16 %v1676, %v1675
      %v1684 = vpack.c.bf16 %v1678, %v1677
      %v1689 = vunpack.c.l.b16 %v1679
      %v1690 = vunpack.c.l.b16 %v1680
      %v1691 = vunpack.c.l.b16 %v1681
      %v1692 = vunpack.c.l.b16 %v1682
      %v1693 = vpack.c.b16 %v1690, %v1689
      %v1694 = vpack.c.b16 %v1692, %v1691
      %v1696 = vsel %vm1123, %v1693, 0
      %v1699 = vsel %vm1123, %v1694, 0
      %1701 = vmatprep.subr.bf16.mxu0 0
      %1702 = vmatpush1.bf16.msra.mxu0 0
      %1703 = vmatprep.subr.bf16.mxu0 0
      %1704 = vmatpush1.bf16.msra.mxu0 0
      %1705 = vmatprep.subr.bf16.mxu0 0
      %1706 = vmatpush1.bf16.msra.mxu0 0
      %1707 = vmatprep.subr.bf16.mxu0 0
      %1708 = vmatpush1.bf16.msra.mxu0 0
      %1709 = vmatprep.subr.bf16.mxu0 0
      %1710 = vmatpush1.bf16.msra.mxu0 0
      %1711 = vmatprep.subr.bf16.mxu0 0
      %1712 = vmatpush1.bf16.msra.mxu0 0
      %1713 = vmatprep.subr.bf16.mxu0 0
      %1714 = vmatpush1.bf16.msra.mxu0 %v1684
      %1715 = vmatprep.subr.bf16.mxu0 0
      %1716 = vmatpush1.bf16.msra.mxu0 %v1683
      %1717 = vmatprep.subr.bf16.mxu0 0
      %1718 = vmatpush2.bf16.msra.mxu0 0
      %1719 = vmatprep.subr.bf16.mxu0 0
      %1720 = vmatpush2.bf16.msra.mxu0 0
      %1721 = vmatprep.subr.bf16.mxu0 0
      %1722 = vmatpush2.bf16.msra.mxu0 0
      %1723 = vmatprep.subr.bf16.mxu0 0
      %1724 = vmatpush2.bf16.msra.mxu0 0
      %1725 = vmatprep.subr.bf16.mxu0 0
      %1726 = vmatpush2.bf16.msra.mxu0 0
      %1727 = vmatprep.subr.bf16.mxu0 0
      %1728 = vmatpush2.bf16.msra.mxu0 0
      %1729 = vmatprep.subr.bf16.mxu0 0
      %1730 = vmatpush2.bf16.msra.mxu0 0
      %1731 = vmatprep.subr.bf16.mxu0 0
      %1732 = vmatpush2.bf16.msra.mxu0 0
      %1733 = vmatprep.mubr.bf16.mxu0 0
      %1734 = vmatmul.mubr.bf16.gmra.mxu0 %v1696
      %v1735 = vpop.f32.mrf.mxu0
      %v1736 = vadd.f32 0.0, %v1735
      %v1737 = vpop.f32.mrf.mxu0
      %v1738 = vpop.f32.mrf.mxu0
      %v1739 = vadd.f32 0.0, %v1738
      %v1740 = vpop.f32.mrf.mxu0
      %1741 = vmatprep.mubr.bf16.mxu0 0
      %1742 = vmatmul.mubr.bf16.gmra.mxu0 %v1699
      %v1743 = vpop.f32.mrf.mxu0
      %v1744 = vadd.f32 0.0, %v1743
      %v1745 = vpop.f32.mrf.mxu0
      %v1746 = vpop.f32.mrf.mxu0
      %v1747 = vadd.f32 0.0, %v1746
      %v1748 = vpop.f32.mrf.mxu0
      %1749 = vdwg.mxu0
      %v1750 = vadd.f32 %v1663, %v1736
      %v1751 = vadd.f32 %v1664, %v1739
      %v1752 = vadd.f32 %v1665, %v1744
      %v1753 = vadd.f32 %v1666, %v1747
      %1754 = vrot.lane.b32.xlu0 %v1073, 123
      %v1755 = vpop.permute.xlu0 %1754
      %1756 = vrot.lane.b32.xlu0 %v1074, 123
      %v1757 = vpop.permute.xlu0 %1756
      %1758 = vrot.lane.b32.xlu0 %v1075, 123
      %v1759 = vpop.permute.xlu0 %1758
      %1760 = vrot.lane.b32.xlu0 %v1076, 123
      %v1761 = vpop.permute.xlu0 %1760
      %v1762 = vsel %vm940, %v1755, 0.0
      %v1763 = vsel %vm940, %v1757, 0.0
      %v1764 = vsel %vm940, %v1759, 0.0
      %v1765 = vsel %vm940, %v1761, 0.0
      %v1766 = vld [vmem:[%s3 + $0x80] sm:$0xf]
      %v1767 = vld [vmem:[%s3 + $0x84] sm:$0xf]
      %v1768 = vld [vmem:[%s3 + $0x88] sm:$0xf]
      %v1769 = vld [vmem:[%s3 + $0x8c] sm:$0xf]
      %v1770 = vpack.c.bf16 %v1763, %v1762
      %v1771 = vpack.c.bf16 %v1765, %v1764
      %v1776 = vunpack.c.l.b16 %v1766
      %v1777 = vunpack.c.l.b16 %v1767
      %v1778 = vunpack.c.l.b16 %v1768
      %v1779 = vunpack.c.l.b16 %v1769
      %v1780 = vpack.c.b16 %v1777, %v1776
      %v1781 = vpack.c.b16 %v1779, %v1778
      %v1783 = vsel %vm1123, %v1780, 0
      %v1786 = vsel %vm1123, %v1781, 0
      %1788 = vmatprep.subr.bf16.mxu0 0
      %1789 = vmatpush1.bf16.msra.mxu0 0
      %1790 = vmatprep.subr.bf16.mxu0 0
      %1791 = vmatpush1.bf16.msra.mxu0 0
      %1792 = vmatprep.subr.bf16.mxu0 0
      %1793 = vmatpush1.bf16.msra.mxu0 0
      %1794 = vmatprep.subr.bf16.mxu0 0
      %1795 = vmatpush1.bf16.msra.mxu0 0
      %1796 = vmatprep.subr.bf16.mxu0 0
      %1797 = vmatpush1.bf16.msra.mxu0 0
      %1798 = vmatprep.subr.bf16.mxu0 0
      %1799 = vmatpush1.bf16.msra.mxu0 0
      %1800 = vmatprep.subr.bf16.mxu0 0
      %1801 = vmatpush1.bf16.msra.mxu0 %v1771
      %1802 = vmatprep.subr.bf16.mxu0 0
      %1803 = vmatpush1.bf16.msra.mxu0 %v1770
      %1804 = vmatprep.subr.bf16.mxu0 0
      %1805 = vmatpush2.bf16.msra.mxu0 0
      %1806 = vmatprep.subr.bf16.mxu0 0
      %1807 = vmatpush2.bf16.msra.mxu0 0
      %1808 = vmatprep.subr.bf16.mxu0 0
      %1809 = vmatpush2.bf16.msra.mxu0 0
      %1810 = vmatprep.subr.bf16.mxu0 0
      %1811 = vmatpush2.bf16.msra.mxu0 0
      %1812 = vmatprep.subr.bf16.mxu0 0
      %1813 = vmatpush2.bf16.msra.mxu0 0
      %1814 = vmatprep.subr.bf16.mxu0 0
      %1815 = vmatpush2.bf16.msra.mxu0 0
      %1816 = vmatprep.subr.bf16.mxu0 0
      %1817 = vmatpush2.bf16.msra.mxu0 0
      %1818 = vmatprep.subr.bf16.mxu0 0
      %1819 = vmatpush2.bf16.msra.mxu0 0
      %1820 = vmatprep.mubr.bf16.mxu0 0
      %1821 = vmatmul.mubr.bf16.gmra.mxu0 %v1783
      %v1822 = vpop.f32.mrf.mxu0
      %v1823 = vadd.f32 0.0, %v1822
      %v1824 = vpop.f32.mrf.mxu0
      %v1825 = vpop.f32.mrf.mxu0
      %v1826 = vadd.f32 0.0, %v1825
      %v1827 = vpop.f32.mrf.mxu0
      %1828 = vmatprep.mubr.bf16.mxu0 0
      %1829 = vmatmul.mubr.bf16.gmra.mxu0 %v1786
      %v1830 = vpop.f32.mrf.mxu0
      %v1831 = vadd.f32 0.0, %v1830
      %v1832 = vpop.f32.mrf.mxu0
      %v1833 = vpop.f32.mrf.mxu0
      %v1834 = vadd.f32 0.0, %v1833
      %v1835 = vpop.f32.mrf.mxu0
      %1836 = vdwg.mxu0
      %v1837 = vadd.f32 %v1750, %v1823
      %v1838 = vadd.f32 %v1751, %v1826
      %v1839 = vadd.f32 %v1752, %v1831
      %v1840 = vadd.f32 %v1753, %v1834
      %v1841 = vld [vmem:[%s4] sm:$0xff]
      %v1842 = vld [vmem:[%s4 + $0x8] sm:$0xff]
      %v1843 = vld [vmem:[%s4 + $0x10] sm:$0xff]
      %v1844 = vld [vmem:[%s4 + $0x18] sm:$0xff]
      %1846 = vset.pattern.permute.xlu0 0
      %1847 = vperm.xlu0 %1846, %v1841
      %v1848 = vpop.permute.xlu0 %1847
      %1851 = vset.pattern.permute.xlu0 0
      %1852 = vperm.xlu0 %1851, %v1842
      %v1853 = vpop.permute.xlu0 %1852
      %1856 = vset.pattern.permute.xlu0 0
      %1857 = vperm.xlu0 %1856, %v1843
      %v1858 = vpop.permute.xlu0 %1857
      %1861 = vset.pattern.permute.xlu0 0
      %1862 = vperm.xlu0 %1861, %v1844
      %v1863 = vpop.permute.xlu0 %1862
      %v1865 = vadd.f32 %v1837, %v1848
      %v1866 = vadd.f32 %v1838, %v1853
      %v1867 = vadd.f32 %v1839, %v1858
      %v1868 = vadd.f32 %v1840, %v1863
      %v1869 = vld [vmem:[%s5] sm:$0xf]
      %v1870 = vld [vmem:[%s5 + $0x4] sm:$0xf]
      %v1871 = vld [vmem:[%s5 + $0x8] sm:$0xf]
      %v1872 = vld [vmem:[%s5 + $0xc] sm:$0xf]
      %v1877 = vunpack.c.l.b16 %v1869
      %v1878 = vunpack.c.l.b16 %v1870
      %v1879 = vunpack.c.l.b16 %v1871
      %v1880 = vunpack.c.l.b16 %v1872
      %v1881 = vpack.c.b16 %v1878, %v1877
      %v1882 = vpack.c.b16 %v1880, %v1879
      %v1884 = vsel %vm325, %v1881, 0
      %v1887 = vsel %vm325, %v1882, 0
      %1889 = vmatprep.subr.bf16.mxu0 0
      %1890 = vmatpush1.bf16.msra.mxu0 0
      %1891 = vmatprep.subr.bf16.mxu0 0
      %1892 = vmatpush1.bf16.msra.mxu0 0
      %1893 = vmatprep.subr.bf16.mxu0 0
      %1894 = vmatpush1.bf16.msra.mxu0 0
      %1895 = vmatprep.subr.bf16.mxu0 0
      %1896 = vmatpush1.bf16.msra.mxu0 0
      %1897 = vmatprep.subr.bf16.mxu0 0
      %1898 = vmatpush1.bf16.msra.mxu0 0
      %1899 = vmatprep.subr.bf16.mxu0 0
      %1900 = vmatpush1.bf16.msra.mxu0 0
      %1901 = vmatprep.subr.bf16.mxu0 0
      %1902 = vmatpush1.bf16.msra.mxu0 0
      %1903 = vmatprep.subr.bf16.mxu0 0
      %1904 = vmatpush1.bf16.msra.mxu0 %v616
      %1905 = vmatprep.subr.bf16.mxu0 0
      %1906 = vmatpush2.bf16.msra.mxu0 0
      %1907 = vmatprep.subr.bf16.mxu0 0
      %1908 = vmatpush2.bf16.msra.mxu0 0
      %1909 = vmatprep.subr.bf16.mxu0 0
      %1910 = vmatpush2.bf16.msra.mxu0 0
      %1911 = vmatprep.subr.bf16.mxu0 0
      %1912 = vmatpush2.bf16.msra.mxu0 0
      %1913 = vmatprep.subr.bf16.mxu0 0
      %1914 = vmatpush2.bf16.msra.mxu0 0
      %1915 = vmatprep.subr.bf16.mxu0 0
      %1916 = vmatpush2.bf16.msra.mxu0 0
      %1917 = vmatprep.subr.bf16.mxu0 0
      %1918 = vmatpush2.bf16.msra.mxu0 0
      %1919 = vmatprep.subr.bf16.mxu0 0
      %1920 = vmatpush2.bf16.msra.mxu0 0
      %1921 = vmatprep.mubr.bf16.mxu0 0
      %1922 = vmatmul.mubr.bf16.gmra.mxu0 %v1884
      %v1923 = vpop.f32.mrf.mxu0
      %v1924 = vadd.f32 0.0, %v1923
      %v1925 = vpop.f32.mrf.mxu0
      %v1926 = vpop.f32.mrf.mxu0
      %v1927 = vadd.f32 0.0, %v1926
      %v1928 = vpop.f32.mrf.mxu0
      %1929 = vmatprep.mubr.bf16.mxu0 0
      %1930 = vmatmul.mubr.bf16.gmra.mxu0 %v1887
      %v1931 = vpop.f32.mrf.mxu0
      %v1932 = vadd.f32 0.0, %v1931
      %v1933 = vpop.f32.mrf.mxu0
      %v1934 = vpop.f32.mrf.mxu0
      %v1935 = vadd.f32 0.0, %v1934
      %v1936 = vpop.f32.mrf.mxu0
      %1937 = vdwg.mxu0
      %v1938 = vadd.f32 %v1865, %v1924
      %v1939 = vadd.f32 %v1866, %v1927
      %v1940 = vadd.f32 %v1867, %v1932
      %v1941 = vadd.f32 %v1868, %v1935
      %v1942 = vld [vmem:[%s6] sm:$0xff]
      %v1943 = vld [vmem:[%s6 + $0x8] sm:$0xff]
      %v1944 = vld [vmem:[%s6 + $0x10] sm:$0xff]
      %v1945 = vld [vmem:[%s6 + $0x18] sm:$0xff]
      %1947 = vset.pattern.permute.xlu0 0
      %1948 = vperm.xlu0 %1947, %v1942
      %v1949 = vpop.permute.xlu0 %1948
      %1952 = vset.pattern.permute.xlu0 0
      %1953 = vperm.xlu0 %1952, %v1943
      %v1954 = vpop.permute.xlu0 %1953
      %1957 = vset.pattern.permute.xlu0 0
      %1958 = vperm.xlu0 %1957, %v1944
      %v1959 = vpop.permute.xlu0 %1958
      %1962 = vset.pattern.permute.xlu0 0
      %1963 = vperm.xlu0 %1962, %v1945
      %v1964 = vpop.permute.xlu0 %1963
      %v1966 = vadd.f32 %v1938, %v1949
      %v1967 = vadd.f32 %v1939, %v1954
      %v1968 = vadd.f32 %v1940, %v1959
      %v1969 = vadd.f32 %v1941, %v1964
      %v1970 = vlaneseq
      %v1971 = vshrl.u32 %v1970, 7
      %v1972 = vadd.s32 %v1971, 8
      %v1973 = vadd.s32 %v1971, 16
      %v1974 = vadd.s32 %v1971, 24
      %v1975 = vadd.s32 %v1971, 32
      %v1976 = vadd.s32 %v1971, 40
      %v1977 = vadd.s32 %v1971, 48
      %v1978 = vadd.s32 %v1971, 56
      %v1979 = vadd.s32 %v1971, 64
      %v1980 = vadd.s32 %v1971, 72
      %v1981 = vadd.s32 %v1971, 80
      %v1982 = vadd.s32 %v1971, 88
      %v1983 = vadd.s32 %v1971, 96
      %v1984 = vadd.s32 %v1971, 104
      %v1985 = vadd.s32 %v1971, 112
      %v1986 = vadd.s32 %v1971, 120
      %v1987 = vshra.s32 %v1971, 2
      %v1988 = vshra.s32 %v1972, 2
      %v1989 = vshra.s32 %v1973, 2
      %v1990 = vshra.s32 %v1974, 2
      %v1991 = vshra.s32 %v1975, 2
      %v1992 = vshra.s32 %v1976, 2
      %v1993 = vshra.s32 %v1977, 2
      %v1994 = vshra.s32 %v1978, 2
      %v1995 = vshra.s32 %v1979, 2
      %v1996 = vshra.s32 %v1980, 2
      %v1997 = vshra.s32 %v1981, 2
      %v1998 = vshra.s32 %v1982, 2
      %v1999 = vshra.s32 %v1983, 2
      %v2000 = vshra.s32 %v1984, 2
      %v2001 = vshra.s32 %v1985, 2
      %v2002 = vshra.s32 %v1986, 2
      %v2003 = vshra.s32 %v1987, 1
      %v2004 = vshra.s32 %v1988, 1
      %v2005 = vshra.s32 %v1989, 1
      %v2006 = vshra.s32 %v1990, 1
      %v2007 = vshra.s32 %v1991, 1
      %v2008 = vshra.s32 %v1992, 1
      %v2009 = vshra.s32 %v1993, 1
      %v2010 = vshra.s32 %v1994, 1
      %v2011 = vshra.s32 %v1995, 1
      %v2012 = vshra.s32 %v1996, 1
      %v2013 = vshra.s32 %v1997, 1
      %v2014 = vshra.s32 %v1998, 1
      %v2015 = vshra.s32 %v1999, 1
      %v2016 = vshra.s32 %v2000, 1
      %v2017 = vshra.s32 %v2001, 1
      %v2018 = vshra.s32 %v2002, 1
      %v2019 = vshra.s32 %v283, 1
      %vm2020 = vcmp.eq.s32.totalorder %v2003, %v2019
      %vm2021 = vcmp.eq.s32.totalorder %v2004, %v2019
      %vm2022 = vcmp.eq.s32.totalorder %v2005, %v2019
      %vm2023 = vcmp.eq.s32.totalorder %v2006, %v2019
      %vm2024 = vcmp.eq.s32.totalorder %v2007, %v2019
      %vm2025 = vcmp.eq.s32.totalorder %v2008, %v2019
      %vm2026 = vcmp.eq.s32.totalorder %v2009, %v2019
      %vm2027 = vcmp.eq.s32.totalorder %v2010, %v2019
      %vm2028 = vcmp.eq.s32.totalorder %v2011, %v2019
      %vm2029 = vcmp.eq.s32.totalorder %v2012, %v2019
      %vm2030 = vcmp.eq.s32.totalorder %v2013, %v2019
      %vm2031 = vcmp.eq.s32.totalorder %v2014, %v2019
      %vm2032 = vcmp.eq.s32.totalorder %v2015, %v2019
      %vm2033 = vcmp.eq.s32.totalorder %v2016, %v2019
      %vm2034 = vcmp.eq.s32.totalorder %v2017, %v2019
      %vm2035 = vcmp.eq.s32.totalorder %v2018, %v2019
      %v2036 = vand.u32 %v1971, 3
      %v2037 = vand.u32 %v1972, 3
      %v2038 = vand.u32 %v1973, 3
      %v2039 = vand.u32 %v1974, 3
      %v2040 = vand.u32 %v1975, 3
      %v2041 = vand.u32 %v1976, 3
      %v2042 = vand.u32 %v1977, 3
      %v2043 = vand.u32 %v1978, 3
      %v2044 = vand.u32 %v1979, 3
      %v2045 = vand.u32 %v1980, 3
      %v2046 = vand.u32 %v1981, 3
      %v2047 = vand.u32 %v1982, 3
      %v2048 = vand.u32 %v1983, 3
      %v2049 = vand.u32 %v1984, 3
      %v2050 = vand.u32 %v1985, 3
      %v2051 = vand.u32 %v1986, 3
      %v2052 = vshra.s32 %v2036, 1
      %v2053 = vshra.s32 %v2037, 1
      %v2054 = vshra.s32 %v2038, 1
      %v2055 = vshra.s32 %v2039, 1
      %v2056 = vshra.s32 %v2040, 1
      %v2057 = vshra.s32 %v2041, 1
      %v2058 = vshra.s32 %v2042, 1
      %v2059 = vshra.s32 %v2043, 1
      %v2060 = vshra.s32 %v2044, 1
      %v2061 = vshra.s32 %v2045, 1
      %v2062 = vshra.s32 %v2046, 1
      %v2063 = vshra.s32 %v2047, 1
      %v2064 = vshra.s32 %v2048, 1
      %v2065 = vshra.s32 %v2049, 1
      %v2066 = vshra.s32 %v2050, 1
      %v2067 = vshra.s32 %v2051, 1
      %v2068 = vand.u32 %v283, 1
      %vm2069 = vcmp.eq.s32.totalorder %v2052, %v2068
      %vm2070 = vcmp.eq.s32.totalorder %v2053, %v2068
      %vm2071 = vcmp.eq.s32.totalorder %v2054, %v2068
      %vm2072 = vcmp.eq.s32.totalorder %v2055, %v2068
      %vm2073 = vcmp.eq.s32.totalorder %v2056, %v2068
      %vm2074 = vcmp.eq.s32.totalorder %v2057, %v2068
      %vm2075 = vcmp.eq.s32.totalorder %v2058, %v2068
      %vm2076 = vcmp.eq.s32.totalorder %v2059, %v2068
      %vm2077 = vcmp.eq.s32.totalorder %v2060, %v2068
      %vm2078 = vcmp.eq.s32.totalorder %v2061, %v2068
      %vm2079 = vcmp.eq.s32.totalorder %v2062, %v2068
      %vm2080 = vcmp.eq.s32.totalorder %v2063, %v2068
      %vm2081 = vcmp.eq.s32.totalorder %v2064, %v2068
      %vm2082 = vcmp.eq.s32.totalorder %v2065, %v2068
      %vm2083 = vcmp.eq.s32.totalorder %v2066, %v2068
      %vm2084 = vcmp.eq.s32.totalorder %v2067, %v2068
      %vm2085 = vmand %vm2020, %vm2069
      %vm2086 = vmand %vm2021, %vm2070
      %vm2087 = vmand %vm2022, %vm2071
      %vm2088 = vmand %vm2023, %vm2072
      %vm2089 = vmand %vm2024, %vm2073
      %vm2090 = vmand %vm2025, %vm2074
      %vm2091 = vmand %vm2026, %vm2075
      %vm2092 = vmand %vm2027, %vm2076
      %vm2093 = vmand %vm2028, %vm2077
      %vm2094 = vmand %vm2029, %vm2078
      %vm2095 = vmand %vm2030, %vm2079
      %vm2096 = vmand %vm2031, %vm2080
      %vm2097 = vmand %vm2032, %vm2081
      %vm2098 = vmand %vm2033, %vm2082
      %vm2099 = vmand %vm2034, %vm2083
      %vm2100 = vmand %vm2035, %vm2084
      %v2101 = vsel %vm2085, 0.25, 0.0
      %v2102 = vsel %vm2086, 0.25, 0.0
      %v2103 = vsel %vm2087, 0.25, 0.0
      %v2104 = vsel %vm2088, 0.25, 0.0
      %v2105 = vsel %vm2089, 0.25, 0.0
      %v2106 = vsel %vm2090, 0.25, 0.0
      %v2107 = vsel %vm2091, 0.25, 0.0
      %v2108 = vsel %vm2092, 0.25, 0.0
      %v2109 = vsel %vm2093, 0.25, 0.0
      %v2110 = vsel %vm2094, 0.25, 0.0
      %v2111 = vsel %vm2095, 0.25, 0.0
      %v2112 = vsel %vm2096, 0.25, 0.0
      %v2113 = vsel %vm2097, 0.25, 0.0
      %v2114 = vsel %vm2098, 0.25, 0.0
      %v2115 = vsel %vm2099, 0.25, 0.0
      %v2116 = vsel %vm2100, 0.25, 0.0
      %2117 = vmatprep.subr.mxu0 0.0
      %2118 = vmatpush1.msra.mxu0 %v2116
      %2119 = vmatprep.subr.mxu0 0.0
      %2120 = vmatpush1.msra.mxu0 %v2115
      %2121 = vmatprep.subr.mxu0 0.0
      %2122 = vmatpush1.msra.mxu0 %v2114
      %2123 = vmatprep.subr.mxu0 0.0
      %2124 = vmatpush1.msra.mxu0 %v2113
      %2125 = vmatprep.subr.mxu0 0.0
      %2126 = vmatpush1.msra.mxu0 %v2112
      %2127 = vmatprep.subr.mxu0 0.0
      %2128 = vmatpush1.msra.mxu0 %v2111
      %2129 = vmatprep.subr.mxu0 0.0
      %2130 = vmatpush1.msra.mxu0 %v2110
      %2131 = vmatprep.subr.mxu0 0.0
      %2132 = vmatpush1.msra.mxu0 %v2109
      %2133 = vmatprep.subr.mxu0 0.0
      %2134 = vmatpush1.msra.mxu0 %v2108
      %2135 = vmatprep.subr.mxu0 0.0
      %2136 = vmatpush1.msra.mxu0 %v2107
      %2137 = vmatprep.subr.mxu0 0.0
      %2138 = vmatpush1.msra.mxu0 %v2106
      %2139 = vmatprep.subr.mxu0 0.0
      %2140 = vmatpush1.msra.mxu0 %v2105
      %2141 = vmatprep.subr.mxu0 0.0
      %2142 = vmatpush1.msra.mxu0 %v2104
      %2143 = vmatprep.subr.mxu0 0.0
      %2144 = vmatpush1.msra.mxu0 %v2103
      %2145 = vmatprep.subr.mxu0 0.0
      %2146 = vmatpush1.msra.mxu0 %v2102
      %2147 = vmatprep.subr.mxu0 0.0
      %2148 = vmatpush1.msra.mxu0 %v2101
      %2149 = vmatprep.subr.mxu0 0.0
      %2150 = vmatpush2.msra.mxu0 0.0
      %2151 = vmatprep.subr.mxu0 0.0
      %2152 = vmatpush2.msra.mxu0 0.0
      %2153 = vmatprep.subr.mxu0 0.0
      %2154 = vmatpush2.msra.mxu0 0.0
      %2155 = vmatprep.subr.mxu0 0.0
      %2156 = vmatpush2.msra.mxu0 0.0
      %2157 = vmatprep.subr.mxu0 0.0
      %2158 = vmatpush2.msra.mxu0 0.0
      %2159 = vmatprep.subr.mxu0 0.0
      %2160 = vmatpush2.msra.mxu0 0.0
      %2161 = vmatprep.subr.mxu0 0.0
      %2162 = vmatpush2.msra.mxu0 0.0
      %2163 = vmatprep.subr.mxu0 0.0
      %2164 = vmatpush2.msra.mxu0 0.0
      %2165 = vmatprep.subr.mxu0 0.0
      %2166 = vmatpush2.msra.mxu0 0.0
      %2167 = vmatprep.subr.mxu0 0.0
      %2168 = vmatpush2.msra.mxu0 0.0
      %2169 = vmatprep.subr.mxu0 0.0
      %2170 = vmatpush2.msra.mxu0 0.0
      %2171 = vmatprep.subr.mxu0 0.0
      %2172 = vmatpush2.msra.mxu0 0.0
      %2173 = vmatprep.subr.mxu0 0.0
      %2174 = vmatpush2.msra.mxu0 0.0
      %2175 = vmatprep.subr.mxu0 0.0
      %2176 = vmatpush2.msra.mxu0 0.0
      %2177 = vmatprep.subr.mxu0 0.0
      %2178 = vmatpush2.msra.mxu0 0.0
      %2179 = vmatprep.subr.mxu0 0.0
      %2180 = vmatpush2.msra.mxu0 0.0
      %2181 = vmatprep.mubr.f32.mxu0 0.0
      %2182 = vmatmul.mubr.f32.gmra.mxu0 %v1966
      %v2183 = vpop.f32.mrf.mxu0
      %v2184 = vadd.f32 0.0, %v2183
      %v2185 = vpop.f32.mrf.mxu0
      %2186 = vmatprep.mubr.f32.mxu0 0.0
      %2187 = vmatmul.mubr.f32.gmra.mxu0 %v1967
      %v2188 = vpop.f32.mrf.mxu0
      %v2189 = vadd.f32 0.0, %v2188
      %v2190 = vpop.f32.mrf.mxu0
      %2191 = vmatprep.mubr.f32.mxu0 0.0
      %2192 = vmatmul.mubr.f32.gmra.mxu0 %v1968
      %v2193 = vpop.f32.mrf.mxu0
      %v2194 = vadd.f32 0.0, %v2193
      %v2195 = vpop.f32.mrf.mxu0
      %2196 = vmatprep.mubr.f32.mxu0 0.0
      %2197 = vmatmul.mubr.f32.gmra.mxu0 %v1969
      %v2198 = vpop.f32.mrf.mxu0
      %v2199 = vadd.f32 0.0, %v2198
      %v2200 = vpop.f32.mrf.mxu0
      %2201 = vdwg.mxu0
      %vm2202 = vcmp.lt.s32.totalorder %v283, 4
      %v2203 = vsel %vm2202, 1, 0
      %vm2204 = vcmp.eq.s32.totalorder %v2203, 1
      %v2205 = vsel %vm2204, %v2184, 0.0
      %v2206 = vsel %vm2204, %v2189, 0.0
      %v2207 = vsel %vm2204, %v2194, 0.0
      %v2208 = vsel %vm2204, %v2199, 0.0
      %2209 = vst [vmem:[%s278] sm:$0xff] %v2205
      %2210 = vst [vmem:[%s278 + $0x8] sm:$0xff] %v2206
      %2211 = vst [vmem:[%s278 + $0x10] sm:$0xff] %v2207
      %2212 = vst [vmem:[%s278 + $0x18] sm:$0xff] %v2208
      %p2213 = scmp.lt.s32.totalorder %s18, 3
      %s2214 = scalar_select %p2213, %s18, 3
      %s2215 = smul.addr %s2214, 4
      %s2216 = smul.addr %s2215, 8
      %s2217 = scalar_lea.vmem %s7, %s2216
      // Predicated region
      $region49: #{encoder_forward.7} parent=47 // pred_check
        %p2218 = pneg %p188
      $region50: #{encoder_forward.7} parent=47 // pred_check_branch
        %2220 = sbr.rel (%p2218) target = $region52
      $region51: #{encoder_forward.7} parent=47 // pred_region
        _
      $region52: #{encoder_forward.7} parent=47 // pred_fallthru
        _
    $region48: #{encoder_forward.7} parent=5 // pred_fallthru
      _
    %p2221 = scmp.le.s32.totalorder 2, %s13
    // Predicated region
    $region53: #{encoder_forward.7} parent=5 // pred_check
      %p2222 = pneg %p2221
    $region54: #{encoder_forward.7} parent=5 // pred_check_branch
      %2224 = sbr.rel (%p2222) target = $region56
    $region55: #{encoder_forward.7} parent=5 // pred_region
      %s2225 = ssub.s32 %s13, 2
      // Predicated region
      $region57: #{encoder_forward.7} parent=55 // pred_check
        %p2226 = pneg %p194
      $region58: #{encoder_forward.7} parent=55 // pred_check_branch
        %2228 = sbr.rel (%p2226) target = $region60
      $region59: #{encoder_forward.7} parent=55 // pred_region
        %p2229 = scmp.lt.s32.totalorder %s19, 3
        %s2230 = scalar_select %p2229, %s19, 3
        %s2231 = smul.addr %s2230, 4
        %s2232 = smul.addr %s2231, 8
        %s2233 = scalar_lea.vmem %s7, %s2232
      $region60: #{encoder_forward.7} parent=55 // pred_fallthru
        _
    $region56: #{encoder_forward.7} parent=5 // pred_fallthru
      _
  $region6: #{encoder_forward.7} parent=0 // loop_footer
    %s17 = sadd.s32 1, %s13
  $region7: #{encoder_forward.7} parent=0 // loop_footer_branch
    %12 = sbr.rel target = $region3
  $region8: #{encoder_forward.7} parent=0 // loop_exit
    _

// kernel: encoder_forward.9
$region0: #{encoder_forward.9}
  #allocation0 [shape = 'u32[]', space=smem, size = 0x4, offset = 0x4, fixed_abs, tag = 'smem constant byte address 0x4 - core index']
  #allocation1 [shape = 'u32[144,128]{1,0:T(1,128)}', space=vmem, size = 0x12000, scoped, tag = 'internal scratch']
  %s0 = inlined_call_operand.vmem [shape: f32[4,2048], index: 0, kind: input, shape index: {}]
  %s1 = inlined_call_operand.vmem [shape: bf16[2048,32], index: 1, kind: input, shape index: {}]
  %s2 = inlined_call_operand.vmem [shape: f32[1,32], index: 2, kind: input, shape index: {}]
  %s3 = inlined_call_operand.vmem [shape: bf16[32,16], index: 3, kind: input, shape index: {}]
  %s4 = inlined_call_operand.vmem [shape: f32[1,16], index: 4, kind: input, shape index: {}]
  %s5 = inlined_call_operand.hbm [shape: f32[4,16], index: 5, kind: output, shape index: {}]
  %s6 = sld [smem:[#allocation0]]
  $region30: #{encoder_forward.9} parent=0
    _
  %s8 = ssub.s32 1, %s6
  %s9 = scalar_select 0, %s8, %s6
  $region1: #{encoder_forward.9} parent=0
    #allocation2 [shape = 'u8[2048]{0}', space=vmem, size = 0x800, scoped, tag = 'output window, operand 0, single buffered']
    #allocation3 [shape = 's32[1]{0}', space=sflag, size = 0x4, scoped, tag = 'scoped memory for encoder_forward.9']
    %10 = vsyncpa [#allocation3], 0
    // Predicated region
    $region2: #{encoder_forward.9} parent=1 // pred_check
      _
    $region3: #{encoder_forward.9} parent=1 // pred_check_branch
      %12 = sbr.rel (0) target = $region5
    $region4: #{encoder_forward.9} parent=1 // pred_region
      _
    $region5: #{encoder_forward.9} parent=1 // pred_fallthru
      _
    // Predicated region
    $region6: #{encoder_forward.9} parent=1 // pred_check
      _
    $region7: #{encoder_forward.9} parent=1 // pred_check_branch
      %14 = sbr.rel (0) target = $region9
    $region8: #{encoder_forward.9} parent=1 // pred_region
      _
    $region9: #{encoder_forward.9} parent=1 // pred_fallthru
      _
    // Predicated region
    $region10: #{encoder_forward.9} parent=1 // pred_check
      _
    $region11: #{encoder_forward.9} parent=1 // pred_check_branch
      %16 = sbr.rel (0) target = $region13
    $region12: #{encoder_forward.9} parent=1 // pred_region
      _
    $region13: #{encoder_forward.9} parent=1 // pred_fallthru
      _
    // Predicated region
    $region14: #{encoder_forward.9} parent=1 // pred_check
      _
    $region15: #{encoder_forward.9} parent=1 // pred_check_branch
      %18 = sbr.rel (0) target = $region17
    $region16: #{encoder_forward.9} parent=1 // pred_region
      _
    $region17: #{encoder_forward.9} parent=1 // pred_fallthru
      _
    // Predicated region
    $region18: #{encoder_forward.9} parent=1 // pred_check
      _
    $region19: #{encoder_forward.9} parent=1 // pred_check_branch
      %20 = sbr.rel (0) target = $region21
    $region20: #{encoder_forward.9} parent=1 // pred_region
      _
    $region21: #{encoder_forward.9} parent=1 // pred_fallthru
      _
    %v22 = vld [vmem:[%s0] sm:$0xff]
    %v23 = vld [vmem:[%s0 + $0x8] sm:$0xff]
    %v24 = vld [vmem:[%s0 + $0x10] sm:$0xff]
    %v25 = vld [vmem:[%s0 + $0x18] sm:$0xff]
    %v26 = vld [vmem:[%s0 + $0x20] sm:$0xff]
    %v27 = vld [vmem:[%s0 + $0x28] sm:$0xff]
    %v28 = vld [vmem:[%s0 + $0x30] sm:$0xff]
    %v29 = vld [vmem:[%s0 + $0x38] sm:$0xff]
    %v38 = vcombine.high %v22, %v22
    %v39 = vcombine.high %v23, %v23
    %v40 = vcombine.high %v24, %v24
    %v41 = vcombine.high %v25, %v25
    %v42 = vcombine.high %v26, %v26
    %v43 = vcombine.high %v27, %v27
    %v44 = vcombine.high %v28, %v28
    %v45 = vcombine.high %v29, %v29
    %v54 = vpack.c.bf16 %v22, %v22
    %v55 = vpack.c.bf16 %v38, %v38
    %v56 = vpack.c.bf16 %v23, %v23
    %v57 = vpack.c.bf16 %v39, %v39
    %v58 = vpack.c.bf16 %v24, %v24
    %v59 = vpack.c.bf16 %v40, %v40
    %v60 = vpack.c.bf16 %v25, %v25
    %v61 = vpack.c.bf16 %v41, %v41
    %v62 = vpack.c.bf16 %v26, %v26
    %v63 = vpack.c.bf16 %v42, %v42
    %v64 = vpack.c.bf16 %v27, %v27
    %v65 = vpack.c.bf16 %v43, %v43
    %v66 = vpack.c.bf16 %v28, %v28
    %v67 = vpack.c.bf16 %v44, %v44
    %v68 = vpack.c.bf16 %v29, %v29
    %v69 = vpack.c.bf16 %v45, %v45
    %v70 = vld [vmem:[%s1] sm:$0xf]
    %v71 = vld [vmem:[%s1 + $0x4] sm:$0xf]
    %v72 = vld [vmem:[%s1 + $0x8] sm:$0xf]
    %v73 = vld [vmem:[%s1 + $0xc] sm:$0xf]
    %v74 = vld [vmem:[%s1 + $0x10] sm:$0xf]
    %v75 = vld [vmem:[%s1 + $0x14] sm:$0xf]
    %v76 = vld [vmem:[%s1 + $0x18] sm:$0xf]
    %v77 = vld [vmem:[%s1 + $0x1c] sm:$0xf]
    %v78 = vld [vmem:[%s1 + $0x20] sm:$0xf]
    %v79 = vld [vmem:[%s1 + $0x24] sm:$0xf]
    %v80 = vld [vmem:[%s1 + $0x28] sm:$0xf]
    %v81 = vld [vmem:[%s1 + $0x2c] sm:$0xf]
    %v82 = vld [vmem:[%s1 + $0x30] sm:$0xf]
    %v83 = vld [vmem:[%s1 + $0x34] sm:$0xf]
    %v84 = vld [vmem:[%s1 + $0x38] sm:$0xf]
    %v85 = vld [vmem:[%s1 + $0x3c] sm:$0xf]
    %v86 = vld [vmem:[%s1 + $0x40] sm:$0xf]
    %v87 = vld [vmem:[%s1 + $0x44] sm:$0xf]
    %v88 = vld [vmem:[%s1 + $0x48] sm:$0xf]
    %v89 = vld [vmem:[%s1 + $0x4c] sm:$0xf]
    %v90 = vld [vmem:[%s1 + $0x50] sm:$0xf]
    %v91 = vld [vmem:[%s1 + $0x54] sm:$0xf]
    %v92 = vld [vmem:[%s1 + $0x58] sm:$0xf]
    %v93 = vld [vmem:[%s1 + $0x5c] sm:$0xf]
    %v94 = vld [vmem:[%s1 + $0x60] sm:$0xf]
    %v95 = vld [vmem:[%s1 + $0x64] sm:$0xf]
    %v96 = vld [vmem:[%s1 + $0x68] sm:$0xf]
    %v97 = vld [vmem:[%s1 + $0x6c] sm:$0xf]
    %v98 = vld [vmem:[%s1 + $0x70] sm:$0xf]
    %v99 = vld [vmem:[%s1 + $0x74] sm:$0xf]
    %v100 = vld [vmem:[%s1 + $0x78] sm:$0xf]
    %v101 = vld [vmem:[%s1 + $0x7c] sm:$0xf]
    %v102 = vld [vmem:[%s1 + $0x80] sm:$0xf]
    %v103 = vld [vmem:[%s1 + $0x84] sm:$0xf]
    %v104 = vld [vmem:[%s1 + $0x88] sm:$0xf]
    %v105 = vld [vmem:[%s1 + $0x8c] sm:$0xf]
    %v106 = vld [vmem:[%s1 + $0x90] sm:$0xf]
    %v107 = vld [vmem:[%s1 + $0x94] sm:$0xf]
    %v108 = vld [vmem:[%s1 + $0x98] sm:$0xf]
    %v109 = vld [vmem:[%s1 + $0x9c] sm:$0xf]
    %v110 = vld [vmem:[%s1 + $0xa0] sm:$0xf]
    %v111 = vld [vmem:[%s1 + $0xa4] sm:$0xf]
    %v112 = vld [vmem:[%s1 + $0xa8] sm:$0xf]
    %v113 = vld [vmem:[%s1 + $0xac] sm:$0xf]
    %v114 = vld [vmem:[%s1 + $0xb0] sm:$0xf]
    %v115 = vld [vmem:[%s1 + $0xb4] sm:$0xf]
    %v116 = vld [vmem:[%s1 + $0xb8] sm:$0xf]
    %v117 = vld [vmem:[%s1 + $0xbc] sm:$0xf]
    %v118 = vld [vmem:[%s1 + $0xc0] sm:$0xf]
    %v119 = vld [vmem:[%s1 + $0xc4] sm:$0xf]
    %v120 = vld [vmem:[%s1 + $0xc8] sm:$0xf]
    %v121 = vld [vmem:[%s1 + $0xcc] sm:$0xf]
    %v122 = vld [vmem:[%s1 + $0xd0] sm:$0xf]
    %v123 = vld [vmem:[%s1 + $0xd4] sm:$0xf]
    %v124 = vld [vmem:[%s1 + $0xd8] sm:$0xf]
    %v125 = vld [vmem:[%s1 + $0xdc] sm:$0xf]
    %v126 = vld [vmem:[%s1 + $0xe0] sm:$0xf]
    %v127 = vld [vmem:[%s1 + $0xe4] sm:$0xf]
    %v128 = vld [vmem:[%s1 + $0xe8] sm:$0xf]
    %v129 = vld [vmem:[%s1 + $0xec] sm:$0xf]
    %v130 = vld [vmem:[%s1 + $0xf0] sm:$0xf]
    %v131 = vld [vmem:[%s1 + $0xf4] sm:$0xf]
    %v132 = vld [vmem:[%s1 + $0xf8] sm:$0xf]
    %v133 = vld [vmem:[%s1 + $0xfc] sm:$0xf]
    %v134 = vld [vmem:[%s1 + $0x100] sm:$0xf]
    %v135 = vld [vmem:[%s1 + $0x104] sm:$0xf]
    %v136 = vld [vmem:[%s1 + $0x108] sm:$0xf]
    %v137 = vld [vmem:[%s1 + $0x10c] sm:$0xf]
    %v138 = vld [vmem:[%s1 + $0x110] sm:$0xf]
    %v139 = vld [vmem:[%s1 + $0x114] sm:$0xf]
    %v140 = vld [vmem:[%s1 + $0x118] sm:$0xf]
    %v141 = vld [vmem:[%s1 + $0x11c] sm:$0xf]
    %v142 = vld [vmem:[%s1 + $0x120] sm:$0xf]
    %v143 = vld [vmem:[%s1 + $0x124] sm:$0xf]
    %v144 = vld [vmem:[%s1 + $0x128] sm:$0xf]
    %v145 = vld [vmem:[%s1 + $0x12c] sm:$0xf]
    %v146 = vld [vmem:[%s1 + $0x130] sm:$0xf]
    %v147 = vld [vmem:[%s1 + $0x134] sm:$0xf]
    %v148 = vld [vmem:[%s1 + $0x138] sm:$0xf]
    %v149 = vld [vmem:[%s1 + $0x13c] sm:$0xf]
    %v150 = vld [vmem:[%s1 + $0x140] sm:$0xf]
    %v151 = vld [vmem:[%s1 + $0x144] sm:$0xf]
    %v152 = vld [vmem:[%s1 + $0x148] sm:$0xf]
    %v153 = vld [vmem:[%s1 + $0x14c] sm:$0xf]
    %v154 = vld [vmem:[%s1 + $0x150] sm:$0xf]
    %v155 = vld [vmem:[%s1 + $0x154] sm:$0xf]
    %v156 = vld [vmem:[%s1 + $0x158] sm:$0xf]
    %v157 = vld [vmem:[%s1 + $0x15c] sm:$0xf]
    %v158 = vld [vmem:[%s1 + $0x160] sm:$0xf]
    %v159 = vld [vmem:[%s1 + $0x164] sm:$0xf]
    %v160 = vld [vmem:[%s1 + $0x168] sm:$0xf]
    %v161 = vld [vmem:[%s1 + $0x16c] sm:$0xf]
    %v162 = vld [vmem:[%s1 + $0x170] sm:$0xf]
    %v163 = vld [vmem:[%s1 + $0x174] sm:$0xf]
    %v164 = vld [vmem:[%s1 + $0x178] sm:$0xf]
    %v165 = vld [vmem:[%s1 + $0x17c] sm:$0xf]
    %v166 = vld [vmem:[%s1 + $0x180] sm:$0xf]
    %v167 = vld [vmem:[%s1 + $0x184] sm:$0xf]
    %v168 = vld [vmem:[%s1 + $0x188] sm:$0xf]
    %v169 = vld [vmem:[%s1 + $0x18c] sm:$0xf]
    %v170 = vld [vmem:[%s1 + $0x190] sm:$0xf]
    %v171 = vld [vmem:[%s1 + $0x194] sm:$0xf]
    %v172 = vld [vmem:[%s1 + $0x198] sm:$0xf]
    %v173 = vld [vmem:[%s1 + $0x19c] sm:$0xf]
    %v174 = vld [vmem:[%s1 + $0x1a0] sm:$0xf]
    %v175 = vld [vmem:[%s1 + $0x1a4] sm:$0xf]
    %v176 = vld [vmem:[%s1 + $0x1a8] sm:$0xf]
    %v177 = vld [vmem:[%s1 + $0x1ac] sm:$0xf]
    %v178 = vld [vmem:[%s1 + $0x1b0] sm:$0xf]
    %v179 = vld [vmem:[%s1 + $0x1b4] sm:$0xf]
    %v180 = vld [vmem:[%s1 + $0x1b8] sm:$0xf]
    %v181 = vld [vmem:[%s1 + $0x1bc] sm:$0xf]
    %v182 = vld [vmem:[%s1 + $0x1c0] sm:$0xf]
    %v183 = vld [vmem:[%s1 + $0x1c4] sm:$0xf]
    %v184 = vld [vmem:[%s1 + $0x1c8] sm:$0xf]
    %v185 = vld [vmem:[%s1 + $0x1cc] sm:$0xf]
    %v186 = vld [vmem:[%s1 + $0x1d0] sm:$0xf]
    %v187 = vld [vmem:[%s1 + $0x1d4] sm:$0xf]
    %v188 = vld [vmem:[%s1 + $0x1d8] sm:$0xf]
    %v189 = vld [vmem:[%s1 + $0x1dc] sm:$0xf]
    %v190 = vld [vmem:[%s1 + $0x1e0] sm:$0xf]
    %v191 = vld [vmem:[%s1 + $0x1e4] sm:$0xf]
    %v192 = vld [vmem:[%s1 + $0x1e8] sm:$0xf]
    %v193 = vld [vmem:[%s1 + $0x1ec] sm:$0xf]
    %v194 = vld [vmem:[%s1 + $0x1f0] sm:$0xf]
    %v195 = vld [vmem:[%s1 + $0x1f4] sm:$0xf]
    %v196 = vld [vmem:[%s1 + $0x1f8] sm:$0xf]
    %v197 = vld [vmem:[%s1 + $0x1fc] sm:$0xf]
    %v198 = vld [vmem:[%s1 + $0x200] sm:$0xf]
    %v199 = vld [vmem:[%s1 + $0x204] sm:$0xf]
    %v200 = vld [vmem:[%s1 + $0x208] sm:$0xf]
    %v201 = vld [vmem:[%s1 + $0x20c] sm:$0xf]
    %v202 = vld [vmem:[%s1 + $0x210] sm:$0xf]
    %v203 = vld [vmem:[%s1 + $0x214] sm:$0xf]
    %v204 = vld [vmem:[%s1 + $0x218] sm:$0xf]
    %v205 = vld [vmem:[%s1 + $0x21c] sm:$0xf]
    %v206 = vld [vmem:[%s1 + $0x220] sm:$0xf]
    %v207 = vld [vmem:[%s1 + $0x224] sm:$0xf]
    %v208 = vld [vmem:[%s1 + $0x228] sm:$0xf]
    %v209 = vld [vmem:[%s1 + $0x22c] sm:$0xf]
    %v210 = vld [vmem:[%s1 + $0x230] sm:$0xf]
    %v211 = vld [vmem:[%s1 + $0x234] sm:$0xf]
    %v212 = vld [vmem:[%s1 + $0x238] sm:$0xf]
    %v213 = vld [vmem:[%s1 + $0x23c] sm:$0xf]
    %v214 = vld [vmem:[%s1 + $0x240] sm:$0xf]
    %v215 = vld [vmem:[%s1 + $0x244] sm:$0xf]
    %v216 = vld [vmem:[%s1 + $0x248] sm:$0xf]
    %v217 = vld [vmem:[%s1 + $0x24c] sm:$0xf]
    %v218 = vld [vmem:[%s1 + $0x250] sm:$0xf]
    %v219 = vld [vmem:[%s1 + $0x254] sm:$0xf]
    %v220 = vld [vmem:[%s1 + $0x258] sm:$0xf]
    %v221 = vld [vmem:[%s1 + $0x25c] sm:$0xf]
    %v222 = vld [vmem:[%s1 + $0x260] sm:$0xf]
    %v223 = vld [vmem:[%s1 + $0x264] sm:$0xf]
    %v224 = vld [vmem:[%s1 + $0x268] sm:$0xf]
    %v225 = vld [vmem:[%s1 + $0x26c] sm:$0xf]
    %v226 = vld [vmem:[%s1 + $0x270] sm:$0xf]
    %v227 = vld [vmem:[%s1 + $0x274] sm:$0xf]
    %v228 = vld [vmem:[%s1 + $0x278] sm:$0xf]
    %v229 = vld [vmem:[%s1 + $0x27c] sm:$0xf]
    %v230 = vld [vmem:[%s1 + $0x280] sm:$0xf]
    %v231 = vld [vmem:[%s1 + $0x284] sm:$0xf]
    %v232 = vld [vmem:[%s1 + $0x288] sm:$0xf]
    %v233 = vld [vmem:[%s1 + $0x28c] sm:$0xf]
    %v234 = vld [vmem:[%s1 + $0x290] sm:$0xf]
    %v235 = vld [vmem:[%s1 + $0x294] sm:$0xf]
    %v236 = vld [vmem:[%s1 + $0x298] sm:$0xf]
    %v237 = vld [vmem:[%s1 + $0x29c] sm:$0xf]
    %v238 = vld [vmem:[%s1 + $0x2a0] sm:$0xf]
    %v239 = vld [vmem:[%s1 + $0x2a4] sm:$0xf]
    %v240 = vld [vmem:[%s1 + $0x2a8] sm:$0xf]
    %v241 = vld [vmem:[%s1 + $0x2ac] sm:$0xf]
    %v242 = vld [vmem:[%s1 + $0x2b0] sm:$0xf]
    %v243 = vld [vmem:[%s1 + $0x2b4] sm:$0xf]
    %v244 = vld [vmem:[%s1 + $0x2b8] sm:$0xf]
    %v245 = vld [vmem:[%s1 + $0x2bc] sm:$0xf]
    %v246 = vld [vmem:[%s1 + $0x2c0] sm:$0xf]
    %v247 = vld [vmem:[%s1 + $0x2c4] sm:$0xf]
    %v248 = vld [vmem:[%s1 + $0x2c8] sm:$0xf]
    %v249 = vld [vmem:[%s1 + $0x2cc] sm:$0xf]
    %v250 = vld [vmem:[%s1 + $0x2d0] sm:$0xf]
    %v251 = vld [vmem:[%s1 + $0x2d4] sm:$0xf]
    %v252 = vld [vmem:[%s1 + $0x2d8] sm:$0xf]
    %v253 = vld [vmem:[%s1 + $0x2dc] sm:$0xf]
    %v254 = vld [vmem:[%s1 + $0x2e0] sm:$0xf]
    %v255 = vld [vmem:[%s1 + $0x2e4] sm:$0xf]
    %v256 = vld [vmem:[%s1 + $0x2e8] sm:$0xf]
    %v257 = vld [vmem:[%s1 + $0x2ec] sm:$0xf]
    %v258 = vld [vmem:[%s1 + $0x2f0] sm:$0xf]
    %v259 = vld [vmem:[%s1 + $0x2f4] sm:$0xf]
    %v260 = vld [vmem:[%s1 + $0x2f8] sm:$0xf]
    %v261 = vld [vmem:[%s1 + $0x2fc] sm:$0xf]
    %v262 = vld [vmem:[%s1 + $0x300] sm:$0xf]
    %v263 = vld [vmem:[%s1 + $0x304] sm:$0xf]
    %v264 = vld [vmem:[%s1 + $0x308] sm:$0xf]
    %v265 = vld [vmem:[%s1 + $0x30c] sm:$0xf]
    %v266 = vld [vmem:[%s1 + $0x310] sm:$0xf]
    %v267 = vld [vmem:[%s1 + $0x314] sm:$0xf]
    %v268 = vld [vmem:[%s1 + $0x318] sm:$0xf]
    %v269 = vld [vmem:[%s1 + $0x31c] sm:$0xf]
    %v270 = vld [vmem:[%s1 + $0x320] sm:$0xf]
    %v271 = vld [vmem:[%s1 + $0x324] sm:$0xf]
    %v272 = vld [vmem:[%s1 + $0x328] sm:$0xf]
    %v273 = vld [vmem:[%s1 + $0x32c] sm:$0xf]
    %v274 = vld [vmem:[%s1 + $0x330] sm:$0xf]
    %v275 = vld [vmem:[%s1 + $0x334] sm:$0xf]
    %v276 = vld [vmem:[%s1 + $0x338] sm:$0xf]
    %v277 = vld [vmem:[%s1 + $0x33c] sm:$0xf]
    %v278 = vld [vmem:[%s1 + $0x340] sm:$0xf]
    %v279 = vld [vmem:[%s1 + $0x344] sm:$0xf]
    %v280 = vld [vmem:[%s1 + $0x348] sm:$0xf]
    %v281 = vld [vmem:[%s1 + $0x34c] sm:$0xf]
    %v282 = vld [vmem:[%s1 + $0x350] sm:$0xf]
    %v283 = vld [vmem:[%s1 + $0x354] sm:$0xf]
    %v284 = vld [vmem:[%s1 + $0x358] sm:$0xf]
    %v285 = vld [vmem:[%s1 + $0x35c] sm:$0xf]
    %v286 = vld [vmem:[%s1 + $0x360] sm:$0xf]
    %v287 = vld [vmem:[%s1 + $0x364] sm:$0xf]
    %v288 = vld [vmem:[%s1 + $0x368] sm:$0xf]
    %v289 = vld [vmem:[%s1 + $0x36c] sm:$0xf]
    %v290 = vld [vmem:[%s1 + $0x370] sm:$0xf]
    %v291 = vld [vmem:[%s1 + $0x374] sm:$0xf]
    %v292 = vld [vmem:[%s1 + $0x378] sm:$0xf]
    %v293 = vld [vmem:[%s1 + $0x37c] sm:$0xf]
    %v294 = vld [vmem:[%s1 + $0x380] sm:$0xf]
    %v295 = vld [vmem:[%s1 + $0x384] sm:$0xf]
    %v296 = vld [vmem:[%s1 + $0x388] sm:$0xf]
    %v297 = vld [vmem:[%s1 + $0x38c] sm:$0xf]
    %v298 = vld [vmem:[%s1 + $0x390] sm:$0xf]
    %v299 = vld [vmem:[%s1 + $0x394] sm:$0xf]
    %v300 = vld [vmem:[%s1 + $0x398] sm:$0xf]
    %v301 = vld [vmem:[%s1 + $0x39c] sm:$0xf]
    %v302 = vld [vmem:[%s1 + $0x3a0] sm:$0xf]
    %v303 = vld [vmem:[%s1 + $0x3a4] sm:$0xf]
    %v304 = vld [vmem:[%s1 + $0x3a8] sm:$0xf]
    %v305 = vld [vmem:[%s1 + $0x3ac] sm:$0xf]
    %v306 = vld [vmem:[%s1 + $0x3b0] sm:$0xf]
    %v307 = vld [vmem:[%s1 + $0x3b4] sm:$0xf]
    %v308 = vld [vmem:[%s1 + $0x3b8] sm:$0xf]
    %v309 = vld [vmem:[%s1 + $0x3bc] sm:$0xf]
    %v310 = vld [vmem:[%s1 + $0x3c0] sm:$0xf]
    %v311 = vld [vmem:[%s1 + $0x3c4] sm:$0xf]
    %v312 = vld [vmem:[%s1 + $0x3c8] sm:$0xf]
    %v313 = vld [vmem:[%s1 + $0x3cc] sm:$0xf]
    %v314 = vld [vmem:[%s1 + $0x3d0] sm:$0xf]
    %v315 = vld [vmem:[%s1 + $0x3d4] sm:$0xf]
    %v316 = vld [vmem:[%s1 + $0x3d8] sm:$0xf]
    %v317 = vld [vmem:[%s1 + $0x3dc] sm:$0xf]
    %v318 = vld [vmem:[%s1 + $0x3e0] sm:$0xf]
    %v319 = vld [vmem:[%s1 + $0x3e4] sm:$0xf]
    %v320 = vld [vmem:[%s1 + $0x3e8] sm:$0xf]
    %v321 = vld [vmem:[%s1 + $0x3ec] sm:$0xf]
    %v322 = vld [vmem:[%s1 + $0x3f0] sm:$0xf]
    %v323 = vld [vmem:[%s1 + $0x3f4] sm:$0xf]
    %v324 = vld [vmem:[%s1 + $0x3f8] sm:$0xf]
    %v325 = vld [vmem:[%s1 + $0x3fc] sm:$0xf]
    %v326 = vld [vmem:[%s2] sm:$0x1]
    %v328 = vlaneseq
    %v329 = vshrl.u32 %v328, 7
    %v330 = vsub.s32 0, %v329
    %v331 = vrot.slane %v326, %v330
    %v589 = vunpack.c.l.b16 %v70
    %v590 = vunpack.c.l.b16 %v71
    %v591 = vunpack.c.l.b16 %v72
    %v592 = vunpack.c.l.b16 %v73
    %v593 = vunpack.c.l.b16 %v74
    %v594 = vunpack.c.l.b16 %v75
    %v595 = vunpack.c.l.b16 %v76
    %v596 = vunpack.c.l.b16 %v77
    %v597 = vunpack.c.l.b16 %v78
    %v598 = vunpack.c.l.b16 %v79
    %v599 = vunpack.c.l.b16 %v80
    %v600 = vunpack.c.l.b16 %v81
    %v601 = vunpack.c.l.b16 %v82
    %v602 = vunpack.c.l.b16 %v83
    %v603 = vunpack.c.l.b16 %v84
    %v604 = vunpack.c.l.b16 %v85
    %v605 = vunpack.c.l.b16 %v86
    %v606 = vunpack.c.l.b16 %v87
    %v607 = vunpack.c.l.b16 %v88
    %v608 = vunpack.c.l.b16 %v89
    %v609 = vunpack.c.l.b16 %v90
    %v610 = vunpack.c.l.b16 %v91
    %v611 = vunpack.c.l.b16 %v92
    %v612 = vunpack.c.l.b16 %v93
    %v613 = vunpack.c.l.b16 %v94
    %v614 = vunpack.c.l.b16 %v95
    %v615 = vunpack.c.l.b16 %v96
    %v616 = vunpack.c.l.b16 %v97
    %v617 = vunpack.c.l.b16 %v98
    %v618 = vunpack.c.l.b16 %v99
    %v619 = vunpack.c.l.b16 %v100
    %v620 = vunpack.c.l.b16 %v101
    %v621 = vunpack.c.l.b16 %v102
    %v622 = vunpack.c.l.b16 %v103
    %v623 = vunpack.c.l.b16 %v104
    %v624 = vunpack.c.l.b16 %v105
    %v625 = vunpack.c.l.b16 %v106
    %v626 = vunpack.c.l.b16 %v107
    %v627 = vunpack.c.l.b16 %v108
    %v628 = vunpack.c.l.b16 %v109
    %v629 = vunpack.c.l.b16 %v110
    %v630 = vunpack.c.l.b16 %v111
    %v631 = vunpack.c.l.b16 %v112
    %v632 = vunpack.c.l.b16 %v113
    %v633 = vunpack.c.l.b16 %v114
    %v634 = vunpack.c.l.b16 %v115
    %v635 = vunpack.c.l.b16 %v116
    %v636 = vunpack.c.l.b16 %v117
    %v637 = vunpack.c.l.b16 %v118
    %v638 = vunpack.c.l.b16 %v119
    %v639 = vunpack.c.l.b16 %v120
    %v640 = vunpack.c.l.b16 %v121
    %v641 = vunpack.c.l.b16 %v122
    %v642 = vunpack.c.l.b16 %v123
    %v643 = vunpack.c.l.b16 %v124
    %v644 = vunpack.c.l.b16 %v125
    %v645 = vunpack.c.l.b16 %v126
    %v646 = vunpack.c.l.b16 %v127
    %v647 = vunpack.c.l.b16 %v128
    %v648 = vunpack.c.l.b16 %v129
    %v649 = vunpack.c.l.b16 %v130
    %v650 = vunpack.c.l.b16 %v131
    %v651 = vunpack.c.l.b16 %v132
    %v652 = vunpack.c.l.b16 %v133
    %v653 = vunpack.c.l.b16 %v134
    %v654 = vunpack.c.l.b16 %v135
    %v655 = vunpack.c.l.b16 %v136
    %v656 = vunpack.c.l.b16 %v137
    %v657 = vunpack.c.l.b16 %v138
    %v658 = vunpack.c.l.b16 %v139
    %v659 = vunpack.c.l.b16 %v140
    %v660 = vunpack.c.l.b16 %v141
    %v661 = vunpack.c.l.b16 %v142
    %v662 = vunpack.c.l.b16 %v143
    %v663 = vunpack.c.l.b16 %v144
    %v664 = vunpack.c.l.b16 %v145
    %v665 = vunpack.c.l.b16 %v146
    %v666 = vunpack.c.l.b16 %v147
    %v667 = vunpack.c.l.b16 %v148
    %v668 = vunpack.c.l.b16 %v149
    %v669 = vunpack.c.l.b16 %v150
    %v670 = vunpack.c.l.b16 %v151
    %v671 = vunpack.c.l.b16 %v152
    %v672 = vunpack.c.l.b16 %v153
    %v673 = vunpack.c.l.b16 %v154
    %v674 = vunpack.c.l.b16 %v155
    %v675 = vunpack.c.l.b16 %v156
    %v676 = vunpack.c.l.b16 %v157
    %v677 = vunpack.c.l.b16 %v158
    %v678 = vunpack.c.l.b16 %v159
    %v679 = vunpack.c.l.b16 %v160
    %v680 = vunpack.c.l.b16 %v161
    %v681 = vunpack.c.l.b16 %v162
    %v682 = vunpack.c.l.b16 %v163
    %v683 = vunpack.c.l.b16 %v164
    %v684 = vunpack.c.l.b16 %v165
    %v685 = vunpack.c.l.b16 %v166
    %v686 = vunpack.c.l.b16 %v167
    %v687 = vunpack.c.l.b16 %v168
    %v688 = vunpack.c.l.b16 %v169
    %v689 = vunpack.c.l.b16 %v170
    %v690 = vunpack.c.l.b16 %v171
    %v691 = vunpack.c.l.b16 %v172
    %v692 = vunpack.c.l.b16 %v173
    %v693 = vunpack.c.l.b16 %v174
    %v694 = vunpack.c.l.b16 %v175
    %v695 = vunpack.c.l.b16 %v176
    %v696 = vunpack.c.l.b16 %v177
    %v697 = vunpack.c.l.b16 %v178
    %v698 = vunpack.c.l.b16 %v179
    %v699 = vunpack.c.l.b16 %v180
    %v700 = vunpack.c.l.b16 %v181
    %v701 = vunpack.c.l.b16 %v182
    %v702 = vunpack.c.l.b16 %v183
    %v703 = vunpack.c.l.b16 %v184
    %v704 = vunpack.c.l.b16 %v185
    %v705 = vunpack.c.l.b16 %v186
    %v706 = vunpack.c.l.b16 %v187
    %v707 = vunpack.c.l.b16 %v188
    %v708 = vunpack.c.l.b16 %v189
    %v709 = vunpack.c.l.b16 %v190
    %v710 = vunpack.c.l.b16 %v191
    %v711 = vunpack.c.l.b16 %v192
    %v712 = vunpack.c.l.b16 %v193
    %v713 = vunpack.c.l.b16 %v194
    %v714 = vunpack.c.l.b16 %v195
    %v715 = vunpack.c.l.b16 %v196
    %v716 = vunpack.c.l.b16 %v197
    %v717 = vunpack.c.l.b16 %v198
    %v718 = vunpack.c.l.b16 %v199
    %v719 = vunpack.c.l.b16 %v200
    %v720 = vunpack.c.l.b16 %v201
    %v721 = vunpack.c.l.b16 %v202
    %v722 = vunpack.c.l.b16 %v203
    %v723 = vunpack.c.l.b16 %v204
    %v724 = vunpack.c.l.b16 %v205
    %v725 = vunpack.c.l.b16 %v206
    %v726 = vunpack.c.l.b16 %v207
    %v727 = vunpack.c.l.b16 %v208
    %v728 = vunpack.c.l.b16 %v209
    %v729 = vunpack.c.l.b16 %v210
    %v730 = vunpack.c.l.b16 %v211
    %v731 = vunpack.c.l.b16 %v212
    %v732 = vunpack.c.l.b16 %v213
    %v733 = vunpack.c.l.b16 %v214
    %v734 = vunpack.c.l.b16 %v215
    %v735 = vunpack.c.l.b16 %v216
    %v736 = vunpack.c.l.b16 %v217
    %v737 = vunpack.c.l.b16 %v218
    %v738 = vunpack.c.l.b16 %v219
    %v739 = vunpack.c.l.b16 %v220
    %v740 = vunpack.c.l.b16 %v221
    %v741 = vunpack.c.l.b16 %v222
    %v742 = vunpack.c.l.b16 %v223
    %v743 = vunpack.c.l.b16 %v224
    %v744 = vunpack.c.l.b16 %v225
    %v745 = vunpack.c.l.b16 %v226
    %v746 = vunpack.c.l.b16 %v227
    %v747 = vunpack.c.l.b16 %v228
    %v748 = vunpack.c.l.b16 %v229
    %v749 = vunpack.c.l.b16 %v230
    %v750 = vunpack.c.l.b16 %v231
    %v751 = vunpack.c.l.b16 %v232
    %v752 = vunpack.c.l.b16 %v233
    %v753 = vunpack.c.l.b16 %v234
    %v754 = vunpack.c.l.b16 %v235
    %v755 = vunpack.c.l.b16 %v236
    %v756 = vunpack.c.l.b16 %v237
    %v757 = vunpack.c.l.b16 %v238
    %v758 = vunpack.c.l.b16 %v239
    %v759 = vunpack.c.l.b16 %v240
    %v760 = vunpack.c.l.b16 %v241
    %v761 = vunpack.c.l.b16 %v242
    %v762 = vunpack.c.l.b16 %v243
    %v763 = vunpack.c.l.b16 %v244
    %v764 = vunpack.c.l.b16 %v245
    %v765 = vunpack.c.l.b16 %v246
    %v766 = vunpack.c.l.b16 %v247
    %v767 = vunpack.c.l.b16 %v248
    %v768 = vunpack.c.l.b16 %v249
    %v769 = vunpack.c.l.b16 %v250
    %v770 = vunpack.c.l.b16 %v251
    %v771 = vunpack.c.l.b16 %v252
    %v772 = vunpack.c.l.b16 %v253
    %v773 = vunpack.c.l.b16 %v254
    %v774 = vunpack.c.l.b16 %v255
    %v775 = vunpack.c.l.b16 %v256
    %v776 = vunpack.c.l.b16 %v257
    %v777 = vunpack.c.l.b16 %v258
    %v778 = vunpack.c.l.b16 %v259
    %v779 = vunpack.c.l.b16 %v260
    %v780 = vunpack.c.l.b16 %v261
    %v781 = vunpack.c.l.b16 %v262
    %v782 = vunpack.c.l.b16 %v263
    %v783 = vunpack.c.l.b16 %v264
    %v784 = vunpack.c.l.b16 %v265
    %v785 = vunpack.c.l.b16 %v266
    %v786 = vunpack.c.l.b16 %v267
    %v787 = vunpack.c.l.b16 %v268
    %v788 = vunpack.c.l.b16 %v269
    %v789 = vunpack.c.l.b16 %v270
    %v790 = vunpack.c.l.b16 %v271
    %v791 = vunpack.c.l.b16 %v272
    %v792 = vunpack.c.l.b16 %v273
    %v793 = vunpack.c.l.b16 %v274
    %v794 = vunpack.c.l.b16 %v275
    %v795 = vunpack.c.l.b16 %v276
    %v796 = vunpack.c.l.b16 %v277
    %v797 = vunpack.c.l.b16 %v278
    %v798 = vunpack.c.l.b16 %v279
    %v799 = vunpack.c.l.b16 %v280
    %v800 = vunpack.c.l.b16 %v281
    %v801 = vunpack.c.l.b16 %v282
    %v802 = vunpack.c.l.b16 %v283
    %v803 = vunpack.c.l.b16 %v284
    %v804 = vunpack.c.l.b16 %v285
    %v805 = vunpack.c.l.b16 %v286
    %v806 = vunpack.c.l.b16 %v287
    %v807 = vunpack.c.l.b16 %v288
    %v808 = vunpack.c.l.b16 %v289
    %v809 = vunpack.c.l.b16 %v290
    %v810 = vunpack.c.l.b16 %v291
    %v811 = vunpack.c.l.b16 %v292
    %v812 = vunpack.c.l.b16 %v293
    %v813 = vunpack.c.l.b16 %v294
    %v814 = vunpack.c.l.b16 %v295
    %v815 = vunpack.c.l.b16 %v296
    %v816 = vunpack.c.l.b16 %v297
    %v817 = vunpack.c.l.b16 %v298
    %v818 = vunpack.c.l.b16 %v299
    %v819 = vunpack.c.l.b16 %v300
    %v820 = vunpack.c.l.b16 %v301
    %v821 = vunpack.c.l.b16 %v302
    %v822 = vunpack.c.l.b16 %v303
    %v823 = vunpack.c.l.b16 %v304
    %v824 = vunpack.c.l.b16 %v305
    %v825 = vunpack.c.l.b16 %v306
    %v826 = vunpack.c.l.b16 %v307
    %v827 = vunpack.c.l.b16 %v308
    %v828 = vunpack.c.l.b16 %v309
    %v829 = vunpack.c.l.b16 %v310
    %v830 = vunpack.c.l.b16 %v311
    %v831 = vunpack.c.l.b16 %v312
    %v832 = vunpack.c.l.b16 %v313
    %v833 = vunpack.c.l.b16 %v314
    %v834 = vunpack.c.l.b16 %v315
    %v835 = vunpack.c.l.b16 %v316
    %v836 = vunpack.c.l.b16 %v317
    %v837 = vunpack.c.l.b16 %v318
    %v838 = vunpack.c.l.b16 %v319
    %v839 = vunpack.c.l.b16 %v320
    %v840 = vunpack.c.l.b16 %v321
    %v841 = vunpack.c.l.b16 %v322
    %v842 = vunpack.c.l.b16 %v323
    %v843 = vunpack.c.l.b16 %v324
    %v844 = vunpack.c.l.b16 %v325
    %v845 = vpack.c.b16 %v590, %v589
    %v846 = vpack.c.b16 %v592, %v591
    %v847 = vpack.c.b16 %v594, %v593
    %v848 = vpack.c.b16 %v596, %v595
    %v849 = vpack.c.b16 %v598, %v597
    %v850 = vpack.c.b16 %v600, %v599
    %v851 = vpack.c.b16 %v602, %v601
    %v852 = vpack.c.b16 %v604, %v603
    %v853 = vpack.c.b16 %v606, %v605
    %v854 = vpack.c.b16 %v608, %v607
    %v855 = vpack.c.b16 %v610, %v609
    %v856 = vpack.c.b16 %v612, %v611
    %v857 = vpack.c.b16 %v614, %v613
    %v858 = vpack.c.b16 %v616, %v615
    %v859 = vpack.c.b16 %v618, %v617
    %v860 = vpack.c.b16 %v620, %v619
    %v861 = vpack.c.b16 %v622, %v621
    %v862 = vpack.c.b16 %v624, %v623
    %v863 = vpack.c.b16 %v626, %v625
    %v864 = vpack.c.b16 %v628, %v627
    %v865 = vpack.c.b16 %v630, %v629
    %v866 = vpack.c.b16 %v632, %v631
    %v867 = vpack.c.b16 %v634, %v633
    %v868 = vpack.c.b16 %v636, %v635
    %v869 = vpack.c.b16 %v638, %v637
    %v870 = vpack.c.b16 %v640, %v639
    %v871 = vpack.c.b16 %v642, %v641
    %v872 = vpack.c.b16 %v644, %v643
    %v873 = vpack.c.b16 %v646, %v645
    %v874 = vpack.c.b16 %v648, %v647
    %v875 = vpack.c.b16 %v650, %v649
    %v876 = vpack.c.b16 %v652, %v651
    %v877 = vpack.c.b16 %v654, %v653
    %v878 = vpack.c.b16 %v656, %v655
    %v879 = vpack.c.b16 %v658, %v657
    %v880 = vpack.c.b16 %v660, %v659
    %v881 = vpack.c.b16 %v662, %v661
    %v882 = vpack.c.b16 %v664, %v663
    %v883 = vpack.c.b16 %v666, %v665
    %v884 = vpack.c.b16 %v668, %v667
    %v885 = vpack.c.b16 %v670, %v669
    %v886 = vpack.c.b16 %v672, %v671
    %v887 = vpack.c.b16 %v674, %v673
    %v888 = vpack.c.b16 %v676, %v675
    %v889 = vpack.c.b16 %v678, %v677
    %v890 = vpack.c.b16 %v680, %v679
    %v891 = vpack.c.b16 %v682, %v681
    %v892 = vpack.c.b16 %v684, %v683
    %v893 = vpack.c.b16 %v686, %v685
    %v894 = vpack.c.b16 %v688, %v687
    %v895 = vpack.c.b16 %v690, %v689
    %v896 = vpack.c.b16 %v692, %v691
    %v897 = vpack.c.b16 %v694, %v693
    %v898 = vpack.c.b16 %v696, %v695
    %v899 = vpack.c.b16 %v698, %v697
    %v900 = vpack.c.b16 %v700, %v699
    %v901 = vpack.c.b16 %v702, %v701
    %v902 = vpack.c.b16 %v704, %v703
    %v903 = vpack.c.b16 %v706, %v705
    %v904 = vpack.c.b16 %v708, %v707
    %v905 = vpack.c.b16 %v710, %v709
    %v906 = vpack.c.b16 %v712, %v711
    %v907 = vpack.c.b16 %v714, %v713
    %v908 = vpack.c.b16 %v716, %v715
    %v909 = vpack.c.b16 %v718, %v717
    %v910 = vpack.c.b16 %v720, %v719
    %v911 = vpack.c.b16 %v722, %v721
    %v912 = vpack.c.b16 %v724, %v723
    %v913 = vpack.c.b16 %v726, %v725
    %v914 = vpack.c.b16 %v728, %v727
    %v915 = vpack.c.b16 %v730, %v729
    %v916 = vpack.c.b16 %v732, %v731
    %v917 = vpack.c.b16 %v734, %v733
    %v918 = vpack.c.b16 %v736, %v735
    %v919 = vpack.c.b16 %v738, %v737
    %v920 = vpack.c.b16 %v740, %v739
    %v921 = vpack.c.b16 %v742, %v741
    %v922 = vpack.c.b16 %v744, %v743
    %v923 = vpack.c.b16 %v746, %v745
    %v924 = vpack.c.b16 %v748, %v747
    %v925 = vpack.c.b16 %v750, %v749
    %v926 = vpack.c.b16 %v752, %v751
    %v927 = vpack.c.b16 %v754, %v753
    %v928 = vpack.c.b16 %v756, %v755
    %v929 = vpack.c.b16 %v758, %v757
    %v930 = vpack.c.b16 %v760, %v759
    %v931 = vpack.c.b16 %v762, %v761
    %v932 = vpack.c.b16 %v764, %v763
    %v933 = vpack.c.b16 %v766, %v765
    %v934 = vpack.c.b16 %v768, %v767
    %v935 = vpack.c.b16 %v770, %v769
    %v936 = vpack.c.b16 %v772, %v771
    %v937 = vpack.c.b16 %v774, %v773
    %v938 = vpack.c.b16 %v776, %v775
    %v939 = vpack.c.b16 %v778, %v777
    %v940 = vpack.c.b16 %v780, %v779
    %v941 = vpack.c.b16 %v782, %v781
    %v942 = vpack.c.b16 %v784, %v783
    %v943 = vpack.c.b16 %v786, %v785
    %v944 = vpack.c.b16 %v788, %v787
    %v945 = vpack.c.b16 %v790, %v789
    %v946 = vpack.c.b16 %v792, %v791
    %v947 = vpack.c.b16 %v794, %v793
    %v948 = vpack.c.b16 %v796, %v795
    %v949 = vpack.c.b16 %v798, %v797
    %v950 = vpack.c.b16 %v800, %v799
    %v951 = vpack.c.b16 %v802, %v801
    %v952 = vpack.c.b16 %v804, %v803
    %v953 = vpack.c.b16 %v806, %v805
    %v954 = vpack.c.b16 %v808, %v807
    %v955 = vpack.c.b16 %v810, %v809
    %v956 = vpack.c.b16 %v812, %v811
    %v957 = vpack.c.b16 %v814, %v813
    %v958 = vpack.c.b16 %v816, %v815
    %v959 = vpack.c.b16 %v818, %v817
    %v960 = vpack.c.b16 %v820, %v819
    %v961 = vpack.c.b16 %v822, %v821
    %v962 = vpack.c.b16 %v824, %v823
    %v963 = vpack.c.b16 %v826, %v825
    %v964 = vpack.c.b16 %v828, %v827
    %v965 = vpack.c.b16 %v830, %v829
    %v966 = vpack.c.b16 %v832, %v831
    %v967 = vpack.c.b16 %v834, %v833
    %v968 = vpack.c.b16 %v836, %v835
    %v969 = vpack.c.b16 %v838, %v837
    %v970 = vpack.c.b16 %v840, %v839
    %v971 = vpack.c.b16 %v842, %v841
    %v972 = vpack.c.b16 %v844, %v843
    %1101 = vmatprep.subr.bf16.mxu0 0
    %1102 = vmatpush1.bf16.msra.mxu0 %v852
    %1103 = vmatprep.subr.bf16.mxu0 0
    %1104 = vmatpush1.bf16.msra.mxu0 %v851
    %1105 = vmatprep.subr.bf16.mxu0 0
    %1106 = vmatpush1.bf16.msra.mxu0 %v850
    %1107 = vmatprep.subr.bf16.mxu0 0
    %1108 = vmatpush1.bf16.msra.mxu0 %v849
    %1109 = vmatprep.subr.bf16.mxu0 0
    %1110 = vmatpush1.bf16.msra.mxu0 %v848
    %1111 = vmatprep.subr.bf16.mxu0 0
    %1112 = vmatpush1.bf16.msra.mxu0 %v847
    %1113 = vmatprep.subr.bf16.mxu0 0
    %1114 = vmatpush1.bf16.msra.mxu0 %v846
    %1115 = vmatprep.subr.bf16.mxu0 0
    %1116 = vmatpush1.bf16.msra.mxu0 %v845
    %1117 = vmatprep.subr.bf16.mxu0 0
    %1118 = vmatpush2.bf16.msra.mxu0 %v860
    %1119 = vmatprep.subr.bf16.mxu0 0
    %1120 = vmatpush2.bf16.msra.mxu0 %v859
    %1121 = vmatprep.subr.bf16.mxu0 0
    %1122 = vmatpush2.bf16.msra.mxu0 %v858
    %1123 = vmatprep.subr.bf16.mxu0 0
    %1124 = vmatpush2.bf16.msra.mxu0 %v857
    %1125 = vmatprep.subr.bf16.mxu0 0
    %1126 = vmatpush2.bf16.msra.mxu0 %v856
    %1127 = vmatprep.subr.bf16.mxu0 0
    %1128 = vmatpush2.bf16.msra.mxu0 %v855
    %1129 = vmatprep.subr.bf16.mxu0 0
    %1130 = vmatpush2.bf16.msra.mxu0 %v854
    %1131 = vmatprep.subr.bf16.mxu0 0
    %1132 = vmatpush2.bf16.msra.mxu0 %v853
    %1133 = vmatprep.mubr.bf16.mxu0 %v55
    %1134 = vmatmul.mubr.bf16.gmra.mxu0 %v54
    %v1135 = vpop.f32.mrf.mxu0
    %v1136 = vadd.f32 %v331, %v1135
    %v1137 = vpop.f32.mrf.mxu0
    %v1138 = vpop.f32.mrf.mxu0
    %v1139 = vpop.f32.mrf.mxu0
    %1140 = vdwg.mxu0
    %1141 = vmatprep.subr.bf16.mxu0 0
    %1142 = vmatpush1.bf16.msra.mxu0 %v868
    %1143 = vmatprep.subr.bf16.mxu0 0
    %1144 = vmatpush1.bf16.msra.mxu0 %v867
    %1145 = vmatprep.subr.bf16.mxu0 0
    %1146 = vmatpush1.bf16.msra.mxu0 %v866
    %1147 = vmatprep.subr.bf16.mxu0 0
    %1148 = vmatpush1.bf16.msra.mxu0 %v865
    %1149 = vmatprep.subr.bf16.mxu0 0
    %1150 = vmatpush1.bf16.msra.mxu0 %v864
    %1151 = vmatprep.subr.bf16.mxu0 0
    %1152 = vmatpush1.bf16.msra.mxu0 %v863
    %1153 = vmatprep.subr.bf16.mxu0 0
    %1154 = vmatpush1.bf16.msra.mxu0 %v862
    %1155 = vmatprep.subr.bf16.mxu0 0
    %1156 = vmatpush1.bf16.msra.mxu0 %v861
    %1157 = vmatprep.subr.bf16.mxu0 0
    %1158 = vmatpush2.bf16.msra.mxu0 %v876
    %1159 = vmatprep.subr.bf16.mxu0 0
    %1160 = vmatpush2.bf16.msra.mxu0 %v875
    %1161 = vmatprep.subr.bf16.mxu0 0
    %1162 = vmatpush2.bf16.msra.mxu0 %v874
    %1163 = vmatprep.subr.bf16.mxu0 0
    %1164 = vmatpush2.bf16.msra.mxu0 %v873
    %1165 = vmatprep.subr.bf16.mxu0 0
    %1166 = vmatpush2.bf16.msra.mxu0 %v872
    %1167 = vmatprep.subr.bf16.mxu0 0
    %1168 = vmatpush2.bf16.msra.mxu0 %v871
    %1169 = vmatprep.subr.bf16.mxu0 0
    %1170 = vmatpush2.bf16.msra.mxu0 %v870
    %1171 = vmatprep.subr.bf16.mxu0 0
    %1172 = vmatpush2.bf16.msra.mxu0 %v869
    %1173 = vmatprep.mubr.bf16.mxu0 %v57
    %1174 = vmatmul.mubr.bf16.gmra.mxu0 %v56
    %v1175 = vpop.f32.mrf.mxu0
    %v1176 = vadd.f32 %v1136, %v1175
    %v1177 = vpop.f32.mrf.mxu0
    %v1178 = vpop.f32.mrf.mxu0
    %v1179 = vpop.f32.mrf.mxu0
    %1180 = vdwg.mxu0
    %1181 = vmatprep.subr.bf16.mxu0 0
    %1182 = vmatpush1.bf16.msra.mxu0 %v884
    %1183 = vmatprep.subr.bf16.mxu0 0
    %1184 = vmatpush1.bf16.msra.mxu0 %v883
    %1185 = vmatprep.subr.bf16.mxu0 0
    %1186 = vmatpush1.bf16.msra.mxu0 %v882
    %1187 = vmatprep.subr.bf16.mxu0 0
    %1188 = vmatpush1.bf16.msra.mxu0 %v881
    %1189 = vmatprep.subr.bf16.mxu0 0
    %1190 = vmatpush1.bf16.msra.mxu0 %v880
    %1191 = vmatprep.subr.bf16.mxu0 0
    %1192 = vmatpush1.bf16.msra.mxu0 %v879
    %1193 = vmatprep.subr.bf16.mxu0 0
    %1194 = vmatpush1.bf16.msra.mxu0 %v878
    %1195 = vmatprep.subr.bf16.mxu0 0
    %1196 = vmatpush1.bf16.msra.mxu0 %v877
    %1197 = vmatprep.subr.bf16.mxu0 0
    %1198 = vmatpush2.bf16.msra.mxu0 %v892
    %1199 = vmatprep.subr.bf16.mxu0 0
    %1200 = vmatpush2.bf16.msra.mxu0 %v891
    %1201 = vmatprep.subr.bf16.mxu0 0
    %1202 = vmatpush2.bf16.msra.mxu0 %v890
    %1203 = vmatprep.subr.bf16.mxu0 0
    %1204 = vmatpush2.bf16.msra.mxu0 %v889
    %1205 = vmatprep.subr.bf16.mxu0 0
    %1206 = vmatpush2.bf16.msra.mxu0 %v888
    %1207 = vmatprep.subr.bf16.mxu0 0
    %1208 = vmatpush2.bf16.msra.mxu0 %v887
    %1209 = vmatprep.subr.bf16.mxu0 0
    %1210 = vmatpush2.bf16.msra.mxu0 %v886
    %1211 = vmatprep.subr.bf16.mxu0 0
    %1212 = vmatpush2.bf16.msra.mxu0 %v885
    %1213 = vmatprep.mubr.bf16.mxu0 %v59
    %1214 = vmatmul.mubr.bf16.gmra.mxu0 %v58
    %v1215 = vpop.f32.mrf.mxu0
    %v1216 = vadd.f32 %v1176, %v1215
    %v1217 = vpop.f32.mrf.mxu0
    %v1218 = vpop.f32.mrf.mxu0
    %v1219 = vpop.f32.mrf.mxu0
    %1220 = vdwg.mxu0
    %1221 = vmatprep.subr.bf16.mxu0 0
    %1222 = vmatpush1.bf16.msra.mxu0 %v900
    %1223 = vmatprep.subr.bf16.mxu0 0
    %1224 = vmatpush1.bf16.msra.mxu0 %v899
    %1225 = vmatprep.subr.bf16.mxu0 0
    %1226 = vmatpush1.bf16.msra.mxu0 %v898
    %1227 = vmatprep.subr.bf16.mxu0 0
    %1228 = vmatpush1.bf16.msra.mxu0 %v897
    %1229 = vmatprep.subr.bf16.mxu0 0
    %1230 = vmatpush1.bf16.msra.mxu0 %v896
    %1231 = vmatprep.subr.bf16.mxu0 0
    %1232 = vmatpush1.bf16.msra.mxu0 %v895
    %1233 = vmatprep.subr.bf16.mxu0 0
    %1234 = vmatpush1.bf16.msra.mxu0 %v894
    %1235 = vmatprep.subr.bf16.mxu0 0
    %1236 = vmatpush1.bf16.msra.mxu0 %v893
    %1237 = vmatprep.subr.bf16.mxu0 0
    %1238 = vmatpush2.bf16.msra.mxu0 %v908
    %1239 = vmatprep.subr.bf16.mxu0 0
    %1240 = vmatpush2.bf16.msra.mxu0 %v907
    %1241 = vmatprep.subr.bf16.mxu0 0
    %1242 = vmatpush2.bf16.msra.mxu0 %v906
    %1243 = vmatprep.subr.bf16.mxu0 0
    %1244 = vmatpush2.bf16.msra.mxu0 %v905
    %1245 = vmatprep.subr.bf16.mxu0 0
    %1246 = vmatpush2.bf16.msra.mxu0 %v904
    %1247 = vmatprep.subr.bf16.mxu0 0
    %1248 = vmatpush2.bf16.msra.mxu0 %v903
    %1249 = vmatprep.subr.bf16.mxu0 0
    %1250 = vmatpush2.bf16.msra.mxu0 %v902
    %1251 = vmatprep.subr.bf16.mxu0 0
    %1252 = vmatpush2.bf16.msra.mxu0 %v901
    %1253 = vmatprep.mubr.bf16.mxu0 %v61
    %1254 = vmatmul.mubr.bf16.gmra.mxu0 %v60
    %v1255 = vpop.f32.mrf.mxu0
    %v1256 = vadd.f32 %v1216, %v1255
    %v1257 = vpop.f32.mrf.mxu0
    %v1258 = vpop.f32.mrf.mxu0
    %v1259 = vpop.f32.mrf.mxu0
    %1260 = vdwg.mxu0
    %1261 = vmatprep.subr.bf16.mxu0 0
    %1262 = vmatpush1.bf16.msra.mxu0 %v916
    %1263 = vmatprep.subr.bf16.mxu0 0
    %1264 = vmatpush1.bf16.msra.mxu0 %v915
    %1265 = vmatprep.subr.bf16.mxu0 0
    %1266 = vmatpush1.bf16.msra.mxu0 %v914
    %1267 = vmatprep.subr.bf16.mxu0 0
    %1268 = vmatpush1.bf16.msra.mxu0 %v913
    %1269 = vmatprep.subr.bf16.mxu0 0
    %1270 = vmatpush1.bf16.msra.mxu0 %v912
    %1271 = vmatprep.subr.bf16.mxu0 0
    %1272 = vmatpush1.bf16.msra.mxu0 %v911
    %1273 = vmatprep.subr.bf16.mxu0 0
    %1274 = vmatpush1.bf16.msra.mxu0 %v910
    %1275 = vmatprep.subr.bf16.mxu0 0
    %1276 = vmatpush1.bf16.msra.mxu0 %v909
    %1277 = vmatprep.subr.bf16.mxu0 0
    %1278 = vmatpush2.bf16.msra.mxu0 %v924
    %1279 = vmatprep.subr.bf16.mxu0 0
    %1280 = vmatpush2.bf16.msra.mxu0 %v923
    %1281 = vmatprep.subr.bf16.mxu0 0
    %1282 = vmatpush2.bf16.msra.mxu0 %v922
    %1283 = vmatprep.subr.bf16.mxu0 0
    %1284 = vmatpush2.bf16.msra.mxu0 %v921
    %1285 = vmatprep.subr.bf16.mxu0 0
    %1286 = vmatpush2.bf16.msra.mxu0 %v920
    %1287 = vmatprep.subr.bf16.mxu0 0
    %1288 = vmatpush2.bf16.msra.mxu0 %v919
    %1289 = vmatprep.subr.bf16.mxu0 0
    %1290 = vmatpush2.bf16.msra.mxu0 %v918
    %1291 = vmatprep.subr.bf16.mxu0 0
    %1292 = vmatpush2.bf16.msra.mxu0 %v917
    %1293 = vmatprep.mubr.bf16.mxu0 %v63
    %1294 = vmatmul.mubr.bf16.gmra.mxu0 %v62
    %v1295 = vpop.f32.mrf.mxu0
    %v1296 = vadd.f32 %v1256, %v1295
    %v1297 = vpop.f32.mrf.mxu0
    %v1298 = vpop.f32.mrf.mxu0
    %v1299 = vpop.f32.mrf.mxu0
    %1300 = vdwg.mxu0
    %1301 = vmatprep.subr.bf16.mxu0 0
    %1302 = vmatpush1.bf16.msra.mxu0 %v932
    %1303 = vmatprep.subr.bf16.mxu0 0
    %1304 = vmatpush1.bf16.msra.mxu0 %v931
    %1305 = vmatprep.subr.bf16.mxu0 0
    %1306 = vmatpush1.bf16.msra.mxu0 %v930
    %1307 = vmatprep.subr.bf16.mxu0 0
    %1308 = vmatpush1.bf16.msra.mxu0 %v929
    %1309 = vmatprep.subr.bf16.mxu0 0
    %1310 = vmatpush1.bf16.msra.mxu0 %v928
    %1311 = vmatprep.subr.bf16.mxu0 0
    %1312 = vmatpush1.bf16.msra.mxu0 %v927
    %1313 = vmatprep.subr.bf16.mxu0 0
    %1314 = vmatpush1.bf16.msra.mxu0 %v926
    %1315 = vmatprep.subr.bf16.mxu0 0
    %1316 = vmatpush1.bf16.msra.mxu0 %v925
    %1317 = vmatprep.subr.bf16.mxu0 0
    %1318 = vmatpush2.bf16.msra.mxu0 %v940
    %1319 = vmatprep.subr.bf16.mxu0 0
    %1320 = vmatpush2.bf16.msra.mxu0 %v939
    %1321 = vmatprep.subr.bf16.mxu0 0
    %1322 = vmatpush2.bf16.msra.mxu0 %v938
    %1323 = vmatprep.subr.bf16.mxu0 0
    %1324 = vmatpush2.bf16.msra.mxu0 %v937
    %1325 = vmatprep.subr.bf16.mxu0 0
    %1326 = vmatpush2.bf16.msra.mxu0 %v936
    %1327 = vmatprep.subr.bf16.mxu0 0
    %1328 = vmatpush2.bf16.msra.mxu0 %v935
    %1329 = vmatprep.subr.bf16.mxu0 0
    %1330 = vmatpush2.bf16.msra.mxu0 %v934
    %1331 = vmatprep.subr.bf16.mxu0 0
    %1332 = vmatpush2.bf16.msra.mxu0 %v933
    %1333 = vmatprep.mubr.bf16.mxu0 %v65
    %1334 = vmatmul.mubr.bf16.gmra.mxu0 %v64
    %v1335 = vpop.f32.mrf.mxu0
    %v1336 = vadd.f32 %v1296, %v1335
    %v1337 = vpop.f32.mrf.mxu0
    %v1338 = vpop.f32.mrf.mxu0
    %v1339 = vpop.f32.mrf.mxu0
    %1340 = vdwg.mxu0
    %1341 = vmatprep.subr.bf16.mxu0 0
    %1342 = vmatpush1.bf16.msra.mxu0 %v948
    %1343 = vmatprep.subr.bf16.mxu0 0
    %1344 = vmatpush1.bf16.msra.mxu0 %v947
    %1345 = vmatprep.subr.bf16.mxu0 0
    %1346 = vmatpush1.bf16.msra.mxu0 %v946
    %1347 = vmatprep.subr.bf16.mxu0 0
    %1348 = vmatpush1.bf16.msra.mxu0 %v945
    %1349 = vmatprep.subr.bf16.mxu0 0
    %1350 = vmatpush1.bf16.msra.mxu0 %v944
    %1351 = vmatprep.subr.bf16.mxu0 0
    %1352 = vmatpush1.bf16.msra.mxu0 %v943
    %1353 = vmatprep.subr.bf16.mxu0 0
    %1354 = vmatpush1.bf16.msra.mxu0 %v942
    %1355 = vmatprep.subr.bf16.mxu0 0
    %1356 = vmatpush1.bf16.msra.mxu0 %v941
    %1357 = vmatprep.subr.bf16.mxu0 0
    %1358 = vmatpush2.bf16.msra.mxu0 %v956
    %1359 = vmatprep.subr.bf16.mxu0 0
    %1360 = vmatpush2.bf16.msra.mxu0 %v955
    %1361 = vmatprep.subr.bf16.mxu0 0
    %1362 = vmatpush2.bf16.msra.mxu0 %v954
    %1363 = vmatprep.subr.bf16.mxu0 0
    %1364 = vmatpush2.bf16.msra.mxu0 %v953
    %1365 = vmatprep.subr.bf16.mxu0 0
    %1366 = vmatpush2.bf16.msra.mxu0 %v952
    %1367 = vmatprep.subr.bf16.mxu0 0
    %1368 = vmatpush2.bf16.msra.mxu0 %v951
    %1369 = vmatprep.subr.bf16.mxu0 0
    %1370 = vmatpush2.bf16.msra.mxu0 %v950
    %1371 = vmatprep.subr.bf16.mxu0 0
    %1372 = vmatpush2.bf16.msra.mxu0 %v949
    %1373 = vmatprep.mubr.bf16.mxu0 %v67
    %1374 = vmatmul.mubr.bf16.gmra.mxu0 %v66
    %v1375 = vpop.f32.mrf.mxu0
    %v1376 = vadd.f32 %v1336, %v1375
    %v1377 = vpop.f32.mrf.mxu0
    %v1378 = vpop.f32.mrf.mxu0
    %v1379 = vpop.f32.mrf.mxu0
    %1380 = vdwg.mxu0
    %1381 = vmatprep.subr.bf16.mxu0 0
    %1382 = vmatpush1.bf16.msra.mxu0 %v964
    %1383 = vmatprep.subr.bf16.mxu0 0
    %1384 = vmatpush1.bf16.msra.mxu0 %v963
    %1385 = vmatprep.subr.bf16.mxu0 0
    %1386 = vmatpush1.bf16.msra.mxu0 %v962
    %1387 = vmatprep.subr.bf16.mxu0 0
    %1388 = vmatpush1.bf16.msra.mxu0 %v961
    %1389 = vmatprep.subr.bf16.mxu0 0
    %1390 = vmatpush1.bf16.msra.mxu0 %v960
    %1391 = vmatprep.subr.bf16.mxu0 0
    %1392 = vmatpush1.bf16.msra.mxu0 %v959
    %1393 = vmatprep.subr.bf16.mxu0 0
    %1394 = vmatpush1.bf16.msra.mxu0 %v958
    %1395 = vmatprep.subr.bf16.mxu0 0
    %1396 = vmatpush1.bf16.msra.mxu0 %v957
    %1397 = vmatprep.subr.bf16.mxu0 0
    %1398 = vmatpush2.bf16.msra.mxu0 %v972
    %1399 = vmatprep.subr.bf16.mxu0 0
    %1400 = vmatpush2.bf16.msra.mxu0 %v971
    %1401 = vmatprep.subr.bf16.mxu0 0
    %1402 = vmatpush2.bf16.msra.mxu0 %v970
    %1403 = vmatprep.subr.bf16.mxu0 0
    %1404 = vmatpush2.bf16.msra.mxu0 %v969
    %1405 = vmatprep.subr.bf16.mxu0 0
    %1406 = vmatpush2.bf16.msra.mxu0 %v968
    %1407 = vmatprep.subr.bf16.mxu0 0
    %1408 = vmatpush2.bf16.msra.mxu0 %v967
    %1409 = vmatprep.subr.bf16.mxu0 0
    %1410 = vmatpush2.bf16.msra.mxu0 %v966
    %1411 = vmatprep.subr.bf16.mxu0 0
    %1412 = vmatpush2.bf16.msra.mxu0 %v965
    %1413 = vmatprep.mubr.bf16.mxu0 %v69
    %1414 = vmatmul.mubr.bf16.gmra.mxu0 %v68
    %v1415 = vpop.f32.mrf.mxu0
    %v1416 = vadd.f32 %v1376, %v1415
    %v1417 = vpop.f32.mrf.mxu0
    %v1418 = vpop.f32.mrf.mxu0
    %v1419 = vpop.f32.mrf.mxu0
    %1420 = vdwg.mxu0
    %vm1421 = vcmp.gt.f32.partialorder %v1416, 0.0
    %v1422 = vmin.f32 %v1416, 0.0
    %v1423 = vmul.f32 %v1422, 1.442695
    %v1424 = vpow.pop %v1423
    %v1425 = vsub.f32 %v1424, 1.0
    %v1426 = vmul.f32 %v1425, 1.6732632
    %v1427 = vsel %vm1421, %v1416, %v1426
    %v1428 = vmul.f32 %v1427, 1.050701
    %v1429 = vpack.c.bf16 %v1428, %v1428
    %v1430 = vld [vmem:[%s3] sm:$0xf]
    %v1431 = vld [vmem:[%s3 + $0x4] sm:$0xf]
    %v1432 = vld [vmem:[%s3 + $0x8] sm:$0xf]
    %v1433 = vld [vmem:[%s3 + $0xc] sm:$0xf]
    %v1434 = vld [vmem:[%s4] sm:$0x1]
    %v1436 = vlaneseq
    %v1437 = vshrl.u32 %v1436, 7
    %v1438 = vsub.s32 0, %v1437
    %v1439 = vrot.slane %v1434, %v1438
    %v1445 = vunpack.c.l.b16 %v1430
    %v1446 = vunpack.c.l.b16 %v1431
    %v1447 = vunpack.c.l.b16 %v1432
    %v1448 = vunpack.c.l.b16 %v1433
    %v1449 = vpack.c.b16 %v1446, %v1445
    %v1450 = vpack.c.b16 %v1448, %v1447
    %vm1453 = vcmask 261120
    %v1455 = vsel %vm1453, %v1429, 0
    %1457 = vmatprep.subr.bf16.mxu0 0
    %1458 = vmatpush1.bf16.msra.mxu0 0
    %1459 = vmatprep.subr.bf16.mxu0 0
    %1460 = vmatpush1.bf16.msra.mxu0 0
    %1461 = vmatprep.subr.bf16.mxu0 0
    %1462 = vmatpush1.bf16.msra.mxu0 0
    %1463 = vmatprep.subr.bf16.mxu0 0
    %1464 = vmatpush1.bf16.msra.mxu0 0
    %1465 = vmatprep.subr.bf16.mxu0 0
    %1466 = vmatpush1.bf16.msra.mxu0 0
    %1467 = vmatprep.subr.bf16.mxu0 0
    %1468 = vmatpush1.bf16.msra.mxu0 0
    %1469 = vmatprep.subr.bf16.mxu0 0
    %1470 = vmatpush1.bf16.msra.mxu0 %v1450
    %1471 = vmatprep.subr.bf16.mxu0 0
    %1472 = vmatpush1.bf16.msra.mxu0 %v1449
    %1473 = vmatprep.subr.bf16.mxu0 0
    %1474 = vmatpush2.bf16.msra.mxu0 0
    %1475 = vmatprep.subr.bf16.mxu0 0
    %1476 = vmatpush2.bf16.msra.mxu0 0
    %1477 = vmatprep.subr.bf16.mxu0 0
    %1478 = vmatpush2.bf16.msra.mxu0 0
    %1479 = vmatprep.subr.bf16.mxu0 0
    %1480 = vmatpush2.bf16.msra.mxu0 0
    %1481 = vmatprep.subr.bf16.mxu0 0
    %1482 = vmatpush2.bf16.msra.mxu0 0
    %1483 = vmatprep.subr.bf16.mxu0 0
    %1484 = vmatpush2.bf16.msra.mxu0 0
    %1485 = vmatprep.subr.bf16.mxu0 0
    %1486 = vmatpush2.bf16.msra.mxu0 0
    %1487 = vmatprep.subr.bf16.mxu0 0
    %1488 = vmatpush2.bf16.msra.mxu0 0
    %1489 = vmatprep.mubr.bf16.mxu0 0
    %1490 = vmatmul.mubr.bf16.gmra.mxu0 %v1455
    %v1491 = vpop.f32.mrf.mxu0
    %v1492 = vadd.f32 %v1439, %v1491
    %v1493 = vpop.f32.mrf.mxu0
    %v1494 = vpop.f32.mrf.mxu0
    %v1495 = vpop.f32.mrf.mxu0
    %1496 = vdwg.mxu0
    %vm1497 = vcmask 125952
    %1498 = vst.msk [vmem:[#allocation2] sm:$0xf] %vm1497, %v1492
    // Predicated region
    $region22: #{encoder_forward.9} parent=1 // pred_check
      _
    $region23: #{encoder_forward.9} parent=1 // pred_check_branch
      %1500 = sbr.rel (0) target = $region25
    $region24: #{encoder_forward.9} parent=1 // pred_region
      %s1502 = ssub.s32 64, 64
      %1503 = vsyncadd [#allocation3], %s1502
      %s1505 = sshll.u32 [#allocation2], 4
      %s1506 = int_to_ptr.vmem [resolvable:$true] %s1505
      %1508 = dma.vmem_to_hbm [thread:$0]  %s1506, 64, %s5, [#allocation3]
    $region25: #{encoder_forward.9} parent=1 // pred_fallthru
      _
    // Predicated region
    $region26: #{encoder_forward.9} parent=1 // pred_check
      _
    $region27: #{encoder_forward.9} parent=1 // pred_check_branch
      %1510 = sbr.rel (0) target = $region29
    $region28: #{encoder_forward.9} parent=1 // pred_region
      %1511 = dma.done [#allocation3], 64
    $region29: #{encoder_forward.9} parent=1 // pred_fallthru
      _
    %1512 = vsyncpa [#allocation3], 1

</llo_original>
